<compile_context>
chip_gen: v5e
topology: v5e:2x2
jax: 0.10.0
libtpu: 0.0.40
codegen_flags: <defaults>
</compile_context>

<pallas_src>
import functools

import jax
import jax.numpy as jnp
from jax.experimental import pallas as pl
from jax.experimental.pallas import tpu as pltpu

NUM_CLASSES = 10
NC = 3
NDF = 64
LRELU_SLOPE = 0.2
BN_EPS = 1e-5

# (name, cin, cout, kernel, stride, pad, has_batchnorm)
FRONT_CFGS = [  # stride-2 front-end, one pallas_call each (wrapper im2col)
    ("conv1", NC,  NDF, 4, 2, 1, False),
    ("conv2", NDF, NDF, 4, 2, 1, True),
    ("conv3", NDF, NDF, 4, 2, 1, True),
]
TAIL_CFGS = [   # stride-1 tail, fused with the head into a single pallas_call
    ("conv4", NDF,     NDF * 2, 3, 1, 1, True),
    ("conv5", NDF * 2, NDF * 2, 3, 1, 1, True),
    ("conv6", NDF * 2, NDF * 2, 3, 1, 0, False),
]

_WP = 6                 # padded width of the 4x4 feature maps in the tail (4 + 2*1)
_AREA = _WP * _WP       # 36 rows per padded image in the flattened layout
_PAD_BASE = _WP + 1     # flat row index of padded position (1, 1)
_S45 = 3 * _WP + 4      # 22: row span covering the 4x4 conv4/conv5 outputs
_S6 = _WP + 2           # 8 : row span covering the 2x2 conv6 output
_BUF_ROWS = 40          # 36 padded-6x6 rows rounded up to a sublane multiple
_STAGE_ROWS = 24        # 22 rounded up to a sublane multiple


# ---------------------------------------------------------------------------
# Pallas kernel: front convs (im2col patches @ W  ->  BN scale/shift  -> LReLU)
# ---------------------------------------------------------------------------
def _front_conv_kernel(x_ref, w_ref, scale_ref, bias_ref, o_ref):
    acc = jnp.dot(x_ref[...], w_ref[...], preferred_element_type=jnp.float32)
    y = acc * scale_ref[...] + bias_ref[...]
    o_ref[...] = jnp.where(y > 0, y, LRELU_SLOPE * y).astype(o_ref.dtype)


def front_conv(patches, w_mat, scale, bias, *, m_tile=512):
    # NOTE: at these shapes M (= N*Hout*Wout) is always a multiple of mt, so the
    # ragged-last-block path (Pallas OOB reads / masked writes) is never hit.
    M, K = patches.shape
    _, Cout = w_mat.shape
    mt = min(m_tile, M)
    return pl.pallas_call(
        _front_conv_kernel,
        out_shape=jax.ShapeDtypeStruct((M, Cout), jnp.bfloat16),
        grid=(pl.cdiv(M, mt),),
        in_specs=[
            pl.BlockSpec((mt, K), lambda i: (i, 0)),
            pl.BlockSpec((K, Cout), lambda i: (0, 0)),
            pl.BlockSpec((1, Cout), lambda i: (0, 0)),
            pl.BlockSpec((1, Cout), lambda i: (0, 0)),
        ],
        out_specs=pl.BlockSpec((mt, Cout), lambda i: (i, 0)),
        compiler_params=pltpu.CompilerParams(dimension_semantics=("parallel",)),
    )(patches, w_mat, scale, bias)


# ---------------------------------------------------------------------------
# Pallas kernel: fused conv4 + conv5 + conv6 + AvgPool + Linear + heads
# (gridded over the batch; one image per grid step, all activations in VMEM)
# ---------------------------------------------------------------------------
def _tail_kernel(x4_ref,
                 w4_ref, s4_ref, b4_ref,
                 w5_ref, s5_ref, b5_ref,
                 w6_ref, wl_ref, bl_ref,
                 feat_ref, cls_ref, logsm_ref, gan_ref,
                 buf5_ref, buf6_ref, stage_ref, feat_sc, cl_sc):
    b = pl.program_id(0)
    nb = pl.num_programs(0)
    C1, C2 = NDF, NDF * 2

    # One-time zero of the padded-6x6 buffers: only the halo rows must stay
    # zero; the 16 interior rows are fully rewritten for every image below.
    @pl.when(b == 0)
    def _():
        buf5_ref[...] = jnp.zeros(buf5_ref.shape, buf5_ref.dtype)
        buf6_ref[...] = jnp.zeros(buf6_ref.shape, buf6_ref.dtype)

    def lrelu(v):
        return jnp.where(v > 0, v, LRELU_SLOPE * v)

    def stage_taps(read_tap, span, cin):
        # In-kernel im2col: 9 shifted bf16 tap slices -> one [span, 9*cin] slab,
        # so each 3x3 conv is a single deep-K matmul (no per-tap accumulation).
        for di in range(3):
            for dj in range(3):
                t = di * 3 + dj
                stage_ref[0:span, t * cin:(t + 1) * cin] = read_tap(di * _WP + dj, span)

    def store_valid(dst_ref, a):
        # Scatter the 4x4 valid output rows into the padded-6x6 layout;
        # cast f32 -> bf16 exactly once, at the store.
        for i in range(4):
            dst_ref[_PAD_BASE + i * _WP:_PAD_BASE + i * _WP + 4, :] = (
                a[i * _WP:i * _WP + 4, :].astype(dst_ref.dtype))

    # ---- conv4: 3x3 pad 1, BN + LeakyReLU (input: per-image padded conv3 map) ----
    stage_taps(lambda rel, sp: x4_ref[rel:rel + sp, :], _S45, C1)
    a4 = jnp.dot(stage_ref[0:_S45, 0:9 * C1], w4_ref[...],
                 preferred_element_type=jnp.float32)
    a4 = lrelu(a4 * s4_ref[...] + b4_ref[...])
    store_valid(buf5_ref, a4)

    # ---- conv5: 3x3 pad 1, BN + LeakyReLU (reads VMEM-resident conv4 output) ----
    stage_taps(lambda rel, sp: buf5_ref[rel:rel + sp, :], _S45, C2)
    a5 = jnp.dot(stage_ref[0:_S45, :], w5_ref[...],
                 preferred_element_type=jnp.float32)
    a5 = lrelu(a5 * s5_ref[...] + b5_ref[...])
    store_valid(buf6_ref, a5)

    # ---- conv6: 3x3 pad 0, LeakyReLU (reads the interior 4x4 of buf6) ----
    stage_taps(lambda rel, sp: buf6_ref[_PAD_BASE + rel:_PAD_BASE + rel + sp, :],
               _S6, C2)
    a6 = lrelu(jnp.dot(stage_ref[0:_S6, :], w6_ref[...],
                       preferred_element_type=jnp.float32))

    # ---- AvgPool2d(2) on the 2x2 map: mean of rows {0, 1, _WP, _WP+1} ----
    feat = 0.25 * (a6[0:1, :] + a6[1:2, :]
                   + a6[_WP:_WP + 1, :] + a6[_WP + 1:_WP + 2, :])      # [1, 128]
    feat_sc[b] = feat
    cl = jnp.dot(feat, wl_ref[...], preferred_element_type=jnp.float32) + bl_ref[...]
    cl_sc[b] = cl                                                      # [1, 11]

    # ---- head (last image): all per-image logits/features now sit in scratch ----
    @pl.when(b == nb - 1)
    def _():
        feat_ref[...] = feat_sc[...][:, 0, :]
        cls_all = cl_sc[...][:, 0, :]                                  # [Nb, 11]
        cls_ref[...] = cls_all

        # nn.LogSoftmax(dim=0): over the batch dimension (as written in the module)
        m0 = jnp.max(cls_all, axis=0, keepdims=True)
        lse0 = jnp.log(jnp.sum(jnp.exp(cls_all - m0), axis=0, keepdims=True)) + m0
        logsm_ref[...] = cls_all - lse0

        # _ganLogits: first NUM_CLASSES lanes are "real" logits, last lane "fake"
        lane = jax.lax.broadcasted_iota(jnp.int32, cls_all.shape, 1)
        real = lane < NUM_CLASSES
        neg_inf = jnp.full_like(cls_all, -jnp.inf)
        max_val = jnp.max(jnp.where(real, cls_all, neg_inf), axis=1, keepdims=True)
        sum_exp = jnp.sum(jnp.where(real, jnp.exp(cls_all - max_val), 0.0),
                          axis=1, keepdims=True)
        fake = jnp.sum(jnp.where(lane == NUM_CLASSES, cls_all, 0.0),
                       axis=1, keepdims=True)
        gan_ref[...] = jnp.log(sum_exp) + max_val - fake


def fused_tail(x4, p4, p5, p6, lin):
    Nb = x4.shape[0]
    K = NUM_CLASSES + 1
    C1, C2 = NDF, NDF * 2

    def whole(shape):
        nd = len(shape)
        return pl.BlockSpec(shape, lambda b, nd=nd: (0,) * nd)

    out_shapes = (
        jax.ShapeDtypeStruct((Nb, C2), jnp.float32),   # features
        jax.ShapeDtypeStruct((Nb, K), jnp.float32),    # class_logits
        jax.ShapeDtypeStruct((Nb, K), jnp.float32),    # log_softmax(dim=0)
        jax.ShapeDtypeStruct((Nb, 1), jnp.float32),    # gan_logits
    )
    return pl.pallas_call(
        _tail_kernel,
        out_shape=out_shapes,
        grid=(Nb,),
        in_specs=[
            pl.BlockSpec((None, _AREA, C1), lambda b: (b, 0, 0)),  # per-image x4 (bf16)
            whole((9 * C1, C2)),                                   # conv4 weights
            whole((1, C2)), whole((1, C2)),
            whole((9 * C2, C2)),                                   # conv5 weights
            whole((1, C2)), whole((1, C2)),
            whole((9 * C2, C2)),                                   # conv6 weights
            whole((C2, K)),                                        # linear W^T
            whole((1, K)),                                         # linear b
        ],
        out_specs=(
            whole((Nb, C2)),
            whole((Nb, K)),
            whole((Nb, K)),
            whole((Nb, 1)),
        ),
        scratch_shapes=[
            pltpu.VMEM((_BUF_ROWS, C2), jnp.bfloat16),        # conv4 out (padded 6x6)
            pltpu.VMEM((_BUF_ROWS, C2), jnp.bfloat16),        # conv5 out (padded 6x6)
            pltpu.VMEM((_STAGE_ROWS, 9 * C2), jnp.bfloat16),  # K-concat im2col staging
            pltpu.VMEM((Nb, 1, C2), jnp.float32),             # per-image features
            pltpu.VMEM((Nb, 1, K), jnp.float32),              # per-image class logits
        ],
        # LogSoftmax(dim=0) couples the batch, so the axis is sequential.
        compiler_params=pltpu.CompilerParams(dimension_semantics=("arbitrary",)),
    )(x4, p4["w"], p4["scale"], p4["bias"],
      p5["w"], p5["scale"], p5["bias"],
      p6["w"], lin["w"], lin["b"])


# ---------------------------------------------------------------------------
# Glue (plain JAX): im2col for the stride-2 front convs
# ---------------------------------------------------------------------------
def im2col(x_nhwc, k, stride, pad):
    N, H, W, C = x_nhwc.shape
    Hout = (H + 2 * pad - k) // stride + 1
    Wout = (W + 2 * pad - k) // stride + 1
    xp = jnp.pad(x_nhwc, ((0, 0), (pad, pad), (pad, pad), (0, 0)))
    cols = []
    for i in range(k):
        for j in range(k):
            cols.append(xp[:, i:i + stride * Hout:stride,
                           j:j + stride * Wout:stride, :])      # [N,Hout,Wout,C]
    patches = jnp.stack(cols, axis=3)                           # [N,Hout,Wout,k*k,C]
    return patches.reshape(N * Hout * Wout, k * k * C), (N, Hout, Wout)


# ---------------------------------------------------------------------------
# Parameters (deterministic synthetic init)
# ---------------------------------------------------------------------------
def init_params(key):
    params = {}
    all_cfgs = FRONT_CFGS + TAIL_CFGS
    keys = jax.random.split(key, len(all_cfgs) * 5 + 2)
    ki = 0
    for (name, cin, cout, k, _s, _p, has_bn) in all_cfgs:
        w = 0.05 * jax.random.normal(keys[ki], (cout, cin, k, k), jnp.float32); ki += 1
        # PyTorch [Cout,Cin,kh,kw] -> tap-major [kh*kw*Cin, Cout] (K = tap*Cin + cin)
        w_mat = jnp.transpose(w, (2, 3, 1, 0)).reshape(k * k * cin, cout)
        if has_bn:
            gamma = 1.0 + 0.1 * jax.random.normal(keys[ki], (cout,), jnp.float32); ki += 1
            beta = 0.1 * jax.random.normal(keys[ki], (cout,), jnp.float32); ki += 1
            rmean = 0.1 * jax.random.normal(keys[ki], (cout,), jnp.float32); ki += 1
            rvar = 1.0 + 0.1 * jax.random.uniform(keys[ki], (cout,), jnp.float32); ki += 1
            scale = gamma / jnp.sqrt(rvar + BN_EPS)
            bias = beta - rmean * scale
        else:
            ki += 4
            scale = jnp.ones((cout,), jnp.float32)
            bias = jnp.zeros((cout,), jnp.float32)
        params[name] = dict(
            w=w_mat.astype(jnp.bfloat16),
            scale=scale.reshape(1, cout).astype(jnp.float32),
            bias=bias.reshape(1, cout).astype(jnp.float32))
    # nn.Linear(128, 11): PyTorch weight is [out,in]; store transposed [in,out]
    w_lin = 0.05 * jax.random.normal(keys[ki], (NUM_CLASSES + 1, NDF * 2), jnp.float32); ki += 1
    b_lin = 0.05 * jax.random.normal(keys[ki], (NUM_CLASSES + 1,), jnp.float32)
    params["linear"] = dict(w=jnp.transpose(w_lin),
                            b=b_lin.reshape(1, NUM_CLASSES + 1))
    return params


# ---------------------------------------------------------------------------
# Forward pass (matches PyTorch Discriminator.forward return order)
# ---------------------------------------------------------------------------
def discriminator_forward(params, x_nchw):
    # layout: NCHW (PyTorch) -> NHWC; bf16 activations feed the MXU, f32 accumulate.
    x = jnp.transpose(x_nchw, (0, 2, 3, 1)).astype(jnp.bfloat16)
    for (name, _cin, cout, k, s, p, _bn) in FRONT_CFGS:
        patches, (N, Ho, Wo) = im2col(x, k, s, p)
        y = front_conv(patches, params[name]["w"],
                       params[name]["scale"], params[name]["bias"])
        x = y.reshape(N, Ho, Wo, cout)
    # conv3 output [N,4,4,64] (bf16, no f32 cast) -> per-image padded 6x6 flat layout
    Nb = x.shape[0]
    x4 = jnp.pad(x, ((0, 0), (1, 1), (1, 1), (0, 0))).reshape(Nb, _AREA, NDF)
    feat, class_logits, log_softmax, gan = fused_tail(
        x4, params["conv4"], params["conv5"], params["conv6"], params["linear"])
    # PyTorch returns (out, class_logits, gan_logits, features)
    return log_softmax, class_logits, gan.reshape(Nb), feat


if __name__ == "__main__":
    key = jax.random.PRNGKey(0)
    pkey, xkey = jax.random.split(key)
    params = init_params(pkey)
    # Architecture implies 3x32x32 inputs (3 stride-2 convs -> 4x4 -> valid 3x3 -> 2x2 -> pool)
    x = jax.random.normal(xkey, (2, NC, 32, 32), dtype=jnp.float32)

    fwd = jax.jit(functools.partial(discriminator_forward, params))
    out, class_logits, gan_logits, features = fwd(x)
    jax.block_until_ready((out, class_logits, gan_logits, features))

    assert out.shape == (2, NUM_CLASSES + 1)
    assert class_logits.shape == (2, NUM_CLASSES + 1)
    assert gan_logits.shape == (2,)
    assert features.shape == (2, NDF * 2)
    assert bool(jnp.all(jnp.isfinite(out)))
    print("KERNEL_OK")
</pallas_src>

<mosaic_0001>
module attributes {stable_mosaic.version = 11 : i64} {
  func.func @_front_conv_kernel(%arg0: i32, %arg1: memref<512x48xbf16, #tpu.memory_space<vmem>>, %arg2: memref<48x64xbf16, #tpu.memory_space<vmem>>, %arg3: memref<1x64xf32, #tpu.memory_space<vmem>>, %arg4: memref<1x64xf32, #tpu.memory_space<vmem>>, %arg5: memref<512x64xbf16, #tpu.memory_space<vmem>>) attributes {dimension_semantics = [#tpu.dimension_semantics<parallel>], iteration_bounds = array<i64: 1>, scalar_prefetch = 0 : i64, scratch_operands = 0 : i64, tpu.core_type = #tpu.core_type<tc>, window_params = [{transform_indices = @transform_0, window_bounds = array<i64: 512, 48>}, {pipeline_mode = #tpu.pipeline_mode<synchronous>, transform_indices = @transform_1, window_bounds = array<i64: 48, 64>}, {pipeline_mode = #tpu.pipeline_mode<synchronous>, transform_indices = @transform_2, window_bounds = array<i64: 1, 64>}, {pipeline_mode = #tpu.pipeline_mode<synchronous>, transform_indices = @transform_3, window_bounds = array<i64: 1, 64>}, {transform_indices = @transform_4, window_bounds = array<i64: 512, 64>}]} {
    %c0 = arith.constant 0 : index
    %c0_0 = arith.constant 0 : index
    %0 = vector.load %arg1[%c0, %c0_0] : memref<512x48xbf16, #tpu.memory_space<vmem>>, vector<512x48xbf16>
    %c0_1 = arith.constant 0 : index
    %c0_2 = arith.constant 0 : index
    %1 = vector.load %arg2[%c0_1, %c0_2] : memref<48x64xbf16, #tpu.memory_space<vmem>>, vector<48x64xbf16>
    %cst = arith.constant dense<0.000000e+00> : vector<512x64xf32>
    %2 = tpu.matmul %0, %1, %cst {dimension_numbers = #tpu.dot_dimension_numbers<[1], [0], [0], [1], [0, 0, 1, 1], [], []>} : vector<512x48xbf16>, vector<48x64xbf16>, vector<512x64xf32> -> vector<512x64xf32>
    %c0_3 = arith.constant 0 : index
    %c0_4 = arith.constant 0 : index
    %3 = vector.load %arg3[%c0_3, %c0_4] : memref<1x64xf32, #tpu.memory_space<vmem>>, vector<1x64xf32>
    %4 = vector.broadcast %3 : vector<1x64xf32> to vector<512x64xf32>
    %5 = arith.mulf %2, %4 : vector<512x64xf32>
    %c0_5 = arith.constant 0 : index
    %c0_6 = arith.constant 0 : index
    %6 = vector.load %arg4[%c0_5, %c0_6] : memref<1x64xf32, #tpu.memory_space<vmem>>, vector<1x64xf32>
    %7 = vector.broadcast %6 : vector<1x64xf32> to vector<512x64xf32>
    %8 = arith.addf %5, %7 : vector<512x64xf32>
    %cst_7 = arith.constant 0.000000e+00 : f32
    %9 = vector.broadcast %cst_7 : f32 to vector<512x64xf32>
    %10 = arith.cmpf ogt, %8, %9 : vector<512x64xf32>
    %cst_8 = arith.constant 2.000000e-01 : f32
    %11 = vector.broadcast %cst_8 : f32 to vector<512x64xf32>
    %12 = arith.mulf %11, %8 : vector<512x64xf32>
    %13 = arith.select %10, %8, %12 : vector<512x64xi1>, vector<512x64xf32>
    %14 = arith.truncf %13 : vector<512x64xf32> to vector<512x64xbf16>
    %c0_9 = arith.constant 0 : index
    %c0_10 = arith.constant 0 : index
    %15 = vector.load %arg5[%c0_9, %c0_10] : memref<512x64xbf16, #tpu.memory_space<vmem>>, vector<512x64xbf16>
    tpu.vector_store %arg5[%c0_9, %c0_10], %14 {strides = array<i32>} : memref<512x64xbf16, #tpu.memory_space<vmem>>, vector<512x64xbf16>,
    return
  }
  func.func @transform_0(%arg0: i32) -> (i32, i32) {
    %c0_i32 = arith.constant 0 : i32
    %c0_i32_0 = arith.constant 0 : i32
    return %arg0, %c0_i32 : i32, i32
  }
  func.func @transform_1(%arg0: i32) -> (i32, i32) {
    %c0_i32 = arith.constant 0 : i32
    %c0_i32_0 = arith.constant 0 : i32
    %c0_i32_1 = arith.constant 0 : i32
    return %c0_i32, %c0_i32_0 : i32, i32
  }
  func.func @transform_2(%arg0: i32) -> (i32, i32) {
    %c0_i32 = arith.constant 0 : i32
    %c0_i32_0 = arith.constant 0 : i32
    %c0_i32_1 = arith.constant 0 : i32
    return %c0_i32, %c0_i32_0 : i32, i32
  }
  func.func @transform_3(%arg0: i32) -> (i32, i32) {
    %c0_i32 = arith.constant 0 : i32
    %c0_i32_0 = arith.constant 0 : i32
    %c0_i32_1 = arith.constant 0 : i32
    return %c0_i32, %c0_i32_0 : i32, i32
  }
  func.func @transform_4(%arg0: i32) -> (i32, i32) {
    %c0_i32 = arith.constant 0 : i32
    %c0_i32_0 = arith.constant 0 : i32
    return %arg0, %c0_i32 : i32, i32
  }
}

module attributes {stable_mosaic.version = 11 : i64} {
  func.func @_front_conv_kernel(%arg0: i32, %arg1: memref<128x1024xbf16, #tpu.memory_space<vmem>>, %arg2: memref<1024x64xbf16, #tpu.memory_space<vmem>>, %arg3: memref<1x64xf32, #tpu.memory_space<vmem>>, %arg4: memref<1x64xf32, #tpu.memory_space<vmem>>, %arg5: memref<128x64xbf16, #tpu.memory_space<vmem>>) attributes {dimension_semantics = [#tpu.dimension_semantics<parallel>], iteration_bounds = array<i64: 1>, scalar_prefetch = 0 : i64, scratch_operands = 0 : i64, tpu.core_type = #tpu.core_type<tc>, window_params = [{transform_indices = @transform_0, window_bounds = array<i64: 128, 1024>}, {pipeline_mode = #tpu.pipeline_mode<synchronous>, transform_indices = @transform_1, window_bounds = array<i64: 1024, 64>}, {pipeline_mode = #tpu.pipeline_mode<synchronous>, transform_indices = @transform_2, window_bounds = array<i64: 1, 64>}, {pipeline_mode = #tpu.pipeline_mode<synchronous>, transform_indices = @transform_3, window_bounds = array<i64: 1, 64>}, {transform_indices = @transform_4, window_bounds = array<i64: 128, 64>}]} {
    %c0 = arith.constant 0 : index
    %c0_0 = arith.constant 0 : index
    %0 = vector.load %arg1[%c0, %c0_0] : memref<128x1024xbf16, #tpu.memory_space<vmem>>, vector<128x1024xbf16>
    %c0_1 = arith.constant 0 : index
    %c0_2 = arith.constant 0 : index
    %1 = vector.load %arg2[%c0_1, %c0_2] : memref<1024x64xbf16, #tpu.memory_space<vmem>>, vector<1024x64xbf16>
    %cst = arith.constant dense<0.000000e+00> : vector<128x64xf32>
    %2 = tpu.matmul %0, %1, %cst {dimension_numbers = #tpu.dot_dimension_numbers<[1], [0], [0], [1], [0, 0, 1, 1], [], []>} : vector<128x1024xbf16>, vector<1024x64xbf16>, vector<128x64xf32> -> vector<128x64xf32>
    %c0_3 = arith.constant 0 : index
    %c0_4 = arith.constant 0 : index
    %3 = vector.load %arg3[%c0_3, %c0_4] : memref<1x64xf32, #tpu.memory_space<vmem>>, vector<1x64xf32>
    %4 = vector.broadcast %3 : vector<1x64xf32> to vector<128x64xf32>
    %5 = arith.mulf %2, %4 : vector<128x64xf32>
    %c0_5 = arith.constant 0 : index
    %c0_6 = arith.constant 0 : index
    %6 = vector.load %arg4[%c0_5, %c0_6] : memref<1x64xf32, #tpu.memory_space<vmem>>, vector<1x64xf32>
    %7 = vector.broadcast %6 : vector<1x64xf32> to vector<128x64xf32>
    %8 = arith.addf %5, %7 : vector<128x64xf32>
    %cst_7 = arith.constant 0.000000e+00 : f32
    %9 = vector.broadcast %cst_7 : f32 to vector<128x64xf32>
    %10 = arith.cmpf ogt, %8, %9 : vector<128x64xf32>
    %cst_8 = arith.constant 2.000000e-01 : f32
    %11 = vector.broadcast %cst_8 : f32 to vector<128x64xf32>
    %12 = arith.mulf %11, %8 : vector<128x64xf32>
    %13 = arith.select %10, %8, %12 : vector<128x64xi1>, vector<128x64xf32>
    %14 = arith.truncf %13 : vector<128x64xf32> to vector<128x64xbf16>
    %c0_9 = arith.constant 0 : index
    %c0_10 = arith.constant 0 : index
    %15 = vector.load %arg5[%c0_9, %c0_10] : memref<128x64xbf16, #tpu.memory_space<vmem>>, vector<128x64xbf16>
    tpu.vector_store %arg5[%c0_9, %c0_10], %14 {strides = array<i32>} : memref<128x64xbf16, #tpu.memory_space<vmem>>, vector<128x64xbf16>,
    return
  }
  func.func @transform_0(%arg0: i32) -> (i32, i32) {
    %c0_i32 = arith.constant 0 : i32
    %c0_i32_0 = arith.constant 0 : i32
    return %arg0, %c0_i32 : i32, i32
  }
  func.func @transform_1(%arg0: i32) -> (i32, i32) {
    %c0_i32 = arith.constant 0 : i32
    %c0_i32_0 = arith.constant 0 : i32
    %c0_i32_1 = arith.constant 0 : i32
    return %c0_i32, %c0_i32_0 : i32, i32
  }
  func.func @transform_2(%arg0: i32) -> (i32, i32) {
    %c0_i32 = arith.constant 0 : i32
    %c0_i32_0 = arith.constant 0 : i32
    %c0_i32_1 = arith.constant 0 : i32
    return %c0_i32, %c0_i32_0 : i32, i32
  }
  func.func @transform_3(%arg0: i32) -> (i32, i32) {
    %c0_i32 = arith.constant 0 : i32
    %c0_i32_0 = arith.constant 0 : i32
    %c0_i32_1 = arith.constant 0 : i32
    return %c0_i32, %c0_i32_0 : i32, i32
  }
  func.func @transform_4(%arg0: i32) -> (i32, i32) {
    %c0_i32 = arith.constant 0 : i32
    %c0_i32_0 = arith.constant 0 : i32
    return %arg0, %c0_i32 : i32, i32
  }
}

module attributes {stable_mosaic.version = 11 : i64} {
  func.func @_front_conv_kernel(%arg0: i32, %arg1: memref<32x1024xbf16, #tpu.memory_space<vmem>>, %arg2: memref<1024x64xbf16, #tpu.memory_space<vmem>>, %arg3: memref<1x64xf32, #tpu.memory_space<vmem>>, %arg4: memref<1x64xf32, #tpu.memory_space<vmem>>, %arg5: memref<32x64xbf16, #tpu.memory_space<vmem>>) attributes {dimension_semantics = [#tpu.dimension_semantics<parallel>], iteration_bounds = array<i64: 1>, scalar_prefetch = 0 : i64, scratch_operands = 0 : i64, tpu.core_type = #tpu.core_type<tc>, window_params = [{transform_indices = @transform_0, window_bounds = array<i64: 32, 1024>}, {pipeline_mode = #tpu.pipeline_mode<synchronous>, transform_indices = @transform_1, window_bounds = array<i64: 1024, 64>}, {pipeline_mode = #tpu.pipeline_mode<synchronous>, transform_indices = @transform_2, window_bounds = array<i64: 1, 64>}, {pipeline_mode = #tpu.pipeline_mode<synchronous>, transform_indices = @transform_3, window_bounds = array<i64: 1, 64>}, {transform_indices = @transform_4, window_bounds = array<i64: 32, 64>}]} {
    %c0 = arith.constant 0 : index
    %c0_0 = arith.constant 0 : index
    %0 = vector.load %arg1[%c0, %c0_0] : memref<32x1024xbf16, #tpu.memory_space<vmem>>, vector<32x1024xbf16>
    %c0_1 = arith.constant 0 : index
    %c0_2 = arith.constant 0 : index
    %1 = vector.load %arg2[%c0_1, %c0_2] : memref<1024x64xbf16, #tpu.memory_space<vmem>>, vector<1024x64xbf16>
    %cst = arith.constant dense<0.000000e+00> : vector<32x64xf32>
    %2 = tpu.matmul %0, %1, %cst {dimension_numbers = #tpu.dot_dimension_numbers<[1], [0], [0], [1], [0, 0, 1, 1], [], []>} : vector<32x1024xbf16>, vector<1024x64xbf16>, vector<32x64xf32> -> vector<32x64xf32>
    %c0_3 = arith.constant 0 : index
    %c0_4 = arith.constant 0 : index
    %3 = vector.load %arg3[%c0_3, %c0_4] : memref<1x64xf32, #tpu.memory_space<vmem>>, vector<1x64xf32>
    %4 = vector.broadcast %3 : vector<1x64xf32> to vector<32x64xf32>
    %5 = arith.mulf %2, %4 : vector<32x64xf32>
    %c0_5 = arith.constant 0 : index
    %c0_6 = arith.constant 0 : index
    %6 = vector.load %arg4[%c0_5, %c0_6] : memref<1x64xf32, #tpu.memory_space<vmem>>, vector<1x64xf32>
    %7 = vector.broadcast %6 : vector<1x64xf32> to vector<32x64xf32>
    %8 = arith.addf %5, %7 : vector<32x64xf32>
    %cst_7 = arith.constant 0.000000e+00 : f32
    %9 = vector.broadcast %cst_7 : f32 to vector<32x64xf32>
    %10 = arith.cmpf ogt, %8, %9 : vector<32x64xf32>
    %cst_8 = arith.constant 2.000000e-01 : f32
    %11 = vector.broadcast %cst_8 : f32 to vector<32x64xf32>
    %12 = arith.mulf %11, %8 : vector<32x64xf32>
    %13 = arith.select %10, %8, %12 : vector<32x64xi1>, vector<32x64xf32>
    %14 = arith.truncf %13 : vector<32x64xf32> to vector<32x64xbf16>
    %c0_9 = arith.constant 0 : index
    %c0_10 = arith.constant 0 : index
    %15 = vector.load %arg5[%c0_9, %c0_10] : memref<32x64xbf16, #tpu.memory_space<vmem>>, vector<32x64xbf16>
    tpu.vector_store %arg5[%c0_9, %c0_10], %14 {strides = array<i32>} : memref<32x64xbf16, #tpu.memory_space<vmem>>, vector<32x64xbf16>,
    return
  }
  func.func @transform_0(%arg0: i32) -> (i32, i32) {
    %c0_i32 = arith.constant 0 : i32
    %c0_i32_0 = arith.constant 0 : i32
    return %arg0, %c0_i32 : i32, i32
  }
  func.func @transform_1(%arg0: i32) -> (i32, i32) {
    %c0_i32 = arith.constant 0 : i32
    %c0_i32_0 = arith.constant 0 : i32
    %c0_i32_1 = arith.constant 0 : i32
    return %c0_i32, %c0_i32_0 : i32, i32
  }
  func.func @transform_2(%arg0: i32) -> (i32, i32) {
    %c0_i32 = arith.constant 0 : i32
    %c0_i32_0 = arith.constant 0 : i32
    %c0_i32_1 = arith.constant 0 : i32
    return %c0_i32, %c0_i32_0 : i32, i32
  }
  func.func @transform_3(%arg0: i32) -> (i32, i32) {
    %c0_i32 = arith.constant 0 : i32
    %c0_i32_0 = arith.constant 0 : i32
    %c0_i32_1 = arith.constant 0 : i32
    return %c0_i32, %c0_i32_0 : i32, i32
  }
  func.func @transform_4(%arg0: i32) -> (i32, i32) {
    %c0_i32 = arith.constant 0 : i32
    %c0_i32_0 = arith.constant 0 : i32
    return %arg0, %c0_i32 : i32, i32
  }
}

module attributes {stable_mosaic.version = 11 : i64} {
  func.func @_tail_kernel(%arg0: i32, %arg1: memref<1x36x64xbf16, #tpu.memory_space<vmem>>, %arg2: memref<576x128xbf16, #tpu.memory_space<vmem>>, %arg3: memref<1x128xf32, #tpu.memory_space<vmem>>, %arg4: memref<1x128xf32, #tpu.memory_space<vmem>>, %arg5: memref<1152x128xbf16, #tpu.memory_space<vmem>>, %arg6: memref<1x128xf32, #tpu.memory_space<vmem>>, %arg7: memref<1x128xf32, #tpu.memory_space<vmem>>, %arg8: memref<1152x128xbf16, #tpu.memory_space<vmem>>, %arg9: memref<128x11xf32, #tpu.memory_space<vmem>>, %arg10: memref<1x11xf32, #tpu.memory_space<vmem>>, %arg11: memref<2x128xf32, #tpu.memory_space<vmem>>, %arg12: memref<2x11xf32, #tpu.memory_space<vmem>>, %arg13: memref<2x11xf32, #tpu.memory_space<vmem>>, %arg14: memref<2x1xf32, #tpu.memory_space<vmem>>, %arg15: memref<40x128xbf16, #tpu.memory_space<vmem>>, %arg16: memref<40x128xbf16, #tpu.memory_space<vmem>>, %arg17: memref<24x1152xbf16, #tpu.memory_space<vmem>>, %arg18: memref<2x1x128xf32, #tpu.memory_space<vmem>>, %arg19: memref<2x1x11xf32, #tpu.memory_space<vmem>>) attributes {dimension_semantics = [#tpu.dimension_semantics<arbitrary>], iteration_bounds = array<i64: 2>, scalar_prefetch = 0 : i64, scratch_operands = 5 : i64, tpu.core_type = #tpu.core_type<tc>, window_params = [{transform_indices = @transform_0, window_bounds = array<i64: 1, 36, 64>}, {pipeline_mode = #tpu.pipeline_mode<synchronous>, transform_indices = @transform_1, window_bounds = array<i64: 576, 128>}, {pipeline_mode = #tpu.pipeline_mode<synchronous>, transform_indices = @transform_2, window_bounds = array<i64: 1, 128>}, {pipeline_mode = #tpu.pipeline_mode<synchronous>, transform_indices = @transform_3, window_bounds = array<i64: 1, 128>}, {pipeline_mode = #tpu.pipeline_mode<synchronous>, transform_indices = @transform_4, window_bounds = array<i64: 1152, 128>}, {pipeline_mode = #tpu.pipeline_mode<synchronous>, transform_indices = @transform_5, window_bounds = array<i64: 1, 128>}, {pipeline_mode = #tpu.pipeline_mode<synchronous>, transform_indices = @transform_6, window_bounds = array<i64: 1, 128>}, {pipeline_mode = #tpu.pipeline_mode<synchronous>, transform_indices = @transform_7, window_bounds = array<i64: 1152, 128>}, {pipeline_mode = #tpu.pipeline_mode<synchronous>, transform_indices = @transform_8, window_bounds = array<i64: 128, 11>}, {pipeline_mode = #tpu.pipeline_mode<synchronous>, transform_indices = @transform_9, window_bounds = array<i64: 1, 11>}, {pipeline_mode = #tpu.pipeline_mode<synchronous>, transform_indices = @transform_10, window_bounds = array<i64: 2, 128>}, {pipeline_mode = #tpu.pipeline_mode<synchronous>, transform_indices = @transform_11, window_bounds = array<i64: 2, 11>}, {pipeline_mode = #tpu.pipeline_mode<synchronous>, transform_indices = @transform_12, window_bounds = array<i64: 2, 11>}, {pipeline_mode = #tpu.pipeline_mode<synchronous>, transform_indices = @transform_13, window_bounds = array<i64: 2, 1>}]} {
    %c0_i32 = arith.constant 0 : i32
    %0 = arith.cmpi eq, %arg0, %c0_i32 : i32
    %1 = arith.extui %0 : i1 to i32
    %c0_i32_0 = arith.constant 0 : i32
    %2 = arith.cmpi ne, %1, %c0_i32_0 : i32
    scf.if %2 {
      %cst_146 = arith.constant 0.000000e+00 : bf16
      %150 = vector.broadcast %cst_146 : bf16 to vector<40x128xbf16>
      %c0_147 = arith.constant 0 : index
      %c0_148 = arith.constant 0 : index
      %151 = vector.load %arg15[%c0_147, %c0_148] : memref<40x128xbf16, #tpu.memory_space<vmem>>, vector<40x128xbf16>
      tpu.vector_store %arg15[%c0_147, %c0_148], %150 {strides = array<i32>} : memref<40x128xbf16, #tpu.memory_space<vmem>>, vector<40x128xbf16>,
      %cst_149 = arith.constant 0.000000e+00 : bf16
      %152 = vector.broadcast %cst_149 : bf16 to vector<40x128xbf16>
      %c0_150 = arith.constant 0 : index
      %c0_151 = arith.constant 0 : index
      %153 = vector.load %arg16[%c0_150, %c0_151] : memref<40x128xbf16, #tpu.memory_space<vmem>>, vector<40x128xbf16>
      tpu.vector_store %arg16[%c0_150, %c0_151], %152 {strides = array<i32>} : memref<40x128xbf16, #tpu.memory_space<vmem>>, vector<40x128xbf16>,
    } else {
    }
    %c0 = arith.constant 0 : index
    %c0_1 = arith.constant 0 : index
    %c0_2 = arith.constant 0 : index
    %3 = vector.load %arg1[%c0, %c0_1, %c0_2] : memref<1x36x64xbf16, #tpu.memory_space<vmem>>, vector<1x22x64xbf16>
    %4 = vector.shape_cast %3 : vector<1x22x64xbf16> to vector<22x64xbf16>
    %c0_3 = arith.constant 0 : index
    %c0_4 = arith.constant 0 : index
    %5 = vector.load %arg17[%c0_3, %c0_4] : memref<24x1152xbf16, #tpu.memory_space<vmem>>, vector<22x64xbf16>
    tpu.vector_store %arg17[%c0_3, %c0_4], %4 {strides = array<i32>} : memref<24x1152xbf16, #tpu.memory_space<vmem>>, vector<22x64xbf16>,
    %c0_5 = arith.constant 0 : index
    %c1 = arith.constant 1 : index
    %c0_6 = arith.constant 0 : index
    %6 = vector.load %arg1[%c0_5, %c1, %c0_6] : memref<1x36x64xbf16, #tpu.memory_space<vmem>>, vector<1x22x64xbf16>
    %7 = vector.shape_cast %6 : vector<1x22x64xbf16> to vector<22x64xbf16>
    %c0_7 = arith.constant 0 : index
    %c64 = arith.constant 64 : index
    %8 = vector.load %arg17[%c0_7, %c64] : memref<24x1152xbf16, #tpu.memory_space<vmem>>, vector<22x64xbf16>
    tpu.vector_store %arg17[%c0_7, %c64], %7 {strides = array<i32>} : memref<24x1152xbf16, #tpu.memory_space<vmem>>, vector<22x64xbf16>,
    %c0_8 = arith.constant 0 : index
    %c2 = arith.constant 2 : index
    %c0_9 = arith.constant 0 : index
    %9 = vector.load %arg1[%c0_8, %c2, %c0_9] : memref<1x36x64xbf16, #tpu.memory_space<vmem>>, vector<1x22x64xbf16>
    %10 = vector.shape_cast %9 : vector<1x22x64xbf16> to vector<22x64xbf16>
    %c0_10 = arith.constant 0 : index
    %c128 = arith.constant 128 : index
    %11 = vector.load %arg17[%c0_10, %c128] : memref<24x1152xbf16, #tpu.memory_space<vmem>>, vector<22x64xbf16>
    tpu.vector_store %arg17[%c0_10, %c128], %10 {strides = array<i32>} : memref<24x1152xbf16, #tpu.memory_space<vmem>>, vector<22x64xbf16>,
    %c0_11 = arith.constant 0 : index
    %c6 = arith.constant 6 : index
    %c0_12 = arith.constant 0 : index
    %12 = vector.load %arg1[%c0_11, %c6, %c0_12] : memref<1x36x64xbf16, #tpu.memory_space<vmem>>, vector<1x22x64xbf16>
    %13 = vector.shape_cast %12 : vector<1x22x64xbf16> to vector<22x64xbf16>
    %c0_13 = arith.constant 0 : index
    %c192 = arith.constant 192 : index
    %14 = vector.load %arg17[%c0_13, %c192] : memref<24x1152xbf16, #tpu.memory_space<vmem>>, vector<22x64xbf16>
    tpu.vector_store %arg17[%c0_13, %c192], %13 {strides = array<i32>} : memref<24x1152xbf16, #tpu.memory_space<vmem>>, vector<22x64xbf16>,
    %c0_14 = arith.constant 0 : index
    %c7 = arith.constant 7 : index
    %c0_15 = arith.constant 0 : index
    %15 = vector.load %arg1[%c0_14, %c7, %c0_15] : memref<1x36x64xbf16, #tpu.memory_space<vmem>>, vector<1x22x64xbf16>
    %16 = vector.shape_cast %15 : vector<1x22x64xbf16> to vector<22x64xbf16>
    %c0_16 = arith.constant 0 : index
    %c256 = arith.constant 256 : index
    %17 = vector.load %arg17[%c0_16, %c256] : memref<24x1152xbf16, #tpu.memory_space<vmem>>, vector<22x64xbf16>
    tpu.vector_store %arg17[%c0_16, %c256], %16 {strides = array<i32>} : memref<24x1152xbf16, #tpu.memory_space<vmem>>, vector<22x64xbf16>,
    %c0_17 = arith.constant 0 : index
    %c8 = arith.constant 8 : index
    %c0_18 = arith.constant 0 : index
    %18 = vector.load %arg1[%c0_17, %c8, %c0_18] : memref<1x36x64xbf16, #tpu.memory_space<vmem>>, vector<1x22x64xbf16>
    %19 = vector.shape_cast %18 : vector<1x22x64xbf16> to vector<22x64xbf16>
    %c0_19 = arith.constant 0 : index
    %c320 = arith.constant 320 : index
    %20 = vector.load %arg17[%c0_19, %c320] : memref<24x1152xbf16, #tpu.memory_space<vmem>>, vector<22x64xbf16>
    tpu.vector_store %arg17[%c0_19, %c320], %19 {strides = array<i32>} : memref<24x1152xbf16, #tpu.memory_space<vmem>>, vector<22x64xbf16>,
    %c0_20 = arith.constant 0 : index
    %c12 = arith.constant 12 : index
    %c0_21 = arith.constant 0 : index
    %21 = vector.load %arg1[%c0_20, %c12, %c0_21] : memref<1x36x64xbf16, #tpu.memory_space<vmem>>, vector<1x22x64xbf16>
    %22 = vector.shape_cast %21 : vector<1x22x64xbf16> to vector<22x64xbf16>
    %c0_22 = arith.constant 0 : index
    %c384 = arith.constant 384 : index
    %23 = vector.load %arg17[%c0_22, %c384] : memref<24x1152xbf16, #tpu.memory_space<vmem>>, vector<22x64xbf16>
    tpu.vector_store %arg17[%c0_22, %c384], %22 {strides = array<i32>} : memref<24x1152xbf16, #tpu.memory_space<vmem>>, vector<22x64xbf16>,
    %c0_23 = arith.constant 0 : index
    %c13 = arith.constant 13 : index
    %c0_24 = arith.constant 0 : index
    %24 = vector.load %arg1[%c0_23, %c13, %c0_24] : memref<1x36x64xbf16, #tpu.memory_space<vmem>>, vector<1x22x64xbf16>
    %25 = vector.shape_cast %24 : vector<1x22x64xbf16> to vector<22x64xbf16>
    %c0_25 = arith.constant 0 : index
    %c448 = arith.constant 448 : index
    %26 = vector.load %arg17[%c0_25, %c448] : memref<24x1152xbf16, #tpu.memory_space<vmem>>, vector<22x64xbf16>
    tpu.vector_store %arg17[%c0_25, %c448], %25 {strides = array<i32>} : memref<24x1152xbf16, #tpu.memory_space<vmem>>, vector<22x64xbf16>,
    %c0_26 = arith.constant 0 : index
    %c14 = arith.constant 14 : index
    %c0_27 = arith.constant 0 : index
    %27 = vector.load %arg1[%c0_26, %c14, %c0_27] : memref<1x36x64xbf16, #tpu.memory_space<vmem>>, vector<1x22x64xbf16>
    %28 = vector.shape_cast %27 : vector<1x22x64xbf16> to vector<22x64xbf16>
    %c0_28 = arith.constant 0 : index
    %c512 = arith.constant 512 : index
    %29 = vector.load %arg17[%c0_28, %c512] : memref<24x1152xbf16, #tpu.memory_space<vmem>>, vector<22x64xbf16>
    tpu.vector_store %arg17[%c0_28, %c512], %28 {strides = array<i32>} : memref<24x1152xbf16, #tpu.memory_space<vmem>>, vector<22x64xbf16>,
    %c0_29 = arith.constant 0 : index
    %c0_30 = arith.constant 0 : index
    %30 = vector.load %arg17[%c0_29, %c0_30] : memref<24x1152xbf16, #tpu.memory_space<vmem>>, vector<22x576xbf16>
    %c0_31 = arith.constant 0 : index
    %c0_32 = arith.constant 0 : index
    %31 = vector.load %arg2[%c0_31, %c0_32] : memref<576x128xbf16, #tpu.memory_space<vmem>>, vector<576x128xbf16>
    %cst = arith.constant dense<0.000000e+00> : vector<22x128xf32>
    %32 = tpu.matmul %30, %31, %cst {dimension_numbers = #tpu.dot_dimension_numbers<[1], [0], [0], [1], [0, 0, 1, 1], [], []>} : vector<22x576xbf16>, vector<576x128xbf16>, vector<22x128xf32> -> vector<22x128xf32>
    %c0_33 = arith.constant 0 : index
    %c0_34 = arith.constant 0 : index
    %33 = vector.load %arg3[%c0_33, %c0_34] : memref<1x128xf32, #tpu.memory_space<vmem>>, vector<1x128xf32>
    %34 = vector.broadcast %33 : vector<1x128xf32> to vector<22x128xf32>
    %35 = arith.mulf %32, %34 : vector<22x128xf32>
    %c0_35 = arith.constant 0 : index
    %c0_36 = arith.constant 0 : index
    %36 = vector.load %arg4[%c0_35, %c0_36] : memref<1x128xf32, #tpu.memory_space<vmem>>, vector<1x128xf32>
    %37 = vector.broadcast %36 : vector<1x128xf32> to vector<22x128xf32>
    %38 = arith.addf %35, %37 : vector<22x128xf32>
    %cst_37 = arith.constant 0.000000e+00 : f32
    %39 = vector.broadcast %cst_37 : f32 to vector<22x128xf32>
    %40 = arith.cmpf ogt, %38, %39 : vector<22x128xf32>
    %cst_38 = arith.constant 2.000000e-01 : f32
    %41 = vector.broadcast %cst_38 : f32 to vector<22x128xf32>
    %42 = arith.mulf %41, %38 : vector<22x128xf32>
    %43 = arith.select %40, %38, %42 : vector<22x128xi1>, vector<22x128xf32>
    %44 = vector.extract_strided_slice %43 {offsets = [0, 0], sizes = [4, 128], strides = [1, 1]} : vector<22x128xf32> to vector<4x128xf32>
    %45 = arith.truncf %44 : vector<4x128xf32> to vector<4x128xbf16>
    %c7_39 = arith.constant 7 : index
    %c0_40 = arith.constant 0 : index
    %46 = vector.load %arg15[%c7_39, %c0_40] : memref<40x128xbf16, #tpu.memory_space<vmem>>, vector<4x128xbf16>
    tpu.vector_store %arg15[%c7_39, %c0_40], %45 {strides = array<i32>} : memref<40x128xbf16, #tpu.memory_space<vmem>>, vector<4x128xbf16>,
    %47 = vector.extract_strided_slice %43 {offsets = [6, 0], sizes = [4, 128], strides = [1, 1]} : vector<22x128xf32> to vector<4x128xf32>
    %48 = arith.truncf %47 : vector<4x128xf32> to vector<4x128xbf16>
    %c13_41 = arith.constant 13 : index
    %c0_42 = arith.constant 0 : index
    %49 = vector.load %arg15[%c13_41, %c0_42] : memref<40x128xbf16, #tpu.memory_space<vmem>>, vector<4x128xbf16>
    tpu.vector_store %arg15[%c13_41, %c0_42], %48 {strides = array<i32>} : memref<40x128xbf16, #tpu.memory_space<vmem>>, vector<4x128xbf16>,
    %50 = vector.extract_strided_slice %43 {offsets = [12, 0], sizes = [4, 128], strides = [1, 1]} : vector<22x128xf32> to vector<4x128xf32>
    %51 = arith.truncf %50 : vector<4x128xf32> to vector<4x128xbf16>
    %c19 = arith.constant 19 : index
    %c0_43 = arith.constant 0 : index
    %52 = vector.load %arg15[%c19, %c0_43] : memref<40x128xbf16, #tpu.memory_space<vmem>>, vector<4x128xbf16>
    tpu.vector_store %arg15[%c19, %c0_43], %51 {strides = array<i32>} : memref<40x128xbf16, #tpu.memory_space<vmem>>, vector<4x128xbf16>,
    %53 = vector.extract_strided_slice %43 {offsets = [18, 0], sizes = [4, 128], strides = [1, 1]} : vector<22x128xf32> to vector<4x128xf32>
    %54 = arith.truncf %53 : vector<4x128xf32> to vector<4x128xbf16>
    %c25 = arith.constant 25 : index
    %c0_44 = arith.constant 0 : index
    %55 = vector.load %arg15[%c25, %c0_44] : memref<40x128xbf16, #tpu.memory_space<vmem>>, vector<4x128xbf16>
    tpu.vector_store %arg15[%c25, %c0_44], %54 {strides = array<i32>} : memref<40x128xbf16, #tpu.memory_space<vmem>>, vector<4x128xbf16>,
    %c0_45 = arith.constant 0 : index
    %c0_46 = arith.constant 0 : index
    %56 = vector.load %arg15[%c0_45, %c0_46] : memref<40x128xbf16, #tpu.memory_space<vmem>>, vector<22x128xbf16>
    %c0_47 = arith.constant 0 : index
    %c0_48 = arith.constant 0 : index
    %57 = vector.load %arg17[%c0_47, %c0_48] : memref<24x1152xbf16, #tpu.memory_space<vmem>>, vector<22x128xbf16>
    tpu.vector_store %arg17[%c0_47, %c0_48], %56 {strides = array<i32>} : memref<24x1152xbf16, #tpu.memory_space<vmem>>, vector<22x128xbf16>,
    %c1_49 = arith.constant 1 : index
    %c0_50 = arith.constant 0 : index
    %58 = vector.load %arg15[%c1_49, %c0_50] : memref<40x128xbf16, #tpu.memory_space<vmem>>, vector<22x128xbf16>
    %c0_51 = arith.constant 0 : index
    %c128_52 = arith.constant 128 : index
    %59 = vector.load %arg17[%c0_51, %c128_52] : memref<24x1152xbf16, #tpu.memory_space<vmem>>, vector<22x128xbf16>
    tpu.vector_store %arg17[%c0_51, %c128_52], %58 {strides = array<i32>} : memref<24x1152xbf16, #tpu.memory_space<vmem>>, vector<22x128xbf16>,
    %c2_53 = arith.constant 2 : index
    %c0_54 = arith.constant 0 : index
    %60 = vector.load %arg15[%c2_53, %c0_54] : memref<40x128xbf16, #tpu.memory_space<vmem>>, vector<22x128xbf16>
    %c0_55 = arith.constant 0 : index
    %c256_56 = arith.constant 256 : index
    %61 = vector.load %arg17[%c0_55, %c256_56] : memref<24x1152xbf16, #tpu.memory_space<vmem>>, vector<22x128xbf16>
    tpu.vector_store %arg17[%c0_55, %c256_56], %60 {strides = array<i32>} : memref<24x1152xbf16, #tpu.memory_space<vmem>>, vector<22x128xbf16>,
    %c6_57 = arith.constant 6 : index
    %c0_58 = arith.constant 0 : index
    %62 = vector.load %arg15[%c6_57, %c0_58] : memref<40x128xbf16, #tpu.memory_space<vmem>>, vector<22x128xbf16>
    %c0_59 = arith.constant 0 : index
    %c384_60 = arith.constant 384 : index
    %63 = vector.load %arg17[%c0_59, %c384_60] : memref<24x1152xbf16, #tpu.memory_space<vmem>>, vector<22x128xbf16>
    tpu.vector_store %arg17[%c0_59, %c384_60], %62 {strides = array<i32>} : memref<24x1152xbf16, #tpu.memory_space<vmem>>, vector<22x128xbf16>,
    %c7_61 = arith.constant 7 : index
    %c0_62 = arith.constant 0 : index
    %64 = vector.load %arg15[%c7_61, %c0_62] : memref<40x128xbf16, #tpu.memory_space<vmem>>, vector<22x128xbf16>
    %c0_63 = arith.constant 0 : index
    %c512_64 = arith.constant 512 : index
    %65 = vector.load %arg17[%c0_63, %c512_64] : memref<24x1152xbf16, #tpu.memory_space<vmem>>, vector<22x128xbf16>
    tpu.vector_store %arg17[%c0_63, %c512_64], %64 {strides = array<i32>} : memref<24x1152xbf16, #tpu.memory_space<vmem>>, vector<22x128xbf16>,
    %c8_65 = arith.constant 8 : index
    %c0_66 = arith.constant 0 : index
    %66 = vector.load %arg15[%c8_65, %c0_66] : memref<40x128xbf16, #tpu.memory_space<vmem>>, vector<22x128xbf16>
    %c0_67 = arith.constant 0 : index
    %c640 = arith.constant 640 : index
    %67 = vector.load %arg17[%c0_67, %c640] : memref<24x1152xbf16, #tpu.memory_space<vmem>>, vector<22x128xbf16>
    tpu.vector_store %arg17[%c0_67, %c640], %66 {strides = array<i32>} : memref<24x1152xbf16, #tpu.memory_space<vmem>>, vector<22x128xbf16>,
    %c12_68 = arith.constant 12 : index
    %c0_69 = arith.constant 0 : index
    %68 = vector.load %arg15[%c12_68, %c0_69] : memref<40x128xbf16, #tpu.memory_space<vmem>>, vector<22x128xbf16>
    %c0_70 = arith.constant 0 : index
    %c768 = arith.constant 768 : index
    %69 = vector.load %arg17[%c0_70, %c768] : memref<24x1152xbf16, #tpu.memory_space<vmem>>, vector<22x128xbf16>
    tpu.vector_store %arg17[%c0_70, %c768], %68 {strides = array<i32>} : memref<24x1152xbf16, #tpu.memory_space<vmem>>, vector<22x128xbf16>,
    %c13_71 = arith.constant 13 : index
    %c0_72 = arith.constant 0 : index
    %70 = vector.load %arg15[%c13_71, %c0_72] : memref<40x128xbf16, #tpu.memory_space<vmem>>, vector<22x128xbf16>
    %c0_73 = arith.constant 0 : index
    %c896 = arith.constant 896 : index
    %71 = vector.load %arg17[%c0_73, %c896] : memref<24x1152xbf16, #tpu.memory_space<vmem>>, vector<22x128xbf16>
    tpu.vector_store %arg17[%c0_73, %c896], %70 {strides = array<i32>} : memref<24x1152xbf16, #tpu.memory_space<vmem>>, vector<22x128xbf16>,
    %c14_74 = arith.constant 14 : index
    %c0_75 = arith.constant 0 : index
    %72 = vector.load %arg15[%c14_74, %c0_75] : memref<40x128xbf16, #tpu.memory_space<vmem>>, vector<22x128xbf16>
    %c0_76 = arith.constant 0 : index
    %c1024 = arith.constant 1024 : index
    %73 = vector.load %arg17[%c0_76, %c1024] : memref<24x1152xbf16, #tpu.memory_space<vmem>>, vector<22x128xbf16>
    tpu.vector_store %arg17[%c0_76, %c1024], %72 {strides = array<i32>} : memref<24x1152xbf16, #tpu.memory_space<vmem>>, vector<22x128xbf16>,
    %c0_77 = arith.constant 0 : index
    %c0_78 = arith.constant 0 : index
    %74 = vector.load %arg17[%c0_77, %c0_78] : memref<24x1152xbf16, #tpu.memory_space<vmem>>, vector<22x1152xbf16>
    %c0_79 = arith.constant 0 : index
    %c0_80 = arith.constant 0 : index
    %75 = vector.load %arg5[%c0_79, %c0_80] : memref<1152x128xbf16, #tpu.memory_space<vmem>>, vector<1152x128xbf16>
    %cst_81 = arith.constant dense<0.000000e+00> : vector<22x128xf32>
    %76 = tpu.matmul %74, %75, %cst_81 {dimension_numbers = #tpu.dot_dimension_numbers<[1], [0], [0], [1], [0, 0, 1, 1], [], []>} : vector<22x1152xbf16>, vector<1152x128xbf16>, vector<22x128xf32> -> vector<22x128xf32>
    %c0_82 = arith.constant 0 : index
    %c0_83 = arith.constant 0 : index
    %77 = vector.load %arg6[%c0_82, %c0_83] : memref<1x128xf32, #tpu.memory_space<vmem>>, vector<1x128xf32>
    %78 = vector.broadcast %77 : vector<1x128xf32> to vector<22x128xf32>
    %79 = arith.mulf %76, %78 : vector<22x128xf32>
    %c0_84 = arith.constant 0 : index
    %c0_85 = arith.constant 0 : index
    %80 = vector.load %arg7[%c0_84, %c0_85] : memref<1x128xf32, #tpu.memory_space<vmem>>, vector<1x128xf32>
    %81 = vector.broadcast %80 : vector<1x128xf32> to vector<22x128xf32>
    %82 = arith.addf %79, %81 : vector<22x128xf32>
    %cst_86 = arith.constant 0.000000e+00 : f32
    %83 = vector.broadcast %cst_86 : f32 to vector<22x128xf32>
    %84 = arith.cmpf ogt, %82, %83 : vector<22x128xf32>
    %cst_87 = arith.constant 2.000000e-01 : f32
    %85 = vector.broadcast %cst_87 : f32 to vector<22x128xf32>
    %86 = arith.mulf %85, %82 : vector<22x128xf32>
    %87 = arith.select %84, %82, %86 : vector<22x128xi1>, vector<22x128xf32>
    %88 = vector.extract_strided_slice %87 {offsets = [0, 0], sizes = [4, 128], strides = [1, 1]} : vector<22x128xf32> to vector<4x128xf32>
    %89 = arith.truncf %88 : vector<4x128xf32> to vector<4x128xbf16>
    %c7_88 = arith.constant 7 : index
    %c0_89 = arith.constant 0 : index
    %90 = vector.load %arg16[%c7_88, %c0_89] : memref<40x128xbf16, #tpu.memory_space<vmem>>, vector<4x128xbf16>
    tpu.vector_store %arg16[%c7_88, %c0_89], %89 {strides = array<i32>} : memref<40x128xbf16, #tpu.memory_space<vmem>>, vector<4x128xbf16>,
    %91 = vector.extract_strided_slice %87 {offsets = [6, 0], sizes = [4, 128], strides = [1, 1]} : vector<22x128xf32> to vector<4x128xf32>
    %92 = arith.truncf %91 : vector<4x128xf32> to vector<4x128xbf16>
    %c13_90 = arith.constant 13 : index
    %c0_91 = arith.constant 0 : index
    %93 = vector.load %arg16[%c13_90, %c0_91] : memref<40x128xbf16, #tpu.memory_space<vmem>>, vector<4x128xbf16>
    tpu.vector_store %arg16[%c13_90, %c0_91], %92 {strides = array<i32>} : memref<40x128xbf16, #tpu.memory_space<vmem>>, vector<4x128xbf16>,
    %94 = vector.extract_strided_slice %87 {offsets = [12, 0], sizes = [4, 128], strides = [1, 1]} : vector<22x128xf32> to vector<4x128xf32>
    %95 = arith.truncf %94 : vector<4x128xf32> to vector<4x128xbf16>
    %c19_92 = arith.constant 19 : index
    %c0_93 = arith.constant 0 : index
    %96 = vector.load %arg16[%c19_92, %c0_93] : memref<40x128xbf16, #tpu.memory_space<vmem>>, vector<4x128xbf16>
    tpu.vector_store %arg16[%c19_92, %c0_93], %95 {strides = array<i32>} : memref<40x128xbf16, #tpu.memory_space<vmem>>, vector<4x128xbf16>,
    %97 = vector.extract_strided_slice %87 {offsets = [18, 0], sizes = [4, 128], strides = [1, 1]} : vector<22x128xf32> to vector<4x128xf32>
    %98 = arith.truncf %97 : vector<4x128xf32> to vector<4x128xbf16>
    %c25_94 = arith.constant 25 : index
    %c0_95 = arith.constant 0 : index
    %99 = vector.load %arg16[%c25_94, %c0_95] : memref<40x128xbf16, #tpu.memory_space<vmem>>, vector<4x128xbf16>
    tpu.vector_store %arg16[%c25_94, %c0_95], %98 {strides = array<i32>} : memref<40x128xbf16, #tpu.memory_space<vmem>>, vector<4x128xbf16>,
    %c7_96 = arith.constant 7 : index
    %c0_97 = arith.constant 0 : index
    %100 = vector.load %arg16[%c7_96, %c0_97] : memref<40x128xbf16, #tpu.memory_space<vmem>>, vector<8x128xbf16>
    %c0_98 = arith.constant 0 : index
    %c0_99 = arith.constant 0 : index
    %101 = vector.load %arg17[%c0_98, %c0_99] : memref<24x1152xbf16, #tpu.memory_space<vmem>>, vector<8x128xbf16>
    tpu.vector_store %arg17[%c0_98, %c0_99], %100 {strides = array<i32>} : memref<24x1152xbf16, #tpu.memory_space<vmem>>, vector<8x128xbf16>,
    %c8_100 = arith.constant 8 : index
    %c0_101 = arith.constant 0 : index
    %102 = vector.load %arg16[%c8_100, %c0_101] : memref<40x128xbf16, #tpu.memory_space<vmem>>, vector<8x128xbf16>
    %c0_102 = arith.constant 0 : index
    %c128_103 = arith.constant 128 : index
    %103 = vector.load %arg17[%c0_102, %c128_103] : memref<24x1152xbf16, #tpu.memory_space<vmem>>, vector<8x128xbf16>
    tpu.vector_store %arg17[%c0_102, %c128_103], %102 {strides = array<i32>} : memref<24x1152xbf16, #tpu.memory_space<vmem>>, vector<8x128xbf16>,
    %c9 = arith.constant 9 : index
    %c0_104 = arith.constant 0 : index
    %104 = vector.load %arg16[%c9, %c0_104] : memref<40x128xbf16, #tpu.memory_space<vmem>>, vector<8x128xbf16>
    %c0_105 = arith.constant 0 : index
    %c256_106 = arith.constant 256 : index
    %105 = vector.load %arg17[%c0_105, %c256_106] : memref<24x1152xbf16, #tpu.memory_space<vmem>>, vector<8x128xbf16>
    tpu.vector_store %arg17[%c0_105, %c256_106], %104 {strides = array<i32>} : memref<24x1152xbf16, #tpu.memory_space<vmem>>, vector<8x128xbf16>,
    %c13_107 = arith.constant 13 : index
    %c0_108 = arith.constant 0 : index
    %106 = vector.load %arg16[%c13_107, %c0_108] : memref<40x128xbf16, #tpu.memory_space<vmem>>, vector<8x128xbf16>
    %c0_109 = arith.constant 0 : index
    %c384_110 = arith.constant 384 : index
    %107 = vector.load %arg17[%c0_109, %c384_110] : memref<24x1152xbf16, #tpu.memory_space<vmem>>, vector<8x128xbf16>
    tpu.vector_store %arg17[%c0_109, %c384_110], %106 {strides = array<i32>} : memref<24x1152xbf16, #tpu.memory_space<vmem>>, vector<8x128xbf16>,
    %c14_111 = arith.constant 14 : index
    %c0_112 = arith.constant 0 : index
    %108 = vector.load %arg16[%c14_111, %c0_112] : memref<40x128xbf16, #tpu.memory_space<vmem>>, vector<8x128xbf16>
    %c0_113 = arith.constant 0 : index
    %c512_114 = arith.constant 512 : index
    %109 = vector.load %arg17[%c0_113, %c512_114] : memref<24x1152xbf16, #tpu.memory_space<vmem>>, vector<8x128xbf16>
    tpu.vector_store %arg17[%c0_113, %c512_114], %108 {strides = array<i32>} : memref<24x1152xbf16, #tpu.memory_space<vmem>>, vector<8x128xbf16>,
    %c15 = arith.constant 15 : index
    %c0_115 = arith.constant 0 : index
    %110 = vector.load %arg16[%c15, %c0_115] : memref<40x128xbf16, #tpu.memory_space<vmem>>, vector<8x128xbf16>
    %c0_116 = arith.constant 0 : index
    %c640_117 = arith.constant 640 : index
    %111 = vector.load %arg17[%c0_116, %c640_117] : memref<24x1152xbf16, #tpu.memory_space<vmem>>, vector<8x128xbf16>
    tpu.vector_store %arg17[%c0_116, %c640_117], %110 {strides = array<i32>} : memref<24x1152xbf16, #tpu.memory_space<vmem>>, vector<8x128xbf16>,
    %c19_118 = arith.constant 19 : index
    %c0_119 = arith.constant 0 : index
    %112 = vector.load %arg16[%c19_118, %c0_119] : memref<40x128xbf16, #tpu.memory_space<vmem>>, vector<8x128xbf16>
    %c0_120 = arith.constant 0 : index
    %c768_121 = arith.constant 768 : index
    %113 = vector.load %arg17[%c0_120, %c768_121] : memref<24x1152xbf16, #tpu.memory_space<vmem>>, vector<8x128xbf16>
    tpu.vector_store %arg17[%c0_120, %c768_121], %112 {strides = array<i32>} : memref<24x1152xbf16, #tpu.memory_space<vmem>>, vector<8x128xbf16>,
    %c20 = arith.constant 20 : index
    %c0_122 = arith.constant 0 : index
    %114 = vector.load %arg16[%c20, %c0_122] : memref<40x128xbf16, #tpu.memory_space<vmem>>, vector<8x128xbf16>
    %c0_123 = arith.constant 0 : index
    %c896_124 = arith.constant 896 : index
    %115 = vector.load %arg17[%c0_123, %c896_124] : memref<24x1152xbf16, #tpu.memory_space<vmem>>, vector<8x128xbf16>
    tpu.vector_store %arg17[%c0_123, %c896_124], %114 {strides = array<i32>} : memref<24x1152xbf16, #tpu.memory_space<vmem>>, vector<8x128xbf16>,
    %c21 = arith.constant 21 : index
    %c0_125 = arith.constant 0 : index
    %116 = vector.load %arg16[%c21, %c0_125] : memref<40x128xbf16, #tpu.memory_space<vmem>>, vector<8x128xbf16>
    %c0_126 = arith.constant 0 : index
    %c1024_127 = arith.constant 1024 : index
    %117 = vector.load %arg17[%c0_126, %c1024_127] : memref<24x1152xbf16, #tpu.memory_space<vmem>>, vector<8x128xbf16>
    tpu.vector_store %arg17[%c0_126, %c1024_127], %116 {strides = array<i32>} : memref<24x1152xbf16, #tpu.memory_space<vmem>>, vector<8x128xbf16>,
    %c0_128 = arith.constant 0 : index
    %c0_129 = arith.constant 0 : index
    %118 = vector.load %arg17[%c0_128, %c0_129] : memref<24x1152xbf16, #tpu.memory_space<vmem>>, vector<8x1152xbf16>
    %c0_130 = arith.constant 0 : index
    %c0_131 = arith.constant 0 : index
    %119 = vector.load %arg8[%c0_130, %c0_131] : memref<1152x128xbf16, #tpu.memory_space<vmem>>, vector<1152x128xbf16>
    %cst_132 = arith.constant dense<0.000000e+00> : vector<8x128xf32>
    %120 = tpu.matmul %118, %119, %cst_132 {dimension_numbers = #tpu.dot_dimension_numbers<[1], [0], [0], [1], [0, 0, 1, 1], [], []>} : vector<8x1152xbf16>, vector<1152x128xbf16>, vector<8x128xf32> -> vector<8x128xf32>
    %cst_133 = arith.constant 0.000000e+00 : f32
    %121 = vector.broadcast %cst_133 : f32 to vector<8x128xf32>
    %122 = arith.cmpf ogt, %120, %121 : vector<8x128xf32>
    %cst_134 = arith.constant 2.000000e-01 : f32
    %123 = vector.broadcast %cst_134 : f32 to vector<8x128xf32>
    %124 = arith.mulf %123, %120 : vector<8x128xf32>
    %125 = arith.select %122, %120, %124 : vector<8x128xi1>, vector<8x128xf32>
    %126 = vector.extract_strided_slice %125 {offsets = [0, 0], sizes = [1, 128], strides = [1, 1]} : vector<8x128xf32> to vector<1x128xf32>
    %127 = vector.extract_strided_slice %125 {offsets = [1, 0], sizes = [1, 128], strides = [1, 1]} : vector<8x128xf32> to vector<1x128xf32>
    %128 = arith.addf %126, %127 : vector<1x128xf32>
    %129 = vector.extract_strided_slice %125 {offsets = [6, 0], sizes = [1, 128], strides = [1, 1]} : vector<8x128xf32> to vector<1x128xf32>
    %130 = arith.addf %128, %129 : vector<1x128xf32>
    %131 = vector.extract_strided_slice %125 {offsets = [7, 0], sizes = [1, 128], strides = [1, 1]} : vector<8x128xf32> to vector<1x128xf32>
    %132 = arith.addf %130, %131 : vector<1x128xf32>
    %cst_135 = arith.constant 2.500000e-01 : f32
    %133 = vector.broadcast %cst_135 : f32 to vector<1x128xf32>
    %134 = arith.mulf %133, %132 : vector<1x128xf32>
    %135 = arith.index_cast %arg0 : i32 to index
    %c0_136 = arith.constant 0 : index
    %c0_137 = arith.constant 0 : index
    %136 = vector.load %arg18[%135, %c0_136, %c0_137] : memref<2x1x128xf32, #tpu.memory_space<vmem>>, vector<1x1x128xf32>
    %137 = vector.shape_cast %136 : vector<1x1x128xf32> to vector<1x128xf32>
    %138 = vector.shape_cast %134 : vector<1x128xf32> to vector<1x1x128xf32>
    tpu.vector_store %arg18[%135, %c0_136, %c0_137], %138 {strides = array<i32>} : memref<2x1x128xf32, #tpu.memory_space<vmem>>, vector<1x1x128xf32>,
    %c0_138 = arith.constant 0 : index
    %c0_139 = arith.constant 0 : index
    %139 = vector.load %arg9[%c0_138, %c0_139] : memref<128x11xf32, #tpu.memory_space<vmem>>, vector<128x11xf32>
    %cst_140 = arith.constant dense<0.000000e+00> : vector<1x11xf32>
    %140 = tpu.matmul %134, %139, %cst_140 {dimension_numbers = #tpu.dot_dimension_numbers<[1], [0], [0], [1], [0, 0, 1, 1], [], []>} : vector<1x128xf32>, vector<128x11xf32>, vector<1x11xf32> -> vector<1x11xf32>
    %c0_141 = arith.constant 0 : index
    %c0_142 = arith.constant 0 : index
    %141 = vector.load %arg10[%c0_141, %c0_142] : memref<1x11xf32, #tpu.memory_space<vmem>>, vector<1x11xf32>
    %142 = arith.addf %140, %141 : vector<1x11xf32>
    %143 = arith.index_cast %arg0 : i32 to index
    %c0_143 = arith.constant 0 : index
    %c0_144 = arith.constant 0 : index
    %144 = vector.load %arg19[%143, %c0_143, %c0_144] : memref<2x1x11xf32, #tpu.memory_space<vmem>>, vector<1x1x11xf32>
    %145 = vector.shape_cast %144 : vector<1x1x11xf32> to vector<1x11xf32>
    %146 = vector.shape_cast %142 : vector<1x11xf32> to vector<1x1x11xf32>
    tpu.vector_store %arg19[%143, %c0_143, %c0_144], %146 {strides = array<i32>} : memref<2x1x11xf32, #tpu.memory_space<vmem>>, vector<1x1x11xf32>,
    %c1_i32 = arith.constant 1 : i32
    %147 = arith.cmpi eq, %arg0, %c1_i32 : i32
    %148 = arith.extui %147 : i1 to i32
    %c0_i32_145 = arith.constant 0 : i32
    %149 = arith.cmpi ne, %148, %c0_i32_145 : i32
    scf.if %149 {
      %c0_146 = arith.constant 0 : index
      %c0_147 = arith.constant 0 : index
      %c0_148 = arith.constant 0 : index
      %150 = vector.load %arg18[%c0_146, %c0_147, %c0_148] : memref<2x1x128xf32, #tpu.memory_space<vmem>>, vector<2x1x128xf32>
      %151 = vector.shape_cast %150 : vector<2x1x128xf32> to vector<2x128xf32>
      %c0_149 = arith.constant 0 : index
      %c0_150 = arith.constant 0 : index
      %152 = vector.load %arg11[%c0_149, %c0_150] : memref<2x128xf32, #tpu.memory_space<vmem>>, vector<2x128xf32>
      tpu.vector_store %arg11[%c0_149, %c0_150], %151 {strides = array<i32>} : memref<2x128xf32, #tpu.memory_space<vmem>>, vector<2x128xf32>,
      %c0_151 = arith.constant 0 : index
      %c0_152 = arith.constant 0 : index
      %c0_153 = arith.constant 0 : index
      %153 = vector.load %arg19[%c0_151, %c0_152, %c0_153] : memref<2x1x11xf32, #tpu.memory_space<vmem>>, vector<2x1x11xf32>
      %154 = vector.shape_cast %153 : vector<2x1x11xf32> to vector<2x11xf32>
      %c0_154 = arith.constant 0 : index
      %c0_155 = arith.constant 0 : index
      %155 = vector.load %arg12[%c0_154, %c0_155] : memref<2x11xf32, #tpu.memory_space<vmem>>, vector<2x11xf32>
      tpu.vector_store %arg12[%c0_154, %c0_155], %154 {strides = array<i32>} : memref<2x11xf32, #tpu.memory_space<vmem>>, vector<2x11xf32>,
      %cst_156 = arith.constant dense<0xFF800000> : vector<11xf32>
      %156 = vector.multi_reduction <maximumf>, %154, %cst_156 [0] : vector<2x11xf32> to vector<11xf32>
      %157 = vector.shape_cast %156 : vector<11xf32> to vector<1x11xf32>
      %158 = vector.broadcast %157 : vector<1x11xf32> to vector<2x11xf32>
      %159 = arith.subf %154, %158 : vector<2x11xf32>
      %160 = math.exp %159 : vector<2x11xf32>
      %cst_157 = arith.constant dense<0.000000e+00> : vector<11xf32>
      %161 = vector.multi_reduction <add>, %160, %cst_157 [0] : vector<2x11xf32> to vector<11xf32>
      %162 = vector.shape_cast %161 : vector<11xf32> to vector<1x11xf32>
      %163 = math.log %162 : vector<1x11xf32>
      %164 = arith.addf %163, %157 : vector<1x11xf32>
      %165 = vector.broadcast %164 : vector<1x11xf32> to vector<2x11xf32>
      %166 = arith.subf %154, %165 : vector<2x11xf32>
      %c0_158 = arith.constant 0 : index
      %c0_159 = arith.constant 0 : index
      %167 = vector.load %arg13[%c0_158, %c0_159] : memref<2x11xf32, #tpu.memory_space<vmem>>, vector<2x11xf32>
      tpu.vector_store %arg13[%c0_158, %c0_159], %166 {strides = array<i32>} : memref<2x11xf32, #tpu.memory_space<vmem>>, vector<2x11xf32>,
      %168 = tpu.iota {dimensions = array<i32: 1>} : vector<2x11xi32>
      %c10_i32 = arith.constant 10 : i32
      %169 = vector.broadcast %c10_i32 : i32 to vector<2x11xi32>
      %170 = arith.cmpi slt, %168, %169 : vector<2x11xi32>
      %cst_160 = arith.constant 0xFF800000 : f32
      %171 = vector.broadcast %cst_160 : f32 to vector<2x11xf32>
      %172 = arith.select %170, %154, %171 : vector<2x11xi1>, vector<2x11xf32>
      %cst_161 = arith.constant dense<0xFF800000> : vector<2xf32>
      %173 = vector.multi_reduction <maximumf>, %172, %cst_161 [1] : vector<2x11xf32> to vector<2xf32>
      %174 = vector.shape_cast %173 : vector<2xf32> to vector<2x1xf32>
      %175 = vector.broadcast %174 : vector<2x1xf32> to vector<2x11xf32>
      %176 = arith.subf %154, %175 : vector<2x11xf32>
      %177 = math.exp %176 : vector<2x11xf32>
      %cst_162 = arith.constant 0.000000e+00 : f32
      %178 = vector.broadcast %cst_162 : f32 to vector<2x11xf32>
      %179 = arith.select %170, %177, %178 : vector<2x11xi1>, vector<2x11xf32>
      %cst_163 = arith.constant dense<0.000000e+00> : vector<2xf32>
      %180 = vector.multi_reduction <add>, %179, %cst_163 [1] : vector<2x11xf32> to vector<2xf32>
      %181 = vector.shape_cast %180 : vector<2xf32> to vector<2x1xf32>
      %c10_i32_164 = arith.constant 10 : i32
      %182 = vector.broadcast %c10_i32_164 : i32 to vector<2x11xi32>
      %183 = arith.cmpi eq, %168, %182 : vector<2x11xi32>
      %cst_165 = arith.constant 0.000000e+00 : f32
      %184 = vector.broadcast %cst_165 : f32 to vector<2x11xf32>
      %185 = arith.select %183, %154, %184 : vector<2x11xi1>, vector<2x11xf32>
      %cst_166 = arith.constant dense<0.000000e+00> : vector<2xf32>
      %186 = vector.multi_reduction <add>, %185, %cst_166 [1] : vector<2x11xf32> to vector<2xf32>
      %187 = vector.shape_cast %186 : vector<2xf32> to vector<2x1xf32>
      %188 = math.log %181 : vector<2x1xf32>
      %189 = arith.addf %188, %174 : vector<2x1xf32>
      %190 = arith.subf %189, %187 : vector<2x1xf32>
      %c0_167 = arith.constant 0 : index
      %c0_168 = arith.constant 0 : index
      %191 = vector.load %arg14[%c0_167, %c0_168] : memref<2x1xf32, #tpu.memory_space<vmem>>, vector<2x1xf32>
      tpu.vector_store %arg14[%c0_167, %c0_168], %190 {strides = array<i32>} : memref<2x1xf32, #tpu.memory_space<vmem>>, vector<2x1xf32>,
    } else {
    }
    return
  }
  func.func @transform_0(%arg0: i32) -> (i32, i32, i32) {
    %c0_i32 = arith.constant 0 : i32
    %c0_i32_0 = arith.constant 0 : i32
    %c0_i32_1 = arith.constant 0 : i32
    return %arg0, %c0_i32, %c0_i32_0 : i32, i32, i32
  }
  func.func @transform_1(%arg0: i32) -> (i32, i32) {
    %c0_i32 = arith.constant 0 : i32
    %c0_i32_0 = arith.constant 0 : i32
    %c0_i32_1 = arith.constant 0 : i32
    return %c0_i32, %c0_i32_0 : i32, i32
  }
  func.func @transform_2(%arg0: i32) -> (i32, i32) {
    %c0_i32 = arith.constant 0 : i32
    %c0_i32_0 = arith.constant 0 : i32
    %c0_i32_1 = arith.constant 0 : i32
    return %c0_i32, %c0_i32_0 : i32, i32
  }
  func.func @transform_3(%arg0: i32) -> (i32, i32) {
    %c0_i32 = arith.constant 0 : i32
    %c0_i32_0 = arith.constant 0 : i32
    %c0_i32_1 = arith.constant 0 : i32
    return %c0_i32, %c0_i32_0 : i32, i32
  }
  func.func @transform_4(%arg0: i32) -> (i32, i32) {
    %c0_i32 = arith.constant 0 : i32
    %c0_i32_0 = arith.constant 0 : i32
    %c0_i32_1 = arith.constant 0 : i32
    return %c0_i32, %c0_i32_0 : i32, i32
  }
  func.func @transform_5(%arg0: i32) -> (i32, i32) {
    %c0_i32 = arith.constant 0 : i32
    %c0_i32_0 = arith.constant 0 : i32
    %c0_i32_1 = arith.constant 0 : i32
    return %c0_i32, %c0_i32_0 : i32, i32
  }
  func.func @transform_6(%arg0: i32) -> (i32, i32) {
    %c0_i32 = arith.constant 0 : i32
    %c0_i32_0 = arith.constant 0 : i32
    %c0_i32_1 = arith.constant 0 : i32
    return %c0_i32, %c0_i32_0 : i32, i32
  }
  func.func @transform_7(%arg0: i32) -> (i32, i32) {
    %c0_i32 = arith.constant 0 : i32
    %c0_i32_0 = arith.constant 0 : i32
    %c0_i32_1 = arith.constant 0 : i32
    return %c0_i32, %c0_i32_0 : i32, i32
  }
  func.func @transform_8(%arg0: i32) -> (i32, i32) {
    %c0_i32 = arith.constant 0 : i32
    %c0_i32_0 = arith.constant 0 : i32
    %c0_i32_1 = arith.constant 0 : i32
    return %c0_i32, %c0_i32_0 : i32, i32
  }
  func.func @transform_9(%arg0: i32) -> (i32, i32) {
    %c0_i32 = arith.constant 0 : i32
    %c0_i32_0 = arith.constant 0 : i32
    %c0_i32_1 = arith.constant 0 : i32
    return %c0_i32, %c0_i32_0 : i32, i32
  }
  func.func @transform_10(%arg0: i32) -> (i32, i32) {
    %c0_i32 = arith.constant 0 : i32
    %c0_i32_0 = arith.constant 0 : i32
    %c0_i32_1 = arith.constant 0 : i32
    return %c0_i32, %c0_i32_0 : i32, i32
  }
  func.func @transform_11(%arg0: i32) -> (i32, i32) {
    %c0_i32 = arith.constant 0 : i32
    %c0_i32_0 = arith.constant 0 : i32
    %c0_i32_1 = arith.constant 0 : i32
    return %c0_i32, %c0_i32_0 : i32, i32
  }
  func.func @transform_12(%arg0: i32) -> (i32, i32) {
    %c0_i32 = arith.constant 0 : i32
    %c0_i32_0 = arith.constant 0 : i32
    %c0_i32_1 = arith.constant 0 : i32
    return %c0_i32, %c0_i32_0 : i32, i32
  }
  func.func @transform_13(%arg0: i32) -> (i32, i32) {
    %c0_i32 = arith.constant 0 : i32
    %c0_i32_0 = arith.constant 0 : i32
    %c0_i32_1 = arith.constant 0 : i32
    return %c0_i32, %c0_i32_0 : i32, i32
  }
}

</mosaic_0001>

<llo_original>
// kernel: discriminator_forward.4
$region0: #{discriminator_forward.4}
  #allocation0 [shape = 'u32[]', space=smem, size = 0x4, offset = 0x4, fixed_abs, tag = 'smem constant byte address 0x4 - core index']
  #allocation1 [shape = 'u32[72,128]{1,0:T(1,128)}', space=vmem, size = 0x9000, scoped, tag = 'internal scratch']
  %s0 = inlined_call_operand.vmem [shape: bf16[512,48], index: 0, kind: input, shape index: {}]
  %s1 = inlined_call_operand.vmem [shape: bf16[48,64], index: 1, kind: input, shape index: {}]
  %s2 = inlined_call_operand.vmem [shape: f32[1,64], index: 2, kind: input, shape index: {}]
  %s3 = inlined_call_operand.vmem [shape: f32[1,64], index: 3, kind: input, shape index: {}]
  %s4 = inlined_call_operand.vmem [shape: bf16[512,64], index: 4, kind: output, shape index: {}]
  %s5 = sld [smem:[#allocation0]]
  $region26: #{discriminator_forward.4} parent=0
    _
  %s7 = ssub.s32 1, %s5
  %s8 = scalar_select 0, %s7, %s5
  // Predicated region
  $region2: #{discriminator_forward.4} parent=0 // pred_check
    _
  $region3: #{discriminator_forward.4} parent=0 // pred_check_branch
    %10 = sbr.rel (0) target = $region5
  $region4: #{discriminator_forward.4} parent=0 // pred_region
    _
  $region5: #{discriminator_forward.4} parent=0 // pred_fallthru
    _
  // Predicated region
  $region6: #{discriminator_forward.4} parent=0 // pred_check
    _
  $region7: #{discriminator_forward.4} parent=0 // pred_check_branch
    %12 = sbr.rel (0) target = $region9
  $region8: #{discriminator_forward.4} parent=0 // pred_region
    _
  $region9: #{discriminator_forward.4} parent=0 // pred_fallthru
    _
  // Predicated region
  $region10: #{discriminator_forward.4} parent=0 // pred_check
    _
  $region11: #{discriminator_forward.4} parent=0 // pred_check_branch
    %14 = sbr.rel (0) target = $region13
  $region12: #{discriminator_forward.4} parent=0 // pred_region
    _
  $region13: #{discriminator_forward.4} parent=0 // pred_fallthru
    _
  // Predicated region
  $region14: #{discriminator_forward.4} parent=0 // pred_check
    _
  $region15: #{discriminator_forward.4} parent=0 // pred_check_branch
    %16 = sbr.rel (0) target = $region17
  $region16: #{discriminator_forward.4} parent=0 // pred_region
    _
  $region17: #{discriminator_forward.4} parent=0 // pred_fallthru
    _
  %v18 = vld [vmem:[%s0] sm:$0xf]
  %v19 = vld [vmem:[%s0 + $0x4] sm:$0xf]
  %v20 = vld [vmem:[%s0 + $0x8] sm:$0xf]
  %v21 = vld [vmem:[%s0 + $0xc] sm:$0xf]
  %v22 = vld [vmem:[%s0 + $0x10] sm:$0xf]
  %v23 = vld [vmem:[%s0 + $0x14] sm:$0xf]
  %v24 = vld [vmem:[%s0 + $0x18] sm:$0xf]
  %v25 = vld [vmem:[%s0 + $0x1c] sm:$0xf]
  %v26 = vld [vmem:[%s0 + $0x20] sm:$0xf]
  %v27 = vld [vmem:[%s0 + $0x24] sm:$0xf]
  %v28 = vld [vmem:[%s0 + $0x28] sm:$0xf]
  %v29 = vld [vmem:[%s0 + $0x2c] sm:$0xf]
  %v30 = vld [vmem:[%s0 + $0x30] sm:$0xf]
  %v31 = vld [vmem:[%s0 + $0x34] sm:$0xf]
  %v32 = vld [vmem:[%s0 + $0x38] sm:$0xf]
  %v33 = vld [vmem:[%s0 + $0x3c] sm:$0xf]
  %v34 = vld [vmem:[%s0 + $0x40] sm:$0xf]
  %v35 = vld [vmem:[%s0 + $0x44] sm:$0xf]
  %v36 = vld [vmem:[%s0 + $0x48] sm:$0xf]
  %v37 = vld [vmem:[%s0 + $0x4c] sm:$0xf]
  %v38 = vld [vmem:[%s0 + $0x50] sm:$0xf]
  %v39 = vld [vmem:[%s0 + $0x54] sm:$0xf]
  %v40 = vld [vmem:[%s0 + $0x58] sm:$0xf]
  %v41 = vld [vmem:[%s0 + $0x5c] sm:$0xf]
  %v42 = vld [vmem:[%s0 + $0x60] sm:$0xf]
  %v43 = vld [vmem:[%s0 + $0x64] sm:$0xf]
  %v44 = vld [vmem:[%s0 + $0x68] sm:$0xf]
  %v45 = vld [vmem:[%s0 + $0x6c] sm:$0xf]
  %v46 = vld [vmem:[%s0 + $0x70] sm:$0xf]
  %v47 = vld [vmem:[%s0 + $0x74] sm:$0xf]
  %v48 = vld [vmem:[%s0 + $0x78] sm:$0xf]
  %v49 = vld [vmem:[%s0 + $0x7c] sm:$0xf]
  %v50 = vld [vmem:[%s0 + $0x80] sm:$0xf]
  %v51 = vld [vmem:[%s0 + $0x84] sm:$0xf]
  %v52 = vld [vmem:[%s0 + $0x88] sm:$0xf]
  %v53 = vld [vmem:[%s0 + $0x8c] sm:$0xf]
  %v54 = vld [vmem:[%s0 + $0x90] sm:$0xf]
  %v55 = vld [vmem:[%s0 + $0x94] sm:$0xf]
  %v56 = vld [vmem:[%s0 + $0x98] sm:$0xf]
  %v57 = vld [vmem:[%s0 + $0x9c] sm:$0xf]
  %v58 = vld [vmem:[%s0 + $0xa0] sm:$0xf]
  %v59 = vld [vmem:[%s0 + $0xa4] sm:$0xf]
  %v60 = vld [vmem:[%s0 + $0xa8] sm:$0xf]
  %v61 = vld [vmem:[%s0 + $0xac] sm:$0xf]
  %v62 = vld [vmem:[%s0 + $0xb0] sm:$0xf]
  %v63 = vld [vmem:[%s0 + $0xb4] sm:$0xf]
  %v64 = vld [vmem:[%s0 + $0xb8] sm:$0xf]
  %v65 = vld [vmem:[%s0 + $0xbc] sm:$0xf]
  %v66 = vld [vmem:[%s0 + $0xc0] sm:$0xf]
  %v67 = vld [vmem:[%s0 + $0xc4] sm:$0xf]
  %v68 = vld [vmem:[%s0 + $0xc8] sm:$0xf]
  %v69 = vld [vmem:[%s0 + $0xcc] sm:$0xf]
  %v70 = vld [vmem:[%s0 + $0xd0] sm:$0xf]
  %v71 = vld [vmem:[%s0 + $0xd4] sm:$0xf]
  %v72 = vld [vmem:[%s0 + $0xd8] sm:$0xf]
  %v73 = vld [vmem:[%s0 + $0xdc] sm:$0xf]
  %v74 = vld [vmem:[%s0 + $0xe0] sm:$0xf]
  %v75 = vld [vmem:[%s0 + $0xe4] sm:$0xf]
  %v76 = vld [vmem:[%s0 + $0xe8] sm:$0xf]
  %v77 = vld [vmem:[%s0 + $0xec] sm:$0xf]
  %v78 = vld [vmem:[%s0 + $0xf0] sm:$0xf]
  %v79 = vld [vmem:[%s0 + $0xf4] sm:$0xf]
  %v80 = vld [vmem:[%s0 + $0xf8] sm:$0xf]
  %v81 = vld [vmem:[%s0 + $0xfc] sm:$0xf]
  %v82 = vld [vmem:[%s1] sm:$0xf]
  %v83 = vld [vmem:[%s1 + $0x4] sm:$0xf]
  %v84 = vld [vmem:[%s1 + $0x8] sm:$0xf]
  %v85 = vld [vmem:[%s1 + $0xc] sm:$0xf]
  %v86 = vld [vmem:[%s1 + $0x10] sm:$0xf]
  %v87 = vld [vmem:[%s1 + $0x14] sm:$0xf]
  %v152 = vunpack.c.l.b16 %v18
  %v153 = vunpack.c.l.b16 %v19
  %v154 = vunpack.c.l.b16 %v20
  %v155 = vunpack.c.l.b16 %v21
  %v156 = vunpack.c.l.b16 %v22
  %v157 = vunpack.c.l.b16 %v23
  %v158 = vunpack.c.l.b16 %v24
  %v159 = vunpack.c.l.b16 %v25
  %v160 = vunpack.c.l.b16 %v26
  %v161 = vunpack.c.l.b16 %v27
  %v162 = vunpack.c.l.b16 %v28
  %v163 = vunpack.c.l.b16 %v29
  %v164 = vunpack.c.l.b16 %v30
  %v165 = vunpack.c.l.b16 %v31
  %v166 = vunpack.c.l.b16 %v32
  %v167 = vunpack.c.l.b16 %v33
  %v168 = vunpack.c.l.b16 %v34
  %v169 = vunpack.c.l.b16 %v35
  %v170 = vunpack.c.l.b16 %v36
  %v171 = vunpack.c.l.b16 %v37
  %v172 = vunpack.c.l.b16 %v38
  %v173 = vunpack.c.l.b16 %v39
  %v174 = vunpack.c.l.b16 %v40
  %v175 = vunpack.c.l.b16 %v41
  %v176 = vunpack.c.l.b16 %v42
  %v177 = vunpack.c.l.b16 %v43
  %v178 = vunpack.c.l.b16 %v44
  %v179 = vunpack.c.l.b16 %v45
  %v180 = vunpack.c.l.b16 %v46
  %v181 = vunpack.c.l.b16 %v47
  %v182 = vunpack.c.l.b16 %v48
  %v183 = vunpack.c.l.b16 %v49
  %v184 = vunpack.c.l.b16 %v50
  %v185 = vunpack.c.l.b16 %v51
  %v186 = vunpack.c.l.b16 %v52
  %v187 = vunpack.c.l.b16 %v53
  %v188 = vunpack.c.l.b16 %v54
  %v189 = vunpack.c.l.b16 %v55
  %v190 = vunpack.c.l.b16 %v56
  %v191 = vunpack.c.l.b16 %v57
  %v192 = vunpack.c.l.b16 %v58
  %v193 = vunpack.c.l.b16 %v59
  %v194 = vunpack.c.l.b16 %v60
  %v195 = vunpack.c.l.b16 %v61
  %v196 = vunpack.c.l.b16 %v62
  %v197 = vunpack.c.l.b16 %v63
  %v198 = vunpack.c.l.b16 %v64
  %v199 = vunpack.c.l.b16 %v65
  %v200 = vunpack.c.l.b16 %v66
  %v201 = vunpack.c.l.b16 %v67
  %v202 = vunpack.c.l.b16 %v68
  %v203 = vunpack.c.l.b16 %v69
  %v204 = vunpack.c.l.b16 %v70
  %v205 = vunpack.c.l.b16 %v71
  %v206 = vunpack.c.l.b16 %v72
  %v207 = vunpack.c.l.b16 %v73
  %v208 = vunpack.c.l.b16 %v74
  %v209 = vunpack.c.l.b16 %v75
  %v210 = vunpack.c.l.b16 %v76
  %v211 = vunpack.c.l.b16 %v77
  %v212 = vunpack.c.l.b16 %v78
  %v213 = vunpack.c.l.b16 %v79
  %v214 = vunpack.c.l.b16 %v80
  %v215 = vunpack.c.l.b16 %v81
  %v216 = vpack.c.b16 %v153, %v152
  %v217 = vpack.c.b16 %v155, %v154
  %v218 = vpack.c.b16 %v157, %v156
  %v219 = vpack.c.b16 %v159, %v158
  %v220 = vpack.c.b16 %v161, %v160
  %v221 = vpack.c.b16 %v163, %v162
  %v222 = vpack.c.b16 %v165, %v164
  %v223 = vpack.c.b16 %v167, %v166
  %v224 = vpack.c.b16 %v169, %v168
  %v225 = vpack.c.b16 %v171, %v170
  %v226 = vpack.c.b16 %v173, %v172
  %v227 = vpack.c.b16 %v175, %v174
  %v228 = vpack.c.b16 %v177, %v176
  %v229 = vpack.c.b16 %v179, %v178
  %v230 = vpack.c.b16 %v181, %v180
  %v231 = vpack.c.b16 %v183, %v182
  %v232 = vpack.c.b16 %v185, %v184
  %v233 = vpack.c.b16 %v187, %v186
  %v234 = vpack.c.b16 %v189, %v188
  %v235 = vpack.c.b16 %v191, %v190
  %v236 = vpack.c.b16 %v193, %v192
  %v237 = vpack.c.b16 %v195, %v194
  %v238 = vpack.c.b16 %v197, %v196
  %v239 = vpack.c.b16 %v199, %v198
  %v240 = vpack.c.b16 %v201, %v200
  %v241 = vpack.c.b16 %v203, %v202
  %v242 = vpack.c.b16 %v205, %v204
  %v243 = vpack.c.b16 %v207, %v206
  %v244 = vpack.c.b16 %v209, %v208
  %v245 = vpack.c.b16 %v211, %v210
  %v246 = vpack.c.b16 %v213, %v212
  %v247 = vpack.c.b16 %v215, %v214
  %v254 = vunpack.c.l.b16 %v82
  %v255 = vunpack.c.l.b16 %v83
  %v256 = vunpack.c.l.b16 %v84
  %v257 = vunpack.c.l.b16 %v85
  %v258 = vunpack.c.l.b16 %v86
  %v259 = vunpack.c.l.b16 %v87
  %v260 = vpack.c.b16 %v255, %v254
  %v261 = vpack.c.b16 %v257, %v256
  %v262 = vpack.c.b16 %v259, %v258
  %vm266 = vcmask 392192
  %v268 = vsel %vm266, %v216, 0
  %v271 = vsel %vm266, %v217, 0
  %v274 = vsel %vm266, %v218, 0
  %v277 = vsel %vm266, %v219, 0
  %v280 = vsel %vm266, %v220, 0
  %v283 = vsel %vm266, %v221, 0
  %v286 = vsel %vm266, %v222, 0
  %v289 = vsel %vm266, %v223, 0
  %v292 = vsel %vm266, %v224, 0
  %v295 = vsel %vm266, %v225, 0
  %v298 = vsel %vm266, %v226, 0
  %v301 = vsel %vm266, %v227, 0
  %v304 = vsel %vm266, %v228, 0
  %v307 = vsel %vm266, %v229, 0
  %v310 = vsel %vm266, %v230, 0
  %v313 = vsel %vm266, %v231, 0
  %v316 = vsel %vm266, %v232, 0
  %v319 = vsel %vm266, %v233, 0
  %v322 = vsel %vm266, %v234, 0
  %v325 = vsel %vm266, %v235, 0
  %v328 = vsel %vm266, %v236, 0
  %v331 = vsel %vm266, %v237, 0
  %v334 = vsel %vm266, %v238, 0
  %v337 = vsel %vm266, %v239, 0
  %v340 = vsel %vm266, %v240, 0
  %v343 = vsel %vm266, %v241, 0
  %v346 = vsel %vm266, %v242, 0
  %v349 = vsel %vm266, %v243, 0
  %v352 = vsel %vm266, %v244, 0
  %v355 = vsel %vm266, %v245, 0
  %v358 = vsel %vm266, %v246, 0
  %v361 = vsel %vm266, %v247, 0
  %363 = vmatpush.bf16.msra.mxu0 0
  %364 = vmatpush.bf16.msra.mxu0 0
  %365 = vmatpush.bf16.msra.mxu0 0
  %366 = vmatpush.bf16.msra.mxu0 0
  %367 = vmatpush.bf16.msra.mxu0 0
  %368 = vmatpush.bf16.msra.mxu0 %v262
  %369 = vmatpush.bf16.msra.mxu0 %v261
  %370 = vmatpush.bf16.msra.mxu0 %v260
  %371 = vmatmul.bf16.gmra.mxu0 %v268
  %v372 = vpop.f32.mrf.mxu0
  %v373 = vadd.f32 0.0, %v372
  %v374 = vpop.f32.mrf.mxu0
  %v375 = vadd.f32 0.0, %v374
  %376 = vmatmul.bf16.gmra.mxu0 %v271
  %v377 = vpop.f32.mrf.mxu0
  %v378 = vadd.f32 0.0, %v377
  %v379 = vpop.f32.mrf.mxu0
  %v380 = vadd.f32 0.0, %v379
  %381 = vmatmul.bf16.gmra.mxu0 %v274
  %v382 = vpop.f32.mrf.mxu0
  %v383 = vadd.f32 0.0, %v382
  %v384 = vpop.f32.mrf.mxu0
  %v385 = vadd.f32 0.0, %v384
  %386 = vmatmul.bf16.gmra.mxu0 %v277
  %v387 = vpop.f32.mrf.mxu0
  %v388 = vadd.f32 0.0, %v387
  %v389 = vpop.f32.mrf.mxu0
  %v390 = vadd.f32 0.0, %v389
  %391 = vmatmul.bf16.gmra.mxu0 %v280
  %v392 = vpop.f32.mrf.mxu0
  %v393 = vadd.f32 0.0, %v392
  %v394 = vpop.f32.mrf.mxu0
  %v395 = vadd.f32 0.0, %v394
  %396 = vmatmul.bf16.gmra.mxu0 %v283
  %v397 = vpop.f32.mrf.mxu0
  %v398 = vadd.f32 0.0, %v397
  %v399 = vpop.f32.mrf.mxu0
  %v400 = vadd.f32 0.0, %v399
  %401 = vmatmul.bf16.gmra.mxu0 %v286
  %v402 = vpop.f32.mrf.mxu0
  %v403 = vadd.f32 0.0, %v402
  %v404 = vpop.f32.mrf.mxu0
  %v405 = vadd.f32 0.0, %v404
  %406 = vmatmul.bf16.gmra.mxu0 %v289
  %v407 = vpop.f32.mrf.mxu0
  %v408 = vadd.f32 0.0, %v407
  %v409 = vpop.f32.mrf.mxu0
  %v410 = vadd.f32 0.0, %v409
  %411 = vmatmul.bf16.gmra.mxu0 %v292
  %v412 = vpop.f32.mrf.mxu0
  %v413 = vadd.f32 0.0, %v412
  %v414 = vpop.f32.mrf.mxu0
  %v415 = vadd.f32 0.0, %v414
  %416 = vmatmul.bf16.gmra.mxu0 %v295
  %v417 = vpop.f32.mrf.mxu0
  %v418 = vadd.f32 0.0, %v417
  %v419 = vpop.f32.mrf.mxu0
  %v420 = vadd.f32 0.0, %v419
  %421 = vmatmul.bf16.gmra.mxu0 %v298
  %v422 = vpop.f32.mrf.mxu0
  %v423 = vadd.f32 0.0, %v422
  %v424 = vpop.f32.mrf.mxu0
  %v425 = vadd.f32 0.0, %v424
  %426 = vmatmul.bf16.gmra.mxu0 %v301
  %v427 = vpop.f32.mrf.mxu0
  %v428 = vadd.f32 0.0, %v427
  %v429 = vpop.f32.mrf.mxu0
  %v430 = vadd.f32 0.0, %v429
  %431 = vmatmul.bf16.gmra.mxu0 %v304
  %v432 = vpop.f32.mrf.mxu0
  %v433 = vadd.f32 0.0, %v432
  %v434 = vpop.f32.mrf.mxu0
  %v435 = vadd.f32 0.0, %v434
  %436 = vmatmul.bf16.gmra.mxu0 %v307
  %v437 = vpop.f32.mrf.mxu0
  %v438 = vadd.f32 0.0, %v437
  %v439 = vpop.f32.mrf.mxu0
  %v440 = vadd.f32 0.0, %v439
  %441 = vmatmul.bf16.gmra.mxu0 %v310
  %v442 = vpop.f32.mrf.mxu0
  %v443 = vadd.f32 0.0, %v442
  %v444 = vpop.f32.mrf.mxu0
  %v445 = vadd.f32 0.0, %v444
  %446 = vmatmul.bf16.gmra.mxu0 %v313
  %v447 = vpop.f32.mrf.mxu0
  %v448 = vadd.f32 0.0, %v447
  %v449 = vpop.f32.mrf.mxu0
  %v450 = vadd.f32 0.0, %v449
  %451 = vmatmul.bf16.gmra.mxu0 %v316
  %v452 = vpop.f32.mrf.mxu0
  %v453 = vadd.f32 0.0, %v452
  %v454 = vpop.f32.mrf.mxu0
  %v455 = vadd.f32 0.0, %v454
  %456 = vmatmul.bf16.gmra.mxu0 %v319
  %v457 = vpop.f32.mrf.mxu0
  %v458 = vadd.f32 0.0, %v457
  %v459 = vpop.f32.mrf.mxu0
  %v460 = vadd.f32 0.0, %v459
  %461 = vmatmul.bf16.gmra.mxu0 %v322
  %v462 = vpop.f32.mrf.mxu0
  %v463 = vadd.f32 0.0, %v462
  %v464 = vpop.f32.mrf.mxu0
  %v465 = vadd.f32 0.0, %v464
  %466 = vmatmul.bf16.gmra.mxu0 %v325
  %v467 = vpop.f32.mrf.mxu0
  %v468 = vadd.f32 0.0, %v467
  %v469 = vpop.f32.mrf.mxu0
  %v470 = vadd.f32 0.0, %v469
  %471 = vmatmul.bf16.gmra.mxu0 %v328
  %v472 = vpop.f32.mrf.mxu0
  %v473 = vadd.f32 0.0, %v472
  %v474 = vpop.f32.mrf.mxu0
  %v475 = vadd.f32 0.0, %v474
  %476 = vmatmul.bf16.gmra.mxu0 %v331
  %v477 = vpop.f32.mrf.mxu0
  %v478 = vadd.f32 0.0, %v477
  %v479 = vpop.f32.mrf.mxu0
  %v480 = vadd.f32 0.0, %v479
  %481 = vmatmul.bf16.gmra.mxu0 %v334
  %v482 = vpop.f32.mrf.mxu0
  %v483 = vadd.f32 0.0, %v482
  %v484 = vpop.f32.mrf.mxu0
  %v485 = vadd.f32 0.0, %v484
  %486 = vmatmul.bf16.gmra.mxu0 %v337
  %v487 = vpop.f32.mrf.mxu0
  %v488 = vadd.f32 0.0, %v487
  %v489 = vpop.f32.mrf.mxu0
  %v490 = vadd.f32 0.0, %v489
  %491 = vmatmul.bf16.gmra.mxu0 %v340
  %v492 = vpop.f32.mrf.mxu0
  %v493 = vadd.f32 0.0, %v492
  %v494 = vpop.f32.mrf.mxu0
  %v495 = vadd.f32 0.0, %v494
  %496 = vmatmul.bf16.gmra.mxu0 %v343
  %v497 = vpop.f32.mrf.mxu0
  %v498 = vadd.f32 0.0, %v497
  %v499 = vpop.f32.mrf.mxu0
  %v500 = vadd.f32 0.0, %v499
  %501 = vmatmul.bf16.gmra.mxu0 %v346
  %v502 = vpop.f32.mrf.mxu0
  %v503 = vadd.f32 0.0, %v502
  %v504 = vpop.f32.mrf.mxu0
  %v505 = vadd.f32 0.0, %v504
  %506 = vmatmul.bf16.gmra.mxu0 %v349
  %v507 = vpop.f32.mrf.mxu0
  %v508 = vadd.f32 0.0, %v507
  %v509 = vpop.f32.mrf.mxu0
  %v510 = vadd.f32 0.0, %v509
  %511 = vmatmul.bf16.gmra.mxu0 %v352
  %v512 = vpop.f32.mrf.mxu0
  %v513 = vadd.f32 0.0, %v512
  %v514 = vpop.f32.mrf.mxu0
  %v515 = vadd.f32 0.0, %v514
  %516 = vmatmul.bf16.gmra.mxu0 %v355
  %v517 = vpop.f32.mrf.mxu0
  %v518 = vadd.f32 0.0, %v517
  %v519 = vpop.f32.mrf.mxu0
  %v520 = vadd.f32 0.0, %v519
  %521 = vmatmul.bf16.gmra.mxu0 %v358
  %v522 = vpop.f32.mrf.mxu0
  %v523 = vadd.f32 0.0, %v522
  %v524 = vpop.f32.mrf.mxu0
  %v525 = vadd.f32 0.0, %v524
  %526 = vmatmul.bf16.gmra.mxu0 %v361
  %v527 = vpop.f32.mrf.mxu0
  %v528 = vadd.f32 0.0, %v527
  %v529 = vpop.f32.mrf.mxu0
  %v530 = vadd.f32 0.0, %v529
  %531 = vdwg.mxu0
  %v532 = vld [vmem:[%s2] sm:$0x1]
  %v534 = vperm.slane %v532, 0
  %v536 = vmul.f32 %v373, %v534
  %v537 = vmul.f32 %v375, %v534
  %v538 = vmul.f32 %v378, %v534
  %v539 = vmul.f32 %v380, %v534
  %v540 = vmul.f32 %v383, %v534
  %v541 = vmul.f32 %v385, %v534
  %v542 = vmul.f32 %v388, %v534
  %v543 = vmul.f32 %v390, %v534
  %v544 = vmul.f32 %v393, %v534
  %v545 = vmul.f32 %v395, %v534
  %v546 = vmul.f32 %v398, %v534
  %v547 = vmul.f32 %v400, %v534
  %v548 = vmul.f32 %v403, %v534
  %v549 = vmul.f32 %v405, %v534
  %v550 = vmul.f32 %v408, %v534
  %v551 = vmul.f32 %v410, %v534
  %v552 = vmul.f32 %v413, %v534
  %v553 = vmul.f32 %v415, %v534
  %v554 = vmul.f32 %v418, %v534
  %v555 = vmul.f32 %v420, %v534
  %v556 = vmul.f32 %v423, %v534
  %v557 = vmul.f32 %v425, %v534
  %v558 = vmul.f32 %v428, %v534
  %v559 = vmul.f32 %v430, %v534
  %v560 = vmul.f32 %v433, %v534
  %v561 = vmul.f32 %v435, %v534
  %v562 = vmul.f32 %v438, %v534
  %v563 = vmul.f32 %v440, %v534
  %v564 = vmul.f32 %v443, %v534
  %v565 = vmul.f32 %v445, %v534
  %v566 = vmul.f32 %v448, %v534
  %v567 = vmul.f32 %v450, %v534
  %v568 = vmul.f32 %v453, %v534
  %v569 = vmul.f32 %v455, %v534
  %v570 = vmul.f32 %v458, %v534
  %v571 = vmul.f32 %v460, %v534
  %v572 = vmul.f32 %v463, %v534
  %v573 = vmul.f32 %v465, %v534
  %v574 = vmul.f32 %v468, %v534
  %v575 = vmul.f32 %v470, %v534
  %v576 = vmul.f32 %v473, %v534
  %v577 = vmul.f32 %v475, %v534
  %v578 = vmul.f32 %v478, %v534
  %v579 = vmul.f32 %v480, %v534
  %v580 = vmul.f32 %v483, %v534
  %v581 = vmul.f32 %v485, %v534
  %v582 = vmul.f32 %v488, %v534
  %v583 = vmul.f32 %v490, %v534
  %v584 = vmul.f32 %v493, %v534
  %v585 = vmul.f32 %v495, %v534
  %v586 = vmul.f32 %v498, %v534
  %v587 = vmul.f32 %v500, %v534
  %v588 = vmul.f32 %v503, %v534
  %v589 = vmul.f32 %v505, %v534
  %v590 = vmul.f32 %v508, %v534
  %v591 = vmul.f32 %v510, %v534
  %v592 = vmul.f32 %v513, %v534
  %v593 = vmul.f32 %v515, %v534
  %v594 = vmul.f32 %v518, %v534
  %v595 = vmul.f32 %v520, %v534
  %v596 = vmul.f32 %v523, %v534
  %v597 = vmul.f32 %v525, %v534
  %v598 = vmul.f32 %v528, %v534
  %v599 = vmul.f32 %v530, %v534
  %v600 = vld [vmem:[%s3] sm:$0x1]
  %v602 = vperm.slane %v600, 0
  %v604 = vadd.f32 %v536, %v602
  %v605 = vadd.f32 %v537, %v602
  %v606 = vadd.f32 %v538, %v602
  %v607 = vadd.f32 %v539, %v602
  %v608 = vadd.f32 %v540, %v602
  %v609 = vadd.f32 %v541, %v602
  %v610 = vadd.f32 %v542, %v602
  %v611 = vadd.f32 %v543, %v602
  %v612 = vadd.f32 %v544, %v602
  %v613 = vadd.f32 %v545, %v602
  %v614 = vadd.f32 %v546, %v602
  %v615 = vadd.f32 %v547, %v602
  %v616 = vadd.f32 %v548, %v602
  %v617 = vadd.f32 %v549, %v602
  %v618 = vadd.f32 %v550, %v602
  %v619 = vadd.f32 %v551, %v602
  %v620 = vadd.f32 %v552, %v602
  %v621 = vadd.f32 %v553, %v602
  %v622 = vadd.f32 %v554, %v602
  %v623 = vadd.f32 %v555, %v602
  %v624 = vadd.f32 %v556, %v602
  %v625 = vadd.f32 %v557, %v602
  %v626 = vadd.f32 %v558, %v602
  %v627 = vadd.f32 %v559, %v602
  %v628 = vadd.f32 %v560, %v602
  %v629 = vadd.f32 %v561, %v602
  %v630 = vadd.f32 %v562, %v602
  %v631 = vadd.f32 %v563, %v602
  %v632 = vadd.f32 %v564, %v602
  %v633 = vadd.f32 %v565, %v602
  %v634 = vadd.f32 %v566, %v602
  %v635 = vadd.f32 %v567, %v602
  %v636 = vadd.f32 %v568, %v602
  %v637 = vadd.f32 %v569, %v602
  %v638 = vadd.f32 %v570, %v602
  %v639 = vadd.f32 %v571, %v602
  %v640 = vadd.f32 %v572, %v602
  %v641 = vadd.f32 %v573, %v602
  %v642 = vadd.f32 %v574, %v602
  %v643 = vadd.f32 %v575, %v602
  %v644 = vadd.f32 %v576, %v602
  %v645 = vadd.f32 %v577, %v602
  %v646 = vadd.f32 %v578, %v602
  %v647 = vadd.f32 %v579, %v602
  %v648 = vadd.f32 %v580, %v602
  %v649 = vadd.f32 %v581, %v602
  %v650 = vadd.f32 %v582, %v602
  %v651 = vadd.f32 %v583, %v602
  %v652 = vadd.f32 %v584, %v602
  %v653 = vadd.f32 %v585, %v602
  %v654 = vadd.f32 %v586, %v602
  %v655 = vadd.f32 %v587, %v602
  %v656 = vadd.f32 %v588, %v602
  %v657 = vadd.f32 %v589, %v602
  %v658 = vadd.f32 %v590, %v602
  %v659 = vadd.f32 %v591, %v602
  %v660 = vadd.f32 %v592, %v602
  %v661 = vadd.f32 %v593, %v602
  %v662 = vadd.f32 %v594, %v602
  %v663 = vadd.f32 %v595, %v602
  %v664 = vadd.f32 %v596, %v602
  %v665 = vadd.f32 %v597, %v602
  %v666 = vadd.f32 %v598, %v602
  %v667 = vadd.f32 %v599, %v602
  %vm668 = vcmp.gt.f32.partialorder %v604, 0.0
  %vm669 = vcmp.gt.f32.partialorder %v605, 0.0
  %vm670 = vcmp.gt.f32.partialorder %v606, 0.0
  %vm671 = vcmp.gt.f32.partialorder %v607, 0.0
  %vm672 = vcmp.gt.f32.partialorder %v608, 0.0
  %vm673 = vcmp.gt.f32.partialorder %v609, 0.0
  %vm674 = vcmp.gt.f32.partialorder %v610, 0.0
  %vm675 = vcmp.gt.f32.partialorder %v611, 0.0
  %vm676 = vcmp.gt.f32.partialorder %v612, 0.0
  %vm677 = vcmp.gt.f32.partialorder %v613, 0.0
  %vm678 = vcmp.gt.f32.partialorder %v614, 0.0
  %vm679 = vcmp.gt.f32.partialorder %v615, 0.0
  %vm680 = vcmp.gt.f32.partialorder %v616, 0.0
  %vm681 = vcmp.gt.f32.partialorder %v617, 0.0
  %vm682 = vcmp.gt.f32.partialorder %v618, 0.0
  %vm683 = vcmp.gt.f32.partialorder %v619, 0.0
  %vm684 = vcmp.gt.f32.partialorder %v620, 0.0
  %vm685 = vcmp.gt.f32.partialorder %v621, 0.0
  %vm686 = vcmp.gt.f32.partialorder %v622, 0.0
  %vm687 = vcmp.gt.f32.partialorder %v623, 0.0
  %vm688 = vcmp.gt.f32.partialorder %v624, 0.0
  %vm689 = vcmp.gt.f32.partialorder %v625, 0.0
  %vm690 = vcmp.gt.f32.partialorder %v626, 0.0
  %vm691 = vcmp.gt.f32.partialorder %v627, 0.0
  %vm692 = vcmp.gt.f32.partialorder %v628, 0.0
  %vm693 = vcmp.gt.f32.partialorder %v629, 0.0
  %vm694 = vcmp.gt.f32.partialorder %v630, 0.0
  %vm695 = vcmp.gt.f32.partialorder %v631, 0.0
  %vm696 = vcmp.gt.f32.partialorder %v632, 0.0
  %vm697 = vcmp.gt.f32.partialorder %v633, 0.0
  %vm698 = vcmp.gt.f32.partialorder %v634, 0.0
  %vm699 = vcmp.gt.f32.partialorder %v635, 0.0
  %vm700 = vcmp.gt.f32.partialorder %v636, 0.0
  %vm701 = vcmp.gt.f32.partialorder %v637, 0.0
  %vm702 = vcmp.gt.f32.partialorder %v638, 0.0
  %vm703 = vcmp.gt.f32.partialorder %v639, 0.0
  %vm704 = vcmp.gt.f32.partialorder %v640, 0.0
  %vm705 = vcmp.gt.f32.partialorder %v641, 0.0
  %vm706 = vcmp.gt.f32.partialorder %v642, 0.0
  %vm707 = vcmp.gt.f32.partialorder %v643, 0.0
  %vm708 = vcmp.gt.f32.partialorder %v644, 0.0
  %vm709 = vcmp.gt.f32.partialorder %v645, 0.0
  %vm710 = vcmp.gt.f32.partialorder %v646, 0.0
  %vm711 = vcmp.gt.f32.partialorder %v647, 0.0
  %vm712 = vcmp.gt.f32.partialorder %v648, 0.0
  %vm713 = vcmp.gt.f32.partialorder %v649, 0.0
  %vm714 = vcmp.gt.f32.partialorder %v650, 0.0
  %vm715 = vcmp.gt.f32.partialorder %v651, 0.0
  %vm716 = vcmp.gt.f32.partialorder %v652, 0.0
  %vm717 = vcmp.gt.f32.partialorder %v653, 0.0
  %vm718 = vcmp.gt.f32.partialorder %v654, 0.0
  %vm719 = vcmp.gt.f32.partialorder %v655, 0.0
  %vm720 = vcmp.gt.f32.partialorder %v656, 0.0
  %vm721 = vcmp.gt.f32.partialorder %v657, 0.0
  %vm722 = vcmp.gt.f32.partialorder %v658, 0.0
  %vm723 = vcmp.gt.f32.partialorder %v659, 0.0
  %vm724 = vcmp.gt.f32.partialorder %v660, 0.0
  %vm725 = vcmp.gt.f32.partialorder %v661, 0.0
  %vm726 = vcmp.gt.f32.partialorder %v662, 0.0
  %vm727 = vcmp.gt.f32.partialorder %v663, 0.0
  %vm728 = vcmp.gt.f32.partialorder %v664, 0.0
  %vm729 = vcmp.gt.f32.partialorder %v665, 0.0
  %vm730 = vcmp.gt.f32.partialorder %v666, 0.0
  %vm731 = vcmp.gt.f32.partialorder %v667, 0.0
  %v732 = vmul.f32 %v604, 0.2
  %v733 = vmul.f32 %v605, 0.2
  %v734 = vmul.f32 %v606, 0.2
  %v735 = vmul.f32 %v607, 0.2
  %v736 = vmul.f32 %v608, 0.2
  %v737 = vmul.f32 %v609, 0.2
  %v738 = vmul.f32 %v610, 0.2
  %v739 = vmul.f32 %v611, 0.2
  %v740 = vmul.f32 %v612, 0.2
  %v741 = vmul.f32 %v613, 0.2
  %v742 = vmul.f32 %v614, 0.2
  %v743 = vmul.f32 %v615, 0.2
  %v744 = vmul.f32 %v616, 0.2
  %v745 = vmul.f32 %v617, 0.2
  %v746 = vmul.f32 %v618, 0.2
  %v747 = vmul.f32 %v619, 0.2
  %v748 = vmul.f32 %v620, 0.2
  %v749 = vmul.f32 %v621, 0.2
  %v750 = vmul.f32 %v622, 0.2
  %v751 = vmul.f32 %v623, 0.2
  %v752 = vmul.f32 %v624, 0.2
  %v753 = vmul.f32 %v625, 0.2
  %v754 = vmul.f32 %v626, 0.2
  %v755 = vmul.f32 %v627, 0.2
  %v756 = vmul.f32 %v628, 0.2
  %v757 = vmul.f32 %v629, 0.2
  %v758 = vmul.f32 %v630, 0.2
  %v759 = vmul.f32 %v631, 0.2
  %v760 = vmul.f32 %v632, 0.2
  %v761 = vmul.f32 %v633, 0.2
  %v762 = vmul.f32 %v634, 0.2
  %v763 = vmul.f32 %v635, 0.2
  %v764 = vmul.f32 %v636, 0.2
  %v765 = vmul.f32 %v637, 0.2
  %v766 = vmul.f32 %v638, 0.2
  %v767 = vmul.f32 %v639, 0.2
  %v768 = vmul.f32 %v640, 0.2
  %v769 = vmul.f32 %v641, 0.2
  %v770 = vmul.f32 %v642, 0.2
  %v771 = vmul.f32 %v643, 0.2
  %v772 = vmul.f32 %v644, 0.2
  %v773 = vmul.f32 %v645, 0.2
  %v774 = vmul.f32 %v646, 0.2
  %v775 = vmul.f32 %v647, 0.2
  %v776 = vmul.f32 %v648, 0.2
  %v777 = vmul.f32 %v649, 0.2
  %v778 = vmul.f32 %v650, 0.2
  %v779 = vmul.f32 %v651, 0.2
  %v780 = vmul.f32 %v652, 0.2
  %v781 = vmul.f32 %v653, 0.2
  %v782 = vmul.f32 %v654, 0.2
  %v783 = vmul.f32 %v655, 0.2
  %v784 = vmul.f32 %v656, 0.2
  %v785 = vmul.f32 %v657, 0.2
  %v786 = vmul.f32 %v658, 0.2
  %v787 = vmul.f32 %v659, 0.2
  %v788 = vmul.f32 %v660, 0.2
  %v789 = vmul.f32 %v661, 0.2
  %v790 = vmul.f32 %v662, 0.2
  %v791 = vmul.f32 %v663, 0.2
  %v792 = vmul.f32 %v664, 0.2
  %v793 = vmul.f32 %v665, 0.2
  %v794 = vmul.f32 %v666, 0.2
  %v795 = vmul.f32 %v667, 0.2
  %v796 = vsel %vm668, %v604, %v732
  %v797 = vsel %vm669, %v605, %v733
  %v798 = vsel %vm670, %v606, %v734
  %v799 = vsel %vm671, %v607, %v735
  %v800 = vsel %vm672, %v608, %v736
  %v801 = vsel %vm673, %v609, %v737
  %v802 = vsel %vm674, %v610, %v738
  %v803 = vsel %vm675, %v611, %v739
  %v804 = vsel %vm676, %v612, %v740
  %v805 = vsel %vm677, %v613, %v741
  %v806 = vsel %vm678, %v614, %v742
  %v807 = vsel %vm679, %v615, %v743
  %v808 = vsel %vm680, %v616, %v744
  %v809 = vsel %vm681, %v617, %v745
  %v810 = vsel %vm682, %v618, %v746
  %v811 = vsel %vm683, %v619, %v747
  %v812 = vsel %vm684, %v620, %v748
  %v813 = vsel %vm685, %v621, %v749
  %v814 = vsel %vm686, %v622, %v750
  %v815 = vsel %vm687, %v623, %v751
  %v816 = vsel %vm688, %v624, %v752
  %v817 = vsel %vm689, %v625, %v753
  %v818 = vsel %vm690, %v626, %v754
  %v819 = vsel %vm691, %v627, %v755
  %v820 = vsel %vm692, %v628, %v756
  %v821 = vsel %vm693, %v629, %v757
  %v822 = vsel %vm694, %v630, %v758
  %v823 = vsel %vm695, %v631, %v759
  %v824 = vsel %vm696, %v632, %v760
  %v825 = vsel %vm697, %v633, %v761
  %v826 = vsel %vm698, %v634, %v762
  %v827 = vsel %vm699, %v635, %v763
  %v828 = vsel %vm700, %v636, %v764
  %v829 = vsel %vm701, %v637, %v765
  %v830 = vsel %vm702, %v638, %v766
  %v831 = vsel %vm703, %v639, %v767
  %v832 = vsel %vm704, %v640, %v768
  %v833 = vsel %vm705, %v641, %v769
  %v834 = vsel %vm706, %v642, %v770
  %v835 = vsel %vm707, %v643, %v771
  %v836 = vsel %vm708, %v644, %v772
  %v837 = vsel %vm709, %v645, %v773
  %v838 = vsel %vm710, %v646, %v774
  %v839 = vsel %vm711, %v647, %v775
  %v840 = vsel %vm712, %v648, %v776
  %v841 = vsel %vm713, %v649, %v777
  %v842 = vsel %vm714, %v650, %v778
  %v843 = vsel %vm715, %v651, %v779
  %v844 = vsel %vm716, %v652, %v780
  %v845 = vsel %vm717, %v653, %v781
  %v846 = vsel %vm718, %v654, %v782
  %v847 = vsel %vm719, %v655, %v783
  %v848 = vsel %vm720, %v656, %v784
  %v849 = vsel %vm721, %v657, %v785
  %v850 = vsel %vm722, %v658, %v786
  %v851 = vsel %vm723, %v659, %v787
  %v852 = vsel %vm724, %v660, %v788
  %v853 = vsel %vm725, %v661, %v789
  %v854 = vsel %vm726, %v662, %v790
  %v855 = vsel %vm727, %v663, %v791
  %v856 = vsel %vm728, %v664, %v792
  %v857 = vsel %vm729, %v665, %v793
  %v858 = vsel %vm730, %v666, %v794
  %v859 = vsel %vm731, %v667, %v795
  %v860 = vpack.c.bf16 %v796, %v796
  %v861 = vpack.c.bf16 %v797, %v797
  %v862 = vpack.c.bf16 %v798, %v798
  %v863 = vpack.c.bf16 %v799, %v799
  %v864 = vpack.c.bf16 %v800, %v800
  %v865 = vpack.c.bf16 %v801, %v801
  %v866 = vpack.c.bf16 %v802, %v802
  %v867 = vpack.c.bf16 %v803, %v803
  %v868 = vpack.c.bf16 %v804, %v804
  %v869 = vpack.c.bf16 %v805, %v805
  %v870 = vpack.c.bf16 %v806, %v806
  %v871 = vpack.c.bf16 %v807, %v807
  %v872 = vpack.c.bf16 %v808, %v808
  %v873 = vpack.c.bf16 %v809, %v809
  %v874 = vpack.c.bf16 %v810, %v810
  %v875 = vpack.c.bf16 %v811, %v811
  %v876 = vpack.c.bf16 %v812, %v812
  %v877 = vpack.c.bf16 %v813, %v813
  %v878 = vpack.c.bf16 %v814, %v814
  %v879 = vpack.c.bf16 %v815, %v815
  %v880 = vpack.c.bf16 %v816, %v816
  %v881 = vpack.c.bf16 %v817, %v817
  %v882 = vpack.c.bf16 %v818, %v818
  %v883 = vpack.c.bf16 %v819, %v819
  %v884 = vpack.c.bf16 %v820, %v820
  %v885 = vpack.c.bf16 %v821, %v821
  %v886 = vpack.c.bf16 %v822, %v822
  %v887 = vpack.c.bf16 %v823, %v823
  %v888 = vpack.c.bf16 %v824, %v824
  %v889 = vpack.c.bf16 %v825, %v825
  %v890 = vpack.c.bf16 %v826, %v826
  %v891 = vpack.c.bf16 %v827, %v827
  %v892 = vpack.c.bf16 %v828, %v828
  %v893 = vpack.c.bf16 %v829, %v829
  %v894 = vpack.c.bf16 %v830, %v830
  %v895 = vpack.c.bf16 %v831, %v831
  %v896 = vpack.c.bf16 %v832, %v832
  %v897 = vpack.c.bf16 %v833, %v833
  %v898 = vpack.c.bf16 %v834, %v834
  %v899 = vpack.c.bf16 %v835, %v835
  %v900 = vpack.c.bf16 %v836, %v836
  %v901 = vpack.c.bf16 %v837, %v837
  %v902 = vpack.c.bf16 %v838, %v838
  %v903 = vpack.c.bf16 %v839, %v839
  %v904 = vpack.c.bf16 %v840, %v840
  %v905 = vpack.c.bf16 %v841, %v841
  %v906 = vpack.c.bf16 %v842, %v842
  %v907 = vpack.c.bf16 %v843, %v843
  %v908 = vpack.c.bf16 %v844, %v844
  %v909 = vpack.c.bf16 %v845, %v845
  %v910 = vpack.c.bf16 %v846, %v846
  %v911 = vpack.c.bf16 %v847, %v847
  %v912 = vpack.c.bf16 %v848, %v848
  %v913 = vpack.c.bf16 %v849, %v849
  %v914 = vpack.c.bf16 %v850, %v850
  %v915 = vpack.c.bf16 %v851, %v851
  %v916 = vpack.c.bf16 %v852, %v852
  %v917 = vpack.c.bf16 %v853, %v853
  %v918 = vpack.c.bf16 %v854, %v854
  %v919 = vpack.c.bf16 %v855, %v855
  %v920 = vpack.c.bf16 %v856, %v856
  %v921 = vpack.c.bf16 %v857, %v857
  %v922 = vpack.c.bf16 %v858, %v858
  %v923 = vpack.c.bf16 %v859, %v859
  %vm924 = vcmask 519168
  %925 = vst.msk [vmem:[%s4] sm:$0xf] %vm924, %v860
  %926 = vst.msk [vmem:[%s4 + $0x4] sm:$0xf] %vm924, %v861
  %927 = vst.msk [vmem:[%s4 + $0x8] sm:$0xf] %vm924, %v862
  %928 = vst.msk [vmem:[%s4 + $0xc] sm:$0xf] %vm924, %v863
  %929 = vst.msk [vmem:[%s4 + $0x10] sm:$0xf] %vm924, %v864
  %930 = vst.msk [vmem:[%s4 + $0x14] sm:$0xf] %vm924, %v865
  %931 = vst.msk [vmem:[%s4 + $0x18] sm:$0xf] %vm924, %v866
  %932 = vst.msk [vmem:[%s4 + $0x1c] sm:$0xf] %vm924, %v867
  %933 = vst.msk [vmem:[%s4 + $0x20] sm:$0xf] %vm924, %v868
  %934 = vst.msk [vmem:[%s4 + $0x24] sm:$0xf] %vm924, %v869
  %935 = vst.msk [vmem:[%s4 + $0x28] sm:$0xf] %vm924, %v870
  %936 = vst.msk [vmem:[%s4 + $0x2c] sm:$0xf] %vm924, %v871
  %937 = vst.msk [vmem:[%s4 + $0x30] sm:$0xf] %vm924, %v872
  %938 = vst.msk [vmem:[%s4 + $0x34] sm:$0xf] %vm924, %v873
  %939 = vst.msk [vmem:[%s4 + $0x38] sm:$0xf] %vm924, %v874
  %940 = vst.msk [vmem:[%s4 + $0x3c] sm:$0xf] %vm924, %v875
  %941 = vst.msk [vmem:[%s4 + $0x40] sm:$0xf] %vm924, %v876
  %942 = vst.msk [vmem:[%s4 + $0x44] sm:$0xf] %vm924, %v877
  %943 = vst.msk [vmem:[%s4 + $0x48] sm:$0xf] %vm924, %v878
  %944 = vst.msk [vmem:[%s4 + $0x4c] sm:$0xf] %vm924, %v879
  %945 = vst.msk [vmem:[%s4 + $0x50] sm:$0xf] %vm924, %v880
  %946 = vst.msk [vmem:[%s4 + $0x54] sm:$0xf] %vm924, %v881
  %947 = vst.msk [vmem:[%s4 + $0x58] sm:$0xf] %vm924, %v882
  %948 = vst.msk [vmem:[%s4 + $0x5c] sm:$0xf] %vm924, %v883
  %949 = vst.msk [vmem:[%s4 + $0x60] sm:$0xf] %vm924, %v884
  %950 = vst.msk [vmem:[%s4 + $0x64] sm:$0xf] %vm924, %v885
  %951 = vst.msk [vmem:[%s4 + $0x68] sm:$0xf] %vm924, %v886
  %952 = vst.msk [vmem:[%s4 + $0x6c] sm:$0xf] %vm924, %v887
  %953 = vst.msk [vmem:[%s4 + $0x70] sm:$0xf] %vm924, %v888
  %954 = vst.msk [vmem:[%s4 + $0x74] sm:$0xf] %vm924, %v889
  %955 = vst.msk [vmem:[%s4 + $0x78] sm:$0xf] %vm924, %v890
  %956 = vst.msk [vmem:[%s4 + $0x7c] sm:$0xf] %vm924, %v891
  %957 = vst.msk [vmem:[%s4 + $0x80] sm:$0xf] %vm924, %v892
  %958 = vst.msk [vmem:[%s4 + $0x84] sm:$0xf] %vm924, %v893
  %959 = vst.msk [vmem:[%s4 + $0x88] sm:$0xf] %vm924, %v894
  %960 = vst.msk [vmem:[%s4 + $0x8c] sm:$0xf] %vm924, %v895
  %961 = vst.msk [vmem:[%s4 + $0x90] sm:$0xf] %vm924, %v896
  %962 = vst.msk [vmem:[%s4 + $0x94] sm:$0xf] %vm924, %v897
  %963 = vst.msk [vmem:[%s4 + $0x98] sm:$0xf] %vm924, %v898
  %964 = vst.msk [vmem:[%s4 + $0x9c] sm:$0xf] %vm924, %v899
  %965 = vst.msk [vmem:[%s4 + $0xa0] sm:$0xf] %vm924, %v900
  %966 = vst.msk [vmem:[%s4 + $0xa4] sm:$0xf] %vm924, %v901
  %967 = vst.msk [vmem:[%s4 + $0xa8] sm:$0xf] %vm924, %v902
  %968 = vst.msk [vmem:[%s4 + $0xac] sm:$0xf] %vm924, %v903
  %969 = vst.msk [vmem:[%s4 + $0xb0] sm:$0xf] %vm924, %v904
  %970 = vst.msk [vmem:[%s4 + $0xb4] sm:$0xf] %vm924, %v905
  %971 = vst.msk [vmem:[%s4 + $0xb8] sm:$0xf] %vm924, %v906
  %972 = vst.msk [vmem:[%s4 + $0xbc] sm:$0xf] %vm924, %v907
  %973 = vst.msk [vmem:[%s4 + $0xc0] sm:$0xf] %vm924, %v908
  %974 = vst.msk [vmem:[%s4 + $0xc4] sm:$0xf] %vm924, %v909
  %975 = vst.msk [vmem:[%s4 + $0xc8] sm:$0xf] %vm924, %v910
  %976 = vst.msk [vmem:[%s4 + $0xcc] sm:$0xf] %vm924, %v911
  %977 = vst.msk [vmem:[%s4 + $0xd0] sm:$0xf] %vm924, %v912
  %978 = vst.msk [vmem:[%s4 + $0xd4] sm:$0xf] %vm924, %v913
  %979 = vst.msk [vmem:[%s4 + $0xd8] sm:$0xf] %vm924, %v914
  %980 = vst.msk [vmem:[%s4 + $0xdc] sm:$0xf] %vm924, %v915
  %981 = vst.msk [vmem:[%s4 + $0xe0] sm:$0xf] %vm924, %v916
  %982 = vst.msk [vmem:[%s4 + $0xe4] sm:$0xf] %vm924, %v917
  %983 = vst.msk [vmem:[%s4 + $0xe8] sm:$0xf] %vm924, %v918
  %984 = vst.msk [vmem:[%s4 + $0xec] sm:$0xf] %vm924, %v919
  %985 = vst.msk [vmem:[%s4 + $0xf0] sm:$0xf] %vm924, %v920
  %986 = vst.msk [vmem:[%s4 + $0xf4] sm:$0xf] %vm924, %v921
  %987 = vst.msk [vmem:[%s4 + $0xf8] sm:$0xf] %vm924, %v922
  %988 = vst.msk [vmem:[%s4 + $0xfc] sm:$0xf] %vm924, %v923
  // Predicated region
  $region18: #{discriminator_forward.4} parent=0 // pred_check
    _
  $region19: #{discriminator_forward.4} parent=0 // pred_check_branch
    %990 = sbr.rel (0) target = $region21
  $region20: #{discriminator_forward.4} parent=0 // pred_region
    _
  $region21: #{discriminator_forward.4} parent=0 // pred_fallthru
    _
  // Predicated region
  $region22: #{discriminator_forward.4} parent=0 // pred_check
    _
  $region23: #{discriminator_forward.4} parent=0 // pred_check_branch
    %992 = sbr.rel (0) target = $region25
  $region24: #{discriminator_forward.4} parent=0 // pred_region
    _
  $region25: #{discriminator_forward.4} parent=0 // pred_fallthru
    _

// kernel: discriminator_forward.5
$region0: #{discriminator_forward.5}
  #allocation0 [shape = 'u32[]', space=smem, size = 0x4, offset = 0x4, fixed_abs, tag = 'smem constant byte address 0x4 - core index']
  #allocation1 [shape = 'u32[72,128]{1,0:T(1,128)}', space=vmem, size = 0x9000, scoped, tag = 'internal scratch']
  %s0 = inlined_call_operand.vmem [shape: bf16[128,1024], index: 0, kind: input, shape index: {}]
  %s1 = inlined_call_operand.vmem [shape: bf16[1024,64], index: 1, kind: input, shape index: {}]
  %s2 = inlined_call_operand.vmem [shape: f32[1,64], index: 2, kind: input, shape index: {}]
  %s3 = inlined_call_operand.vmem [shape: f32[1,64], index: 3, kind: input, shape index: {}]
  %s4 = inlined_call_operand.vmem [shape: bf16[128,64], index: 4, kind: output, shape index: {}]
  %s5 = sld [smem:[#allocation0]]
  $region26: #{discriminator_forward.5} parent=0
    _
  %s7 = ssub.s32 1, %s5
  %s8 = scalar_select 0, %s7, %s5
  // Predicated region
  $region2: #{discriminator_forward.5} parent=0 // pred_check
    _
  $region3: #{discriminator_forward.5} parent=0 // pred_check_branch
    %10 = sbr.rel (0) target = $region5
  $region4: #{discriminator_forward.5} parent=0 // pred_region
    _
  $region5: #{discriminator_forward.5} parent=0 // pred_fallthru
    _
  // Predicated region
  $region6: #{discriminator_forward.5} parent=0 // pred_check
    _
  $region7: #{discriminator_forward.5} parent=0 // pred_check_branch
    %12 = sbr.rel (0) target = $region9
  $region8: #{discriminator_forward.5} parent=0 // pred_region
    _
  $region9: #{discriminator_forward.5} parent=0 // pred_fallthru
    _
  // Predicated region
  $region10: #{discriminator_forward.5} parent=0 // pred_check
    _
  $region11: #{discriminator_forward.5} parent=0 // pred_check_branch
    %14 = sbr.rel (0) target = $region13
  $region12: #{discriminator_forward.5} parent=0 // pred_region
    _
  $region13: #{discriminator_forward.5} parent=0 // pred_fallthru
    _
  // Predicated region
  $region14: #{discriminator_forward.5} parent=0 // pred_check
    _
  $region15: #{discriminator_forward.5} parent=0 // pred_check_branch
    %16 = sbr.rel (0) target = $region17
  $region16: #{discriminator_forward.5} parent=0 // pred_region
    _
  $region17: #{discriminator_forward.5} parent=0 // pred_fallthru
    _
  %v17 = vld [vmem:[%s0] sm:$0xff]
  %v18 = vld [vmem:[%s0 + $0x8] sm:$0xff]
  %v19 = vld [vmem:[%s0 + $0x10] sm:$0xff]
  %v20 = vld [vmem:[%s0 + $0x18] sm:$0xff]
  %v21 = vld [vmem:[%s0 + $0x20] sm:$0xff]
  %v22 = vld [vmem:[%s0 + $0x28] sm:$0xff]
  %v23 = vld [vmem:[%s0 + $0x30] sm:$0xff]
  %v24 = vld [vmem:[%s0 + $0x38] sm:$0xff]
  %v25 = vld [vmem:[%s0 + $0x40] sm:$0xff]
  %v26 = vld [vmem:[%s0 + $0x48] sm:$0xff]
  %v27 = vld [vmem:[%s0 + $0x50] sm:$0xff]
  %v28 = vld [vmem:[%s0 + $0x58] sm:$0xff]
  %v29 = vld [vmem:[%s0 + $0x60] sm:$0xff]
  %v30 = vld [vmem:[%s0 + $0x68] sm:$0xff]
  %v31 = vld [vmem:[%s0 + $0x70] sm:$0xff]
  %v32 = vld [vmem:[%s0 + $0x78] sm:$0xff]
  %v33 = vld [vmem:[%s0 + $0x80] sm:$0xff]
  %v34 = vld [vmem:[%s0 + $0x88] sm:$0xff]
  %v35 = vld [vmem:[%s0 + $0x90] sm:$0xff]
  %v36 = vld [vmem:[%s0 + $0x98] sm:$0xff]
  %v37 = vld [vmem:[%s0 + $0xa0] sm:$0xff]
  %v38 = vld [vmem:[%s0 + $0xa8] sm:$0xff]
  %v39 = vld [vmem:[%s0 + $0xb0] sm:$0xff]
  %v40 = vld [vmem:[%s0 + $0xb8] sm:$0xff]
  %v41 = vld [vmem:[%s0 + $0xc0] sm:$0xff]
  %v42 = vld [vmem:[%s0 + $0xc8] sm:$0xff]
  %v43 = vld [vmem:[%s0 + $0xd0] sm:$0xff]
  %v44 = vld [vmem:[%s0 + $0xd8] sm:$0xff]
  %v45 = vld [vmem:[%s0 + $0xe0] sm:$0xff]
  %v46 = vld [vmem:[%s0 + $0xe8] sm:$0xff]
  %v47 = vld [vmem:[%s0 + $0xf0] sm:$0xff]
  %v48 = vld [vmem:[%s0 + $0xf8] sm:$0xff]
  %v49 = vld [vmem:[%s0 + $0x100] sm:$0xff]
  %v50 = vld [vmem:[%s0 + $0x108] sm:$0xff]
  %v51 = vld [vmem:[%s0 + $0x110] sm:$0xff]
  %v52 = vld [vmem:[%s0 + $0x118] sm:$0xff]
  %v53 = vld [vmem:[%s0 + $0x120] sm:$0xff]
  %v54 = vld [vmem:[%s0 + $0x128] sm:$0xff]
  %v55 = vld [vmem:[%s0 + $0x130] sm:$0xff]
  %v56 = vld [vmem:[%s0 + $0x138] sm:$0xff]
  %v57 = vld [vmem:[%s0 + $0x140] sm:$0xff]
  %v58 = vld [vmem:[%s0 + $0x148] sm:$0xff]
  %v59 = vld [vmem:[%s0 + $0x150] sm:$0xff]
  %v60 = vld [vmem:[%s0 + $0x158] sm:$0xff]
  %v61 = vld [vmem:[%s0 + $0x160] sm:$0xff]
  %v62 = vld [vmem:[%s0 + $0x168] sm:$0xff]
  %v63 = vld [vmem:[%s0 + $0x170] sm:$0xff]
  %v64 = vld [vmem:[%s0 + $0x178] sm:$0xff]
  %v65 = vld [vmem:[%s0 + $0x180] sm:$0xff]
  %v66 = vld [vmem:[%s0 + $0x188] sm:$0xff]
  %v67 = vld [vmem:[%s0 + $0x190] sm:$0xff]
  %v68 = vld [vmem:[%s0 + $0x198] sm:$0xff]
  %v69 = vld [vmem:[%s0 + $0x1a0] sm:$0xff]
  %v70 = vld [vmem:[%s0 + $0x1a8] sm:$0xff]
  %v71 = vld [vmem:[%s0 + $0x1b0] sm:$0xff]
  %v72 = vld [vmem:[%s0 + $0x1b8] sm:$0xff]
  %v73 = vld [vmem:[%s0 + $0x1c0] sm:$0xff]
  %v74 = vld [vmem:[%s0 + $0x1c8] sm:$0xff]
  %v75 = vld [vmem:[%s0 + $0x1d0] sm:$0xff]
  %v76 = vld [vmem:[%s0 + $0x1d8] sm:$0xff]
  %v77 = vld [vmem:[%s0 + $0x1e0] sm:$0xff]
  %v78 = vld [vmem:[%s0 + $0x1e8] sm:$0xff]
  %v79 = vld [vmem:[%s0 + $0x1f0] sm:$0xff]
  %v80 = vld [vmem:[%s0 + $0x1f8] sm:$0xff]
  %v81 = vld [vmem:[%s1] sm:$0xf]
  %v82 = vld [vmem:[%s1 + $0x4] sm:$0xf]
  %v83 = vld [vmem:[%s1 + $0x8] sm:$0xf]
  %v84 = vld [vmem:[%s1 + $0xc] sm:$0xf]
  %v85 = vld [vmem:[%s1 + $0x10] sm:$0xf]
  %v86 = vld [vmem:[%s1 + $0x14] sm:$0xf]
  %v87 = vld [vmem:[%s1 + $0x18] sm:$0xf]
  %v88 = vld [vmem:[%s1 + $0x1c] sm:$0xf]
  %v89 = vld [vmem:[%s1 + $0x20] sm:$0xf]
  %v90 = vld [vmem:[%s1 + $0x24] sm:$0xf]
  %v91 = vld [vmem:[%s1 + $0x28] sm:$0xf]
  %v92 = vld [vmem:[%s1 + $0x2c] sm:$0xf]
  %v93 = vld [vmem:[%s1 + $0x30] sm:$0xf]
  %v94 = vld [vmem:[%s1 + $0x34] sm:$0xf]
  %v95 = vld [vmem:[%s1 + $0x38] sm:$0xf]
  %v96 = vld [vmem:[%s1 + $0x3c] sm:$0xf]
  %v97 = vld [vmem:[%s1 + $0x40] sm:$0xf]
  %v98 = vld [vmem:[%s1 + $0x44] sm:$0xf]
  %v99 = vld [vmem:[%s1 + $0x48] sm:$0xf]
  %v100 = vld [vmem:[%s1 + $0x4c] sm:$0xf]
  %v101 = vld [vmem:[%s1 + $0x50] sm:$0xf]
  %v102 = vld [vmem:[%s1 + $0x54] sm:$0xf]
  %v103 = vld [vmem:[%s1 + $0x58] sm:$0xf]
  %v104 = vld [vmem:[%s1 + $0x5c] sm:$0xf]
  %v105 = vld [vmem:[%s1 + $0x60] sm:$0xf]
  %v106 = vld [vmem:[%s1 + $0x64] sm:$0xf]
  %v107 = vld [vmem:[%s1 + $0x68] sm:$0xf]
  %v108 = vld [vmem:[%s1 + $0x6c] sm:$0xf]
  %v109 = vld [vmem:[%s1 + $0x70] sm:$0xf]
  %v110 = vld [vmem:[%s1 + $0x74] sm:$0xf]
  %v111 = vld [vmem:[%s1 + $0x78] sm:$0xf]
  %v112 = vld [vmem:[%s1 + $0x7c] sm:$0xf]
  %v113 = vld [vmem:[%s1 + $0x80] sm:$0xf]
  %v114 = vld [vmem:[%s1 + $0x84] sm:$0xf]
  %v115 = vld [vmem:[%s1 + $0x88] sm:$0xf]
  %v116 = vld [vmem:[%s1 + $0x8c] sm:$0xf]
  %v117 = vld [vmem:[%s1 + $0x90] sm:$0xf]
  %v118 = vld [vmem:[%s1 + $0x94] sm:$0xf]
  %v119 = vld [vmem:[%s1 + $0x98] sm:$0xf]
  %v120 = vld [vmem:[%s1 + $0x9c] sm:$0xf]
  %v121 = vld [vmem:[%s1 + $0xa0] sm:$0xf]
  %v122 = vld [vmem:[%s1 + $0xa4] sm:$0xf]
  %v123 = vld [vmem:[%s1 + $0xa8] sm:$0xf]
  %v124 = vld [vmem:[%s1 + $0xac] sm:$0xf]
  %v125 = vld [vmem:[%s1 + $0xb0] sm:$0xf]
  %v126 = vld [vmem:[%s1 + $0xb4] sm:$0xf]
  %v127 = vld [vmem:[%s1 + $0xb8] sm:$0xf]
  %v128 = vld [vmem:[%s1 + $0xbc] sm:$0xf]
  %v129 = vld [vmem:[%s1 + $0xc0] sm:$0xf]
  %v130 = vld [vmem:[%s1 + $0xc4] sm:$0xf]
  %v131 = vld [vmem:[%s1 + $0xc8] sm:$0xf]
  %v132 = vld [vmem:[%s1 + $0xcc] sm:$0xf]
  %v133 = vld [vmem:[%s1 + $0xd0] sm:$0xf]
  %v134 = vld [vmem:[%s1 + $0xd4] sm:$0xf]
  %v135 = vld [vmem:[%s1 + $0xd8] sm:$0xf]
  %v136 = vld [vmem:[%s1 + $0xdc] sm:$0xf]
  %v137 = vld [vmem:[%s1 + $0xe0] sm:$0xf]
  %v138 = vld [vmem:[%s1 + $0xe4] sm:$0xf]
  %v139 = vld [vmem:[%s1 + $0xe8] sm:$0xf]
  %v140 = vld [vmem:[%s1 + $0xec] sm:$0xf]
  %v141 = vld [vmem:[%s1 + $0xf0] sm:$0xf]
  %v142 = vld [vmem:[%s1 + $0xf4] sm:$0xf]
  %v143 = vld [vmem:[%s1 + $0xf8] sm:$0xf]
  %v144 = vld [vmem:[%s1 + $0xfc] sm:$0xf]
  %v145 = vld [vmem:[%s1 + $0x100] sm:$0xf]
  %v146 = vld [vmem:[%s1 + $0x104] sm:$0xf]
  %v147 = vld [vmem:[%s1 + $0x108] sm:$0xf]
  %v148 = vld [vmem:[%s1 + $0x10c] sm:$0xf]
  %v149 = vld [vmem:[%s1 + $0x110] sm:$0xf]
  %v150 = vld [vmem:[%s1 + $0x114] sm:$0xf]
  %v151 = vld [vmem:[%s1 + $0x118] sm:$0xf]
  %v152 = vld [vmem:[%s1 + $0x11c] sm:$0xf]
  %v153 = vld [vmem:[%s1 + $0x120] sm:$0xf]
  %v154 = vld [vmem:[%s1 + $0x124] sm:$0xf]
  %v155 = vld [vmem:[%s1 + $0x128] sm:$0xf]
  %v156 = vld [vmem:[%s1 + $0x12c] sm:$0xf]
  %v157 = vld [vmem:[%s1 + $0x130] sm:$0xf]
  %v158 = vld [vmem:[%s1 + $0x134] sm:$0xf]
  %v159 = vld [vmem:[%s1 + $0x138] sm:$0xf]
  %v160 = vld [vmem:[%s1 + $0x13c] sm:$0xf]
  %v161 = vld [vmem:[%s1 + $0x140] sm:$0xf]
  %v162 = vld [vmem:[%s1 + $0x144] sm:$0xf]
  %v163 = vld [vmem:[%s1 + $0x148] sm:$0xf]
  %v164 = vld [vmem:[%s1 + $0x14c] sm:$0xf]
  %v165 = vld [vmem:[%s1 + $0x150] sm:$0xf]
  %v166 = vld [vmem:[%s1 + $0x154] sm:$0xf]
  %v167 = vld [vmem:[%s1 + $0x158] sm:$0xf]
  %v168 = vld [vmem:[%s1 + $0x15c] sm:$0xf]
  %v169 = vld [vmem:[%s1 + $0x160] sm:$0xf]
  %v170 = vld [vmem:[%s1 + $0x164] sm:$0xf]
  %v171 = vld [vmem:[%s1 + $0x168] sm:$0xf]
  %v172 = vld [vmem:[%s1 + $0x16c] sm:$0xf]
  %v173 = vld [vmem:[%s1 + $0x170] sm:$0xf]
  %v174 = vld [vmem:[%s1 + $0x174] sm:$0xf]
  %v175 = vld [vmem:[%s1 + $0x178] sm:$0xf]
  %v176 = vld [vmem:[%s1 + $0x17c] sm:$0xf]
  %v177 = vld [vmem:[%s1 + $0x180] sm:$0xf]
  %v178 = vld [vmem:[%s1 + $0x184] sm:$0xf]
  %v179 = vld [vmem:[%s1 + $0x188] sm:$0xf]
  %v180 = vld [vmem:[%s1 + $0x18c] sm:$0xf]
  %v181 = vld [vmem:[%s1 + $0x190] sm:$0xf]
  %v182 = vld [vmem:[%s1 + $0x194] sm:$0xf]
  %v183 = vld [vmem:[%s1 + $0x198] sm:$0xf]
  %v184 = vld [vmem:[%s1 + $0x19c] sm:$0xf]
  %v185 = vld [vmem:[%s1 + $0x1a0] sm:$0xf]
  %v186 = vld [vmem:[%s1 + $0x1a4] sm:$0xf]
  %v187 = vld [vmem:[%s1 + $0x1a8] sm:$0xf]
  %v188 = vld [vmem:[%s1 + $0x1ac] sm:$0xf]
  %v189 = vld [vmem:[%s1 + $0x1b0] sm:$0xf]
  %v190 = vld [vmem:[%s1 + $0x1b4] sm:$0xf]
  %v191 = vld [vmem:[%s1 + $0x1b8] sm:$0xf]
  %v192 = vld [vmem:[%s1 + $0x1bc] sm:$0xf]
  %v193 = vld [vmem:[%s1 + $0x1c0] sm:$0xf]
  %v194 = vld [vmem:[%s1 + $0x1c4] sm:$0xf]
  %v195 = vld [vmem:[%s1 + $0x1c8] sm:$0xf]
  %v196 = vld [vmem:[%s1 + $0x1cc] sm:$0xf]
  %v197 = vld [vmem:[%s1 + $0x1d0] sm:$0xf]
  %v198 = vld [vmem:[%s1 + $0x1d4] sm:$0xf]
  %v199 = vld [vmem:[%s1 + $0x1d8] sm:$0xf]
  %v200 = vld [vmem:[%s1 + $0x1dc] sm:$0xf]
  %v201 = vld [vmem:[%s1 + $0x1e0] sm:$0xf]
  %v202 = vld [vmem:[%s1 + $0x1e4] sm:$0xf]
  %v203 = vld [vmem:[%s1 + $0x1e8] sm:$0xf]
  %v204 = vld [vmem:[%s1 + $0x1ec] sm:$0xf]
  %v205 = vld [vmem:[%s1 + $0x1f0] sm:$0xf]
  %v206 = vld [vmem:[%s1 + $0x1f4] sm:$0xf]
  %v207 = vld [vmem:[%s1 + $0x1f8] sm:$0xf]
  %v208 = vld [vmem:[%s1 + $0x1fc] sm:$0xf]
  %v273 = vunpack.c.l.b16 %v17
  %v274 = vunpack.c.h.b16 %v17
  %v275 = vunpack.c.l.b16 %v18
  %v276 = vunpack.c.h.b16 %v18
  %v277 = vunpack.c.l.b16 %v19
  %v278 = vunpack.c.h.b16 %v19
  %v279 = vunpack.c.l.b16 %v20
  %v280 = vunpack.c.h.b16 %v20
  %v281 = vunpack.c.l.b16 %v21
  %v282 = vunpack.c.h.b16 %v21
  %v283 = vunpack.c.l.b16 %v22
  %v284 = vunpack.c.h.b16 %v22
  %v285 = vunpack.c.l.b16 %v23
  %v286 = vunpack.c.h.b16 %v23
  %v287 = vunpack.c.l.b16 %v24
  %v288 = vunpack.c.h.b16 %v24
  %v289 = vunpack.c.l.b16 %v25
  %v290 = vunpack.c.h.b16 %v25
  %v291 = vunpack.c.l.b16 %v26
  %v292 = vunpack.c.h.b16 %v26
  %v293 = vunpack.c.l.b16 %v27
  %v294 = vunpack.c.h.b16 %v27
  %v295 = vunpack.c.l.b16 %v28
  %v296 = vunpack.c.h.b16 %v28
  %v297 = vunpack.c.l.b16 %v29
  %v298 = vunpack.c.h.b16 %v29
  %v299 = vunpack.c.l.b16 %v30
  %v300 = vunpack.c.h.b16 %v30
  %v301 = vunpack.c.l.b16 %v31
  %v302 = vunpack.c.h.b16 %v31
  %v303 = vunpack.c.l.b16 %v32
  %v304 = vunpack.c.h.b16 %v32
  %v305 = vunpack.c.l.b16 %v33
  %v306 = vunpack.c.h.b16 %v33
  %v307 = vunpack.c.l.b16 %v34
  %v308 = vunpack.c.h.b16 %v34
  %v309 = vunpack.c.l.b16 %v35
  %v310 = vunpack.c.h.b16 %v35
  %v311 = vunpack.c.l.b16 %v36
  %v312 = vunpack.c.h.b16 %v36
  %v313 = vunpack.c.l.b16 %v37
  %v314 = vunpack.c.h.b16 %v37
  %v315 = vunpack.c.l.b16 %v38
  %v316 = vunpack.c.h.b16 %v38
  %v317 = vunpack.c.l.b16 %v39
  %v318 = vunpack.c.h.b16 %v39
  %v319 = vunpack.c.l.b16 %v40
  %v320 = vunpack.c.h.b16 %v40
  %v321 = vunpack.c.l.b16 %v41
  %v322 = vunpack.c.h.b16 %v41
  %v323 = vunpack.c.l.b16 %v42
  %v324 = vunpack.c.h.b16 %v42
  %v325 = vunpack.c.l.b16 %v43
  %v326 = vunpack.c.h.b16 %v43
  %v327 = vunpack.c.l.b16 %v44
  %v328 = vunpack.c.h.b16 %v44
  %v329 = vunpack.c.l.b16 %v45
  %v330 = vunpack.c.h.b16 %v45
  %v331 = vunpack.c.l.b16 %v46
  %v332 = vunpack.c.h.b16 %v46
  %v333 = vunpack.c.l.b16 %v47
  %v334 = vunpack.c.h.b16 %v47
  %v335 = vunpack.c.l.b16 %v48
  %v336 = vunpack.c.h.b16 %v48
  %v337 = vunpack.c.l.b16 %v49
  %v338 = vunpack.c.h.b16 %v49
  %v339 = vunpack.c.l.b16 %v50
  %v340 = vunpack.c.h.b16 %v50
  %v341 = vunpack.c.l.b16 %v51
  %v342 = vunpack.c.h.b16 %v51
  %v343 = vunpack.c.l.b16 %v52
  %v344 = vunpack.c.h.b16 %v52
  %v345 = vunpack.c.l.b16 %v53
  %v346 = vunpack.c.h.b16 %v53
  %v347 = vunpack.c.l.b16 %v54
  %v348 = vunpack.c.h.b16 %v54
  %v349 = vunpack.c.l.b16 %v55
  %v350 = vunpack.c.h.b16 %v55
  %v351 = vunpack.c.l.b16 %v56
  %v352 = vunpack.c.h.b16 %v56
  %v353 = vunpack.c.l.b16 %v57
  %v354 = vunpack.c.h.b16 %v57
  %v355 = vunpack.c.l.b16 %v58
  %v356 = vunpack.c.h.b16 %v58
  %v357 = vunpack.c.l.b16 %v59
  %v358 = vunpack.c.h.b16 %v59
  %v359 = vunpack.c.l.b16 %v60
  %v360 = vunpack.c.h.b16 %v60
  %v361 = vunpack.c.l.b16 %v61
  %v362 = vunpack.c.h.b16 %v61
  %v363 = vunpack.c.l.b16 %v62
  %v364 = vunpack.c.h.b16 %v62
  %v365 = vunpack.c.l.b16 %v63
  %v366 = vunpack.c.h.b16 %v63
  %v367 = vunpack.c.l.b16 %v64
  %v368 = vunpack.c.h.b16 %v64
  %v369 = vunpack.c.l.b16 %v65
  %v370 = vunpack.c.h.b16 %v65
  %v371 = vunpack.c.l.b16 %v66
  %v372 = vunpack.c.h.b16 %v66
  %v373 = vunpack.c.l.b16 %v67
  %v374 = vunpack.c.h.b16 %v67
  %v375 = vunpack.c.l.b16 %v68
  %v376 = vunpack.c.h.b16 %v68
  %v377 = vunpack.c.l.b16 %v69
  %v378 = vunpack.c.h.b16 %v69
  %v379 = vunpack.c.l.b16 %v70
  %v380 = vunpack.c.h.b16 %v70
  %v381 = vunpack.c.l.b16 %v71
  %v382 = vunpack.c.h.b16 %v71
  %v383 = vunpack.c.l.b16 %v72
  %v384 = vunpack.c.h.b16 %v72
  %v385 = vunpack.c.l.b16 %v73
  %v386 = vunpack.c.h.b16 %v73
  %v387 = vunpack.c.l.b16 %v74
  %v388 = vunpack.c.h.b16 %v74
  %v389 = vunpack.c.l.b16 %v75
  %v390 = vunpack.c.h.b16 %v75
  %v391 = vunpack.c.l.b16 %v76
  %v392 = vunpack.c.h.b16 %v76
  %v393 = vunpack.c.l.b16 %v77
  %v394 = vunpack.c.h.b16 %v77
  %v395 = vunpack.c.l.b16 %v78
  %v396 = vunpack.c.h.b16 %v78
  %v397 = vunpack.c.l.b16 %v79
  %v398 = vunpack.c.h.b16 %v79
  %v399 = vunpack.c.l.b16 %v80
  %v400 = vunpack.c.h.b16 %v80
  %v401 = vpack.c.b16 %v281, %v273
  %v402 = vpack.c.b16 %v282, %v274
  %v403 = vpack.c.b16 %v283, %v275
  %v404 = vpack.c.b16 %v284, %v276
  %v405 = vpack.c.b16 %v285, %v277
  %v406 = vpack.c.b16 %v286, %v278
  %v407 = vpack.c.b16 %v287, %v279
  %v408 = vpack.c.b16 %v288, %v280
  %v409 = vpack.c.b16 %v297, %v289
  %v410 = vpack.c.b16 %v298, %v290
  %v411 = vpack.c.b16 %v299, %v291
  %v412 = vpack.c.b16 %v300, %v292
  %v413 = vpack.c.b16 %v301, %v293
  %v414 = vpack.c.b16 %v302, %v294
  %v415 = vpack.c.b16 %v303, %v295
  %v416 = vpack.c.b16 %v304, %v296
  %v417 = vpack.c.b16 %v313, %v305
  %v418 = vpack.c.b16 %v314, %v306
  %v419 = vpack.c.b16 %v315, %v307
  %v420 = vpack.c.b16 %v316, %v308
  %v421 = vpack.c.b16 %v317, %v309
  %v422 = vpack.c.b16 %v318, %v310
  %v423 = vpack.c.b16 %v319, %v311
  %v424 = vpack.c.b16 %v320, %v312
  %v425 = vpack.c.b16 %v329, %v321
  %v426 = vpack.c.b16 %v330, %v322
  %v427 = vpack.c.b16 %v331, %v323
  %v428 = vpack.c.b16 %v332, %v324
  %v429 = vpack.c.b16 %v333, %v325
  %v430 = vpack.c.b16 %v334, %v326
  %v431 = vpack.c.b16 %v335, %v327
  %v432 = vpack.c.b16 %v336, %v328
  %v433 = vpack.c.b16 %v345, %v337
  %v434 = vpack.c.b16 %v346, %v338
  %v435 = vpack.c.b16 %v347, %v339
  %v436 = vpack.c.b16 %v348, %v340
  %v437 = vpack.c.b16 %v349, %v341
  %v438 = vpack.c.b16 %v350, %v342
  %v439 = vpack.c.b16 %v351, %v343
  %v440 = vpack.c.b16 %v352, %v344
  %v441 = vpack.c.b16 %v361, %v353
  %v442 = vpack.c.b16 %v362, %v354
  %v443 = vpack.c.b16 %v363, %v355
  %v444 = vpack.c.b16 %v364, %v356
  %v445 = vpack.c.b16 %v365, %v357
  %v446 = vpack.c.b16 %v366, %v358
  %v447 = vpack.c.b16 %v367, %v359
  %v448 = vpack.c.b16 %v368, %v360
  %v449 = vpack.c.b16 %v377, %v369
  %v450 = vpack.c.b16 %v378, %v370
  %v451 = vpack.c.b16 %v379, %v371
  %v452 = vpack.c.b16 %v380, %v372
  %v453 = vpack.c.b16 %v381, %v373
  %v454 = vpack.c.b16 %v382, %v374
  %v455 = vpack.c.b16 %v383, %v375
  %v456 = vpack.c.b16 %v384, %v376
  %v457 = vpack.c.b16 %v393, %v385
  %v458 = vpack.c.b16 %v394, %v386
  %v459 = vpack.c.b16 %v395, %v387
  %v460 = vpack.c.b16 %v396, %v388
  %v461 = vpack.c.b16 %v397, %v389
  %v462 = vpack.c.b16 %v398, %v390
  %v463 = vpack.c.b16 %v399, %v391
  %v464 = vpack.c.b16 %v400, %v392
  %v657 = vunpack.c.l.b16 %v81
  %v658 = vunpack.c.l.b16 %v82
  %v659 = vunpack.c.l.b16 %v83
  %v660 = vunpack.c.l.b16 %v84
  %v661 = vunpack.c.l.b16 %v85
  %v662 = vunpack.c.l.b16 %v86
  %v663 = vunpack.c.l.b16 %v87
  %v664 = vunpack.c.l.b16 %v88
  %v665 = vunpack.c.l.b16 %v89
  %v666 = vunpack.c.l.b16 %v90
  %v667 = vunpack.c.l.b16 %v91
  %v668 = vunpack.c.l.b16 %v92
  %v669 = vunpack.c.l.b16 %v93
  %v670 = vunpack.c.l.b16 %v94
  %v671 = vunpack.c.l.b16 %v95
  %v672 = vunpack.c.l.b16 %v96
  %v673 = vunpack.c.l.b16 %v97
  %v674 = vunpack.c.l.b16 %v98
  %v675 = vunpack.c.l.b16 %v99
  %v676 = vunpack.c.l.b16 %v100
  %v677 = vunpack.c.l.b16 %v101
  %v678 = vunpack.c.l.b16 %v102
  %v679 = vunpack.c.l.b16 %v103
  %v680 = vunpack.c.l.b16 %v104
  %v681 = vunpack.c.l.b16 %v105
  %v682 = vunpack.c.l.b16 %v106
  %v683 = vunpack.c.l.b16 %v107
  %v684 = vunpack.c.l.b16 %v108
  %v685 = vunpack.c.l.b16 %v109
  %v686 = vunpack.c.l.b16 %v110
  %v687 = vunpack.c.l.b16 %v111
  %v688 = vunpack.c.l.b16 %v112
  %v689 = vunpack.c.l.b16 %v113
  %v690 = vunpack.c.l.b16 %v114
  %v691 = vunpack.c.l.b16 %v115
  %v692 = vunpack.c.l.b16 %v116
  %v693 = vunpack.c.l.b16 %v117
  %v694 = vunpack.c.l.b16 %v118
  %v695 = vunpack.c.l.b16 %v119
  %v696 = vunpack.c.l.b16 %v120
  %v697 = vunpack.c.l.b16 %v121
  %v698 = vunpack.c.l.b16 %v122
  %v699 = vunpack.c.l.b16 %v123
  %v700 = vunpack.c.l.b16 %v124
  %v701 = vunpack.c.l.b16 %v125
  %v702 = vunpack.c.l.b16 %v126
  %v703 = vunpack.c.l.b16 %v127
  %v704 = vunpack.c.l.b16 %v128
  %v705 = vunpack.c.l.b16 %v129
  %v706 = vunpack.c.l.b16 %v130
  %v707 = vunpack.c.l.b16 %v131
  %v708 = vunpack.c.l.b16 %v132
  %v709 = vunpack.c.l.b16 %v133
  %v710 = vunpack.c.l.b16 %v134
  %v711 = vunpack.c.l.b16 %v135
  %v712 = vunpack.c.l.b16 %v136
  %v713 = vunpack.c.l.b16 %v137
  %v714 = vunpack.c.l.b16 %v138
  %v715 = vunpack.c.l.b16 %v139
  %v716 = vunpack.c.l.b16 %v140
  %v717 = vunpack.c.l.b16 %v141
  %v718 = vunpack.c.l.b16 %v142
  %v719 = vunpack.c.l.b16 %v143
  %v720 = vunpack.c.l.b16 %v144
  %v721 = vunpack.c.l.b16 %v145
  %v722 = vunpack.c.l.b16 %v146
  %v723 = vunpack.c.l.b16 %v147
  %v724 = vunpack.c.l.b16 %v148
  %v725 = vunpack.c.l.b16 %v149
  %v726 = vunpack.c.l.b16 %v150
  %v727 = vunpack.c.l.b16 %v151
  %v728 = vunpack.c.l.b16 %v152
  %v729 = vunpack.c.l.b16 %v153
  %v730 = vunpack.c.l.b16 %v154
  %v731 = vunpack.c.l.b16 %v155
  %v732 = vunpack.c.l.b16 %v156
  %v733 = vunpack.c.l.b16 %v157
  %v734 = vunpack.c.l.b16 %v158
  %v735 = vunpack.c.l.b16 %v159
  %v736 = vunpack.c.l.b16 %v160
  %v737 = vunpack.c.l.b16 %v161
  %v738 = vunpack.c.l.b16 %v162
  %v739 = vunpack.c.l.b16 %v163
  %v740 = vunpack.c.l.b16 %v164
  %v741 = vunpack.c.l.b16 %v165
  %v742 = vunpack.c.l.b16 %v166
  %v743 = vunpack.c.l.b16 %v167
  %v744 = vunpack.c.l.b16 %v168
  %v745 = vunpack.c.l.b16 %v169
  %v746 = vunpack.c.l.b16 %v170
  %v747 = vunpack.c.l.b16 %v171
  %v748 = vunpack.c.l.b16 %v172
  %v749 = vunpack.c.l.b16 %v173
  %v750 = vunpack.c.l.b16 %v174
  %v751 = vunpack.c.l.b16 %v175
  %v752 = vunpack.c.l.b16 %v176
  %v753 = vunpack.c.l.b16 %v177
  %v754 = vunpack.c.l.b16 %v178
  %v755 = vunpack.c.l.b16 %v179
  %v756 = vunpack.c.l.b16 %v180
  %v757 = vunpack.c.l.b16 %v181
  %v758 = vunpack.c.l.b16 %v182
  %v759 = vunpack.c.l.b16 %v183
  %v760 = vunpack.c.l.b16 %v184
  %v761 = vunpack.c.l.b16 %v185
  %v762 = vunpack.c.l.b16 %v186
  %v763 = vunpack.c.l.b16 %v187
  %v764 = vunpack.c.l.b16 %v188
  %v765 = vunpack.c.l.b16 %v189
  %v766 = vunpack.c.l.b16 %v190
  %v767 = vunpack.c.l.b16 %v191
  %v768 = vunpack.c.l.b16 %v192
  %v769 = vunpack.c.l.b16 %v193
  %v770 = vunpack.c.l.b16 %v194
  %v771 = vunpack.c.l.b16 %v195
  %v772 = vunpack.c.l.b16 %v196
  %v773 = vunpack.c.l.b16 %v197
  %v774 = vunpack.c.l.b16 %v198
  %v775 = vunpack.c.l.b16 %v199
  %v776 = vunpack.c.l.b16 %v200
  %v777 = vunpack.c.l.b16 %v201
  %v778 = vunpack.c.l.b16 %v202
  %v779 = vunpack.c.l.b16 %v203
  %v780 = vunpack.c.l.b16 %v204
  %v781 = vunpack.c.l.b16 %v205
  %v782 = vunpack.c.l.b16 %v206
  %v783 = vunpack.c.l.b16 %v207
  %v784 = vunpack.c.l.b16 %v208
  %v785 = vpack.c.b16 %v658, %v657
  %v786 = vpack.c.b16 %v660, %v659
  %v787 = vpack.c.b16 %v662, %v661
  %v788 = vpack.c.b16 %v664, %v663
  %v789 = vpack.c.b16 %v666, %v665
  %v790 = vpack.c.b16 %v668, %v667
  %v791 = vpack.c.b16 %v670, %v669
  %v792 = vpack.c.b16 %v672, %v671
  %v793 = vpack.c.b16 %v674, %v673
  %v794 = vpack.c.b16 %v676, %v675
  %v795 = vpack.c.b16 %v678, %v677
  %v796 = vpack.c.b16 %v680, %v679
  %v797 = vpack.c.b16 %v682, %v681
  %v798 = vpack.c.b16 %v684, %v683
  %v799 = vpack.c.b16 %v686, %v685
  %v800 = vpack.c.b16 %v688, %v687
  %v801 = vpack.c.b16 %v690, %v689
  %v802 = vpack.c.b16 %v692, %v691
  %v803 = vpack.c.b16 %v694, %v693
  %v804 = vpack.c.b16 %v696, %v695
  %v805 = vpack.c.b16 %v698, %v697
  %v806 = vpack.c.b16 %v700, %v699
  %v807 = vpack.c.b16 %v702, %v701
  %v808 = vpack.c.b16 %v704, %v703
  %v809 = vpack.c.b16 %v706, %v705
  %v810 = vpack.c.b16 %v708, %v707
  %v811 = vpack.c.b16 %v710, %v709
  %v812 = vpack.c.b16 %v712, %v711
  %v813 = vpack.c.b16 %v714, %v713
  %v814 = vpack.c.b16 %v716, %v715
  %v815 = vpack.c.b16 %v718, %v717
  %v816 = vpack.c.b16 %v720, %v719
  %v817 = vpack.c.b16 %v722, %v721
  %v818 = vpack.c.b16 %v724, %v723
  %v819 = vpack.c.b16 %v726, %v725
  %v820 = vpack.c.b16 %v728, %v727
  %v821 = vpack.c.b16 %v730, %v729
  %v822 = vpack.c.b16 %v732, %v731
  %v823 = vpack.c.b16 %v734, %v733
  %v824 = vpack.c.b16 %v736, %v735
  %v825 = vpack.c.b16 %v738, %v737
  %v826 = vpack.c.b16 %v740, %v739
  %v827 = vpack.c.b16 %v742, %v741
  %v828 = vpack.c.b16 %v744, %v743
  %v829 = vpack.c.b16 %v746, %v745
  %v830 = vpack.c.b16 %v748, %v747
  %v831 = vpack.c.b16 %v750, %v749
  %v832 = vpack.c.b16 %v752, %v751
  %v833 = vpack.c.b16 %v754, %v753
  %v834 = vpack.c.b16 %v756, %v755
  %v835 = vpack.c.b16 %v758, %v757
  %v836 = vpack.c.b16 %v760, %v759
  %v837 = vpack.c.b16 %v762, %v761
  %v838 = vpack.c.b16 %v764, %v763
  %v839 = vpack.c.b16 %v766, %v765
  %v840 = vpack.c.b16 %v768, %v767
  %v841 = vpack.c.b16 %v770, %v769
  %v842 = vpack.c.b16 %v772, %v771
  %v843 = vpack.c.b16 %v774, %v773
  %v844 = vpack.c.b16 %v776, %v775
  %v845 = vpack.c.b16 %v778, %v777
  %v846 = vpack.c.b16 %v780, %v779
  %v847 = vpack.c.b16 %v782, %v781
  %v848 = vpack.c.b16 %v784, %v783
  %913 = vmatpush.bf16.msra.mxu0 %v792
  %914 = vmatpush.bf16.msra.mxu0 %v791
  %915 = vmatpush.bf16.msra.mxu0 %v790
  %916 = vmatpush.bf16.msra.mxu0 %v789
  %917 = vmatpush.bf16.msra.mxu0 %v788
  %918 = vmatpush.bf16.msra.mxu0 %v787
  %919 = vmatpush.bf16.msra.mxu0 %v786
  %920 = vmatpush.bf16.msra.mxu0 %v785
  %921 = vmatmul.bf16.gmra.mxu0 %v401
  %v922 = vpop.f32.mrf.mxu0
  %v923 = vadd.f32 0.0, %v922
  %v924 = vpop.f32.mrf.mxu0
  %v925 = vadd.f32 0.0, %v924
  %926 = vmatmul.bf16.gmra.mxu0 %v409
  %v927 = vpop.f32.mrf.mxu0
  %v928 = vadd.f32 0.0, %v927
  %v929 = vpop.f32.mrf.mxu0
  %v930 = vadd.f32 0.0, %v929
  %931 = vmatmul.bf16.gmra.mxu0 %v417
  %v932 = vpop.f32.mrf.mxu0
  %v933 = vadd.f32 0.0, %v932
  %v934 = vpop.f32.mrf.mxu0
  %v935 = vadd.f32 0.0, %v934
  %936 = vmatmul.bf16.gmra.mxu0 %v425
  %v937 = vpop.f32.mrf.mxu0
  %v938 = vadd.f32 0.0, %v937
  %v939 = vpop.f32.mrf.mxu0
  %v940 = vadd.f32 0.0, %v939
  %941 = vmatmul.bf16.gmra.mxu0 %v433
  %v942 = vpop.f32.mrf.mxu0
  %v943 = vadd.f32 0.0, %v942
  %v944 = vpop.f32.mrf.mxu0
  %v945 = vadd.f32 0.0, %v944
  %946 = vmatmul.bf16.gmra.mxu0 %v441
  %v947 = vpop.f32.mrf.mxu0
  %v948 = vadd.f32 0.0, %v947
  %v949 = vpop.f32.mrf.mxu0
  %v950 = vadd.f32 0.0, %v949
  %951 = vmatmul.bf16.gmra.mxu0 %v449
  %v952 = vpop.f32.mrf.mxu0
  %v953 = vadd.f32 0.0, %v952
  %v954 = vpop.f32.mrf.mxu0
  %v955 = vadd.f32 0.0, %v954
  %956 = vmatmul.bf16.gmra.mxu0 %v457
  %v957 = vpop.f32.mrf.mxu0
  %v958 = vadd.f32 0.0, %v957
  %v959 = vpop.f32.mrf.mxu0
  %v960 = vadd.f32 0.0, %v959
  %961 = vdwg.mxu0
  %962 = vmatpush.bf16.msra.mxu0 %v800
  %963 = vmatpush.bf16.msra.mxu0 %v799
  %964 = vmatpush.bf16.msra.mxu0 %v798
  %965 = vmatpush.bf16.msra.mxu0 %v797
  %966 = vmatpush.bf16.msra.mxu0 %v796
  %967 = vmatpush.bf16.msra.mxu0 %v795
  %968 = vmatpush.bf16.msra.mxu0 %v794
  %969 = vmatpush.bf16.msra.mxu0 %v793
  %970 = vmatmul.bf16.gmra.mxu0 %v402
  %v971 = vpop.f32.mrf.mxu0
  %v972 = vadd.f32 %v923, %v971
  %v973 = vpop.f32.mrf.mxu0
  %v974 = vadd.f32 %v925, %v973
  %975 = vmatmul.bf16.gmra.mxu0 %v410
  %v976 = vpop.f32.mrf.mxu0
  %v977 = vadd.f32 %v928, %v976
  %v978 = vpop.f32.mrf.mxu0
  %v979 = vadd.f32 %v930, %v978
  %980 = vmatmul.bf16.gmra.mxu0 %v418
  %v981 = vpop.f32.mrf.mxu0
  %v982 = vadd.f32 %v933, %v981
  %v983 = vpop.f32.mrf.mxu0
  %v984 = vadd.f32 %v935, %v983
  %985 = vmatmul.bf16.gmra.mxu0 %v426
  %v986 = vpop.f32.mrf.mxu0
  %v987 = vadd.f32 %v938, %v986
  %v988 = vpop.f32.mrf.mxu0
  %v989 = vadd.f32 %v940, %v988
  %990 = vmatmul.bf16.gmra.mxu0 %v434
  %v991 = vpop.f32.mrf.mxu0
  %v992 = vadd.f32 %v943, %v991
  %v993 = vpop.f32.mrf.mxu0
  %v994 = vadd.f32 %v945, %v993
  %995 = vmatmul.bf16.gmra.mxu0 %v442
  %v996 = vpop.f32.mrf.mxu0
  %v997 = vadd.f32 %v948, %v996
  %v998 = vpop.f32.mrf.mxu0
  %v999 = vadd.f32 %v950, %v998
  %1000 = vmatmul.bf16.gmra.mxu0 %v450
  %v1001 = vpop.f32.mrf.mxu0
  %v1002 = vadd.f32 %v953, %v1001
  %v1003 = vpop.f32.mrf.mxu0
  %v1004 = vadd.f32 %v955, %v1003
  %1005 = vmatmul.bf16.gmra.mxu0 %v458
  %v1006 = vpop.f32.mrf.mxu0
  %v1007 = vadd.f32 %v958, %v1006
  %v1008 = vpop.f32.mrf.mxu0
  %v1009 = vadd.f32 %v960, %v1008
  %1010 = vdwg.mxu0
  %1011 = vmatpush.bf16.msra.mxu0 %v808
  %1012 = vmatpush.bf16.msra.mxu0 %v807
  %1013 = vmatpush.bf16.msra.mxu0 %v806
  %1014 = vmatpush.bf16.msra.mxu0 %v805
  %1015 = vmatpush.bf16.msra.mxu0 %v804
  %1016 = vmatpush.bf16.msra.mxu0 %v803
  %1017 = vmatpush.bf16.msra.mxu0 %v802
  %1018 = vmatpush.bf16.msra.mxu0 %v801
  %1019 = vmatmul.bf16.gmra.mxu0 %v403
  %v1020 = vpop.f32.mrf.mxu0
  %v1021 = vadd.f32 %v972, %v1020
  %v1022 = vpop.f32.mrf.mxu0
  %v1023 = vadd.f32 %v974, %v1022
  %1024 = vmatmul.bf16.gmra.mxu0 %v411
  %v1025 = vpop.f32.mrf.mxu0
  %v1026 = vadd.f32 %v977, %v1025
  %v1027 = vpop.f32.mrf.mxu0
  %v1028 = vadd.f32 %v979, %v1027
  %1029 = vmatmul.bf16.gmra.mxu0 %v419
  %v1030 = vpop.f32.mrf.mxu0
  %v1031 = vadd.f32 %v982, %v1030
  %v1032 = vpop.f32.mrf.mxu0
  %v1033 = vadd.f32 %v984, %v1032
  %1034 = vmatmul.bf16.gmra.mxu0 %v427
  %v1035 = vpop.f32.mrf.mxu0
  %v1036 = vadd.f32 %v987, %v1035
  %v1037 = vpop.f32.mrf.mxu0
  %v1038 = vadd.f32 %v989, %v1037
  %1039 = vmatmul.bf16.gmra.mxu0 %v435
  %v1040 = vpop.f32.mrf.mxu0
  %v1041 = vadd.f32 %v992, %v1040
  %v1042 = vpop.f32.mrf.mxu0
  %v1043 = vadd.f32 %v994, %v1042
  %1044 = vmatmul.bf16.gmra.mxu0 %v443
  %v1045 = vpop.f32.mrf.mxu0
  %v1046 = vadd.f32 %v997, %v1045
  %v1047 = vpop.f32.mrf.mxu0
  %v1048 = vadd.f32 %v999, %v1047
  %1049 = vmatmul.bf16.gmra.mxu0 %v451
  %v1050 = vpop.f32.mrf.mxu0
  %v1051 = vadd.f32 %v1002, %v1050
  %v1052 = vpop.f32.mrf.mxu0
  %v1053 = vadd.f32 %v1004, %v1052
  %1054 = vmatmul.bf16.gmra.mxu0 %v459
  %v1055 = vpop.f32.mrf.mxu0
  %v1056 = vadd.f32 %v1007, %v1055
  %v1057 = vpop.f32.mrf.mxu0
  %v1058 = vadd.f32 %v1009, %v1057
  %1059 = vdwg.mxu0
  %1060 = vmatpush.bf16.msra.mxu0 %v816
  %1061 = vmatpush.bf16.msra.mxu0 %v815
  %1062 = vmatpush.bf16.msra.mxu0 %v814
  %1063 = vmatpush.bf16.msra.mxu0 %v813
  %1064 = vmatpush.bf16.msra.mxu0 %v812
  %1065 = vmatpush.bf16.msra.mxu0 %v811
  %1066 = vmatpush.bf16.msra.mxu0 %v810
  %1067 = vmatpush.bf16.msra.mxu0 %v809
  %1068 = vmatmul.bf16.gmra.mxu0 %v404
  %v1069 = vpop.f32.mrf.mxu0
  %v1070 = vadd.f32 %v1021, %v1069
  %v1071 = vpop.f32.mrf.mxu0
  %v1072 = vadd.f32 %v1023, %v1071
  %1073 = vmatmul.bf16.gmra.mxu0 %v412
  %v1074 = vpop.f32.mrf.mxu0
  %v1075 = vadd.f32 %v1026, %v1074
  %v1076 = vpop.f32.mrf.mxu0
  %v1077 = vadd.f32 %v1028, %v1076
  %1078 = vmatmul.bf16.gmra.mxu0 %v420
  %v1079 = vpop.f32.mrf.mxu0
  %v1080 = vadd.f32 %v1031, %v1079
  %v1081 = vpop.f32.mrf.mxu0
  %v1082 = vadd.f32 %v1033, %v1081
  %1083 = vmatmul.bf16.gmra.mxu0 %v428
  %v1084 = vpop.f32.mrf.mxu0
  %v1085 = vadd.f32 %v1036, %v1084
  %v1086 = vpop.f32.mrf.mxu0
  %v1087 = vadd.f32 %v1038, %v1086
  %1088 = vmatmul.bf16.gmra.mxu0 %v436
  %v1089 = vpop.f32.mrf.mxu0
  %v1090 = vadd.f32 %v1041, %v1089
  %v1091 = vpop.f32.mrf.mxu0
  %v1092 = vadd.f32 %v1043, %v1091
  %1093 = vmatmul.bf16.gmra.mxu0 %v444
  %v1094 = vpop.f32.mrf.mxu0
  %v1095 = vadd.f32 %v1046, %v1094
  %v1096 = vpop.f32.mrf.mxu0
  %v1097 = vadd.f32 %v1048, %v1096
  %1098 = vmatmul.bf16.gmra.mxu0 %v452
  %v1099 = vpop.f32.mrf.mxu0
  %v1100 = vadd.f32 %v1051, %v1099
  %v1101 = vpop.f32.mrf.mxu0
  %v1102 = vadd.f32 %v1053, %v1101
  %1103 = vmatmul.bf16.gmra.mxu0 %v460
  %v1104 = vpop.f32.mrf.mxu0
  %v1105 = vadd.f32 %v1056, %v1104
  %v1106 = vpop.f32.mrf.mxu0
  %v1107 = vadd.f32 %v1058, %v1106
  %1108 = vdwg.mxu0
  %1109 = vmatpush.bf16.msra.mxu0 %v824
  %1110 = vmatpush.bf16.msra.mxu0 %v823
  %1111 = vmatpush.bf16.msra.mxu0 %v822
  %1112 = vmatpush.bf16.msra.mxu0 %v821
  %1113 = vmatpush.bf16.msra.mxu0 %v820
  %1114 = vmatpush.bf16.msra.mxu0 %v819
  %1115 = vmatpush.bf16.msra.mxu0 %v818
  %1116 = vmatpush.bf16.msra.mxu0 %v817
  %1117 = vmatmul.bf16.gmra.mxu0 %v405
  %v1118 = vpop.f32.mrf.mxu0
  %v1119 = vadd.f32 %v1070, %v1118
  %v1120 = vpop.f32.mrf.mxu0
  %v1121 = vadd.f32 %v1072, %v1120
  %1122 = vmatmul.bf16.gmra.mxu0 %v413
  %v1123 = vpop.f32.mrf.mxu0
  %v1124 = vadd.f32 %v1075, %v1123
  %v1125 = vpop.f32.mrf.mxu0
  %v1126 = vadd.f32 %v1077, %v1125
  %1127 = vmatmul.bf16.gmra.mxu0 %v421
  %v1128 = vpop.f32.mrf.mxu0
  %v1129 = vadd.f32 %v1080, %v1128
  %v1130 = vpop.f32.mrf.mxu0
  %v1131 = vadd.f32 %v1082, %v1130
  %1132 = vmatmul.bf16.gmra.mxu0 %v429
  %v1133 = vpop.f32.mrf.mxu0
  %v1134 = vadd.f32 %v1085, %v1133
  %v1135 = vpop.f32.mrf.mxu0
  %v1136 = vadd.f32 %v1087, %v1135
  %1137 = vmatmul.bf16.gmra.mxu0 %v437
  %v1138 = vpop.f32.mrf.mxu0
  %v1139 = vadd.f32 %v1090, %v1138
  %v1140 = vpop.f32.mrf.mxu0
  %v1141 = vadd.f32 %v1092, %v1140
  %1142 = vmatmul.bf16.gmra.mxu0 %v445
  %v1143 = vpop.f32.mrf.mxu0
  %v1144 = vadd.f32 %v1095, %v1143
  %v1145 = vpop.f32.mrf.mxu0
  %v1146 = vadd.f32 %v1097, %v1145
  %1147 = vmatmul.bf16.gmra.mxu0 %v453
  %v1148 = vpop.f32.mrf.mxu0
  %v1149 = vadd.f32 %v1100, %v1148
  %v1150 = vpop.f32.mrf.mxu0
  %v1151 = vadd.f32 %v1102, %v1150
  %1152 = vmatmul.bf16.gmra.mxu0 %v461
  %v1153 = vpop.f32.mrf.mxu0
  %v1154 = vadd.f32 %v1105, %v1153
  %v1155 = vpop.f32.mrf.mxu0
  %v1156 = vadd.f32 %v1107, %v1155
  %1157 = vdwg.mxu0
  %1158 = vmatpush.bf16.msra.mxu0 %v832
  %1159 = vmatpush.bf16.msra.mxu0 %v831
  %1160 = vmatpush.bf16.msra.mxu0 %v830
  %1161 = vmatpush.bf16.msra.mxu0 %v829
  %1162 = vmatpush.bf16.msra.mxu0 %v828
  %1163 = vmatpush.bf16.msra.mxu0 %v827
  %1164 = vmatpush.bf16.msra.mxu0 %v826
  %1165 = vmatpush.bf16.msra.mxu0 %v825
  %1166 = vmatmul.bf16.gmra.mxu0 %v406
  %v1167 = vpop.f32.mrf.mxu0
  %v1168 = vadd.f32 %v1119, %v1167
  %v1169 = vpop.f32.mrf.mxu0
  %v1170 = vadd.f32 %v1121, %v1169
  %1171 = vmatmul.bf16.gmra.mxu0 %v414
  %v1172 = vpop.f32.mrf.mxu0
  %v1173 = vadd.f32 %v1124, %v1172
  %v1174 = vpop.f32.mrf.mxu0
  %v1175 = vadd.f32 %v1126, %v1174
  %1176 = vmatmul.bf16.gmra.mxu0 %v422
  %v1177 = vpop.f32.mrf.mxu0
  %v1178 = vadd.f32 %v1129, %v1177
  %v1179 = vpop.f32.mrf.mxu0
  %v1180 = vadd.f32 %v1131, %v1179
  %1181 = vmatmul.bf16.gmra.mxu0 %v430
  %v1182 = vpop.f32.mrf.mxu0
  %v1183 = vadd.f32 %v1134, %v1182
  %v1184 = vpop.f32.mrf.mxu0
  %v1185 = vadd.f32 %v1136, %v1184
  %1186 = vmatmul.bf16.gmra.mxu0 %v438
  %v1187 = vpop.f32.mrf.mxu0
  %v1188 = vadd.f32 %v1139, %v1187
  %v1189 = vpop.f32.mrf.mxu0
  %v1190 = vadd.f32 %v1141, %v1189
  %1191 = vmatmul.bf16.gmra.mxu0 %v446
  %v1192 = vpop.f32.mrf.mxu0
  %v1193 = vadd.f32 %v1144, %v1192
  %v1194 = vpop.f32.mrf.mxu0
  %v1195 = vadd.f32 %v1146, %v1194
  %1196 = vmatmul.bf16.gmra.mxu0 %v454
  %v1197 = vpop.f32.mrf.mxu0
  %v1198 = vadd.f32 %v1149, %v1197
  %v1199 = vpop.f32.mrf.mxu0
  %v1200 = vadd.f32 %v1151, %v1199
  %1201 = vmatmul.bf16.gmra.mxu0 %v462
  %v1202 = vpop.f32.mrf.mxu0
  %v1203 = vadd.f32 %v1154, %v1202
  %v1204 = vpop.f32.mrf.mxu0
  %v1205 = vadd.f32 %v1156, %v1204
  %1206 = vdwg.mxu0
  %1207 = vmatpush.bf16.msra.mxu0 %v840
  %1208 = vmatpush.bf16.msra.mxu0 %v839
  %1209 = vmatpush.bf16.msra.mxu0 %v838
  %1210 = vmatpush.bf16.msra.mxu0 %v837
  %1211 = vmatpush.bf16.msra.mxu0 %v836
  %1212 = vmatpush.bf16.msra.mxu0 %v835
  %1213 = vmatpush.bf16.msra.mxu0 %v834
  %1214 = vmatpush.bf16.msra.mxu0 %v833
  %1215 = vmatmul.bf16.gmra.mxu0 %v407
  %v1216 = vpop.f32.mrf.mxu0
  %v1217 = vadd.f32 %v1168, %v1216
  %v1218 = vpop.f32.mrf.mxu0
  %v1219 = vadd.f32 %v1170, %v1218
  %1220 = vmatmul.bf16.gmra.mxu0 %v415
  %v1221 = vpop.f32.mrf.mxu0
  %v1222 = vadd.f32 %v1173, %v1221
  %v1223 = vpop.f32.mrf.mxu0
  %v1224 = vadd.f32 %v1175, %v1223
  %1225 = vmatmul.bf16.gmra.mxu0 %v423
  %v1226 = vpop.f32.mrf.mxu0
  %v1227 = vadd.f32 %v1178, %v1226
  %v1228 = vpop.f32.mrf.mxu0
  %v1229 = vadd.f32 %v1180, %v1228
  %1230 = vmatmul.bf16.gmra.mxu0 %v431
  %v1231 = vpop.f32.mrf.mxu0
  %v1232 = vadd.f32 %v1183, %v1231
  %v1233 = vpop.f32.mrf.mxu0
  %v1234 = vadd.f32 %v1185, %v1233
  %1235 = vmatmul.bf16.gmra.mxu0 %v439
  %v1236 = vpop.f32.mrf.mxu0
  %v1237 = vadd.f32 %v1188, %v1236
  %v1238 = vpop.f32.mrf.mxu0
  %v1239 = vadd.f32 %v1190, %v1238
  %1240 = vmatmul.bf16.gmra.mxu0 %v447
  %v1241 = vpop.f32.mrf.mxu0
  %v1242 = vadd.f32 %v1193, %v1241
  %v1243 = vpop.f32.mrf.mxu0
  %v1244 = vadd.f32 %v1195, %v1243
  %1245 = vmatmul.bf16.gmra.mxu0 %v455
  %v1246 = vpop.f32.mrf.mxu0
  %v1247 = vadd.f32 %v1198, %v1246
  %v1248 = vpop.f32.mrf.mxu0
  %v1249 = vadd.f32 %v1200, %v1248
  %1250 = vmatmul.bf16.gmra.mxu0 %v463
  %v1251 = vpop.f32.mrf.mxu0
  %v1252 = vadd.f32 %v1203, %v1251
  %v1253 = vpop.f32.mrf.mxu0
  %v1254 = vadd.f32 %v1205, %v1253
  %1255 = vdwg.mxu0
  %1256 = vmatpush.bf16.msra.mxu0 %v848
  %1257 = vmatpush.bf16.msra.mxu0 %v847
  %1258 = vmatpush.bf16.msra.mxu0 %v846
  %1259 = vmatpush.bf16.msra.mxu0 %v845
  %1260 = vmatpush.bf16.msra.mxu0 %v844
  %1261 = vmatpush.bf16.msra.mxu0 %v843
  %1262 = vmatpush.bf16.msra.mxu0 %v842
  %1263 = vmatpush.bf16.msra.mxu0 %v841
  %1264 = vmatmul.bf16.gmra.mxu0 %v408
  %v1265 = vpop.f32.mrf.mxu0
  %v1266 = vadd.f32 %v1217, %v1265
  %v1267 = vpop.f32.mrf.mxu0
  %v1268 = vadd.f32 %v1219, %v1267
  %1269 = vmatmul.bf16.gmra.mxu0 %v416
  %v1270 = vpop.f32.mrf.mxu0
  %v1271 = vadd.f32 %v1222, %v1270
  %v1272 = vpop.f32.mrf.mxu0
  %v1273 = vadd.f32 %v1224, %v1272
  %1274 = vmatmul.bf16.gmra.mxu0 %v424
  %v1275 = vpop.f32.mrf.mxu0
  %v1276 = vadd.f32 %v1227, %v1275
  %v1277 = vpop.f32.mrf.mxu0
  %v1278 = vadd.f32 %v1229, %v1277
  %1279 = vmatmul.bf16.gmra.mxu0 %v432
  %v1280 = vpop.f32.mrf.mxu0
  %v1281 = vadd.f32 %v1232, %v1280
  %v1282 = vpop.f32.mrf.mxu0
  %v1283 = vadd.f32 %v1234, %v1282
  %1284 = vmatmul.bf16.gmra.mxu0 %v440
  %v1285 = vpop.f32.mrf.mxu0
  %v1286 = vadd.f32 %v1237, %v1285
  %v1287 = vpop.f32.mrf.mxu0
  %v1288 = vadd.f32 %v1239, %v1287
  %1289 = vmatmul.bf16.gmra.mxu0 %v448
  %v1290 = vpop.f32.mrf.mxu0
  %v1291 = vadd.f32 %v1242, %v1290
  %v1292 = vpop.f32.mrf.mxu0
  %v1293 = vadd.f32 %v1244, %v1292
  %1294 = vmatmul.bf16.gmra.mxu0 %v456
  %v1295 = vpop.f32.mrf.mxu0
  %v1296 = vadd.f32 %v1247, %v1295
  %v1297 = vpop.f32.mrf.mxu0
  %v1298 = vadd.f32 %v1249, %v1297
  %1299 = vmatmul.bf16.gmra.mxu0 %v464
  %v1300 = vpop.f32.mrf.mxu0
  %v1301 = vadd.f32 %v1252, %v1300
  %v1302 = vpop.f32.mrf.mxu0
  %v1303 = vadd.f32 %v1254, %v1302
  %1304 = vdwg.mxu0
  %v1305 = vld [vmem:[%s2] sm:$0x1]
  %v1307 = vperm.slane %v1305, 0
  %v1309 = vmul.f32 %v1266, %v1307
  %v1310 = vmul.f32 %v1268, %v1307
  %v1311 = vmul.f32 %v1271, %v1307
  %v1312 = vmul.f32 %v1273, %v1307
  %v1313 = vmul.f32 %v1276, %v1307
  %v1314 = vmul.f32 %v1278, %v1307
  %v1315 = vmul.f32 %v1281, %v1307
  %v1316 = vmul.f32 %v1283, %v1307
  %v1317 = vmul.f32 %v1286, %v1307
  %v1318 = vmul.f32 %v1288, %v1307
  %v1319 = vmul.f32 %v1291, %v1307
  %v1320 = vmul.f32 %v1293, %v1307
  %v1321 = vmul.f32 %v1296, %v1307
  %v1322 = vmul.f32 %v1298, %v1307
  %v1323 = vmul.f32 %v1301, %v1307
  %v1324 = vmul.f32 %v1303, %v1307
  %v1325 = vld [vmem:[%s3] sm:$0x1]
  %v1327 = vperm.slane %v1325, 0
  %v1329 = vadd.f32 %v1309, %v1327
  %v1330 = vadd.f32 %v1310, %v1327
  %v1331 = vadd.f32 %v1311, %v1327
  %v1332 = vadd.f32 %v1312, %v1327
  %v1333 = vadd.f32 %v1313, %v1327
  %v1334 = vadd.f32 %v1314, %v1327
  %v1335 = vadd.f32 %v1315, %v1327
  %v1336 = vadd.f32 %v1316, %v1327
  %v1337 = vadd.f32 %v1317, %v1327
  %v1338 = vadd.f32 %v1318, %v1327
  %v1339 = vadd.f32 %v1319, %v1327
  %v1340 = vadd.f32 %v1320, %v1327
  %v1341 = vadd.f32 %v1321, %v1327
  %v1342 = vadd.f32 %v1322, %v1327
  %v1343 = vadd.f32 %v1323, %v1327
  %v1344 = vadd.f32 %v1324, %v1327
  %vm1345 = vcmp.gt.f32.partialorder %v1329, 0.0
  %vm1346 = vcmp.gt.f32.partialorder %v1330, 0.0
  %vm1347 = vcmp.gt.f32.partialorder %v1331, 0.0
  %vm1348 = vcmp.gt.f32.partialorder %v1332, 0.0
  %vm1349 = vcmp.gt.f32.partialorder %v1333, 0.0
  %vm1350 = vcmp.gt.f32.partialorder %v1334, 0.0
  %vm1351 = vcmp.gt.f32.partialorder %v1335, 0.0
  %vm1352 = vcmp.gt.f32.partialorder %v1336, 0.0
  %vm1353 = vcmp.gt.f32.partialorder %v1337, 0.0
  %vm1354 = vcmp.gt.f32.partialorder %v1338, 0.0
  %vm1355 = vcmp.gt.f32.partialorder %v1339, 0.0
  %vm1356 = vcmp.gt.f32.partialorder %v1340, 0.0
  %vm1357 = vcmp.gt.f32.partialorder %v1341, 0.0
  %vm1358 = vcmp.gt.f32.partialorder %v1342, 0.0
  %vm1359 = vcmp.gt.f32.partialorder %v1343, 0.0
  %vm1360 = vcmp.gt.f32.partialorder %v1344, 0.0
  %v1361 = vmul.f32 %v1329, 0.2
  %v1362 = vmul.f32 %v1330, 0.2
  %v1363 = vmul.f32 %v1331, 0.2
  %v1364 = vmul.f32 %v1332, 0.2
  %v1365 = vmul.f32 %v1333, 0.2
  %v1366 = vmul.f32 %v1334, 0.2
  %v1367 = vmul.f32 %v1335, 0.2
  %v1368 = vmul.f32 %v1336, 0.2
  %v1369 = vmul.f32 %v1337, 0.2
  %v1370 = vmul.f32 %v1338, 0.2
  %v1371 = vmul.f32 %v1339, 0.2
  %v1372 = vmul.f32 %v1340, 0.2
  %v1373 = vmul.f32 %v1341, 0.2
  %v1374 = vmul.f32 %v1342, 0.2
  %v1375 = vmul.f32 %v1343, 0.2
  %v1376 = vmul.f32 %v1344, 0.2
  %v1377 = vsel %vm1345, %v1329, %v1361
  %v1378 = vsel %vm1346, %v1330, %v1362
  %v1379 = vsel %vm1347, %v1331, %v1363
  %v1380 = vsel %vm1348, %v1332, %v1364
  %v1381 = vsel %vm1349, %v1333, %v1365
  %v1382 = vsel %vm1350, %v1334, %v1366
  %v1383 = vsel %vm1351, %v1335, %v1367
  %v1384 = vsel %vm1352, %v1336, %v1368
  %v1385 = vsel %vm1353, %v1337, %v1369
  %v1386 = vsel %vm1354, %v1338, %v1370
  %v1387 = vsel %vm1355, %v1339, %v1371
  %v1388 = vsel %vm1356, %v1340, %v1372
  %v1389 = vsel %vm1357, %v1341, %v1373
  %v1390 = vsel %vm1358, %v1342, %v1374
  %v1391 = vsel %vm1359, %v1343, %v1375
  %v1392 = vsel %vm1360, %v1344, %v1376
  %v1393 = vpack.c.bf16 %v1377, %v1377
  %v1394 = vpack.c.bf16 %v1378, %v1378
  %v1395 = vpack.c.bf16 %v1379, %v1379
  %v1396 = vpack.c.bf16 %v1380, %v1380
  %v1397 = vpack.c.bf16 %v1381, %v1381
  %v1398 = vpack.c.bf16 %v1382, %v1382
  %v1399 = vpack.c.bf16 %v1383, %v1383
  %v1400 = vpack.c.bf16 %v1384, %v1384
  %v1401 = vpack.c.bf16 %v1385, %v1385
  %v1402 = vpack.c.bf16 %v1386, %v1386
  %v1403 = vpack.c.bf16 %v1387, %v1387
  %v1404 = vpack.c.bf16 %v1388, %v1388
  %v1405 = vpack.c.bf16 %v1389, %v1389
  %v1406 = vpack.c.bf16 %v1390, %v1390
  %v1407 = vpack.c.bf16 %v1391, %v1391
  %v1408 = vpack.c.bf16 %v1392, %v1392
  %vm1409 = vcmask 519168
  %1410 = vst.msk [vmem:[%s4] sm:$0xf] %vm1409, %v1393
  %1411 = vst.msk [vmem:[%s4 + $0x4] sm:$0xf] %vm1409, %v1394
  %1412 = vst.msk [vmem:[%s4 + $0x8] sm:$0xf] %vm1409, %v1395
  %1413 = vst.msk [vmem:[%s4 + $0xc] sm:$0xf] %vm1409, %v1396
  %1414 = vst.msk [vmem:[%s4 + $0x10] sm:$0xf] %vm1409, %v1397
  %1415 = vst.msk [vmem:[%s4 + $0x14] sm:$0xf] %vm1409, %v1398
  %1416 = vst.msk [vmem:[%s4 + $0x18] sm:$0xf] %vm1409, %v1399
  %1417 = vst.msk [vmem:[%s4 + $0x1c] sm:$0xf] %vm1409, %v1400
  %1418 = vst.msk [vmem:[%s4 + $0x20] sm:$0xf] %vm1409, %v1401
  %1419 = vst.msk [vmem:[%s4 + $0x24] sm:$0xf] %vm1409, %v1402
  %1420 = vst.msk [vmem:[%s4 + $0x28] sm:$0xf] %vm1409, %v1403
  %1421 = vst.msk [vmem:[%s4 + $0x2c] sm:$0xf] %vm1409, %v1404
  %1422 = vst.msk [vmem:[%s4 + $0x30] sm:$0xf] %vm1409, %v1405
  %1423 = vst.msk [vmem:[%s4 + $0x34] sm:$0xf] %vm1409, %v1406
  %1424 = vst.msk [vmem:[%s4 + $0x38] sm:$0xf] %vm1409, %v1407
  %1425 = vst.msk [vmem:[%s4 + $0x3c] sm:$0xf] %vm1409, %v1408
  // Predicated region
  $region18: #{discriminator_forward.5} parent=0 // pred_check
    _
  $region19: #{discriminator_forward.5} parent=0 // pred_check_branch
    %1427 = sbr.rel (0) target = $region21
  $region20: #{discriminator_forward.5} parent=0 // pred_region
    _
  $region21: #{discriminator_forward.5} parent=0 // pred_fallthru
    _
  // Predicated region
  $region22: #{discriminator_forward.5} parent=0 // pred_check
    _
  $region23: #{discriminator_forward.5} parent=0 // pred_check_branch
    %1429 = sbr.rel (0) target = $region25
  $region24: #{discriminator_forward.5} parent=0 // pred_region
    _
  $region25: #{discriminator_forward.5} parent=0 // pred_fallthru
    _

// kernel: discriminator_forward.6
$region0: #{discriminator_forward.6}
  #allocation0 [shape = 'u32[]', space=smem, size = 0x4, offset = 0x4, fixed_abs, tag = 'smem constant byte address 0x4 - core index']
  #allocation1 [shape = 'u32[72,128]{1,0:T(1,128)}', space=vmem, size = 0x9000, scoped, tag = 'internal scratch']
  %s0 = inlined_call_operand.vmem [shape: bf16[32,1024], index: 0, kind: input, shape index: {}]
  %s1 = inlined_call_operand.vmem [shape: bf16[1024,64], index: 1, kind: input, shape index: {}]
  %s2 = inlined_call_operand.vmem [shape: f32[1,64], index: 2, kind: input, shape index: {}]
  %s3 = inlined_call_operand.vmem [shape: f32[1,64], index: 3, kind: input, shape index: {}]
  %s4 = inlined_call_operand.vmem [shape: bf16[32,64], index: 4, kind: output, shape index: {}]
  %s5 = sld [smem:[#allocation0]]
  $region26: #{discriminator_forward.6} parent=0
    _
  %s7 = ssub.s32 1, %s5
  %s8 = scalar_select 0, %s7, %s5
  // Predicated region
  $region2: #{discriminator_forward.6} parent=0 // pred_check
    _
  $region3: #{discriminator_forward.6} parent=0 // pred_check_branch
    %10 = sbr.rel (0) target = $region5
  $region4: #{discriminator_forward.6} parent=0 // pred_region
    _
  $region5: #{discriminator_forward.6} parent=0 // pred_fallthru
    _
  // Predicated region
  $region6: #{discriminator_forward.6} parent=0 // pred_check
    _
  $region7: #{discriminator_forward.6} parent=0 // pred_check_branch
    %12 = sbr.rel (0) target = $region9
  $region8: #{discriminator_forward.6} parent=0 // pred_region
    _
  $region9: #{discriminator_forward.6} parent=0 // pred_fallthru
    _
  // Predicated region
  $region10: #{discriminator_forward.6} parent=0 // pred_check
    _
  $region11: #{discriminator_forward.6} parent=0 // pred_check_branch
    %14 = sbr.rel (0) target = $region13
  $region12: #{discriminator_forward.6} parent=0 // pred_region
    _
  $region13: #{discriminator_forward.6} parent=0 // pred_fallthru
    _
  // Predicated region
  $region14: #{discriminator_forward.6} parent=0 // pred_check
    _
  $region15: #{discriminator_forward.6} parent=0 // pred_check_branch
    %16 = sbr.rel (0) target = $region17
  $region16: #{discriminator_forward.6} parent=0 // pred_region
    _
  $region17: #{discriminator_forward.6} parent=0 // pred_fallthru
    _
  %v17 = vld [vmem:[%s0] sm:$0xff]
  %v18 = vld [vmem:[%s0 + $0x8] sm:$0xff]
  %v19 = vld [vmem:[%s0 + $0x10] sm:$0xff]
  %v20 = vld [vmem:[%s0 + $0x18] sm:$0xff]
  %v21 = vld [vmem:[%s0 + $0x20] sm:$0xff]
  %v22 = vld [vmem:[%s0 + $0x28] sm:$0xff]
  %v23 = vld [vmem:[%s0 + $0x30] sm:$0xff]
  %v24 = vld [vmem:[%s0 + $0x38] sm:$0xff]
  %v25 = vld [vmem:[%s0 + $0x40] sm:$0xff]
  %v26 = vld [vmem:[%s0 + $0x48] sm:$0xff]
  %v27 = vld [vmem:[%s0 + $0x50] sm:$0xff]
  %v28 = vld [vmem:[%s0 + $0x58] sm:$0xff]
  %v29 = vld [vmem:[%s0 + $0x60] sm:$0xff]
  %v30 = vld [vmem:[%s0 + $0x68] sm:$0xff]
  %v31 = vld [vmem:[%s0 + $0x70] sm:$0xff]
  %v32 = vld [vmem:[%s0 + $0x78] sm:$0xff]
  %v33 = vld [vmem:[%s1] sm:$0xf]
  %v34 = vld [vmem:[%s1 + $0x4] sm:$0xf]
  %v35 = vld [vmem:[%s1 + $0x8] sm:$0xf]
  %v36 = vld [vmem:[%s1 + $0xc] sm:$0xf]
  %v37 = vld [vmem:[%s1 + $0x10] sm:$0xf]
  %v38 = vld [vmem:[%s1 + $0x14] sm:$0xf]
  %v39 = vld [vmem:[%s1 + $0x18] sm:$0xf]
  %v40 = vld [vmem:[%s1 + $0x1c] sm:$0xf]
  %v41 = vld [vmem:[%s1 + $0x20] sm:$0xf]
  %v42 = vld [vmem:[%s1 + $0x24] sm:$0xf]
  %v43 = vld [vmem:[%s1 + $0x28] sm:$0xf]
  %v44 = vld [vmem:[%s1 + $0x2c] sm:$0xf]
  %v45 = vld [vmem:[%s1 + $0x30] sm:$0xf]
  %v46 = vld [vmem:[%s1 + $0x34] sm:$0xf]
  %v47 = vld [vmem:[%s1 + $0x38] sm:$0xf]
  %v48 = vld [vmem:[%s1 + $0x3c] sm:$0xf]
  %v49 = vld [vmem:[%s1 + $0x40] sm:$0xf]
  %v50 = vld [vmem:[%s1 + $0x44] sm:$0xf]
  %v51 = vld [vmem:[%s1 + $0x48] sm:$0xf]
  %v52 = vld [vmem:[%s1 + $0x4c] sm:$0xf]
  %v53 = vld [vmem:[%s1 + $0x50] sm:$0xf]
  %v54 = vld [vmem:[%s1 + $0x54] sm:$0xf]
  %v55 = vld [vmem:[%s1 + $0x58] sm:$0xf]
  %v56 = vld [vmem:[%s1 + $0x5c] sm:$0xf]
  %v57 = vld [vmem:[%s1 + $0x60] sm:$0xf]
  %v58 = vld [vmem:[%s1 + $0x64] sm:$0xf]
  %v59 = vld [vmem:[%s1 + $0x68] sm:$0xf]
  %v60 = vld [vmem:[%s1 + $0x6c] sm:$0xf]
  %v61 = vld [vmem:[%s1 + $0x70] sm:$0xf]
  %v62 = vld [vmem:[%s1 + $0x74] sm:$0xf]
  %v63 = vld [vmem:[%s1 + $0x78] sm:$0xf]
  %v64 = vld [vmem:[%s1 + $0x7c] sm:$0xf]
  %v65 = vld [vmem:[%s1 + $0x80] sm:$0xf]
  %v66 = vld [vmem:[%s1 + $0x84] sm:$0xf]
  %v67 = vld [vmem:[%s1 + $0x88] sm:$0xf]
  %v68 = vld [vmem:[%s1 + $0x8c] sm:$0xf]
  %v69 = vld [vmem:[%s1 + $0x90] sm:$0xf]
  %v70 = vld [vmem:[%s1 + $0x94] sm:$0xf]
  %v71 = vld [vmem:[%s1 + $0x98] sm:$0xf]
  %v72 = vld [vmem:[%s1 + $0x9c] sm:$0xf]
  %v73 = vld [vmem:[%s1 + $0xa0] sm:$0xf]
  %v74 = vld [vmem:[%s1 + $0xa4] sm:$0xf]
  %v75 = vld [vmem:[%s1 + $0xa8] sm:$0xf]
  %v76 = vld [vmem:[%s1 + $0xac] sm:$0xf]
  %v77 = vld [vmem:[%s1 + $0xb0] sm:$0xf]
  %v78 = vld [vmem:[%s1 + $0xb4] sm:$0xf]
  %v79 = vld [vmem:[%s1 + $0xb8] sm:$0xf]
  %v80 = vld [vmem:[%s1 + $0xbc] sm:$0xf]
  %v81 = vld [vmem:[%s1 + $0xc0] sm:$0xf]
  %v82 = vld [vmem:[%s1 + $0xc4] sm:$0xf]
  %v83 = vld [vmem:[%s1 + $0xc8] sm:$0xf]
  %v84 = vld [vmem:[%s1 + $0xcc] sm:$0xf]
  %v85 = vld [vmem:[%s1 + $0xd0] sm:$0xf]
  %v86 = vld [vmem:[%s1 + $0xd4] sm:$0xf]
  %v87 = vld [vmem:[%s1 + $0xd8] sm:$0xf]
  %v88 = vld [vmem:[%s1 + $0xdc] sm:$0xf]
  %v89 = vld [vmem:[%s1 + $0xe0] sm:$0xf]
  %v90 = vld [vmem:[%s1 + $0xe4] sm:$0xf]
  %v91 = vld [vmem:[%s1 + $0xe8] sm:$0xf]
  %v92 = vld [vmem:[%s1 + $0xec] sm:$0xf]
  %v93 = vld [vmem:[%s1 + $0xf0] sm:$0xf]
  %v94 = vld [vmem:[%s1 + $0xf4] sm:$0xf]
  %v95 = vld [vmem:[%s1 + $0xf8] sm:$0xf]
  %v96 = vld [vmem:[%s1 + $0xfc] sm:$0xf]
  %v97 = vld [vmem:[%s1 + $0x100] sm:$0xf]
  %v98 = vld [vmem:[%s1 + $0x104] sm:$0xf]
  %v99 = vld [vmem:[%s1 + $0x108] sm:$0xf]
  %v100 = vld [vmem:[%s1 + $0x10c] sm:$0xf]
  %v101 = vld [vmem:[%s1 + $0x110] sm:$0xf]
  %v102 = vld [vmem:[%s1 + $0x114] sm:$0xf]
  %v103 = vld [vmem:[%s1 + $0x118] sm:$0xf]
  %v104 = vld [vmem:[%s1 + $0x11c] sm:$0xf]
  %v105 = vld [vmem:[%s1 + $0x120] sm:$0xf]
  %v106 = vld [vmem:[%s1 + $0x124] sm:$0xf]
  %v107 = vld [vmem:[%s1 + $0x128] sm:$0xf]
  %v108 = vld [vmem:[%s1 + $0x12c] sm:$0xf]
  %v109 = vld [vmem:[%s1 + $0x130] sm:$0xf]
  %v110 = vld [vmem:[%s1 + $0x134] sm:$0xf]
  %v111 = vld [vmem:[%s1 + $0x138] sm:$0xf]
  %v112 = vld [vmem:[%s1 + $0x13c] sm:$0xf]
  %v113 = vld [vmem:[%s1 + $0x140] sm:$0xf]
  %v114 = vld [vmem:[%s1 + $0x144] sm:$0xf]
  %v115 = vld [vmem:[%s1 + $0x148] sm:$0xf]
  %v116 = vld [vmem:[%s1 + $0x14c] sm:$0xf]
  %v117 = vld [vmem:[%s1 + $0x150] sm:$0xf]
  %v118 = vld [vmem:[%s1 + $0x154] sm:$0xf]
  %v119 = vld [vmem:[%s1 + $0x158] sm:$0xf]
  %v120 = vld [vmem:[%s1 + $0x15c] sm:$0xf]
  %v121 = vld [vmem:[%s1 + $0x160] sm:$0xf]
  %v122 = vld [vmem:[%s1 + $0x164] sm:$0xf]
  %v123 = vld [vmem:[%s1 + $0x168] sm:$0xf]
  %v124 = vld [vmem:[%s1 + $0x16c] sm:$0xf]
  %v125 = vld [vmem:[%s1 + $0x170] sm:$0xf]
  %v126 = vld [vmem:[%s1 + $0x174] sm:$0xf]
  %v127 = vld [vmem:[%s1 + $0x178] sm:$0xf]
  %v128 = vld [vmem:[%s1 + $0x17c] sm:$0xf]
  %v129 = vld [vmem:[%s1 + $0x180] sm:$0xf]
  %v130 = vld [vmem:[%s1 + $0x184] sm:$0xf]
  %v131 = vld [vmem:[%s1 + $0x188] sm:$0xf]
  %v132 = vld [vmem:[%s1 + $0x18c] sm:$0xf]
  %v133 = vld [vmem:[%s1 + $0x190] sm:$0xf]
  %v134 = vld [vmem:[%s1 + $0x194] sm:$0xf]
  %v135 = vld [vmem:[%s1 + $0x198] sm:$0xf]
  %v136 = vld [vmem:[%s1 + $0x19c] sm:$0xf]
  %v137 = vld [vmem:[%s1 + $0x1a0] sm:$0xf]
  %v138 = vld [vmem:[%s1 + $0x1a4] sm:$0xf]
  %v139 = vld [vmem:[%s1 + $0x1a8] sm:$0xf]
  %v140 = vld [vmem:[%s1 + $0x1ac] sm:$0xf]
  %v141 = vld [vmem:[%s1 + $0x1b0] sm:$0xf]
  %v142 = vld [vmem:[%s1 + $0x1b4] sm:$0xf]
  %v143 = vld [vmem:[%s1 + $0x1b8] sm:$0xf]
  %v144 = vld [vmem:[%s1 + $0x1bc] sm:$0xf]
  %v145 = vld [vmem:[%s1 + $0x1c0] sm:$0xf]
  %v146 = vld [vmem:[%s1 + $0x1c4] sm:$0xf]
  %v147 = vld [vmem:[%s1 + $0x1c8] sm:$0xf]
  %v148 = vld [vmem:[%s1 + $0x1cc] sm:$0xf]
  %v149 = vld [vmem:[%s1 + $0x1d0] sm:$0xf]
  %v150 = vld [vmem:[%s1 + $0x1d4] sm:$0xf]
  %v151 = vld [vmem:[%s1 + $0x1d8] sm:$0xf]
  %v152 = vld [vmem:[%s1 + $0x1dc] sm:$0xf]
  %v153 = vld [vmem:[%s1 + $0x1e0] sm:$0xf]
  %v154 = vld [vmem:[%s1 + $0x1e4] sm:$0xf]
  %v155 = vld [vmem:[%s1 + $0x1e8] sm:$0xf]
  %v156 = vld [vmem:[%s1 + $0x1ec] sm:$0xf]
  %v157 = vld [vmem:[%s1 + $0x1f0] sm:$0xf]
  %v158 = vld [vmem:[%s1 + $0x1f4] sm:$0xf]
  %v159 = vld [vmem:[%s1 + $0x1f8] sm:$0xf]
  %v160 = vld [vmem:[%s1 + $0x1fc] sm:$0xf]
  %v177 = vunpack.c.l.b16 %v17
  %v178 = vunpack.c.h.b16 %v17
  %v179 = vunpack.c.l.b16 %v18
  %v180 = vunpack.c.h.b16 %v18
  %v181 = vunpack.c.l.b16 %v19
  %v182 = vunpack.c.h.b16 %v19
  %v183 = vunpack.c.l.b16 %v20
  %v184 = vunpack.c.h.b16 %v20
  %v185 = vunpack.c.l.b16 %v21
  %v186 = vunpack.c.h.b16 %v21
  %v187 = vunpack.c.l.b16 %v22
  %v188 = vunpack.c.h.b16 %v22
  %v189 = vunpack.c.l.b16 %v23
  %v190 = vunpack.c.h.b16 %v23
  %v191 = vunpack.c.l.b16 %v24
  %v192 = vunpack.c.h.b16 %v24
  %v193 = vunpack.c.l.b16 %v25
  %v194 = vunpack.c.h.b16 %v25
  %v195 = vunpack.c.l.b16 %v26
  %v196 = vunpack.c.h.b16 %v26
  %v197 = vunpack.c.l.b16 %v27
  %v198 = vunpack.c.h.b16 %v27
  %v199 = vunpack.c.l.b16 %v28
  %v200 = vunpack.c.h.b16 %v28
  %v201 = vunpack.c.l.b16 %v29
  %v202 = vunpack.c.h.b16 %v29
  %v203 = vunpack.c.l.b16 %v30
  %v204 = vunpack.c.h.b16 %v30
  %v205 = vunpack.c.l.b16 %v31
  %v206 = vunpack.c.h.b16 %v31
  %v207 = vunpack.c.l.b16 %v32
  %v208 = vunpack.c.h.b16 %v32
  %v209 = vpack.c.b16 %v185, %v177
  %v210 = vpack.c.b16 %v186, %v178
  %v211 = vpack.c.b16 %v187, %v179
  %v212 = vpack.c.b16 %v188, %v180
  %v213 = vpack.c.b16 %v189, %v181
  %v214 = vpack.c.b16 %v190, %v182
  %v215 = vpack.c.b16 %v191, %v183
  %v216 = vpack.c.b16 %v192, %v184
  %v217 = vpack.c.b16 %v201, %v193
  %v218 = vpack.c.b16 %v202, %v194
  %v219 = vpack.c.b16 %v203, %v195
  %v220 = vpack.c.b16 %v204, %v196
  %v221 = vpack.c.b16 %v205, %v197
  %v222 = vpack.c.b16 %v206, %v198
  %v223 = vpack.c.b16 %v207, %v199
  %v224 = vpack.c.b16 %v208, %v200
  %v369 = vunpack.c.l.b16 %v33
  %v370 = vunpack.c.l.b16 %v34
  %v371 = vunpack.c.l.b16 %v35
  %v372 = vunpack.c.l.b16 %v36
  %v373 = vunpack.c.l.b16 %v37
  %v374 = vunpack.c.l.b16 %v38
  %v375 = vunpack.c.l.b16 %v39
  %v376 = vunpack.c.l.b16 %v40
  %v377 = vunpack.c.l.b16 %v41
  %v378 = vunpack.c.l.b16 %v42
  %v379 = vunpack.c.l.b16 %v43
  %v380 = vunpack.c.l.b16 %v44
  %v381 = vunpack.c.l.b16 %v45
  %v382 = vunpack.c.l.b16 %v46
  %v383 = vunpack.c.l.b16 %v47
  %v384 = vunpack.c.l.b16 %v48
  %v385 = vunpack.c.l.b16 %v49
  %v386 = vunpack.c.l.b16 %v50
  %v387 = vunpack.c.l.b16 %v51
  %v388 = vunpack.c.l.b16 %v52
  %v389 = vunpack.c.l.b16 %v53
  %v390 = vunpack.c.l.b16 %v54
  %v391 = vunpack.c.l.b16 %v55
  %v392 = vunpack.c.l.b16 %v56
  %v393 = vunpack.c.l.b16 %v57
  %v394 = vunpack.c.l.b16 %v58
  %v395 = vunpack.c.l.b16 %v59
  %v396 = vunpack.c.l.b16 %v60
  %v397 = vunpack.c.l.b16 %v61
  %v398 = vunpack.c.l.b16 %v62
  %v399 = vunpack.c.l.b16 %v63
  %v400 = vunpack.c.l.b16 %v64
  %v401 = vunpack.c.l.b16 %v65
  %v402 = vunpack.c.l.b16 %v66
  %v403 = vunpack.c.l.b16 %v67
  %v404 = vunpack.c.l.b16 %v68
  %v405 = vunpack.c.l.b16 %v69
  %v406 = vunpack.c.l.b16 %v70
  %v407 = vunpack.c.l.b16 %v71
  %v408 = vunpack.c.l.b16 %v72
  %v409 = vunpack.c.l.b16 %v73
  %v410 = vunpack.c.l.b16 %v74
  %v411 = vunpack.c.l.b16 %v75
  %v412 = vunpack.c.l.b16 %v76
  %v413 = vunpack.c.l.b16 %v77
  %v414 = vunpack.c.l.b16 %v78
  %v415 = vunpack.c.l.b16 %v79
  %v416 = vunpack.c.l.b16 %v80
  %v417 = vunpack.c.l.b16 %v81
  %v418 = vunpack.c.l.b16 %v82
  %v419 = vunpack.c.l.b16 %v83
  %v420 = vunpack.c.l.b16 %v84
  %v421 = vunpack.c.l.b16 %v85
  %v422 = vunpack.c.l.b16 %v86
  %v423 = vunpack.c.l.b16 %v87
  %v424 = vunpack.c.l.b16 %v88
  %v425 = vunpack.c.l.b16 %v89
  %v426 = vunpack.c.l.b16 %v90
  %v427 = vunpack.c.l.b16 %v91
  %v428 = vunpack.c.l.b16 %v92
  %v429 = vunpack.c.l.b16 %v93
  %v430 = vunpack.c.l.b16 %v94
  %v431 = vunpack.c.l.b16 %v95
  %v432 = vunpack.c.l.b16 %v96
  %v433 = vunpack.c.l.b16 %v97
  %v434 = vunpack.c.l.b16 %v98
  %v435 = vunpack.c.l.b16 %v99
  %v436 = vunpack.c.l.b16 %v100
  %v437 = vunpack.c.l.b16 %v101
  %v438 = vunpack.c.l.b16 %v102
  %v439 = vunpack.c.l.b16 %v103
  %v440 = vunpack.c.l.b16 %v104
  %v441 = vunpack.c.l.b16 %v105
  %v442 = vunpack.c.l.b16 %v106
  %v443 = vunpack.c.l.b16 %v107
  %v444 = vunpack.c.l.b16 %v108
  %v445 = vunpack.c.l.b16 %v109
  %v446 = vunpack.c.l.b16 %v110
  %v447 = vunpack.c.l.b16 %v111
  %v448 = vunpack.c.l.b16 %v112
  %v449 = vunpack.c.l.b16 %v113
  %v450 = vunpack.c.l.b16 %v114
  %v451 = vunpack.c.l.b16 %v115
  %v452 = vunpack.c.l.b16 %v116
  %v453 = vunpack.c.l.b16 %v117
  %v454 = vunpack.c.l.b16 %v118
  %v455 = vunpack.c.l.b16 %v119
  %v456 = vunpack.c.l.b16 %v120
  %v457 = vunpack.c.l.b16 %v121
  %v458 = vunpack.c.l.b16 %v122
  %v459 = vunpack.c.l.b16 %v123
  %v460 = vunpack.c.l.b16 %v124
  %v461 = vunpack.c.l.b16 %v125
  %v462 = vunpack.c.l.b16 %v126
  %v463 = vunpack.c.l.b16 %v127
  %v464 = vunpack.c.l.b16 %v128
  %v465 = vunpack.c.l.b16 %v129
  %v466 = vunpack.c.l.b16 %v130
  %v467 = vunpack.c.l.b16 %v131
  %v468 = vunpack.c.l.b16 %v132
  %v469 = vunpack.c.l.b16 %v133
  %v470 = vunpack.c.l.b16 %v134
  %v471 = vunpack.c.l.b16 %v135
  %v472 = vunpack.c.l.b16 %v136
  %v473 = vunpack.c.l.b16 %v137
  %v474 = vunpack.c.l.b16 %v138
  %v475 = vunpack.c.l.b16 %v139
  %v476 = vunpack.c.l.b16 %v140
  %v477 = vunpack.c.l.b16 %v141
  %v478 = vunpack.c.l.b16 %v142
  %v479 = vunpack.c.l.b16 %v143
  %v480 = vunpack.c.l.b16 %v144
  %v481 = vunpack.c.l.b16 %v145
  %v482 = vunpack.c.l.b16 %v146
  %v483 = vunpack.c.l.b16 %v147
  %v484 = vunpack.c.l.b16 %v148
  %v485 = vunpack.c.l.b16 %v149
  %v486 = vunpack.c.l.b16 %v150
  %v487 = vunpack.c.l.b16 %v151
  %v488 = vunpack.c.l.b16 %v152
  %v489 = vunpack.c.l.b16 %v153
  %v490 = vunpack.c.l.b16 %v154
  %v491 = vunpack.c.l.b16 %v155
  %v492 = vunpack.c.l.b16 %v156
  %v493 = vunpack.c.l.b16 %v157
  %v494 = vunpack.c.l.b16 %v158
  %v495 = vunpack.c.l.b16 %v159
  %v496 = vunpack.c.l.b16 %v160
  %v497 = vpack.c.b16 %v370, %v369
  %v498 = vpack.c.b16 %v372, %v371
  %v499 = vpack.c.b16 %v374, %v373
  %v500 = vpack.c.b16 %v376, %v375
  %v501 = vpack.c.b16 %v378, %v377
  %v502 = vpack.c.b16 %v380, %v379
  %v503 = vpack.c.b16 %v382, %v381
  %v504 = vpack.c.b16 %v384, %v383
  %v505 = vpack.c.b16 %v386, %v385
  %v506 = vpack.c.b16 %v388, %v387
  %v507 = vpack.c.b16 %v390, %v389
  %v508 = vpack.c.b16 %v392, %v391
  %v509 = vpack.c.b16 %v394, %v393
  %v510 = vpack.c.b16 %v396, %v395
  %v511 = vpack.c.b16 %v398, %v397
  %v512 = vpack.c.b16 %v400, %v399
  %v513 = vpack.c.b16 %v402, %v401
  %v514 = vpack.c.b16 %v404, %v403
  %v515 = vpack.c.b16 %v406, %v405
  %v516 = vpack.c.b16 %v408, %v407
  %v517 = vpack.c.b16 %v410, %v409
  %v518 = vpack.c.b16 %v412, %v411
  %v519 = vpack.c.b16 %v414, %v413
  %v520 = vpack.c.b16 %v416, %v415
  %v521 = vpack.c.b16 %v418, %v417
  %v522 = vpack.c.b16 %v420, %v419
  %v523 = vpack.c.b16 %v422, %v421
  %v524 = vpack.c.b16 %v424, %v423
  %v525 = vpack.c.b16 %v426, %v425
  %v526 = vpack.c.b16 %v428, %v427
  %v527 = vpack.c.b16 %v430, %v429
  %v528 = vpack.c.b16 %v432, %v431
  %v529 = vpack.c.b16 %v434, %v433
  %v530 = vpack.c.b16 %v436, %v435
  %v531 = vpack.c.b16 %v438, %v437
  %v532 = vpack.c.b16 %v440, %v439
  %v533 = vpack.c.b16 %v442, %v441
  %v534 = vpack.c.b16 %v444, %v443
  %v535 = vpack.c.b16 %v446, %v445
  %v536 = vpack.c.b16 %v448, %v447
  %v537 = vpack.c.b16 %v450, %v449
  %v538 = vpack.c.b16 %v452, %v451
  %v539 = vpack.c.b16 %v454, %v453
  %v540 = vpack.c.b16 %v456, %v455
  %v541 = vpack.c.b16 %v458, %v457
  %v542 = vpack.c.b16 %v460, %v459
  %v543 = vpack.c.b16 %v462, %v461
  %v544 = vpack.c.b16 %v464, %v463
  %v545 = vpack.c.b16 %v466, %v465
  %v546 = vpack.c.b16 %v468, %v467
  %v547 = vpack.c.b16 %v470, %v469
  %v548 = vpack.c.b16 %v472, %v471
  %v549 = vpack.c.b16 %v474, %v473
  %v550 = vpack.c.b16 %v476, %v475
  %v551 = vpack.c.b16 %v478, %v477
  %v552 = vpack.c.b16 %v480, %v479
  %v553 = vpack.c.b16 %v482, %v481
  %v554 = vpack.c.b16 %v484, %v483
  %v555 = vpack.c.b16 %v486, %v485
  %v556 = vpack.c.b16 %v488, %v487
  %v557 = vpack.c.b16 %v490, %v489
  %v558 = vpack.c.b16 %v492, %v491
  %v559 = vpack.c.b16 %v494, %v493
  %v560 = vpack.c.b16 %v496, %v495
  %625 = vmatpush.bf16.msra.mxu0 %v504
  %626 = vmatpush.bf16.msra.mxu0 %v503
  %627 = vmatpush.bf16.msra.mxu0 %v502
  %628 = vmatpush.bf16.msra.mxu0 %v501
  %629 = vmatpush.bf16.msra.mxu0 %v500
  %630 = vmatpush.bf16.msra.mxu0 %v499
  %631 = vmatpush.bf16.msra.mxu0 %v498
  %632 = vmatpush.bf16.msra.mxu0 %v497
  %633 = vmatmul.bf16.gmra.mxu0 %v209
  %v634 = vpop.f32.mrf.mxu0
  %v635 = vadd.f32 0.0, %v634
  %v636 = vpop.f32.mrf.mxu0
  %v637 = vadd.f32 0.0, %v636
  %638 = vmatmul.bf16.gmra.mxu0 %v217
  %v639 = vpop.f32.mrf.mxu0
  %v640 = vadd.f32 0.0, %v639
  %v641 = vpop.f32.mrf.mxu0
  %v642 = vadd.f32 0.0, %v641
  %643 = vdwg.mxu0
  %644 = vmatpush.bf16.msra.mxu0 %v512
  %645 = vmatpush.bf16.msra.mxu0 %v511
  %646 = vmatpush.bf16.msra.mxu0 %v510
  %647 = vmatpush.bf16.msra.mxu0 %v509
  %648 = vmatpush.bf16.msra.mxu0 %v508
  %649 = vmatpush.bf16.msra.mxu0 %v507
  %650 = vmatpush.bf16.msra.mxu0 %v506
  %651 = vmatpush.bf16.msra.mxu0 %v505
  %652 = vmatmul.bf16.gmra.mxu0 %v210
  %v653 = vpop.f32.mrf.mxu0
  %v654 = vadd.f32 %v635, %v653
  %v655 = vpop.f32.mrf.mxu0
  %v656 = vadd.f32 %v637, %v655
  %657 = vmatmul.bf16.gmra.mxu0 %v218
  %v658 = vpop.f32.mrf.mxu0
  %v659 = vadd.f32 %v640, %v658
  %v660 = vpop.f32.mrf.mxu0
  %v661 = vadd.f32 %v642, %v660
  %662 = vdwg.mxu0
  %663 = vmatpush.bf16.msra.mxu0 %v520
  %664 = vmatpush.bf16.msra.mxu0 %v519
  %665 = vmatpush.bf16.msra.mxu0 %v518
  %666 = vmatpush.bf16.msra.mxu0 %v517
  %667 = vmatpush.bf16.msra.mxu0 %v516
  %668 = vmatpush.bf16.msra.mxu0 %v515
  %669 = vmatpush.bf16.msra.mxu0 %v514
  %670 = vmatpush.bf16.msra.mxu0 %v513
  %671 = vmatmul.bf16.gmra.mxu0 %v211
  %v672 = vpop.f32.mrf.mxu0
  %v673 = vadd.f32 %v654, %v672
  %v674 = vpop.f32.mrf.mxu0
  %v675 = vadd.f32 %v656, %v674
  %676 = vmatmul.bf16.gmra.mxu0 %v219
  %v677 = vpop.f32.mrf.mxu0
  %v678 = vadd.f32 %v659, %v677
  %v679 = vpop.f32.mrf.mxu0
  %v680 = vadd.f32 %v661, %v679
  %681 = vdwg.mxu0
  %682 = vmatpush.bf16.msra.mxu0 %v528
  %683 = vmatpush.bf16.msra.mxu0 %v527
  %684 = vmatpush.bf16.msra.mxu0 %v526
  %685 = vmatpush.bf16.msra.mxu0 %v525
  %686 = vmatpush.bf16.msra.mxu0 %v524
  %687 = vmatpush.bf16.msra.mxu0 %v523
  %688 = vmatpush.bf16.msra.mxu0 %v522
  %689 = vmatpush.bf16.msra.mxu0 %v521
  %690 = vmatmul.bf16.gmra.mxu0 %v212
  %v691 = vpop.f32.mrf.mxu0
  %v692 = vadd.f32 %v673, %v691
  %v693 = vpop.f32.mrf.mxu0
  %v694 = vadd.f32 %v675, %v693
  %695 = vmatmul.bf16.gmra.mxu0 %v220
  %v696 = vpop.f32.mrf.mxu0
  %v697 = vadd.f32 %v678, %v696
  %v698 = vpop.f32.mrf.mxu0
  %v699 = vadd.f32 %v680, %v698
  %700 = vdwg.mxu0
  %701 = vmatpush.bf16.msra.mxu0 %v536
  %702 = vmatpush.bf16.msra.mxu0 %v535
  %703 = vmatpush.bf16.msra.mxu0 %v534
  %704 = vmatpush.bf16.msra.mxu0 %v533
  %705 = vmatpush.bf16.msra.mxu0 %v532
  %706 = vmatpush.bf16.msra.mxu0 %v531
  %707 = vmatpush.bf16.msra.mxu0 %v530
  %708 = vmatpush.bf16.msra.mxu0 %v529
  %709 = vmatmul.bf16.gmra.mxu0 %v213
  %v710 = vpop.f32.mrf.mxu0
  %v711 = vadd.f32 %v692, %v710
  %v712 = vpop.f32.mrf.mxu0
  %v713 = vadd.f32 %v694, %v712
  %714 = vmatmul.bf16.gmra.mxu0 %v221
  %v715 = vpop.f32.mrf.mxu0
  %v716 = vadd.f32 %v697, %v715
  %v717 = vpop.f32.mrf.mxu0
  %v718 = vadd.f32 %v699, %v717
  %719 = vdwg.mxu0
  %720 = vmatpush.bf16.msra.mxu0 %v544
  %721 = vmatpush.bf16.msra.mxu0 %v543
  %722 = vmatpush.bf16.msra.mxu0 %v542
  %723 = vmatpush.bf16.msra.mxu0 %v541
  %724 = vmatpush.bf16.msra.mxu0 %v540
  %725 = vmatpush.bf16.msra.mxu0 %v539
  %726 = vmatpush.bf16.msra.mxu0 %v538
  %727 = vmatpush.bf16.msra.mxu0 %v537
  %728 = vmatmul.bf16.gmra.mxu0 %v214
  %v729 = vpop.f32.mrf.mxu0
  %v730 = vadd.f32 %v711, %v729
  %v731 = vpop.f32.mrf.mxu0
  %v732 = vadd.f32 %v713, %v731
  %733 = vmatmul.bf16.gmra.mxu0 %v222
  %v734 = vpop.f32.mrf.mxu0
  %v735 = vadd.f32 %v716, %v734
  %v736 = vpop.f32.mrf.mxu0
  %v737 = vadd.f32 %v718, %v736
  %738 = vdwg.mxu0
  %739 = vmatpush.bf16.msra.mxu0 %v552
  %740 = vmatpush.bf16.msra.mxu0 %v551
  %741 = vmatpush.bf16.msra.mxu0 %v550
  %742 = vmatpush.bf16.msra.mxu0 %v549
  %743 = vmatpush.bf16.msra.mxu0 %v548
  %744 = vmatpush.bf16.msra.mxu0 %v547
  %745 = vmatpush.bf16.msra.mxu0 %v546
  %746 = vmatpush.bf16.msra.mxu0 %v545
  %747 = vmatmul.bf16.gmra.mxu0 %v215
  %v748 = vpop.f32.mrf.mxu0
  %v749 = vadd.f32 %v730, %v748
  %v750 = vpop.f32.mrf.mxu0
  %v751 = vadd.f32 %v732, %v750
  %752 = vmatmul.bf16.gmra.mxu0 %v223
  %v753 = vpop.f32.mrf.mxu0
  %v754 = vadd.f32 %v735, %v753
  %v755 = vpop.f32.mrf.mxu0
  %v756 = vadd.f32 %v737, %v755
  %757 = vdwg.mxu0
  %758 = vmatpush.bf16.msra.mxu0 %v560
  %759 = vmatpush.bf16.msra.mxu0 %v559
  %760 = vmatpush.bf16.msra.mxu0 %v558
  %761 = vmatpush.bf16.msra.mxu0 %v557
  %762 = vmatpush.bf16.msra.mxu0 %v556
  %763 = vmatpush.bf16.msra.mxu0 %v555
  %764 = vmatpush.bf16.msra.mxu0 %v554
  %765 = vmatpush.bf16.msra.mxu0 %v553
  %766 = vmatmul.bf16.gmra.mxu0 %v216
  %v767 = vpop.f32.mrf.mxu0
  %v768 = vadd.f32 %v749, %v767
  %v769 = vpop.f32.mrf.mxu0
  %v770 = vadd.f32 %v751, %v769
  %771 = vmatmul.bf16.gmra.mxu0 %v224
  %v772 = vpop.f32.mrf.mxu0
  %v773 = vadd.f32 %v754, %v772
  %v774 = vpop.f32.mrf.mxu0
  %v775 = vadd.f32 %v756, %v774
  %776 = vdwg.mxu0
  %v777 = vld [vmem:[%s2] sm:$0x1]
  %v779 = vperm.slane %v777, 0
  %v781 = vmul.f32 %v768, %v779
  %v782 = vmul.f32 %v770, %v779
  %v783 = vmul.f32 %v773, %v779
  %v784 = vmul.f32 %v775, %v779
  %v785 = vld [vmem:[%s3] sm:$0x1]
  %v787 = vperm.slane %v785, 0
  %v789 = vadd.f32 %v781, %v787
  %v790 = vadd.f32 %v782, %v787
  %v791 = vadd.f32 %v783, %v787
  %v792 = vadd.f32 %v784, %v787
  %vm793 = vcmp.gt.f32.partialorder %v789, 0.0
  %vm794 = vcmp.gt.f32.partialorder %v790, 0.0
  %vm795 = vcmp.gt.f32.partialorder %v791, 0.0
  %vm796 = vcmp.gt.f32.partialorder %v792, 0.0
  %v797 = vmul.f32 %v789, 0.2
  %v798 = vmul.f32 %v790, 0.2
  %v799 = vmul.f32 %v791, 0.2
  %v800 = vmul.f32 %v792, 0.2
  %v801 = vsel %vm793, %v789, %v797
  %v802 = vsel %vm794, %v790, %v798
  %v803 = vsel %vm795, %v791, %v799
  %v804 = vsel %vm796, %v792, %v800
  %v805 = vpack.c.bf16 %v801, %v801
  %v806 = vpack.c.bf16 %v802, %v802
  %v807 = vpack.c.bf16 %v803, %v803
  %v808 = vpack.c.bf16 %v804, %v804
  %vm809 = vcmask 519168
  %810 = vst.msk [vmem:[%s4] sm:$0xf] %vm809, %v805
  %811 = vst.msk [vmem:[%s4 + $0x4] sm:$0xf] %vm809, %v806
  %812 = vst.msk [vmem:[%s4 + $0x8] sm:$0xf] %vm809, %v807
  %813 = vst.msk [vmem:[%s4 + $0xc] sm:$0xf] %vm809, %v808
  // Predicated region
  $region18: #{discriminator_forward.6} parent=0 // pred_check
    _
  $region19: #{discriminator_forward.6} parent=0 // pred_check_branch
    %815 = sbr.rel (0) target = $region21
  $region20: #{discriminator_forward.6} parent=0 // pred_region
    _
  $region21: #{discriminator_forward.6} parent=0 // pred_fallthru
    _
  // Predicated region
  $region22: #{discriminator_forward.6} parent=0 // pred_check
    _
  $region23: #{discriminator_forward.6} parent=0 // pred_check_branch
    %817 = sbr.rel (0) target = $region25
  $region24: #{discriminator_forward.6} parent=0 // pred_region
    _
  $region25: #{discriminator_forward.6} parent=0 // pred_fallthru
    _

// kernel: discriminator_forward.7
$region0: #{discriminator_forward.7}
  #allocation0 [shape = 'u32[]', space=smem, size = 0x4, offset = 0x4, fixed_abs, tag = 'smem constant byte address 0x4 - core index']
  #allocation1 [shape = 'u32[72,128]{1,0:T(1,128)}', space=vmem, size = 0x9000, scoped, tag = 'internal scratch']
  #allocation2 [shape = 'bf16[40,128]{1,0:T(8,128)(2,1)}', space=vmem, size = 0x2800, scoped, tag = 'scratch operand']
  #allocation3 [shape = 'bf16[40,128]{1,0:T(8,128)(2,1)}', space=vmem, size = 0x2800, scoped, tag = 'scratch operand']
  #allocation4 [shape = 'bf16[24,1152]{1,0:T(8,128)(2,1)}', space=vmem, size = 0xd800, scoped, tag = 'scratch operand']
  #allocation5 [shape = 'f32[2,1,128]{2,1,0:T(1,128)}', space=vmem, size = 0x400, scoped, tag = 'scratch operand']
  #allocation6 [shape = 'f32[2,1,11]{2,1,0:T(1,128)}', space=vmem, size = 0x400, scoped, tag = 'scratch operand']
  %s0 = inlined_call_operand.vmem [shape: bf16[2,36,64], index: 0, kind: input, shape index: {}]
  %s1 = inlined_call_operand.vmem [shape: bf16[576,128], index: 1, kind: input, shape index: {}]
  %s2 = inlined_call_operand.vmem [shape: f32[1,128], index: 2, kind: input, shape index: {}]
  %s3 = inlined_call_operand.vmem [shape: f32[1,128], index: 3, kind: input, shape index: {}]
  %s4 = inlined_call_operand.vmem [shape: bf16[1152,128], index: 4, kind: input, shape index: {}]
  %s5 = inlined_call_operand.vmem [shape: f32[1,128], index: 5, kind: input, shape index: {}]
  %s6 = inlined_call_operand.vmem [shape: f32[1,128], index: 6, kind: input, shape index: {}]
  %s7 = inlined_call_operand.vmem [shape: bf16[1152,128], index: 7, kind: input, shape index: {}]
  %s8 = inlined_call_operand.vmem [shape: f32[128,11], index: 8, kind: input, shape index: {}]
  %s9 = inlined_call_operand.vmem [shape: f32[1,11], index: 9, kind: input, shape index: {}]
  %s10 = inlined_call_operand.hbm [shape: f32[2,128], index: 10, kind: output, shape index: {0}]
  %s11 = inlined_call_operand.hbm [shape: f32[2,11], index: 11, kind: output, shape index: {1}]
  %s12 = inlined_call_operand.hbm [shape: f32[2,11], index: 12, kind: output, shape index: {2}]
  %s13 = inlined_call_operand.vmem [shape: f32[2,1], index: 13, kind: output, shape index: {3}]
  %14 = xla_tuple %s10, %s11, %s12, %s13
  %s15 = sld [smem:[#allocation0]]
  $region105: #{discriminator_forward.7} parent=0
    _
  %s17 = ssub.s32 1, %s15
  %s18 = scalar_select 0, %s17, %s15
  $region1: #{discriminator_forward.7} parent=0
    #allocation7 [shape = 'u8[1024]{0}', space=vmem, size = 0x400, scoped, tag = 'output window, operand 0, single buffered']
    #allocation8 [shape = 's32[2]{0}', space=sflag, size = 0x8, scoped, tag = 'scoped memory for discriminator_forward.7']
    #allocation9 [shape = 'u8[1024]{0}', space=vmem, size = 0x400, scoped, tag = 'output window, operand 1, single buffered']
    #allocation10 [shape = 's32[1]{0}', space=sflag, size = 0x4, scoped, tag = 'scoped memory for discriminator_forward.7']
    #allocation11 [shape = 'u8[1024]{0}', space=vmem, size = 0x400, scoped, tag = 'output window, operand 2, single buffered']
    %19 = vsyncpa [#allocation8], 0
    %20 = vsyncpa [#allocation10], 0
    loop: start=0, step=1, limit=4
    $region2: #{discriminator_forward.7} parent=1 // loop_pre_header
      _
    $region3: #{discriminator_forward.7} parent=1 // loop_header
      %s22 = sphi 0, %s26
      %p23 = scmp.ge.s32.totalorder %s22, 4
      %s32 = sphi 0, %s34
      %s35 = sphi 0, %s32
      %s36 = sphi 0, %s35
      %s52 = sphi 0, %s36
      %s56 = sphi 0, %s56
      %s58 = sphi 0, %s56
      %s59 = sphi 0, %s58
      %s73 = sphi 0, %s59
      %s77 = sphi 0, %s77
      %s79 = sphi 0, %s77
      %s80 = sphi 0, %s79
      %s94 = sphi 0, %s80
      %s98 = sphi 0, %s98
      %s100 = sphi 0, %s98
      %s101 = sphi 0, %s100
      %s115 = sphi 0, %s101
      %s119 = sphi 0, %s119
      %s121 = sphi 0, %s119
      %s122 = sphi 0, %s121
      %s136 = sphi 0, %s122
      %s140 = sphi 0, %s140
      %s142 = sphi 0, %s140
      %s143 = sphi 0, %s142
      %s157 = sphi 0, %s143
      %s161 = sphi 0, %s161
      %s163 = sphi 0, %s161
      %s164 = sphi 0, %s163
      %s178 = sphi 0, %s164
      %s182 = sphi 0, %s182
      %s184 = sphi 0, %s182
      %s185 = sphi 0, %s184
      %s199 = sphi 0, %s185
      %s203 = sphi 0, %s203
      %s205 = sphi 0, %s203
      %s206 = sphi 0, %s205
      %s220 = sphi 0, %s206
      %s224 = sphi 0, %s224
      %s226 = sphi 0, %s224
      %s227 = sphi 0, %s226
      %s241 = sphi 0, %s227
      %s245 = sphi 0, %s245
      %s247 = sphi 0, %s245
      %s248 = sphi 0, %s247
      %s262 = sphi 0, %s248
      %s266 = sphi 0, %s266
      %s268 = sphi 0, %s266
      %s269 = sphi 0, %s268
      %s283 = sphi 0, %s269
      %s287 = sphi 0, %s287
      %s289 = sphi 0, %s287
      %s290 = sphi 0, %s289
      %s304 = sphi 0, %s290
      %s308 = sphi 0, %s308
      %s310 = sphi 0, %s308
      %s311 = sphi 0, %s310
      %s325 = sphi 0, %s311
    $region4: #{discriminator_forward.7} parent=1 // loop_header_branch
      %25 = sbr.rel (%p23) target = $region8
    $region5: #{discriminator_forward.7} parent=1 // loop_body
      %s27 = ssub.s32 %s22, 1
      %s28 = ssub.s32 %s22, 2
      %s29 = sadd.s32 %s22, 1
      %s30 = ssub.s32 %s22, %s29
      %p31 = scmp.eq.s32.totalorder %s30, 0
      %s33 = sadd.s32 %s32, 1
      %s34 = scalar_select %p31, %s32, %s33
      %p37 = pneg %p31
      %p38 = scmp.eq.s32.totalorder %s22, 1
      %p39 = por %p37, %p38
      %p40 = scmp.ne.s32.totalorder %s32, %s35
      %p41 = scmp.eq.s32.totalorder %s22, 0
      %p42 = por %p40, %p41
      %p43 = scmp.ne.s32.totalorder %s32, %s35
      %p44 = scmp.eq.s32.totalorder %s27, 1
      %p45 = por %p43, %p44
      %p46 = scmp.ne.s32.totalorder %s35, %s36
      %p47 = scmp.eq.s32.totalorder %s27, 0
      %p48 = por %p46, %p47
      %p49 = scmp.ne.s32.totalorder %s35, %s36
      %p50 = scmp.eq.s32.totalorder %s28, 1
      %p51 = por %p49, %p50
      %p53 = scmp.ne.s32.totalorder %s36, %s52
      %p54 = scmp.eq.s32.totalorder %s28, 0
      %p55 = por %p53, %p54
      %s57 = sadd.s32 %s56, 1
      %p60 = scmp.eq.s32.totalorder %s22, 1
      %p61 = scmp.ne.s32.totalorder %s56, %s58
      %p62 = scmp.eq.s32.totalorder %s22, 0
      %p63 = por %p61, %p62
      %p64 = scmp.ne.s32.totalorder %s56, %s58
      %p65 = scmp.eq.s32.totalorder %s27, 1
      %p66 = por %p64, %p65
      %p67 = scmp.ne.s32.totalorder %s58, %s59
      %p68 = scmp.eq.s32.totalorder %s27, 0
      %p69 = por %p67, %p68
      %p70 = scmp.ne.s32.totalorder %s58, %s59
      %p71 = scmp.eq.s32.totalorder %s28, 1
      %p72 = por %p70, %p71
      %p74 = scmp.ne.s32.totalorder %s59, %s73
      %p75 = scmp.eq.s32.totalorder %s28, 0
      %p76 = por %p74, %p75
      %s78 = sadd.s32 %s77, 1
      %p81 = scmp.eq.s32.totalorder %s22, 1
      %p82 = scmp.ne.s32.totalorder %s77, %s79
      %p83 = scmp.eq.s32.totalorder %s22, 0
      %p84 = por %p82, %p83
      %p85 = scmp.ne.s32.totalorder %s77, %s79
      %p86 = scmp.eq.s32.totalorder %s27, 1
      %p87 = por %p85, %p86
      %p88 = scmp.ne.s32.totalorder %s79, %s80
      %p89 = scmp.eq.s32.totalorder %s27, 0
      %p90 = por %p88, %p89
      %p91 = scmp.ne.s32.totalorder %s79, %s80
      %p92 = scmp.eq.s32.totalorder %s28, 1
      %p93 = por %p91, %p92
      %p95 = scmp.ne.s32.totalorder %s80, %s94
      %p96 = scmp.eq.s32.totalorder %s28, 0
      %p97 = por %p95, %p96
      %s99 = sadd.s32 %s98, 1
      %p102 = scmp.eq.s32.totalorder %s22, 1
      %p103 = scmp.ne.s32.totalorder %s98, %s100
      %p104 = scmp.eq.s32.totalorder %s22, 0
      %p105 = por %p103, %p104
      %p106 = scmp.ne.s32.totalorder %s98, %s100
      %p107 = scmp.eq.s32.totalorder %s27, 1
      %p108 = por %p106, %p107
      %p109 = scmp.ne.s32.totalorder %s100, %s101
      %p110 = scmp.eq.s32.totalorder %s27, 0
      %p111 = por %p109, %p110
      %p112 = scmp.ne.s32.totalorder %s100, %s101
      %p113 = scmp.eq.s32.totalorder %s28, 1
      %p114 = por %p112, %p113
      %p116 = scmp.ne.s32.totalorder %s101, %s115
      %p117 = scmp.eq.s32.totalorder %s28, 0
      %p118 = por %p116, %p117
      %s120 = sadd.s32 %s119, 1
      %p123 = scmp.eq.s32.totalorder %s22, 1
      %p124 = scmp.ne.s32.totalorder %s119, %s121
      %p125 = scmp.eq.s32.totalorder %s22, 0
      %p126 = por %p124, %p125
      %p127 = scmp.ne.s32.totalorder %s119, %s121
      %p128 = scmp.eq.s32.totalorder %s27, 1
      %p129 = por %p127, %p128
      %p130 = scmp.ne.s32.totalorder %s121, %s122
      %p131 = scmp.eq.s32.totalorder %s27, 0
      %p132 = por %p130, %p131
      %p133 = scmp.ne.s32.totalorder %s121, %s122
      %p134 = scmp.eq.s32.totalorder %s28, 1
      %p135 = por %p133, %p134
      %p137 = scmp.ne.s32.totalorder %s122, %s136
      %p138 = scmp.eq.s32.totalorder %s28, 0
      %p139 = por %p137, %p138
      %s141 = sadd.s32 %s140, 1
      %p144 = scmp.eq.s32.totalorder %s22, 1
      %p145 = scmp.ne.s32.totalorder %s140, %s142
      %p146 = scmp.eq.s32.totalorder %s22, 0
      %p147 = por %p145, %p146
      %p148 = scmp.ne.s32.totalorder %s140, %s142
      %p149 = scmp.eq.s32.totalorder %s27, 1
      %p150 = por %p148, %p149
      %p151 = scmp.ne.s32.totalorder %s142, %s143
      %p152 = scmp.eq.s32.totalorder %s27, 0
      %p153 = por %p151, %p152
      %p154 = scmp.ne.s32.totalorder %s142, %s143
      %p155 = scmp.eq.s32.totalorder %s28, 1
      %p156 = por %p154, %p155
      %p158 = scmp.ne.s32.totalorder %s143, %s157
      %p159 = scmp.eq.s32.totalorder %s28, 0
      %p160 = por %p158, %p159
      %s162 = sadd.s32 %s161, 1
      %p165 = scmp.eq.s32.totalorder %s22, 1
      %p166 = scmp.ne.s32.totalorder %s161, %s163
      %p167 = scmp.eq.s32.totalorder %s22, 0
      %p168 = por %p166, %p167
      %p169 = scmp.ne.s32.totalorder %s161, %s163
      %p170 = scmp.eq.s32.totalorder %s27, 1
      %p171 = por %p169, %p170
      %p172 = scmp.ne.s32.totalorder %s163, %s164
      %p173 = scmp.eq.s32.totalorder %s27, 0
      %p174 = por %p172, %p173
      %p175 = scmp.ne.s32.totalorder %s163, %s164
      %p176 = scmp.eq.s32.totalorder %s28, 1
      %p177 = por %p175, %p176
      %p179 = scmp.ne.s32.totalorder %s164, %s178
      %p180 = scmp.eq.s32.totalorder %s28, 0
      %p181 = por %p179, %p180
      %s183 = sadd.s32 %s182, 1
      %p186 = scmp.eq.s32.totalorder %s22, 1
      %p187 = scmp.ne.s32.totalorder %s182, %s184
      %p188 = scmp.eq.s32.totalorder %s22, 0
      %p189 = por %p187, %p188
      %p190 = scmp.ne.s32.totalorder %s182, %s184
      %p191 = scmp.eq.s32.totalorder %s27, 1
      %p192 = por %p190, %p191
      %p193 = scmp.ne.s32.totalorder %s184, %s185
      %p194 = scmp.eq.s32.totalorder %s27, 0
      %p195 = por %p193, %p194
      %p196 = scmp.ne.s32.totalorder %s184, %s185
      %p197 = scmp.eq.s32.totalorder %s28, 1
      %p198 = por %p196, %p197
      %p200 = scmp.ne.s32.totalorder %s185, %s199
      %p201 = scmp.eq.s32.totalorder %s28, 0
      %p202 = por %p200, %p201
      %s204 = sadd.s32 %s203, 1
      %p207 = scmp.eq.s32.totalorder %s22, 1
      %p208 = scmp.ne.s32.totalorder %s203, %s205
      %p209 = scmp.eq.s32.totalorder %s22, 0
      %p210 = por %p208, %p209
      %p211 = scmp.ne.s32.totalorder %s203, %s205
      %p212 = scmp.eq.s32.totalorder %s27, 1
      %p213 = por %p211, %p212
      %p214 = scmp.ne.s32.totalorder %s205, %s206
      %p215 = scmp.eq.s32.totalorder %s27, 0
      %p216 = por %p214, %p215
      %p217 = scmp.ne.s32.totalorder %s205, %s206
      %p218 = scmp.eq.s32.totalorder %s28, 1
      %p219 = por %p217, %p218
      %p221 = scmp.ne.s32.totalorder %s206, %s220
      %p222 = scmp.eq.s32.totalorder %s28, 0
      %p223 = por %p221, %p222
      %s225 = sadd.s32 %s224, 1
      %p228 = scmp.eq.s32.totalorder %s22, 1
      %p229 = scmp.ne.s32.totalorder %s224, %s226
      %p230 = scmp.eq.s32.totalorder %s22, 0
      %p231 = por %p229, %p230
      %p232 = scmp.ne.s32.totalorder %s224, %s226
      %p233 = scmp.eq.s32.totalorder %s27, 1
      %p234 = por %p232, %p233
      %p235 = scmp.ne.s32.totalorder %s226, %s227
      %p236 = scmp.eq.s32.totalorder %s27, 0
      %p237 = por %p235, %p236
      %p238 = scmp.ne.s32.totalorder %s226, %s227
      %p239 = scmp.eq.s32.totalorder %s28, 1
      %p240 = por %p238, %p239
      %p242 = scmp.ne.s32.totalorder %s227, %s241
      %p243 = scmp.eq.s32.totalorder %s28, 0
      %p244 = por %p242, %p243
      %s246 = sadd.s32 %s245, 1
      %p249 = scmp.eq.s32.totalorder %s22, 1
      %p250 = scmp.ne.s32.totalorder %s245, %s247
      %p251 = scmp.eq.s32.totalorder %s22, 0
      %p252 = por %p250, %p251
      %p253 = scmp.ne.s32.totalorder %s245, %s247
      %p254 = scmp.eq.s32.totalorder %s27, 1
      %p255 = por %p253, %p254
      %p256 = scmp.ne.s32.totalorder %s247, %s248
      %p257 = scmp.eq.s32.totalorder %s27, 0
      %p258 = por %p256, %p257
      %p259 = scmp.ne.s32.totalorder %s247, %s248
      %p260 = scmp.eq.s32.totalorder %s28, 1
      %p261 = por %p259, %p260
      %p263 = scmp.ne.s32.totalorder %s248, %s262
      %p264 = scmp.eq.s32.totalorder %s28, 0
      %p265 = por %p263, %p264
      %s267 = sadd.s32 %s266, 1
      %p270 = scmp.eq.s32.totalorder %s22, 1
      %p271 = scmp.ne.s32.totalorder %s266, %s268
      %p272 = scmp.eq.s32.totalorder %s22, 0
      %p273 = por %p271, %p272
      %p274 = scmp.ne.s32.totalorder %s266, %s268
      %p275 = scmp.eq.s32.totalorder %s27, 1
      %p276 = por %p274, %p275
      %p277 = scmp.ne.s32.totalorder %s268, %s269
      %p278 = scmp.eq.s32.totalorder %s27, 0
      %p279 = por %p277, %p278
      %p280 = scmp.ne.s32.totalorder %s268, %s269
      %p281 = scmp.eq.s32.totalorder %s28, 1
      %p282 = por %p280, %p281
      %p284 = scmp.ne.s32.totalorder %s269, %s283
      %p285 = scmp.eq.s32.totalorder %s28, 0
      %p286 = por %p284, %p285
      %s288 = sadd.s32 %s287, 1
      %p291 = scmp.eq.s32.totalorder %s22, 1
      %p292 = scmp.ne.s32.totalorder %s287, %s289
      %p293 = scmp.eq.s32.totalorder %s22, 0
      %p294 = por %p292, %p293
      %p295 = scmp.ne.s32.totalorder %s287, %s289
      %p296 = scmp.eq.s32.totalorder %s27, 1
      %p297 = por %p295, %p296
      %p298 = scmp.ne.s32.totalorder %s289, %s290
      %p299 = scmp.eq.s32.totalorder %s27, 0
      %p300 = por %p298, %p299
      %p301 = scmp.ne.s32.totalorder %s289, %s290
      %p302 = scmp.eq.s32.totalorder %s28, 1
      %p303 = por %p301, %p302
      %p305 = scmp.ne.s32.totalorder %s290, %s304
      %p306 = scmp.eq.s32.totalorder %s28, 0
      %p307 = por %p305, %p306
      %s309 = sadd.s32 %s308, 1
      %p312 = scmp.eq.s32.totalorder %s22, 1
      %p313 = scmp.ne.s32.totalorder %s308, %s310
      %p314 = scmp.eq.s32.totalorder %s22, 0
      %p315 = por %p313, %p314
      %p316 = scmp.ne.s32.totalorder %s308, %s310
      %p317 = scmp.eq.s32.totalorder %s27, 1
      %p318 = por %p316, %p317
      %p319 = scmp.ne.s32.totalorder %s310, %s311
      %p320 = scmp.eq.s32.totalorder %s27, 0
      %p321 = por %p319, %p320
      %p322 = scmp.ne.s32.totalorder %s310, %s311
      %p323 = scmp.eq.s32.totalorder %s28, 1
      %p324 = por %p322, %p323
      %p326 = scmp.ne.s32.totalorder %s311, %s325
      %p327 = scmp.eq.s32.totalorder %s28, 0
      %p328 = por %p326, %p327
      %p329 = scmp.le.s32.totalorder 1, %s22
      %p330 = scmp.lt.s32.totalorder %s22, 3
      %p331 = pnand %p329, %p330
      %p332 = pneg %p331
      // Predicated region
      $region9: #{discriminator_forward.7} parent=5 // pred_check
        _
      $region10: #{discriminator_forward.7} parent=5 // pred_check_branch
        %334 = sbr.rel (%p331) target = $region12
      $region11: #{discriminator_forward.7} parent=5 // pred_region
        %s335 = ssub.s32 %s22, 1
        // Predicated region
        $region13: #{discriminator_forward.7} parent=11 // pred_check
          %p336 = pneg %p69
        $region14: #{discriminator_forward.7} parent=11 // pred_check_branch
          %338 = sbr.rel (%p336) target = $region16
        $region15: #{discriminator_forward.7} parent=11 // pred_region
          _
        $region16: #{discriminator_forward.7} parent=11 // pred_fallthru
          _
        // Predicated region
        $region17: #{discriminator_forward.7} parent=11 // pred_check
          %p339 = pneg %p90
        $region18: #{discriminator_forward.7} parent=11 // pred_check_branch
          %341 = sbr.rel (%p339) target = $region20
        $region19: #{discriminator_forward.7} parent=11 // pred_region
          _
        $region20: #{discriminator_forward.7} parent=11 // pred_fallthru
          _
        // Predicated region
        $region21: #{discriminator_forward.7} parent=11 // pred_check
          %p342 = pneg %p111
        $region22: #{discriminator_forward.7} parent=11 // pred_check_branch
          %344 = sbr.rel (%p342) target = $region24
        $region23: #{discriminator_forward.7} parent=11 // pred_region
          _
        $region24: #{discriminator_forward.7} parent=11 // pred_fallthru
          _
        // Predicated region
        $region25: #{discriminator_forward.7} parent=11 // pred_check
          %p345 = pneg %p132
        $region26: #{discriminator_forward.7} parent=11 // pred_check_branch
          %347 = sbr.rel (%p345) target = $region28
        $region27: #{discriminator_forward.7} parent=11 // pred_region
          _
        $region28: #{discriminator_forward.7} parent=11 // pred_fallthru
          _
        // Predicated region
        $region29: #{discriminator_forward.7} parent=11 // pred_check
          %p348 = pneg %p153
        $region30: #{discriminator_forward.7} parent=11 // pred_check_branch
          %350 = sbr.rel (%p348) target = $region32
        $region31: #{discriminator_forward.7} parent=11 // pred_region
          _
        $region32: #{discriminator_forward.7} parent=11 // pred_fallthru
          _
        // Predicated region
        $region33: #{discriminator_forward.7} parent=11 // pred_check
          %p351 = pneg %p174
        $region34: #{discriminator_forward.7} parent=11 // pred_check_branch
          %353 = sbr.rel (%p351) target = $region36
        $region35: #{discriminator_forward.7} parent=11 // pred_region
          _
        $region36: #{discriminator_forward.7} parent=11 // pred_fallthru
          _
        // Predicated region
        $region37: #{discriminator_forward.7} parent=11 // pred_check
          %p354 = pneg %p195
        $region38: #{discriminator_forward.7} parent=11 // pred_check_branch
          %356 = sbr.rel (%p354) target = $region40
        $region39: #{discriminator_forward.7} parent=11 // pred_region
          _
        $region40: #{discriminator_forward.7} parent=11 // pred_fallthru
          _
        // Predicated region
        $region41: #{discriminator_forward.7} parent=11 // pred_check
          %p357 = pneg %p216
        $region42: #{discriminator_forward.7} parent=11 // pred_check_branch
          %359 = sbr.rel (%p357) target = $region44
        $region43: #{discriminator_forward.7} parent=11 // pred_region
          _
        $region44: #{discriminator_forward.7} parent=11 // pred_fallthru
          _
        // Predicated region
        $region45: #{discriminator_forward.7} parent=11 // pred_check
          %p360 = pneg %p237
        $region46: #{discriminator_forward.7} parent=11 // pred_check_branch
          %362 = sbr.rel (%p360) target = $region48
        $region47: #{discriminator_forward.7} parent=11 // pred_region
          _
        $region48: #{discriminator_forward.7} parent=11 // pred_fallthru
          _
      $region12: #{discriminator_forward.7} parent=5 // pred_fallthru
        _
      %p363 = scmp.lt.s32.totalorder %s22, 2
      // Predicated region
      $region49: #{discriminator_forward.7} parent=5 // pred_check
        %p364 = pneg %p363
      $region50: #{discriminator_forward.7} parent=5 // pred_check_branch
        %366 = sbr.rel (%p364) target = $region52
      $region51: #{discriminator_forward.7} parent=5 // pred_region
        // Predicated region
        $region53: #{discriminator_forward.7} parent=51 // pred_check
          %p367 = pneg %p42
        $region54: #{discriminator_forward.7} parent=51 // pred_check_branch
          %369 = sbr.rel (%p367) target = $region56
        $region55: #{discriminator_forward.7} parent=51 // pred_region
          %p370 = scmp.lt.s32.totalorder %s22, 1
          %s371 = scalar_select %p370, %s22, 1
          %s372 = smul.addr %s371, 5
          %s373 = smul.addr %s372, 4
          %s374 = scalar_lea.vmem %s0, %s373
        $region56: #{discriminator_forward.7} parent=51 // pred_fallthru
          _
      $region52: #{discriminator_forward.7} parent=5 // pred_fallthru
        _
      %p375 = scmp.le.s32.totalorder 1, %s22
      %p376 = scmp.lt.s32.totalorder %s22, 3
      %p377 = pnand %p375, %p376
      %p378 = pneg %p377
      // Predicated region
      $region57: #{discriminator_forward.7} parent=5 // pred_check
        _
      $region58: #{discriminator_forward.7} parent=5 // pred_check_branch
        %380 = sbr.rel (%p377) target = $region60
      $region59: #{discriminator_forward.7} parent=5 // pred_region
        %s381 = ssub.s32 %s22, 1
        %p382 = scmp.lt.s32.totalorder %s27, 1
        %s383 = scalar_select %p382, %s27, 1
        %s384 = smul.addr %s383, 5
        %s385 = smul.addr %s384, 4
        %s386 = scalar_lea.vmem %s0, %s385
        %p387 = pneg %p48
        %p388 = pneg %p45
        %p389 = pneg %p69
        %p390 = pneg %p66
        %p391 = pneg %p90
        %p392 = pneg %p87
        %p393 = pneg %p111
        %p394 = pneg %p108
        %p395 = pneg %p132
        %p396 = pneg %p129
        %p397 = pneg %p153
        %p398 = pneg %p150
        %p399 = pneg %p174
        %p400 = pneg %p171
        %p401 = pneg %p195
        %p402 = pneg %p192
        %p403 = pneg %p216
        %p404 = pneg %p213
        %p405 = pneg %p237
        %p406 = pneg %p234
        %p407 = pneg %p258
        %p408 = pneg %p255
        %p409 = pneg %p279
        %p410 = pneg %p276
        %p411 = pneg %p300
        %p412 = pneg %p297
        %p413 = pneg %p321
        %p414 = pneg %p318
        %p415 = scmp.lt.s32.totalorder %s27, 1
        %s416 = scalar_select %p415, %s27, 1
        %s417 = smul.addr %s416, 5
        %s418 = smul.addr %s417, 4
        %s419 = scalar_lea.vmem %s0, %s418
        %p421 = scmp.eq.s32.totalorder %s27, 0
        // Predicated region
        $region61: #{discriminator_forward.7} parent=59 // pred_check
          %p422 = pneg %p421
        $region62: #{discriminator_forward.7} parent=59 // pred_check_branch
          %424 = sbr.rel (%p422) target = $region64
        $region63: #{discriminator_forward.7} parent=59 // pred_region
          %425 = vst [vmem:[#allocation2] sm:$0xf] 0
          %426 = vst [vmem:[#allocation2 + $0x4] sm:$0xf] 0
          %427 = vst [vmem:[#allocation2 + $0x8] sm:$0xf] 0
          %428 = vst [vmem:[#allocation2 + $0xc] sm:$0xf] 0
          %429 = vst [vmem:[#allocation2 + $0x10] sm:$0xf] 0
          %430 = vst [vmem:[#allocation3] sm:$0xf] 0
          %431 = vst [vmem:[#allocation3 + $0x4] sm:$0xf] 0
          %432 = vst [vmem:[#allocation3 + $0x8] sm:$0xf] 0
          %433 = vst [vmem:[#allocation3 + $0xc] sm:$0xf] 0
          %434 = vst [vmem:[#allocation3 + $0x10] sm:$0xf] 0
        $region64: #{discriminator_forward.7} parent=59 // pred_fallthru
          _
        %v435 = vld [vmem:[%s419] sm:$0xf]
        %v436 = vld [vmem:[%s419 + $0x4] sm:$0xf]
        %v437 = vld [vmem:[%s419 + $0x8] sm:$0x7]
        %vm438 = vcmask 519168
        %439 = vst.msk [vmem:[#allocation4] sm:$0xf] %vm438, %v435
        %440 = vst.msk [vmem:[#allocation4 + $0x24] sm:$0xf] %vm438, %v436
        %vm441 = vcmask 518144
        %442 = vst.msk [vmem:[#allocation4 + $0x48] sm:$0x7] %vm441, %v437
        %v443 = vld [vmem:[%s419] sm:$0xf]
        %v444 = vld [vmem:[%s419 + $0x4] sm:$0xf]
        %v445 = vld [vmem:[%s419 + $0x8] sm:$0xf]
        %vm446 = vsmask.f32 3328
        %vm447 = vsmask.f32 7440
        %vm448 = vmor %vm446, %vm447
        %v450 = vshrl.u32 %v443, 16
        %v452 = vrot.slane %v450, 4
        %v453 = vshll.u32 %v443, 16
        %v455 = vrot.slane %v453, 5
        %v456 = vor.u32 %v452, %v455
        %v457 = vrot.slane %v456, 4
        %v459 = vshll.u32 %v444, 16
        %v461 = vrot.slane %v459, 5
        %v462 = vsel %vm448, %v457, %v461
        %v463 = vshrl.u32 %v444, 16
        %v465 = vrot.slane %v463, 4
        %v466 = vor.u32 %v465, %v461
        %v467 = vrot.slane %v466, 4
        %v469 = vshll.u32 %v445, 16
        %v471 = vrot.slane %v469, 5
        %v472 = vsel %vm448, %v467, %v471
        %v473 = vshrl.u32 %v445, 16
        %v475 = vrot.slane %v473, 4
        %v476 = vor.u32 %v475, %v471
        %v477 = vrot.slane %v476, 4
        %478 = vrot.lane.b32.xlu0 %v462, 64
        %v479 = vpop.permute.xlu0 %478
        %480 = vrot.lane.b32.xlu0 %v472, 64
        %v481 = vpop.permute.xlu0 %480
        %482 = vrot.lane.b32.xlu0 %v477, 64
        %v483 = vpop.permute.xlu0 %482
        %vm487 = vcmask 1043968
        %488 = vst.msk [vmem:[#allocation4] sm:$0xf] %vm487, %v479
        %489 = vst.msk [vmem:[#allocation4 + $0x24] sm:$0xf] %vm487, %v481
        %vm490 = vcmask 1042944
        %491 = vst.msk [vmem:[#allocation4 + $0x48] sm:$0x7] %vm490, %v483
        %v492 = vld [vmem:[%s419] sm:$0xe]
        %v493 = vld [vmem:[%s419 + $0x4] sm:$0xf]
        %v494 = vld [vmem:[%s419 + $0x8] sm:$0xf]
        %vm498 = vcmask 1042432
        %vm499 = vcmask 1046532
        %vm500 = vmor %vm498, %vm499
        %v501 = vrot.slane %v492, 5
        %v502 = vrot.slane %v501, 4
        %v503 = vrot.slane %v493, 5
        %v504 = vsel %vm500, %v502, %v503
        %v505 = vrot.slane %v503, 4
        %v506 = vrot.slane %v494, 5
        %v507 = vsel %vm500, %v505, %v506
        %v508 = vrot.slane %v506, 4
        %512 = vst.msk [vmem:[#allocation4 + $0x4] sm:$0xf] %vm438, %v504
        %513 = vst.msk [vmem:[#allocation4 + $0x28] sm:$0xf] %vm438, %v507
        %514 = vst.msk [vmem:[#allocation4 + $0x4c] sm:$0x7] %vm441, %v508
        %v515 = vld [vmem:[%s419] sm:$0x8]
        %v516 = vld [vmem:[%s419 + $0x4] sm:$0xf]
        %v517 = vld [vmem:[%s419 + $0x8] sm:$0xf]
        %v518 = vld [vmem:[%s419 + $0xc] sm:$0x3]
        %vm523 = vcmask 1040384
        %vm524 = vcmask 1044484
        %vm525 = vmor %vm523, %vm524
        %v526 = vrot.slane %v515, 7
        %v527 = vrot.slane %v526, 4
        %v528 = vrot.slane %v516, 7
        %v529 = vsel %vm525, %v527, %v528
        %v530 = vrot.slane %v528, 4
        %v531 = vrot.slane %v517, 7
        %v532 = vsel %vm525, %v530, %v531
        %v533 = vrot.slane %v531, 4
        %v534 = vrot.slane %v518, 7
        %v535 = vsel %vm525, %v533, %v534
        %536 = vrot.lane.b32.xlu0 %v529, 64
        %v537 = vpop.permute.xlu0 %536
        %538 = vrot.lane.b32.xlu0 %v532, 64
        %v539 = vpop.permute.xlu0 %538
        %540 = vrot.lane.b32.xlu0 %v535, 64
        %v541 = vpop.permute.xlu0 %540
        %545 = vst.msk [vmem:[#allocation4 + $0x4] sm:$0xf] %vm487, %v537
        %546 = vst.msk [vmem:[#allocation4 + $0x28] sm:$0xf] %vm487, %v539
        %547 = vst.msk [vmem:[#allocation4 + $0x4c] sm:$0x7] %vm490, %v541
        %v548 = vld [vmem:[%s419] sm:$0x8]
        %v549 = vld [vmem:[%s419 + $0x4] sm:$0xf]
        %v550 = vld [vmem:[%s419 + $0x8] sm:$0xf]
        %v551 = vld [vmem:[%s419 + $0xc] sm:$0x7]
        %vm552 = vsmask.f32 256
        %vm553 = vsmask.f32 4368
        %vm554 = vmor %vm552, %vm553
        %v556 = vshrl.u32 %v548, 16
        %v558 = vrot.slane %v556, 7
        %v559 = vrot.slane %v558, 4
        %v561 = vshrl.u32 %v549, 16
        %v563 = vrot.slane %v561, 7
        %v564 = vshll.u32 %v549, 16
        %v566 = vor.u32 %v563, %v564
        %v567 = vsel %vm554, %v559, %v566
        %v568 = vrot.slane %v563, 4
        %v570 = vshrl.u32 %v550, 16
        %v572 = vrot.slane %v570, 7
        %v573 = vshll.u32 %v550, 16
        %v575 = vor.u32 %v572, %v573
        %v576 = vsel %vm554, %v568, %v575
        %v577 = vrot.slane %v572, 4
        %v579 = vshrl.u32 %v551, 16
        %v581 = vrot.slane %v579, 7
        %v582 = vshll.u32 %v551, 16
        %v584 = vor.u32 %v581, %v582
        %v585 = vsel %vm554, %v577, %v584
        %589 = vst.msk [vmem:[#allocation4 + $0x8] sm:$0xf] %vm438, %v567
        %590 = vst.msk [vmem:[#allocation4 + $0x2c] sm:$0xf] %vm438, %v576
        %591 = vst.msk [vmem:[#allocation4 + $0x50] sm:$0x7] %vm441, %v585
        %v592 = vld [vmem:[%s419 + $0x4] sm:$0xf]
        %v593 = vld [vmem:[%s419 + $0x8] sm:$0xf]
        %v594 = vld [vmem:[%s419 + $0xc] sm:$0x7]
        %598 = vrot.lane.b32.xlu0 %v592, 64
        %v599 = vpop.permute.xlu0 %598
        %600 = vrot.lane.b32.xlu0 %v593, 64
        %v601 = vpop.permute.xlu0 %600
        %602 = vrot.lane.b32.xlu0 %v594, 64
        %v603 = vpop.permute.xlu0 %602
        %607 = vst.msk [vmem:[#allocation4 + $0x8] sm:$0xf] %vm487, %v599
        %608 = vst.msk [vmem:[#allocation4 + $0x2c] sm:$0xf] %vm487, %v601
        %609 = vst.msk [vmem:[#allocation4 + $0x50] sm:$0x7] %vm490, %v603
        %v610 = vld [vmem:[%s419 + $0x4] sm:$0xc]
        %v611 = vld [vmem:[%s419 + $0x8] sm:$0xf]
        %v612 = vld [vmem:[%s419 + $0xc] sm:$0xf]
        %v613 = vld [vmem:[%s419 + $0x10] sm:$0x1]
        %vm618 = vcmask 1041408
        %vm619 = vcmask 1045508
        %vm620 = vmor %vm618, %vm619
        %v621 = vrot.slane %v610, 6
        %v622 = vrot.slane %v621, 4
        %v623 = vrot.slane %v611, 6
        %v624 = vsel %vm620, %v622, %v623
        %v625 = vrot.slane %v623, 4
        %v626 = vrot.slane %v612, 6
        %v627 = vsel %vm620, %v625, %v626
        %v628 = vrot.slane %v626, 4
        %v629 = vrot.slane %v613, 6
        %v630 = vsel %vm620, %v628, %v629
        %634 = vst.msk [vmem:[#allocation4 + $0xc] sm:$0xf] %vm438, %v624
        %635 = vst.msk [vmem:[#allocation4 + $0x30] sm:$0xf] %vm438, %v627
        %636 = vst.msk [vmem:[#allocation4 + $0x54] sm:$0x7] %vm441, %v630
        %v637 = vld [vmem:[%s419 + $0x4] sm:$0xc]
        %v638 = vld [vmem:[%s419 + $0x8] sm:$0xf]
        %v639 = vld [vmem:[%s419 + $0xc] sm:$0xf]
        %v640 = vld [vmem:[%s419 + $0x10] sm:$0x3]
        %vm641 = vsmask.f32 1280
        %vm642 = vsmask.f32 5392
        %vm643 = vmor %vm641, %vm642
        %v645 = vshrl.u32 %v637, 16
        %v647 = vrot.slane %v645, 6
        %v648 = vshll.u32 %v637, 16
        %v650 = vrot.slane %v648, 7
        %v651 = vor.u32 %v647, %v650
        %v652 = vrot.slane %v651, 4
        %v654 = vshrl.u32 %v638, 16
        %v656 = vrot.slane %v654, 6
        %v657 = vshll.u32 %v638, 16
        %v659 = vrot.slane %v657, 7
        %v660 = vor.u32 %v656, %v659
        %v661 = vsel %vm643, %v652, %v660
        %v662 = vrot.slane %v660, 4
        %v664 = vshrl.u32 %v639, 16
        %v666 = vrot.slane %v664, 6
        %v667 = vshll.u32 %v639, 16
        %v669 = vrot.slane %v667, 7
        %v670 = vor.u32 %v666, %v669
        %v671 = vsel %vm643, %v662, %v670
        %v672 = vrot.slane %v670, 4
        %v674 = vshrl.u32 %v640, 16
        %v676 = vrot.slane %v674, 6
        %v677 = vshll.u32 %v640, 16
        %v679 = vrot.slane %v677, 7
        %v680 = vor.u32 %v676, %v679
        %v681 = vsel %vm643, %v672, %v680
        %682 = vrot.lane.b32.xlu0 %v661, 64
        %v683 = vpop.permute.xlu0 %682
        %684 = vrot.lane.b32.xlu0 %v671, 64
        %v685 = vpop.permute.xlu0 %684
        %686 = vrot.lane.b32.xlu0 %v681, 64
        %v687 = vpop.permute.xlu0 %686
        %691 = vst.msk [vmem:[#allocation4 + $0xc] sm:$0xf] %vm487, %v683
        %692 = vst.msk [vmem:[#allocation4 + $0x30] sm:$0xf] %vm487, %v685
        %693 = vst.msk [vmem:[#allocation4 + $0x54] sm:$0x7] %vm490, %v687
        %v694 = vld [vmem:[%s419 + $0x4] sm:$0x8]
        %v695 = vld [vmem:[%s419 + $0x8] sm:$0xf]
        %v696 = vld [vmem:[%s419 + $0xc] sm:$0xf]
        %v697 = vld [vmem:[%s419 + $0x10] sm:$0x3]
        %v702 = vrot.slane %v694, 7
        %v703 = vrot.slane %v702, 4
        %v704 = vrot.slane %v695, 7
        %v705 = vsel %vm525, %v703, %v704
        %v706 = vrot.slane %v704, 4
        %v707 = vrot.slane %v696, 7
        %v708 = vsel %vm525, %v706, %v707
        %v709 = vrot.slane %v707, 4
        %v710 = vrot.slane %v697, 7
        %v711 = vsel %vm525, %v709, %v710
        %715 = vst.msk [vmem:[#allocation4 + $0x10] sm:$0xf] %vm438, %v705
        %716 = vst.msk [vmem:[#allocation4 + $0x34] sm:$0xf] %vm438, %v708
        %717 = vst.msk [vmem:[#allocation4 + $0x58] sm:$0x7] %vm441, %v711
        %v718 = vld [vmem:[#allocation4] sm:$0xff]
        %v719 = vld [vmem:[#allocation4 + $0x8] sm:$0xff]
        %v720 = vld [vmem:[#allocation4 + $0x10] sm:$0xf]
        %v721 = vld [vmem:[#allocation4 + $0x24] sm:$0xff]
        %v722 = vld [vmem:[#allocation4 + $0x2c] sm:$0xff]
        %v723 = vld [vmem:[#allocation4 + $0x34] sm:$0xf]
        %v724 = vld [vmem:[#allocation4 + $0x48] sm:$0x77]
        %v725 = vld [vmem:[#allocation4 + $0x50] sm:$0x77]
        %v726 = vld [vmem:[#allocation4 + $0x58] sm:$0x7]
        %v727 = vld [vmem:[%s1] sm:$0xf]
        %v728 = vld [vmem:[%s1 + $0x4] sm:$0xf]
        %v729 = vld [vmem:[%s1 + $0x8] sm:$0xf]
        %v730 = vld [vmem:[%s1 + $0xc] sm:$0xf]
        %v731 = vld [vmem:[%s1 + $0x10] sm:$0xf]
        %v732 = vld [vmem:[%s1 + $0x14] sm:$0xf]
        %v733 = vld [vmem:[%s1 + $0x18] sm:$0xf]
        %v734 = vld [vmem:[%s1 + $0x1c] sm:$0xf]
        %v735 = vld [vmem:[%s1 + $0x20] sm:$0xf]
        %v736 = vld [vmem:[%s1 + $0x24] sm:$0xf]
        %v737 = vld [vmem:[%s1 + $0x28] sm:$0xf]
        %v738 = vld [vmem:[%s1 + $0x2c] sm:$0xf]
        %v739 = vld [vmem:[%s1 + $0x30] sm:$0xf]
        %v740 = vld [vmem:[%s1 + $0x34] sm:$0xf]
        %v741 = vld [vmem:[%s1 + $0x38] sm:$0xf]
        %v742 = vld [vmem:[%s1 + $0x3c] sm:$0xf]
        %v743 = vld [vmem:[%s1 + $0x40] sm:$0xf]
        %v744 = vld [vmem:[%s1 + $0x44] sm:$0xf]
        %v745 = vld [vmem:[%s1 + $0x48] sm:$0xf]
        %v746 = vld [vmem:[%s1 + $0x4c] sm:$0xf]
        %v747 = vld [vmem:[%s1 + $0x50] sm:$0xf]
        %v748 = vld [vmem:[%s1 + $0x54] sm:$0xf]
        %v749 = vld [vmem:[%s1 + $0x58] sm:$0xf]
        %v750 = vld [vmem:[%s1 + $0x5c] sm:$0xf]
        %v751 = vld [vmem:[%s1 + $0x60] sm:$0xf]
        %v752 = vld [vmem:[%s1 + $0x64] sm:$0xf]
        %v753 = vld [vmem:[%s1 + $0x68] sm:$0xf]
        %v754 = vld [vmem:[%s1 + $0x6c] sm:$0xf]
        %v755 = vld [vmem:[%s1 + $0x70] sm:$0xf]
        %v756 = vld [vmem:[%s1 + $0x74] sm:$0xf]
        %v757 = vld [vmem:[%s1 + $0x78] sm:$0xf]
        %v758 = vld [vmem:[%s1 + $0x7c] sm:$0xf]
        %v759 = vld [vmem:[%s1 + $0x80] sm:$0xf]
        %v760 = vld [vmem:[%s1 + $0x84] sm:$0xf]
        %v761 = vld [vmem:[%s1 + $0x88] sm:$0xf]
        %v762 = vld [vmem:[%s1 + $0x8c] sm:$0xf]
        %v763 = vld [vmem:[%s1 + $0x90] sm:$0xf]
        %v764 = vld [vmem:[%s1 + $0x94] sm:$0xf]
        %v765 = vld [vmem:[%s1 + $0x98] sm:$0xf]
        %v766 = vld [vmem:[%s1 + $0x9c] sm:$0xf]
        %v767 = vld [vmem:[%s1 + $0xa0] sm:$0xf]
        %v768 = vld [vmem:[%s1 + $0xa4] sm:$0xf]
        %v769 = vld [vmem:[%s1 + $0xa8] sm:$0xf]
        %v770 = vld [vmem:[%s1 + $0xac] sm:$0xf]
        %v771 = vld [vmem:[%s1 + $0xb0] sm:$0xf]
        %v772 = vld [vmem:[%s1 + $0xb4] sm:$0xf]
        %v773 = vld [vmem:[%s1 + $0xb8] sm:$0xf]
        %v774 = vld [vmem:[%s1 + $0xbc] sm:$0xf]
        %v775 = vld [vmem:[%s1 + $0xc0] sm:$0xf]
        %v776 = vld [vmem:[%s1 + $0xc4] sm:$0xf]
        %v777 = vld [vmem:[%s1 + $0xc8] sm:$0xf]
        %v778 = vld [vmem:[%s1 + $0xcc] sm:$0xf]
        %v779 = vld [vmem:[%s1 + $0xd0] sm:$0xf]
        %v780 = vld [vmem:[%s1 + $0xd4] sm:$0xf]
        %v781 = vld [vmem:[%s1 + $0xd8] sm:$0xf]
        %v782 = vld [vmem:[%s1 + $0xdc] sm:$0xf]
        %v783 = vld [vmem:[%s1 + $0xe0] sm:$0xf]
        %v784 = vld [vmem:[%s1 + $0xe4] sm:$0xf]
        %v785 = vld [vmem:[%s1 + $0xe8] sm:$0xf]
        %v786 = vld [vmem:[%s1 + $0xec] sm:$0xf]
        %v787 = vld [vmem:[%s1 + $0xf0] sm:$0xf]
        %v788 = vld [vmem:[%s1 + $0xf4] sm:$0xf]
        %v789 = vld [vmem:[%s1 + $0xf8] sm:$0xf]
        %v790 = vld [vmem:[%s1 + $0xfc] sm:$0xf]
        %v791 = vld [vmem:[%s1 + $0x100] sm:$0xf]
        %v792 = vld [vmem:[%s1 + $0x104] sm:$0xf]
        %v793 = vld [vmem:[%s1 + $0x108] sm:$0xf]
        %v794 = vld [vmem:[%s1 + $0x10c] sm:$0xf]
        %v795 = vld [vmem:[%s1 + $0x110] sm:$0xf]
        %v796 = vld [vmem:[%s1 + $0x114] sm:$0xf]
        %v797 = vld [vmem:[%s1 + $0x118] sm:$0xf]
        %v798 = vld [vmem:[%s1 + $0x11c] sm:$0xf]
        %v808 = vunpack.c.l.b16 %v718
        %v809 = vunpack.c.h.b16 %v718
        %v810 = vunpack.c.l.b16 %v719
        %v811 = vunpack.c.h.b16 %v719
        %v812 = vunpack.c.l.b16 %v720
        %v813 = vunpack.c.l.b16 %v721
        %v814 = vunpack.c.h.b16 %v721
        %v815 = vunpack.c.l.b16 %v722
        %v816 = vunpack.c.h.b16 %v722
        %v817 = vunpack.c.l.b16 %v723
        %v818 = vunpack.c.l.b16 %v724
        %v819 = vunpack.c.h.b16 %v724
        %v820 = vunpack.c.l.b16 %v725
        %v821 = vunpack.c.h.b16 %v725
        %v822 = vunpack.c.l.b16 %v726
        %v823 = vpack.c.b16 %v813, %v808
        %v824 = vpack.c.b16 %v814, %v809
        %v825 = vpack.c.b16 %v815, %v810
        %v826 = vpack.c.b16 %v816, %v811
        %v827 = vpack.c.b16 %v817, %v812
        %v828 = vpack.c.b16 %v818, %v818
        %v829 = vpack.c.b16 %v819, %v819
        %v830 = vpack.c.b16 %v820, %v820
        %v831 = vpack.c.b16 %v821, %v821
        %v832 = vpack.c.b16 %v822, %v822
        %v913 = vunpack.c.l.b16 %v727
        %v914 = vunpack.c.l.b16 %v728
        %v915 = vunpack.c.l.b16 %v729
        %v916 = vunpack.c.l.b16 %v730
        %v917 = vunpack.c.l.b16 %v731
        %v918 = vunpack.c.l.b16 %v732
        %v919 = vunpack.c.l.b16 %v733
        %v920 = vunpack.c.l.b16 %v734
        %v921 = vunpack.c.l.b16 %v735
        %v922 = vunpack.c.l.b16 %v736
        %v923 = vunpack.c.l.b16 %v737
        %v924 = vunpack.c.l.b16 %v738
        %v925 = vunpack.c.l.b16 %v739
        %v926 = vunpack.c.l.b16 %v740
        %v927 = vunpack.c.l.b16 %v741
        %v928 = vunpack.c.l.b16 %v742
        %v929 = vunpack.c.l.b16 %v743
        %v930 = vunpack.c.l.b16 %v744
        %v931 = vunpack.c.l.b16 %v745
        %v932 = vunpack.c.l.b16 %v746
        %v933 = vunpack.c.l.b16 %v747
        %v934 = vunpack.c.l.b16 %v748
        %v935 = vunpack.c.l.b16 %v749
        %v936 = vunpack.c.l.b16 %v750
        %v937 = vunpack.c.l.b16 %v751
        %v938 = vunpack.c.l.b16 %v752
        %v939 = vunpack.c.l.b16 %v753
        %v940 = vunpack.c.l.b16 %v754
        %v941 = vunpack.c.l.b16 %v755
        %v942 = vunpack.c.l.b16 %v756
        %v943 = vunpack.c.l.b16 %v757
        %v944 = vunpack.c.l.b16 %v758
        %v945 = vunpack.c.l.b16 %v759
        %v946 = vunpack.c.l.b16 %v760
        %v947 = vunpack.c.l.b16 %v761
        %v948 = vunpack.c.l.b16 %v762
        %v949 = vunpack.c.l.b16 %v763
        %v950 = vunpack.c.l.b16 %v764
        %v951 = vunpack.c.l.b16 %v765
        %v952 = vunpack.c.l.b16 %v766
        %v953 = vunpack.c.l.b16 %v767
        %v954 = vunpack.c.l.b16 %v768
        %v955 = vunpack.c.l.b16 %v769
        %v956 = vunpack.c.l.b16 %v770
        %v957 = vunpack.c.l.b16 %v771
        %v958 = vunpack.c.l.b16 %v772
        %v959 = vunpack.c.l.b16 %v773
        %v960 = vunpack.c.l.b16 %v774
        %v961 = vunpack.c.l.b16 %v775
        %v962 = vunpack.c.l.b16 %v776
        %v963 = vunpack.c.l.b16 %v777
        %v964 = vunpack.c.l.b16 %v778
        %v965 = vunpack.c.l.b16 %v779
        %v966 = vunpack.c.l.b16 %v780
        %v967 = vunpack.c.l.b16 %v781
        %v968 = vunpack.c.l.b16 %v782
        %v969 = vunpack.c.l.b16 %v783
        %v970 = vunpack.c.l.b16 %v784
        %v971 = vunpack.c.l.b16 %v785
        %v972 = vunpack.c.l.b16 %v786
        %v973 = vunpack.c.l.b16 %v787
        %v974 = vunpack.c.l.b16 %v788
        %v975 = vunpack.c.l.b16 %v789
        %v976 = vunpack.c.l.b16 %v790
        %v977 = vunpack.c.l.b16 %v791
        %v978 = vunpack.c.l.b16 %v792
        %v979 = vunpack.c.l.b16 %v793
        %v980 = vunpack.c.l.b16 %v794
        %v981 = vunpack.c.l.b16 %v795
        %v982 = vunpack.c.l.b16 %v796
        %v983 = vunpack.c.l.b16 %v797
        %v984 = vunpack.c.l.b16 %v798
        %v985 = vpack.c.b16 %v914, %v913
        %v986 = vpack.c.b16 %v916, %v915
        %v987 = vpack.c.b16 %v918, %v917
        %v988 = vpack.c.b16 %v920, %v919
        %v989 = vpack.c.b16 %v922, %v921
        %v990 = vpack.c.b16 %v924, %v923
        %v991 = vpack.c.b16 %v926, %v925
        %v992 = vpack.c.b16 %v928, %v927
        %v993 = vpack.c.b16 %v930, %v929
        %v994 = vpack.c.b16 %v932, %v931
        %v995 = vpack.c.b16 %v934, %v933
        %v996 = vpack.c.b16 %v936, %v935
        %v997 = vpack.c.b16 %v938, %v937
        %v998 = vpack.c.b16 %v940, %v939
        %v999 = vpack.c.b16 %v942, %v941
        %v1000 = vpack.c.b16 %v944, %v943
        %v1001 = vpack.c.b16 %v946, %v945
        %v1002 = vpack.c.b16 %v948, %v947
        %v1003 = vpack.c.b16 %v950, %v949
        %v1004 = vpack.c.b16 %v952, %v951
        %v1005 = vpack.c.b16 %v954, %v953
        %v1006 = vpack.c.b16 %v956, %v955
        %v1007 = vpack.c.b16 %v958, %v957
        %v1008 = vpack.c.b16 %v960, %v959
        %v1009 = vpack.c.b16 %v962, %v961
        %v1010 = vpack.c.b16 %v964, %v963
        %v1011 = vpack.c.b16 %v966, %v965
        %v1012 = vpack.c.b16 %v968, %v967
        %v1013 = vpack.c.b16 %v970, %v969
        %v1014 = vpack.c.b16 %v972, %v971
        %v1015 = vpack.c.b16 %v974, %v973
        %v1016 = vpack.c.b16 %v976, %v975
        %v1017 = vpack.c.b16 %v978, %v977
        %v1018 = vpack.c.b16 %v980, %v979
        %v1019 = vpack.c.b16 %v982, %v981
        %v1020 = vpack.c.b16 %v984, %v983
        %vm1057 = vcmask 523264
        %v1059 = vsel %vm1057, %v827, 0
        %v1062 = vsel %vm1057, %v832, 0
        %1064 = vmatpush.bf16.msra.mxu0 %v992
        %1065 = vmatpush.bf16.msra.mxu0 %v991
        %1066 = vmatpush.bf16.msra.mxu0 %v990
        %1067 = vmatpush.bf16.msra.mxu0 %v989
        %1068 = vmatpush.bf16.msra.mxu0 %v988
        %1069 = vmatpush.bf16.msra.mxu0 %v987
        %1070 = vmatpush.bf16.msra.mxu0 %v986
        %1071 = vmatpush.bf16.msra.mxu0 %v985
        %1072 = vmatmul.bf16.gmra.mxu0 %v823
        %v1073 = vpop.f32.mrf.mxu0
        %v1074 = vadd.f32 0.0, %v1073
        %v1075 = vpop.f32.mrf.mxu0
        %v1076 = vadd.f32 0.0, %v1075
        %1077 = vmatmul.bf16.gmra.mxu0 %v828
        %v1078 = vpop.f32.mrf.mxu0
        %v1079 = vadd.f32 0.0, %v1078
        %v1080 = vpop.f32.mrf.mxu0
        %1081 = vdwg.mxu0
        %1082 = vmatpush.bf16.msra.mxu0 %v1000
        %1083 = vmatpush.bf16.msra.mxu0 %v999
        %1084 = vmatpush.bf16.msra.mxu0 %v998
        %1085 = vmatpush.bf16.msra.mxu0 %v997
        %1086 = vmatpush.bf16.msra.mxu0 %v996
        %1087 = vmatpush.bf16.msra.mxu0 %v995
        %1088 = vmatpush.bf16.msra.mxu0 %v994
        %1089 = vmatpush.bf16.msra.mxu0 %v993
        %1090 = vmatmul.bf16.gmra.mxu0 %v824
        %v1091 = vpop.f32.mrf.mxu0
        %v1092 = vadd.f32 %v1074, %v1091
        %v1093 = vpop.f32.mrf.mxu0
        %v1094 = vadd.f32 %v1076, %v1093
        %1095 = vmatmul.bf16.gmra.mxu0 %v829
        %v1096 = vpop.f32.mrf.mxu0
        %v1097 = vadd.f32 %v1079, %v1096
        %v1098 = vpop.f32.mrf.mxu0
        %1099 = vdwg.mxu0
        %1100 = vmatpush.bf16.msra.mxu0 %v1008
        %1101 = vmatpush.bf16.msra.mxu0 %v1007
        %1102 = vmatpush.bf16.msra.mxu0 %v1006
        %1103 = vmatpush.bf16.msra.mxu0 %v1005
        %1104 = vmatpush.bf16.msra.mxu0 %v1004
        %1105 = vmatpush.bf16.msra.mxu0 %v1003
        %1106 = vmatpush.bf16.msra.mxu0 %v1002
        %1107 = vmatpush.bf16.msra.mxu0 %v1001
        %1108 = vmatmul.bf16.gmra.mxu0 %v825
        %v1109 = vpop.f32.mrf.mxu0
        %v1110 = vadd.f32 %v1092, %v1109
        %v1111 = vpop.f32.mrf.mxu0
        %v1112 = vadd.f32 %v1094, %v1111
        %1113 = vmatmul.bf16.gmra.mxu0 %v830
        %v1114 = vpop.f32.mrf.mxu0
        %v1115 = vadd.f32 %v1097, %v1114
        %v1116 = vpop.f32.mrf.mxu0
        %1117 = vdwg.mxu0
        %1118 = vmatpush.bf16.msra.mxu0 %v1016
        %1119 = vmatpush.bf16.msra.mxu0 %v1015
        %1120 = vmatpush.bf16.msra.mxu0 %v1014
        %1121 = vmatpush.bf16.msra.mxu0 %v1013
        %1122 = vmatpush.bf16.msra.mxu0 %v1012
        %1123 = vmatpush.bf16.msra.mxu0 %v1011
        %1124 = vmatpush.bf16.msra.mxu0 %v1010
        %1125 = vmatpush.bf16.msra.mxu0 %v1009
        %1126 = vmatmul.bf16.gmra.mxu0 %v826
        %v1127 = vpop.f32.mrf.mxu0
        %v1128 = vadd.f32 %v1110, %v1127
        %v1129 = vpop.f32.mrf.mxu0
        %v1130 = vadd.f32 %v1112, %v1129
        %1131 = vmatmul.bf16.gmra.mxu0 %v831
        %v1132 = vpop.f32.mrf.mxu0
        %v1133 = vadd.f32 %v1115, %v1132
        %v1134 = vpop.f32.mrf.mxu0
        %1135 = vdwg.mxu0
        %1136 = vmatpush.bf16.msra.mxu0 0
        %1137 = vmatpush.bf16.msra.mxu0 0
        %1138 = vmatpush.bf16.msra.mxu0 0
        %1139 = vmatpush.bf16.msra.mxu0 0
        %1140 = vmatpush.bf16.msra.mxu0 %v1020
        %1141 = vmatpush.bf16.msra.mxu0 %v1019
        %1142 = vmatpush.bf16.msra.mxu0 %v1018
        %1143 = vmatpush.bf16.msra.mxu0 %v1017
        %1144 = vmatmul.bf16.gmra.mxu0 %v1059
        %v1145 = vpop.f32.mrf.mxu0
        %v1146 = vadd.f32 %v1128, %v1145
        %v1147 = vpop.f32.mrf.mxu0
        %v1148 = vadd.f32 %v1130, %v1147
        %1149 = vmatmul.bf16.gmra.mxu0 %v1062
        %v1150 = vpop.f32.mrf.mxu0
        %v1151 = vadd.f32 %v1133, %v1150
        %v1152 = vpop.f32.mrf.mxu0
        %1153 = vdwg.mxu0
        %v1154 = vld [vmem:[%s2] sm:$0x1]
        %v1156 = vperm.slane %v1154, 0
        %v1158 = vmul.f32 %v1146, %v1156
        %v1159 = vmul.f32 %v1148, %v1156
        %v1160 = vmul.f32 %v1151, %v1156
        %v1161 = vld [vmem:[%s3] sm:$0x1]
        %v1163 = vperm.slane %v1161, 0
        %v1165 = vadd.f32 %v1158, %v1163
        %v1166 = vadd.f32 %v1159, %v1163
        %v1167 = vadd.f32 %v1160, %v1163
        %vm1168 = vcmp.gt.f32.partialorder %v1165, 0.0
        %vm1169 = vcmp.gt.f32.partialorder %v1166, 0.0
        %vm1170 = vcmp.gt.f32.partialorder %v1167, 0.0
        %v1171 = vmul.f32 %v1165, 0.2
        %v1172 = vmul.f32 %v1166, 0.2
        %v1173 = vmul.f32 %v1167, 0.2
        %v1174 = vsel %vm1168, %v1165, %v1171
        %v1175 = vsel %vm1169, %v1166, %v1172
        %v1176 = vsel %vm1170, %v1167, %v1173
        %v1177 = vpack.c.bf16 %v1174, %v1174
        %v1179 = vshll.u32 %v1177, 16
        %v1181 = vrot.slane %v1179, 5
        %v1182 = vshrl.u32 %v1177, 16
        %v1184 = vrot.slane %v1182, 4
        %v1185 = vor.u32 %v1184, %v1181
        %v1186 = vrot.slane %v1185, 4
        %vm1189 = vcmask 1043459
        %vm1190 = vsmask.f32 7950
        %vm1191 = vmand %vm1189, %vm1190
        %v1192 = vld [vmem:[#allocation2] sm:$0x8]
        %v1193 = vsel %vm1191, %v1181, %v1192
        %1194 = vst [vmem:[#allocation2] sm:$0x8] %v1193
        %vm1195 = vmand %vm618, %vm641
        %v1196 = vld [vmem:[#allocation2 + $0x4] sm:$0x3]
        %v1197 = vsel %vm1195, %v1186, %v1196
        %1198 = vst [vmem:[#allocation2 + $0x4] sm:$0x3] %v1197
        %v1199 = vpack.c.bf16 %v1175, %v1175
        %v1201 = vshll.u32 %v1199, 16
        %v1203 = vrot.slane %v1201, 5
        %v1204 = vsel %vm448, %v1186, %v1203
        %v1205 = vshrl.u32 %v1199, 16
        %v1207 = vrot.slane %v1205, 4
        %v1208 = vrot.slane %v1207, 4
        %vm1211 = vcmask 1043458
        %vm1212 = vsmask.f32 7946
        %vm1213 = vmand %vm1211, %vm1212
        %v1214 = vld [vmem:[#allocation2 + $0x4] sm:$0xc]
        %v1215 = vsel %vm1213, %v1204, %v1214
        %1216 = vst [vmem:[#allocation2 + $0x4] sm:$0xc] %v1215
        %vm1217 = vmand %vm523, %vm552
        %v1218 = vld [vmem:[#allocation2 + $0x8] sm:$0x1]
        %v1219 = vsel %vm1217, %v1208, %v1218
        %1220 = vst [vmem:[#allocation2 + $0x8] sm:$0x1] %v1219
        %v1221 = vor.u32 %v1207, %v1203
        %v1222 = vrot.slane %v1221, 4
        %vm1224 = vcmask 1043457
        %vm1225 = vsmask.f32 3334
        %vm1226 = vmand %vm1224, %vm1225
        %v1227 = vld [vmem:[#allocation2 + $0x8] sm:$0xe]
        %v1228 = vsel %vm1226, %v1222, %v1227
        %1229 = vst [vmem:[#allocation2 + $0x8] sm:$0xe] %v1228
        %v1230 = vpack.c.bf16 %v1176, %v1176
        %v1232 = vshrl.u32 %v1230, 16
        %v1234 = vrot.slane %v1232, 4
        %v1235 = vshll.u32 %v1230, 16
        %v1237 = vrot.slane %v1235, 5
        %v1238 = vor.u32 %v1234, %v1237
        %v1239 = vrot.slane %v1238, 4
        %vm1241 = vsmask.f32 2306
        %vm1242 = vmand %vm498, %vm1241
        %v1243 = vld [vmem:[#allocation2 + $0xc] sm:$0x7]
        %v1244 = vsel %vm1242, %v1239, %v1243
        %1245 = vst [vmem:[#allocation2 + $0xc] sm:$0x7] %v1244
        %v1246 = vld [vmem:[#allocation2] sm:$0xf]
        %v1247 = vld [vmem:[#allocation2 + $0x4] sm:$0xf]
        %v1248 = vld [vmem:[#allocation2 + $0x8] sm:$0x7]
        %1249 = vst [vmem:[#allocation4] sm:$0xf] %v1246
        %1250 = vst [vmem:[#allocation4 + $0x24] sm:$0xf] %v1247
        %1251 = vst [vmem:[#allocation4 + $0x48] sm:$0x7] %v1248
        %v1252 = vld [vmem:[#allocation2] sm:$0xf]
        %v1253 = vld [vmem:[#allocation2 + $0x4] sm:$0xf]
        %v1254 = vld [vmem:[#allocation2 + $0x8] sm:$0xf]
        %v1256 = vshrl.u32 %v1252, 16
        %v1258 = vrot.slane %v1256, 4
        %v1259 = vshll.u32 %v1252, 16
        %v1261 = vrot.slane %v1259, 5
        %v1262 = vor.u32 %v1258, %v1261
        %v1263 = vrot.slane %v1262, 4
        %v1265 = vshll.u32 %v1253, 16
        %v1267 = vrot.slane %v1265, 5
        %v1268 = vsel %vm448, %v1263, %v1267
        %v1269 = vshrl.u32 %v1253, 16
        %v1271 = vrot.slane %v1269, 4
        %v1272 = vor.u32 %v1271, %v1267
        %v1273 = vrot.slane %v1272, 4
        %v1275 = vshll.u32 %v1254, 16
        %v1277 = vrot.slane %v1275, 5
        %v1278 = vsel %vm448, %v1273, %v1277
        %v1279 = vshrl.u32 %v1254, 16
        %v1281 = vrot.slane %v1279, 4
        %v1282 = vor.u32 %v1281, %v1277
        %v1283 = vrot.slane %v1282, 4
        %1287 = vst [vmem:[#allocation4 + $0x4] sm:$0xf] %v1268
        %1288 = vst [vmem:[#allocation4 + $0x28] sm:$0xf] %v1278
        %1289 = vst [vmem:[#allocation4 + $0x4c] sm:$0x7] %v1283
        %v1290 = vld [vmem:[#allocation2] sm:$0xe]
        %v1291 = vld [vmem:[#allocation2 + $0x4] sm:$0xf]
        %v1292 = vld [vmem:[#allocation2 + $0x8] sm:$0xf]
        %v1296 = vrot.slane %v1290, 5
        %v1297 = vrot.slane %v1296, 4
        %v1298 = vrot.slane %v1291, 5
        %v1299 = vsel %vm500, %v1297, %v1298
        %v1300 = vrot.slane %v1298, 4
        %v1301 = vrot.slane %v1292, 5
        %v1302 = vsel %vm500, %v1300, %v1301
        %v1303 = vrot.slane %v1301, 4
        %1307 = vst [vmem:[#allocation4 + $0x8] sm:$0xf] %v1299
        %1308 = vst [vmem:[#allocation4 + $0x2c] sm:$0xf] %v1302
        %1309 = vst [vmem:[#allocation4 + $0x50] sm:$0x7] %v1303
        %v1310 = vld [vmem:[#allocation2] sm:$0x8]
        %v1311 = vld [vmem:[#allocation2 + $0x4] sm:$0xf]
        %v1312 = vld [vmem:[#allocation2 + $0x8] sm:$0xf]
        %v1313 = vld [vmem:[#allocation2 + $0xc] sm:$0x3]
        %v1318 = vrot.slane %v1310, 7
        %v1319 = vrot.slane %v1318, 4
        %v1320 = vrot.slane %v1311, 7
        %v1321 = vsel %vm525, %v1319, %v1320
        %v1322 = vrot.slane %v1320, 4
        %v1323 = vrot.slane %v1312, 7
        %v1324 = vsel %vm525, %v1322, %v1323
        %v1325 = vrot.slane %v1323, 4
        %v1326 = vrot.slane %v1313, 7
        %v1327 = vsel %vm525, %v1325, %v1326
        %1331 = vst [vmem:[#allocation4 + $0xc] sm:$0xf] %v1321
        %1332 = vst [vmem:[#allocation4 + $0x30] sm:$0xf] %v1324
        %1333 = vst [vmem:[#allocation4 + $0x54] sm:$0x7] %v1327
        %v1334 = vld [vmem:[#allocation2] sm:$0x8]
        %v1335 = vld [vmem:[#allocation2 + $0x4] sm:$0xf]
        %v1336 = vld [vmem:[#allocation2 + $0x8] sm:$0xf]
        %v1337 = vld [vmem:[#allocation2 + $0xc] sm:$0x7]
        %v1339 = vshrl.u32 %v1334, 16
        %v1341 = vrot.slane %v1339, 7
        %v1342 = vrot.slane %v1341, 4
        %v1344 = vshrl.u32 %v1335, 16
        %v1346 = vrot.slane %v1344, 7
        %v1347 = vshll.u32 %v1335, 16
        %v1349 = vor.u32 %v1346, %v1347
        %v1350 = vsel %vm554, %v1342, %v1349
        %v1351 = vrot.slane %v1346, 4
        %v1353 = vshrl.u32 %v1336, 16
        %v1355 = vrot.slane %v1353, 7
        %v1356 = vshll.u32 %v1336, 16
        %v1358 = vor.u32 %v1355, %v1356
        %v1359 = vsel %vm554, %v1351, %v1358
        %v1360 = vrot.slane %v1355, 4
        %v1362 = vshrl.u32 %v1337, 16
        %v1364 = vrot.slane %v1362, 7
        %v1365 = vshll.u32 %v1337, 16
        %v1367 = vor.u32 %v1364, %v1365
        %v1368 = vsel %vm554, %v1360, %v1367
        %1372 = vst [vmem:[#allocation4 + $0x10] sm:$0xf] %v1350
        %1373 = vst [vmem:[#allocation4 + $0x34] sm:$0xf] %v1359
        %1374 = vst [vmem:[#allocation4 + $0x58] sm:$0x7] %v1368
        %v1375 = vld [vmem:[#allocation2 + $0x4] sm:$0xf]
        %v1376 = vld [vmem:[#allocation2 + $0x8] sm:$0xf]
        %v1377 = vld [vmem:[#allocation2 + $0xc] sm:$0x7]
        %1378 = vst [vmem:[#allocation4 + $0x14] sm:$0xf] %v1375
        %1379 = vst [vmem:[#allocation4 + $0x38] sm:$0xf] %v1376
        %1380 = vst [vmem:[#allocation4 + $0x5c] sm:$0x7] %v1377
        %v1381 = vld [vmem:[#allocation2 + $0x4] sm:$0xc]
        %v1382 = vld [vmem:[#allocation2 + $0x8] sm:$0xf]
        %v1383 = vld [vmem:[#allocation2 + $0xc] sm:$0xf]
        %v1384 = vld [vmem:[#allocation2 + $0x10] sm:$0x1]
        %v1389 = vrot.slane %v1381, 6
        %v1390 = vrot.slane %v1389, 4
        %v1391 = vrot.slane %v1382, 6
        %v1392 = vsel %vm620, %v1390, %v1391
        %v1393 = vrot.slane %v1391, 4
        %v1394 = vrot.slane %v1383, 6
        %v1395 = vsel %vm620, %v1393, %v1394
        %v1396 = vrot.slane %v1394, 4
        %v1397 = vrot.slane %v1384, 6
        %v1398 = vsel %vm620, %v1396, %v1397
        %1402 = vst [vmem:[#allocation4 + $0x18] sm:$0xf] %v1392
        %1403 = vst [vmem:[#allocation4 + $0x3c] sm:$0xf] %v1395
        %1404 = vst [vmem:[#allocation4 + $0x60] sm:$0x7] %v1398
        %v1405 = vld [vmem:[#allocation2 + $0x4] sm:$0xc]
        %v1406 = vld [vmem:[#allocation2 + $0x8] sm:$0xf]
        %v1407 = vld [vmem:[#allocation2 + $0xc] sm:$0xf]
        %v1408 = vld [vmem:[#allocation2 + $0x10] sm:$0x3]
        %v1410 = vshrl.u32 %v1405, 16
        %v1412 = vrot.slane %v1410, 6
        %v1413 = vshll.u32 %v1405, 16
        %v1415 = vrot.slane %v1413, 7
        %v1416 = vor.u32 %v1412, %v1415
        %v1417 = vrot.slane %v1416, 4
        %v1419 = vshrl.u32 %v1406, 16
        %v1421 = vrot.slane %v1419, 6
        %v1422 = vshll.u32 %v1406, 16
        %v1424 = vrot.slane %v1422, 7
        %v1425 = vor.u32 %v1421, %v1424
        %v1426 = vsel %vm643, %v1417, %v1425
        %v1427 = vrot.slane %v1425, 4
        %v1429 = vshrl.u32 %v1407, 16
        %v1431 = vrot.slane %v1429, 6
        %v1432 = vshll.u32 %v1407, 16
        %v1434 = vrot.slane %v1432, 7
        %v1435 = vor.u32 %v1431, %v1434
        %v1436 = vsel %vm643, %v1427, %v1435
        %v1437 = vrot.slane %v1435, 4
        %v1439 = vshrl.u32 %v1408, 16
        %v1441 = vrot.slane %v1439, 6
        %v1442 = vshll.u32 %v1408, 16
        %v1444 = vrot.slane %v1442, 7
        %v1445 = vor.u32 %v1441, %v1444
        %v1446 = vsel %vm643, %v1437, %v1445
        %1450 = vst [vmem:[#allocation4 + $0x1c] sm:$0xf] %v1426
        %1451 = vst [vmem:[#allocation4 + $0x40] sm:$0xf] %v1436
        %1452 = vst [vmem:[#allocation4 + $0x64] sm:$0x7] %v1446
        %v1453 = vld [vmem:[#allocation2 + $0x4] sm:$0x8]
        %v1454 = vld [vmem:[#allocation2 + $0x8] sm:$0xf]
        %v1455 = vld [vmem:[#allocation2 + $0xc] sm:$0xf]
        %v1456 = vld [vmem:[#allocation2 + $0x10] sm:$0x3]
        %v1461 = vrot.slane %v1453, 7
        %v1462 = vrot.slane %v1461, 4
        %v1463 = vrot.slane %v1454, 7
        %v1464 = vsel %vm525, %v1462, %v1463
        %v1465 = vrot.slane %v1463, 4
        %v1466 = vrot.slane %v1455, 7
        %v1467 = vsel %vm525, %v1465, %v1466
        %v1468 = vrot.slane %v1466, 4
        %v1469 = vrot.slane %v1456, 7
        %v1470 = vsel %vm525, %v1468, %v1469
        %1474 = vst [vmem:[#allocation4 + $0x20] sm:$0xf] %v1464
        %1475 = vst [vmem:[#allocation4 + $0x44] sm:$0xf] %v1467
        %1476 = vst [vmem:[#allocation4 + $0x68] sm:$0x7] %v1470
        %v1477 = vld [vmem:[#allocation4] sm:$0xff]
        %v1478 = vld [vmem:[#allocation4 + $0x8] sm:$0xff]
        %v1479 = vld [vmem:[#allocation4 + $0x10] sm:$0xff]
        %v1480 = vld [vmem:[#allocation4 + $0x18] sm:$0xff]
        %v1481 = vld [vmem:[#allocation4 + $0x20] sm:$0xf]
        %v1482 = vld [vmem:[#allocation4 + $0x24] sm:$0xff]
        %v1483 = vld [vmem:[#allocation4 + $0x2c] sm:$0xff]
        %v1484 = vld [vmem:[#allocation4 + $0x34] sm:$0xff]
        %v1485 = vld [vmem:[#allocation4 + $0x3c] sm:$0xff]
        %v1486 = vld [vmem:[#allocation4 + $0x44] sm:$0xf]
        %v1487 = vld [vmem:[#allocation4 + $0x48] sm:$0x77]
        %v1488 = vld [vmem:[#allocation4 + $0x50] sm:$0x77]
        %v1489 = vld [vmem:[#allocation4 + $0x58] sm:$0x77]
        %v1490 = vld [vmem:[#allocation4 + $0x60] sm:$0x77]
        %v1491 = vld [vmem:[#allocation4 + $0x68] sm:$0x7]
        %v1492 = vld [vmem:[%s4] sm:$0xf]
        %v1493 = vld [vmem:[%s4 + $0x4] sm:$0xf]
        %v1494 = vld [vmem:[%s4 + $0x8] sm:$0xf]
        %v1495 = vld [vmem:[%s4 + $0xc] sm:$0xf]
        %v1496 = vld [vmem:[%s4 + $0x10] sm:$0xf]
        %v1497 = vld [vmem:[%s4 + $0x14] sm:$0xf]
        %v1498 = vld [vmem:[%s4 + $0x18] sm:$0xf]
        %v1499 = vld [vmem:[%s4 + $0x1c] sm:$0xf]
        %v1500 = vld [vmem:[%s4 + $0x20] sm:$0xf]
        %v1501 = vld [vmem:[%s4 + $0x24] sm:$0xf]
        %v1502 = vld [vmem:[%s4 + $0x28] sm:$0xf]
        %v1503 = vld [vmem:[%s4 + $0x2c] sm:$0xf]
        %v1504 = vld [vmem:[%s4 + $0x30] sm:$0xf]
        %v1505 = vld [vmem:[%s4 + $0x34] sm:$0xf]
        %v1506 = vld [vmem:[%s4 + $0x38] sm:$0xf]
        %v1507 = vld [vmem:[%s4 + $0x3c] sm:$0xf]
        %v1508 = vld [vmem:[%s4 + $0x40] sm:$0xf]
        %v1509 = vld [vmem:[%s4 + $0x44] sm:$0xf]
        %v1510 = vld [vmem:[%s4 + $0x48] sm:$0xf]
        %v1511 = vld [vmem:[%s4 + $0x4c] sm:$0xf]
        %v1512 = vld [vmem:[%s4 + $0x50] sm:$0xf]
        %v1513 = vld [vmem:[%s4 + $0x54] sm:$0xf]
        %v1514 = vld [vmem:[%s4 + $0x58] sm:$0xf]
        %v1515 = vld [vmem:[%s4 + $0x5c] sm:$0xf]
        %v1516 = vld [vmem:[%s4 + $0x60] sm:$0xf]
        %v1517 = vld [vmem:[%s4 + $0x64] sm:$0xf]
        %v1518 = vld [vmem:[%s4 + $0x68] sm:$0xf]
        %v1519 = vld [vmem:[%s4 + $0x6c] sm:$0xf]
        %v1520 = vld [vmem:[%s4 + $0x70] sm:$0xf]
        %v1521 = vld [vmem:[%s4 + $0x74] sm:$0xf]
        %v1522 = vld [vmem:[%s4 + $0x78] sm:$0xf]
        %v1523 = vld [vmem:[%s4 + $0x7c] sm:$0xf]
        %v1524 = vld [vmem:[%s4 + $0x80] sm:$0xf]
        %v1525 = vld [vmem:[%s4 + $0x84] sm:$0xf]
        %v1526 = vld [vmem:[%s4 + $0x88] sm:$0xf]
        %v1527 = vld [vmem:[%s4 + $0x8c] sm:$0xf]
        %v1528 = vld [vmem:[%s4 + $0x90] sm:$0xf]
        %v1529 = vld [vmem:[%s4 + $0x94] sm:$0xf]
        %v1530 = vld [vmem:[%s4 + $0x98] sm:$0xf]
        %v1531 = vld [vmem:[%s4 + $0x9c] sm:$0xf]
        %v1532 = vld [vmem:[%s4 + $0xa0] sm:$0xf]
        %v1533 = vld [vmem:[%s4 + $0xa4] sm:$0xf]
        %v1534 = vld [vmem:[%s4 + $0xa8] sm:$0xf]
        %v1535 = vld [vmem:[%s4 + $0xac] sm:$0xf]
        %v1536 = vld [vmem:[%s4 + $0xb0] sm:$0xf]
        %v1537 = vld [vmem:[%s4 + $0xb4] sm:$0xf]
        %v1538 = vld [vmem:[%s4 + $0xb8] sm:$0xf]
        %v1539 = vld [vmem:[%s4 + $0xbc] sm:$0xf]
        %v1540 = vld [vmem:[%s4 + $0xc0] sm:$0xf]
        %v1541 = vld [vmem:[%s4 + $0xc4] sm:$0xf]
        %v1542 = vld [vmem:[%s4 + $0xc8] sm:$0xf]
        %v1543 = vld [vmem:[%s4 + $0xcc] sm:$0xf]
        %v1544 = vld [vmem:[%s4 + $0xd0] sm:$0xf]
        %v1545 = vld [vmem:[%s4 + $0xd4] sm:$0xf]
        %v1546 = vld [vmem:[%s4 + $0xd8] sm:$0xf]
        %v1547 = vld [vmem:[%s4 + $0xdc] sm:$0xf]
        %v1548 = vld [vmem:[%s4 + $0xe0] sm:$0xf]
        %v1549 = vld [vmem:[%s4 + $0xe4] sm:$0xf]
        %v1550 = vld [vmem:[%s4 + $0xe8] sm:$0xf]
        %v1551 = vld [vmem:[%s4 + $0xec] sm:$0xf]
        %v1552 = vld [vmem:[%s4 + $0xf0] sm:$0xf]
        %v1553 = vld [vmem:[%s4 + $0xf4] sm:$0xf]
        %v1554 = vld [vmem:[%s4 + $0xf8] sm:$0xf]
        %v1555 = vld [vmem:[%s4 + $0xfc] sm:$0xf]
        %v1556 = vld [vmem:[%s4 + $0x100] sm:$0xf]
        %v1557 = vld [vmem:[%s4 + $0x104] sm:$0xf]
        %v1558 = vld [vmem:[%s4 + $0x108] sm:$0xf]
        %v1559 = vld [vmem:[%s4 + $0x10c] sm:$0xf]
        %v1560 = vld [vmem:[%s4 + $0x110] sm:$0xf]
        %v1561 = vld [vmem:[%s4 + $0x114] sm:$0xf]
        %v1562 = vld [vmem:[%s4 + $0x118] sm:$0xf]
        %v1563 = vld [vmem:[%s4 + $0x11c] sm:$0xf]
        %v1564 = vld [vmem:[%s4 + $0x120] sm:$0xf]
        %v1565 = vld [vmem:[%s4 + $0x124] sm:$0xf]
        %v1566 = vld [vmem:[%s4 + $0x128] sm:$0xf]
        %v1567 = vld [vmem:[%s4 + $0x12c] sm:$0xf]
        %v1568 = vld [vmem:[%s4 + $0x130] sm:$0xf]
        %v1569 = vld [vmem:[%s4 + $0x134] sm:$0xf]
        %v1570 = vld [vmem:[%s4 + $0x138] sm:$0xf]
        %v1571 = vld [vmem:[%s4 + $0x13c] sm:$0xf]
        %v1572 = vld [vmem:[%s4 + $0x140] sm:$0xf]
        %v1573 = vld [vmem:[%s4 + $0x144] sm:$0xf]
        %v1574 = vld [vmem:[%s4 + $0x148] sm:$0xf]
        %v1575 = vld [vmem:[%s4 + $0x14c] sm:$0xf]
        %v1576 = vld [vmem:[%s4 + $0x150] sm:$0xf]
        %v1577 = vld [vmem:[%s4 + $0x154] sm:$0xf]
        %v1578 = vld [vmem:[%s4 + $0x158] sm:$0xf]
        %v1579 = vld [vmem:[%s4 + $0x15c] sm:$0xf]
        %v1580 = vld [vmem:[%s4 + $0x160] sm:$0xf]
        %v1581 = vld [vmem:[%s4 + $0x164] sm:$0xf]
        %v1582 = vld [vmem:[%s4 + $0x168] sm:$0xf]
        %v1583 = vld [vmem:[%s4 + $0x16c] sm:$0xf]
        %v1584 = vld [vmem:[%s4 + $0x170] sm:$0xf]
        %v1585 = vld [vmem:[%s4 + $0x174] sm:$0xf]
        %v1586 = vld [vmem:[%s4 + $0x178] sm:$0xf]
        %v1587 = vld [vmem:[%s4 + $0x17c] sm:$0xf]
        %v1588 = vld [vmem:[%s4 + $0x180] sm:$0xf]
        %v1589 = vld [vmem:[%s4 + $0x184] sm:$0xf]
        %v1590 = vld [vmem:[%s4 + $0x188] sm:$0xf]
        %v1591 = vld [vmem:[%s4 + $0x18c] sm:$0xf]
        %v1592 = vld [vmem:[%s4 + $0x190] sm:$0xf]
        %v1593 = vld [vmem:[%s4 + $0x194] sm:$0xf]
        %v1594 = vld [vmem:[%s4 + $0x198] sm:$0xf]
        %v1595 = vld [vmem:[%s4 + $0x19c] sm:$0xf]
        %v1596 = vld [vmem:[%s4 + $0x1a0] sm:$0xf]
        %v1597 = vld [vmem:[%s4 + $0x1a4] sm:$0xf]
        %v1598 = vld [vmem:[%s4 + $0x1a8] sm:$0xf]
        %v1599 = vld [vmem:[%s4 + $0x1ac] sm:$0xf]
        %v1600 = vld [vmem:[%s4 + $0x1b0] sm:$0xf]
        %v1601 = vld [vmem:[%s4 + $0x1b4] sm:$0xf]
        %v1602 = vld [vmem:[%s4 + $0x1b8] sm:$0xf]
        %v1603 = vld [vmem:[%s4 + $0x1bc] sm:$0xf]
        %v1604 = vld [vmem:[%s4 + $0x1c0] sm:$0xf]
        %v1605 = vld [vmem:[%s4 + $0x1c4] sm:$0xf]
        %v1606 = vld [vmem:[%s4 + $0x1c8] sm:$0xf]
        %v1607 = vld [vmem:[%s4 + $0x1cc] sm:$0xf]
        %v1608 = vld [vmem:[%s4 + $0x1d0] sm:$0xf]
        %v1609 = vld [vmem:[%s4 + $0x1d4] sm:$0xf]
        %v1610 = vld [vmem:[%s4 + $0x1d8] sm:$0xf]
        %v1611 = vld [vmem:[%s4 + $0x1dc] sm:$0xf]
        %v1612 = vld [vmem:[%s4 + $0x1e0] sm:$0xf]
        %v1613 = vld [vmem:[%s4 + $0x1e4] sm:$0xf]
        %v1614 = vld [vmem:[%s4 + $0x1e8] sm:$0xf]
        %v1615 = vld [vmem:[%s4 + $0x1ec] sm:$0xf]
        %v1616 = vld [vmem:[%s4 + $0x1f0] sm:$0xf]
        %v1617 = vld [vmem:[%s4 + $0x1f4] sm:$0xf]
        %v1618 = vld [vmem:[%s4 + $0x1f8] sm:$0xf]
        %v1619 = vld [vmem:[%s4 + $0x1fc] sm:$0xf]
        %v1620 = vld [vmem:[%s4 + $0x200] sm:$0xf]
        %v1621 = vld [vmem:[%s4 + $0x204] sm:$0xf]
        %v1622 = vld [vmem:[%s4 + $0x208] sm:$0xf]
        %v1623 = vld [vmem:[%s4 + $0x20c] sm:$0xf]
        %v1624 = vld [vmem:[%s4 + $0x210] sm:$0xf]
        %v1625 = vld [vmem:[%s4 + $0x214] sm:$0xf]
        %v1626 = vld [vmem:[%s4 + $0x218] sm:$0xf]
        %v1627 = vld [vmem:[%s4 + $0x21c] sm:$0xf]
        %v1628 = vld [vmem:[%s4 + $0x220] sm:$0xf]
        %v1629 = vld [vmem:[%s4 + $0x224] sm:$0xf]
        %v1630 = vld [vmem:[%s4 + $0x228] sm:$0xf]
        %v1631 = vld [vmem:[%s4 + $0x22c] sm:$0xf]
        %v1632 = vld [vmem:[%s4 + $0x230] sm:$0xf]
        %v1633 = vld [vmem:[%s4 + $0x234] sm:$0xf]
        %v1634 = vld [vmem:[%s4 + $0x238] sm:$0xf]
        %v1635 = vld [vmem:[%s4 + $0x23c] sm:$0xf]
        %v1651 = vunpack.c.l.b16 %v1477
        %v1652 = vunpack.c.h.b16 %v1477
        %v1653 = vunpack.c.l.b16 %v1478
        %v1654 = vunpack.c.h.b16 %v1478
        %v1655 = vunpack.c.l.b16 %v1479
        %v1656 = vunpack.c.h.b16 %v1479
        %v1657 = vunpack.c.l.b16 %v1480
        %v1658 = vunpack.c.h.b16 %v1480
        %v1659 = vunpack.c.l.b16 %v1481
        %v1660 = vunpack.c.l.b16 %v1482
        %v1661 = vunpack.c.h.b16 %v1482
        %v1662 = vunpack.c.l.b16 %v1483
        %v1663 = vunpack.c.h.b16 %v1483
        %v1664 = vunpack.c.l.b16 %v1484
        %v1665 = vunpack.c.h.b16 %v1484
        %v1666 = vunpack.c.l.b16 %v1485
        %v1667 = vunpack.c.h.b16 %v1485
        %v1668 = vunpack.c.l.b16 %v1486
        %v1669 = vunpack.c.l.b16 %v1487
        %v1670 = vunpack.c.h.b16 %v1487
        %v1671 = vunpack.c.l.b16 %v1488
        %v1672 = vunpack.c.h.b16 %v1488
        %v1673 = vunpack.c.l.b16 %v1489
        %v1674 = vunpack.c.h.b16 %v1489
        %v1675 = vunpack.c.l.b16 %v1490
        %v1676 = vunpack.c.h.b16 %v1490
        %v1677 = vunpack.c.l.b16 %v1491
        %v1678 = vpack.c.b16 %v1660, %v1651
        %v1679 = vpack.c.b16 %v1661, %v1652
        %v1680 = vpack.c.b16 %v1662, %v1653
        %v1681 = vpack.c.b16 %v1663, %v1654
        %v1682 = vpack.c.b16 %v1664, %v1655
        %v1683 = vpack.c.b16 %v1665, %v1656
        %v1684 = vpack.c.b16 %v1666, %v1657
        %v1685 = vpack.c.b16 %v1667, %v1658
        %v1686 = vpack.c.b16 %v1668, %v1659
        %v1687 = vpack.c.b16 %v1669, %v1669
        %v1688 = vpack.c.b16 %v1670, %v1670
        %v1689 = vpack.c.b16 %v1671, %v1671
        %v1690 = vpack.c.b16 %v1672, %v1672
        %v1691 = vpack.c.b16 %v1673, %v1673
        %v1692 = vpack.c.b16 %v1674, %v1674
        %v1693 = vpack.c.b16 %v1675, %v1675
        %v1694 = vpack.c.b16 %v1676, %v1676
        %v1695 = vpack.c.b16 %v1677, %v1677
        %v1858 = vunpack.c.l.b16 %v1492
        %v1859 = vunpack.c.l.b16 %v1493
        %v1860 = vunpack.c.l.b16 %v1494
        %v1861 = vunpack.c.l.b16 %v1495
        %v1862 = vunpack.c.l.b16 %v1496
        %v1863 = vunpack.c.l.b16 %v1497
        %v1864 = vunpack.c.l.b16 %v1498
        %v1865 = vunpack.c.l.b16 %v1499
        %v1866 = vunpack.c.l.b16 %v1500
        %v1867 = vunpack.c.l.b16 %v1501
        %v1868 = vunpack.c.l.b16 %v1502
        %v1869 = vunpack.c.l.b16 %v1503
        %v1870 = vunpack.c.l.b16 %v1504
        %v1871 = vunpack.c.l.b16 %v1505
        %v1872 = vunpack.c.l.b16 %v1506
        %v1873 = vunpack.c.l.b16 %v1507
        %v1874 = vunpack.c.l.b16 %v1508
        %v1875 = vunpack.c.l.b16 %v1509
        %v1876 = vunpack.c.l.b16 %v1510
        %v1877 = vunpack.c.l.b16 %v1511
        %v1878 = vunpack.c.l.b16 %v1512
        %v1879 = vunpack.c.l.b16 %v1513
        %v1880 = vunpack.c.l.b16 %v1514
        %v1881 = vunpack.c.l.b16 %v1515
        %v1882 = vunpack.c.l.b16 %v1516
        %v1883 = vunpack.c.l.b16 %v1517
        %v1884 = vunpack.c.l.b16 %v1518
        %v1885 = vunpack.c.l.b16 %v1519
        %v1886 = vunpack.c.l.b16 %v1520
        %v1887 = vunpack.c.l.b16 %v1521
        %v1888 = vunpack.c.l.b16 %v1522
        %v1889 = vunpack.c.l.b16 %v1523
        %v1890 = vunpack.c.l.b16 %v1524
        %v1891 = vunpack.c.l.b16 %v1525
        %v1892 = vunpack.c.l.b16 %v1526
        %v1893 = vunpack.c.l.b16 %v1527
        %v1894 = vunpack.c.l.b16 %v1528
        %v1895 = vunpack.c.l.b16 %v1529
        %v1896 = vunpack.c.l.b16 %v1530
        %v1897 = vunpack.c.l.b16 %v1531
        %v1898 = vunpack.c.l.b16 %v1532
        %v1899 = vunpack.c.l.b16 %v1533
        %v1900 = vunpack.c.l.b16 %v1534
        %v1901 = vunpack.c.l.b16 %v1535
        %v1902 = vunpack.c.l.b16 %v1536
        %v1903 = vunpack.c.l.b16 %v1537
        %v1904 = vunpack.c.l.b16 %v1538
        %v1905 = vunpack.c.l.b16 %v1539
        %v1906 = vunpack.c.l.b16 %v1540
        %v1907 = vunpack.c.l.b16 %v1541
        %v1908 = vunpack.c.l.b16 %v1542
        %v1909 = vunpack.c.l.b16 %v1543
        %v1910 = vunpack.c.l.b16 %v1544
        %v1911 = vunpack.c.l.b16 %v1545
        %v1912 = vunpack.c.l.b16 %v1546
        %v1913 = vunpack.c.l.b16 %v1547
        %v1914 = vunpack.c.l.b16 %v1548
        %v1915 = vunpack.c.l.b16 %v1549
        %v1916 = vunpack.c.l.b16 %v1550
        %v1917 = vunpack.c.l.b16 %v1551
        %v1918 = vunpack.c.l.b16 %v1552
        %v1919 = vunpack.c.l.b16 %v1553
        %v1920 = vunpack.c.l.b16 %v1554
        %v1921 = vunpack.c.l.b16 %v1555
        %v1922 = vunpack.c.l.b16 %v1556
        %v1923 = vunpack.c.l.b16 %v1557
        %v1924 = vunpack.c.l.b16 %v1558
        %v1925 = vunpack.c.l.b16 %v1559
        %v1926 = vunpack.c.l.b16 %v1560
        %v1927 = vunpack.c.l.b16 %v1561
        %v1928 = vunpack.c.l.b16 %v1562
        %v1929 = vunpack.c.l.b16 %v1563
        %v1930 = vunpack.c.l.b16 %v1564
        %v1931 = vunpack.c.l.b16 %v1565
        %v1932 = vunpack.c.l.b16 %v1566
        %v1933 = vunpack.c.l.b16 %v1567
        %v1934 = vunpack.c.l.b16 %v1568
        %v1935 = vunpack.c.l.b16 %v1569
        %v1936 = vunpack.c.l.b16 %v1570
        %v1937 = vunpack.c.l.b16 %v1571
        %v1938 = vunpack.c.l.b16 %v1572
        %v1939 = vunpack.c.l.b16 %v1573
        %v1940 = vunpack.c.l.b16 %v1574
        %v1941 = vunpack.c.l.b16 %v1575
        %v1942 = vunpack.c.l.b16 %v1576
        %v1943 = vunpack.c.l.b16 %v1577
        %v1944 = vunpack.c.l.b16 %v1578
        %v1945 = vunpack.c.l.b16 %v1579
        %v1946 = vunpack.c.l.b16 %v1580
        %v1947 = vunpack.c.l.b16 %v1581
        %v1948 = vunpack.c.l.b16 %v1582
        %v1949 = vunpack.c.l.b16 %v1583
        %v1950 = vunpack.c.l.b16 %v1584
        %v1951 = vunpack.c.l.b16 %v1585
        %v1952 = vunpack.c.l.b16 %v1586
        %v1953 = vunpack.c.l.b16 %v1587
        %v1954 = vunpack.c.l.b16 %v1588
        %v1955 = vunpack.c.l.b16 %v1589
        %v1956 = vunpack.c.l.b16 %v1590
        %v1957 = vunpack.c.l.b16 %v1591
        %v1958 = vunpack.c.l.b16 %v1592
        %v1959 = vunpack.c.l.b16 %v1593
        %v1960 = vunpack.c.l.b16 %v1594
        %v1961 = vunpack.c.l.b16 %v1595
        %v1962 = vunpack.c.l.b16 %v1596
        %v1963 = vunpack.c.l.b16 %v1597
        %v1964 = vunpack.c.l.b16 %v1598
        %v1965 = vunpack.c.l.b16 %v1599
        %v1966 = vunpack.c.l.b16 %v1600
        %v1967 = vunpack.c.l.b16 %v1601
        %v1968 = vunpack.c.l.b16 %v1602
        %v1969 = vunpack.c.l.b16 %v1603
        %v1970 = vunpack.c.l.b16 %v1604
        %v1971 = vunpack.c.l.b16 %v1605
        %v1972 = vunpack.c.l.b16 %v1606
        %v1973 = vunpack.c.l.b16 %v1607
        %v1974 = vunpack.c.l.b16 %v1608
        %v1975 = vunpack.c.l.b16 %v1609
        %v1976 = vunpack.c.l.b16 %v1610
        %v1977 = vunpack.c.l.b16 %v1611
        %v1978 = vunpack.c.l.b16 %v1612
        %v1979 = vunpack.c.l.b16 %v1613
        %v1980 = vunpack.c.l.b16 %v1614
        %v1981 = vunpack.c.l.b16 %v1615
        %v1982 = vunpack.c.l.b16 %v1616
        %v1983 = vunpack.c.l.b16 %v1617
        %v1984 = vunpack.c.l.b16 %v1618
        %v1985 = vunpack.c.l.b16 %v1619
        %v1986 = vunpack.c.l.b16 %v1620
        %v1987 = vunpack.c.l.b16 %v1621
        %v1988 = vunpack.c.l.b16 %v1622
        %v1989 = vunpack.c.l.b16 %v1623
        %v1990 = vunpack.c.l.b16 %v1624
        %v1991 = vunpack.c.l.b16 %v1625
        %v1992 = vunpack.c.l.b16 %v1626
        %v1993 = vunpack.c.l.b16 %v1627
        %v1994 = vunpack.c.l.b16 %v1628
        %v1995 = vunpack.c.l.b16 %v1629
        %v1996 = vunpack.c.l.b16 %v1630
        %v1997 = vunpack.c.l.b16 %v1631
        %v1998 = vunpack.c.l.b16 %v1632
        %v1999 = vunpack.c.l.b16 %v1633
        %v2000 = vunpack.c.l.b16 %v1634
        %v2001 = vunpack.c.l.b16 %v1635
        %v2002 = vpack.c.b16 %v1859, %v1858
        %v2003 = vpack.c.b16 %v1861, %v1860
        %v2004 = vpack.c.b16 %v1863, %v1862
        %v2005 = vpack.c.b16 %v1865, %v1864
        %v2006 = vpack.c.b16 %v1867, %v1866
        %v2007 = vpack.c.b16 %v1869, %v1868
        %v2008 = vpack.c.b16 %v1871, %v1870
        %v2009 = vpack.c.b16 %v1873, %v1872
        %v2010 = vpack.c.b16 %v1875, %v1874
        %v2011 = vpack.c.b16 %v1877, %v1876
        %v2012 = vpack.c.b16 %v1879, %v1878
        %v2013 = vpack.c.b16 %v1881, %v1880
        %v2014 = vpack.c.b16 %v1883, %v1882
        %v2015 = vpack.c.b16 %v1885, %v1884
        %v2016 = vpack.c.b16 %v1887, %v1886
        %v2017 = vpack.c.b16 %v1889, %v1888
        %v2018 = vpack.c.b16 %v1891, %v1890
        %v2019 = vpack.c.b16 %v1893, %v1892
        %v2020 = vpack.c.b16 %v1895, %v1894
        %v2021 = vpack.c.b16 %v1897, %v1896
        %v2022 = vpack.c.b16 %v1899, %v1898
        %v2023 = vpack.c.b16 %v1901, %v1900
        %v2024 = vpack.c.b16 %v1903, %v1902
        %v2025 = vpack.c.b16 %v1905, %v1904
        %v2026 = vpack.c.b16 %v1907, %v1906
        %v2027 = vpack.c.b16 %v1909, %v1908
        %v2028 = vpack.c.b16 %v1911, %v1910
        %v2029 = vpack.c.b16 %v1913, %v1912
        %v2030 = vpack.c.b16 %v1915, %v1914
        %v2031 = vpack.c.b16 %v1917, %v1916
        %v2032 = vpack.c.b16 %v1919, %v1918
        %v2033 = vpack.c.b16 %v1921, %v1920
        %v2034 = vpack.c.b16 %v1923, %v1922
        %v2035 = vpack.c.b16 %v1925, %v1924
        %v2036 = vpack.c.b16 %v1927, %v1926
        %v2037 = vpack.c.b16 %v1929, %v1928
        %v2038 = vpack.c.b16 %v1931, %v1930
        %v2039 = vpack.c.b16 %v1933, %v1932
        %v2040 = vpack.c.b16 %v1935, %v1934
        %v2041 = vpack.c.b16 %v1937, %v1936
        %v2042 = vpack.c.b16 %v1939, %v1938
        %v2043 = vpack.c.b16 %v1941, %v1940
        %v2044 = vpack.c.b16 %v1943, %v1942
        %v2045 = vpack.c.b16 %v1945, %v1944
        %v2046 = vpack.c.b16 %v1947, %v1946
        %v2047 = vpack.c.b16 %v1949, %v1948
        %v2048 = vpack.c.b16 %v1951, %v1950
        %v2049 = vpack.c.b16 %v1953, %v1952
        %v2050 = vpack.c.b16 %v1955, %v1954
        %v2051 = vpack.c.b16 %v1957, %v1956
        %v2052 = vpack.c.b16 %v1959, %v1958
        %v2053 = vpack.c.b16 %v1961, %v1960
        %v2054 = vpack.c.b16 %v1963, %v1962
        %v2055 = vpack.c.b16 %v1965, %v1964
        %v2056 = vpack.c.b16 %v1967, %v1966
        %v2057 = vpack.c.b16 %v1969, %v1968
        %v2058 = vpack.c.b16 %v1971, %v1970
        %v2059 = vpack.c.b16 %v1973, %v1972
        %v2060 = vpack.c.b16 %v1975, %v1974
        %v2061 = vpack.c.b16 %v1977, %v1976
        %v2062 = vpack.c.b16 %v1979, %v1978
        %v2063 = vpack.c.b16 %v1981, %v1980
        %v2064 = vpack.c.b16 %v1983, %v1982
        %v2065 = vpack.c.b16 %v1985, %v1984
        %v2066 = vpack.c.b16 %v1987, %v1986
        %v2067 = vpack.c.b16 %v1989, %v1988
        %v2068 = vpack.c.b16 %v1991, %v1990
        %v2069 = vpack.c.b16 %v1993, %v1992
        %v2070 = vpack.c.b16 %v1995, %v1994
        %v2071 = vpack.c.b16 %v1997, %v1996
        %v2072 = vpack.c.b16 %v1999, %v1998
        %v2073 = vpack.c.b16 %v2001, %v2000
        %2146 = vmatpush.bf16.msra.mxu0 %v2009
        %2147 = vmatpush.bf16.msra.mxu0 %v2008
        %2148 = vmatpush.bf16.msra.mxu0 %v2007
        %2149 = vmatpush.bf16.msra.mxu0 %v2006
        %2150 = vmatpush.bf16.msra.mxu0 %v2005
        %2151 = vmatpush.bf16.msra.mxu0 %v2004
        %2152 = vmatpush.bf16.msra.mxu0 %v2003
        %2153 = vmatpush.bf16.msra.mxu0 %v2002
        %2154 = vmatmul.bf16.gmra.mxu0 %v1678
        %v2155 = vpop.f32.mrf.mxu0
        %v2156 = vadd.f32 0.0, %v2155
        %v2157 = vpop.f32.mrf.mxu0
        %v2158 = vadd.f32 0.0, %v2157
        %2159 = vmatmul.bf16.gmra.mxu0 %v1687
        %v2160 = vpop.f32.mrf.mxu0
        %v2161 = vadd.f32 0.0, %v2160
        %v2162 = vpop.f32.mrf.mxu0
        %2163 = vdwg.mxu0
        %2164 = vmatpush.bf16.msra.mxu0 %v2017
        %2165 = vmatpush.bf16.msra.mxu0 %v2016
        %2166 = vmatpush.bf16.msra.mxu0 %v2015
        %2167 = vmatpush.bf16.msra.mxu0 %v2014
        %2168 = vmatpush.bf16.msra.mxu0 %v2013
        %2169 = vmatpush.bf16.msra.mxu0 %v2012
        %2170 = vmatpush.bf16.msra.mxu0 %v2011
        %2171 = vmatpush.bf16.msra.mxu0 %v2010
        %2172 = vmatmul.bf16.gmra.mxu0 %v1679
        %v2173 = vpop.f32.mrf.mxu0
        %v2174 = vadd.f32 %v2156, %v2173
        %v2175 = vpop.f32.mrf.mxu0
        %v2176 = vadd.f32 %v2158, %v2175
        %2177 = vmatmul.bf16.gmra.mxu0 %v1688
        %v2178 = vpop.f32.mrf.mxu0
        %v2179 = vadd.f32 %v2161, %v2178
        %v2180 = vpop.f32.mrf.mxu0
        %2181 = vdwg.mxu0
        %2182 = vmatpush.bf16.msra.mxu0 %v2025
        %2183 = vmatpush.bf16.msra.mxu0 %v2024
        %2184 = vmatpush.bf16.msra.mxu0 %v2023
        %2185 = vmatpush.bf16.msra.mxu0 %v2022
        %2186 = vmatpush.bf16.msra.mxu0 %v2021
        %2187 = vmatpush.bf16.msra.mxu0 %v2020
        %2188 = vmatpush.bf16.msra.mxu0 %v2019
        %2189 = vmatpush.bf16.msra.mxu0 %v2018
        %2190 = vmatmul.bf16.gmra.mxu0 %v1680
        %v2191 = vpop.f32.mrf.mxu0
        %v2192 = vadd.f32 %v2174, %v2191
        %v2193 = vpop.f32.mrf.mxu0
        %v2194 = vadd.f32 %v2176, %v2193
        %2195 = vmatmul.bf16.gmra.mxu0 %v1689
        %v2196 = vpop.f32.mrf.mxu0
        %v2197 = vadd.f32 %v2179, %v2196
        %v2198 = vpop.f32.mrf.mxu0
        %2199 = vdwg.mxu0
        %2200 = vmatpush.bf16.msra.mxu0 %v2033
        %2201 = vmatpush.bf16.msra.mxu0 %v2032
        %2202 = vmatpush.bf16.msra.mxu0 %v2031
        %2203 = vmatpush.bf16.msra.mxu0 %v2030
        %2204 = vmatpush.bf16.msra.mxu0 %v2029
        %2205 = vmatpush.bf16.msra.mxu0 %v2028
        %2206 = vmatpush.bf16.msra.mxu0 %v2027
        %2207 = vmatpush.bf16.msra.mxu0 %v2026
        %2208 = vmatmul.bf16.gmra.mxu0 %v1681
        %v2209 = vpop.f32.mrf.mxu0
        %v2210 = vadd.f32 %v2192, %v2209
        %v2211 = vpop.f32.mrf.mxu0
        %v2212 = vadd.f32 %v2194, %v2211
        %2213 = vmatmul.bf16.gmra.mxu0 %v1690
        %v2214 = vpop.f32.mrf.mxu0
        %v2215 = vadd.f32 %v2197, %v2214
        %v2216 = vpop.f32.mrf.mxu0
        %2217 = vdwg.mxu0
        %2218 = vmatpush.bf16.msra.mxu0 %v2041
        %2219 = vmatpush.bf16.msra.mxu0 %v2040
        %2220 = vmatpush.bf16.msra.mxu0 %v2039
        %2221 = vmatpush.bf16.msra.mxu0 %v2038
        %2222 = vmatpush.bf16.msra.mxu0 %v2037
        %2223 = vmatpush.bf16.msra.mxu0 %v2036
        %2224 = vmatpush.bf16.msra.mxu0 %v2035
        %2225 = vmatpush.bf16.msra.mxu0 %v2034
        %2226 = vmatmul.bf16.gmra.mxu0 %v1682
        %v2227 = vpop.f32.mrf.mxu0
        %v2228 = vadd.f32 %v2210, %v2227
        %v2229 = vpop.f32.mrf.mxu0
        %v2230 = vadd.f32 %v2212, %v2229
        %2231 = vmatmul.bf16.gmra.mxu0 %v1691
        %v2232 = vpop.f32.mrf.mxu0
        %v2233 = vadd.f32 %v2215, %v2232
        %v2234 = vpop.f32.mrf.mxu0
        %2235 = vdwg.mxu0
        %2236 = vmatpush.bf16.msra.mxu0 %v2049
        %2237 = vmatpush.bf16.msra.mxu0 %v2048
        %2238 = vmatpush.bf16.msra.mxu0 %v2047
        %2239 = vmatpush.bf16.msra.mxu0 %v2046
        %2240 = vmatpush.bf16.msra.mxu0 %v2045
        %2241 = vmatpush.bf16.msra.mxu0 %v2044
        %2242 = vmatpush.bf16.msra.mxu0 %v2043
        %2243 = vmatpush.bf16.msra.mxu0 %v2042
        %2244 = vmatmul.bf16.gmra.mxu0 %v1683
        %v2245 = vpop.f32.mrf.mxu0
        %v2246 = vadd.f32 %v2228, %v2245
        %v2247 = vpop.f32.mrf.mxu0
        %v2248 = vadd.f32 %v2230, %v2247
        %2249 = vmatmul.bf16.gmra.mxu0 %v1692
        %v2250 = vpop.f32.mrf.mxu0
        %v2251 = vadd.f32 %v2233, %v2250
        %v2252 = vpop.f32.mrf.mxu0
        %2253 = vdwg.mxu0
        %2254 = vmatpush.bf16.msra.mxu0 %v2057
        %2255 = vmatpush.bf16.msra.mxu0 %v2056
        %2256 = vmatpush.bf16.msra.mxu0 %v2055
        %2257 = vmatpush.bf16.msra.mxu0 %v2054
        %2258 = vmatpush.bf16.msra.mxu0 %v2053
        %2259 = vmatpush.bf16.msra.mxu0 %v2052
        %2260 = vmatpush.bf16.msra.mxu0 %v2051
        %2261 = vmatpush.bf16.msra.mxu0 %v2050
        %2262 = vmatmul.bf16.gmra.mxu0 %v1684
        %v2263 = vpop.f32.mrf.mxu0
        %v2264 = vadd.f32 %v2246, %v2263
        %v2265 = vpop.f32.mrf.mxu0
        %v2266 = vadd.f32 %v2248, %v2265
        %2267 = vmatmul.bf16.gmra.mxu0 %v1693
        %v2268 = vpop.f32.mrf.mxu0
        %v2269 = vadd.f32 %v2251, %v2268
        %v2270 = vpop.f32.mrf.mxu0
        %2271 = vdwg.mxu0
        %2272 = vmatpush.bf16.msra.mxu0 %v2065
        %2273 = vmatpush.bf16.msra.mxu0 %v2064
        %2274 = vmatpush.bf16.msra.mxu0 %v2063
        %2275 = vmatpush.bf16.msra.mxu0 %v2062
        %2276 = vmatpush.bf16.msra.mxu0 %v2061
        %2277 = vmatpush.bf16.msra.mxu0 %v2060
        %2278 = vmatpush.bf16.msra.mxu0 %v2059
        %2279 = vmatpush.bf16.msra.mxu0 %v2058
        %2280 = vmatmul.bf16.gmra.mxu0 %v1685
        %v2281 = vpop.f32.mrf.mxu0
        %v2282 = vadd.f32 %v2264, %v2281
        %v2283 = vpop.f32.mrf.mxu0
        %v2284 = vadd.f32 %v2266, %v2283
        %2285 = vmatmul.bf16.gmra.mxu0 %v1694
        %v2286 = vpop.f32.mrf.mxu0
        %v2287 = vadd.f32 %v2269, %v2286
        %v2288 = vpop.f32.mrf.mxu0
        %2289 = vdwg.mxu0
        %2290 = vmatpush.bf16.msra.mxu0 %v2073
        %2291 = vmatpush.bf16.msra.mxu0 %v2072
        %2292 = vmatpush.bf16.msra.mxu0 %v2071
        %2293 = vmatpush.bf16.msra.mxu0 %v2070
        %2294 = vmatpush.bf16.msra.mxu0 %v2069
        %2295 = vmatpush.bf16.msra.mxu0 %v2068
        %2296 = vmatpush.bf16.msra.mxu0 %v2067
        %2297 = vmatpush.bf16.msra.mxu0 %v2066
        %2298 = vmatmul.bf16.gmra.mxu0 %v1686
        %v2299 = vpop.f32.mrf.mxu0
        %v2300 = vadd.f32 %v2282, %v2299
        %v2301 = vpop.f32.mrf.mxu0
        %v2302 = vadd.f32 %v2284, %v2301
        %2303 = vmatmul.bf16.gmra.mxu0 %v1695
        %v2304 = vpop.f32.mrf.mxu0
        %v2305 = vadd.f32 %v2287, %v2304
        %v2306 = vpop.f32.mrf.mxu0
        %2307 = vdwg.mxu0
        %v2308 = vld [vmem:[%s5] sm:$0x1]
        %v2310 = vperm.slane %v2308, 0
        %v2312 = vmul.f32 %v2300, %v2310
        %v2313 = vmul.f32 %v2302, %v2310
        %v2314 = vmul.f32 %v2305, %v2310
        %v2315 = vld [vmem:[%s6] sm:$0x1]
        %v2317 = vperm.slane %v2315, 0
        %v2319 = vadd.f32 %v2312, %v2317
        %v2320 = vadd.f32 %v2313, %v2317
        %v2321 = vadd.f32 %v2314, %v2317
        %vm2322 = vcmp.gt.f32.partialorder %v2319, 0.0
        %vm2323 = vcmp.gt.f32.partialorder %v2320, 0.0
        %vm2324 = vcmp.gt.f32.partialorder %v2321, 0.0
        %v2325 = vmul.f32 %v2319, 0.2
        %v2326 = vmul.f32 %v2320, 0.2
        %v2327 = vmul.f32 %v2321, 0.2
        %v2328 = vsel %vm2322, %v2319, %v2325
        %v2329 = vsel %vm2323, %v2320, %v2326
        %v2330 = vsel %vm2324, %v2321, %v2327
        %v2331 = vpack.c.bf16 %v2328, %v2328
        %v2333 = vshll.u32 %v2331, 16
        %v2335 = vrot.slane %v2333, 5
        %v2336 = vshrl.u32 %v2331, 16
        %v2338 = vrot.slane %v2336, 4
        %v2339 = vor.u32 %v2338, %v2335
        %v2340 = vrot.slane %v2339, 4
        %v2343 = vld [vmem:[#allocation3] sm:$0x8]
        %v2344 = vsel %vm1191, %v2335, %v2343
        %2345 = vst [vmem:[#allocation3] sm:$0x8] %v2344
        %v2346 = vld [vmem:[#allocation3 + $0x4] sm:$0x3]
        %v2347 = vsel %vm1195, %v2340, %v2346
        %2348 = vst [vmem:[#allocation3 + $0x4] sm:$0x3] %v2347
        %v2349 = vpack.c.bf16 %v2329, %v2329
        %v2351 = vshll.u32 %v2349, 16
        %v2353 = vrot.slane %v2351, 5
        %v2354 = vsel %vm448, %v2340, %v2353
        %v2355 = vshrl.u32 %v2349, 16
        %v2357 = vrot.slane %v2355, 4
        %v2358 = vrot.slane %v2357, 4
        %v2361 = vld [vmem:[#allocation3 + $0x4] sm:$0xc]
        %v2362 = vsel %vm1213, %v2354, %v2361
        %2363 = vst [vmem:[#allocation3 + $0x4] sm:$0xc] %v2362
        %v2364 = vld [vmem:[#allocation3 + $0x8] sm:$0x1]
        %v2365 = vsel %vm1217, %v2358, %v2364
        %2366 = vst [vmem:[#allocation3 + $0x8] sm:$0x1] %v2365
        %v2367 = vor.u32 %v2357, %v2353
        %v2368 = vrot.slane %v2367, 4
        %v2370 = vld [vmem:[#allocation3 + $0x8] sm:$0xe]
        %v2371 = vsel %vm1226, %v2368, %v2370
        %2372 = vst [vmem:[#allocation3 + $0x8] sm:$0xe] %v2371
        %v2373 = vpack.c.bf16 %v2330, %v2330
        %v2375 = vshrl.u32 %v2373, 16
        %v2377 = vrot.slane %v2375, 4
        %v2378 = vshll.u32 %v2373, 16
        %v2380 = vrot.slane %v2378, 5
        %v2381 = vor.u32 %v2377, %v2380
        %v2382 = vrot.slane %v2381, 4
        %v2384 = vld [vmem:[#allocation3 + $0xc] sm:$0x7]
        %v2385 = vsel %vm1242, %v2382, %v2384
        %2386 = vst [vmem:[#allocation3 + $0xc] sm:$0x7] %v2385
        %v2387 = vld [vmem:[#allocation3] sm:$0x8]
        %v2388 = vld [vmem:[#allocation3 + $0x4] sm:$0xf]
        %v2390 = vshrl.u32 %v2387, 16
        %v2392 = vrot.slane %v2390, 7
        %v2393 = vrot.slane %v2392, 4
        %v2395 = vshrl.u32 %v2388, 16
        %v2397 = vrot.slane %v2395, 7
        %v2398 = vshll.u32 %v2388, 16
        %v2400 = vor.u32 %v2397, %v2398
        %v2401 = vsel %vm554, %v2393, %v2400
        %2403 = vst [vmem:[#allocation4] sm:$0xf] %v2401
        %v2404 = vld [vmem:[#allocation3 + $0x4] sm:$0xf]
        %2405 = vst [vmem:[#allocation4 + $0x4] sm:$0xf] %v2404
        %v2406 = vld [vmem:[#allocation3 + $0x4] sm:$0xf]
        %v2407 = vld [vmem:[#allocation3 + $0x8] sm:$0x1]
        %v2409 = vshrl.u32 %v2406, 16
        %v2411 = vrot.slane %v2409, 4
        %v2412 = vshll.u32 %v2406, 16
        %v2414 = vrot.slane %v2412, 5
        %v2415 = vor.u32 %v2411, %v2414
        %v2416 = vrot.slane %v2415, 4
        %v2418 = vshll.u32 %v2407, 16
        %v2420 = vrot.slane %v2418, 5
        %v2421 = vsel %vm448, %v2416, %v2420
        %2423 = vst [vmem:[#allocation4 + $0x8] sm:$0xf] %v2421
        %v2424 = vld [vmem:[#allocation3 + $0x4] sm:$0xc]
        %v2425 = vld [vmem:[#allocation3 + $0x8] sm:$0x7]
        %v2427 = vshrl.u32 %v2424, 16
        %v2429 = vrot.slane %v2427, 6
        %v2430 = vshll.u32 %v2424, 16
        %v2432 = vrot.slane %v2430, 7
        %v2433 = vor.u32 %v2429, %v2432
        %v2434 = vrot.slane %v2433, 4
        %v2436 = vshrl.u32 %v2425, 16
        %v2438 = vrot.slane %v2436, 6
        %v2439 = vshll.u32 %v2425, 16
        %v2441 = vrot.slane %v2439, 7
        %v2442 = vor.u32 %v2438, %v2441
        %v2443 = vsel %vm643, %v2434, %v2442
        %2445 = vst [vmem:[#allocation4 + $0xc] sm:$0xf] %v2443
        %v2446 = vld [vmem:[#allocation3 + $0x4] sm:$0x8]
        %v2447 = vld [vmem:[#allocation3 + $0x8] sm:$0x7]
        %v2450 = vrot.slane %v2446, 7
        %v2451 = vrot.slane %v2450, 4
        %v2452 = vrot.slane %v2447, 7
        %v2453 = vsel %vm525, %v2451, %v2452
        %2455 = vst [vmem:[#allocation4 + $0x10] sm:$0xf] %v2453
        %v2456 = vld [vmem:[#allocation3 + $0x4] sm:$0x8]
        %v2457 = vld [vmem:[#allocation3 + $0x8] sm:$0xf]
        %v2459 = vshrl.u32 %v2456, 16
        %v2461 = vrot.slane %v2459, 7
        %v2462 = vrot.slane %v2461, 4
        %v2464 = vshrl.u32 %v2457, 16
        %v2466 = vrot.slane %v2464, 7
        %v2467 = vshll.u32 %v2457, 16
        %v2469 = vor.u32 %v2466, %v2467
        %v2470 = vsel %vm554, %v2462, %v2469
        %2472 = vst [vmem:[#allocation4 + $0x14] sm:$0xf] %v2470
        %v2473 = vld [vmem:[#allocation3 + $0x8] sm:$0xe]
        %v2474 = vld [vmem:[#allocation3 + $0xc] sm:$0x3]
        %vm2475 = vsmask.f32 2304
        %vm2476 = vsmask.f32 6416
        %vm2477 = vmor %vm2475, %vm2476
        %v2479 = vshrl.u32 %v2473, 16
        %v2481 = vrot.slane %v2479, 5
        %v2482 = vshll.u32 %v2473, 16
        %v2484 = vrot.slane %v2482, 6
        %v2485 = vor.u32 %v2481, %v2484
        %v2486 = vrot.slane %v2485, 4
        %v2488 = vshrl.u32 %v2474, 16
        %v2490 = vrot.slane %v2488, 5
        %v2491 = vshll.u32 %v2474, 16
        %v2493 = vrot.slane %v2491, 6
        %v2494 = vor.u32 %v2490, %v2493
        %v2495 = vsel %vm2477, %v2486, %v2494
        %2497 = vst [vmem:[#allocation4 + $0x18] sm:$0xf] %v2495
        %v2498 = vld [vmem:[#allocation3 + $0x8] sm:$0xc]
        %v2499 = vld [vmem:[#allocation3 + $0xc] sm:$0x3]
        %v2502 = vrot.slane %v2498, 6
        %v2503 = vrot.slane %v2502, 4
        %v2504 = vrot.slane %v2499, 6
        %v2505 = vsel %vm620, %v2503, %v2504
        %2507 = vst [vmem:[#allocation4 + $0x1c] sm:$0xf] %v2505
        %v2508 = vld [vmem:[#allocation3 + $0x8] sm:$0xc]
        %v2509 = vld [vmem:[#allocation3 + $0xc] sm:$0x7]
        %v2511 = vshrl.u32 %v2508, 16
        %v2513 = vrot.slane %v2511, 6
        %v2514 = vshll.u32 %v2508, 16
        %v2516 = vrot.slane %v2514, 7
        %v2517 = vor.u32 %v2513, %v2516
        %v2518 = vrot.slane %v2517, 4
        %v2520 = vshrl.u32 %v2509, 16
        %v2522 = vrot.slane %v2520, 6
        %v2523 = vshll.u32 %v2509, 16
        %v2525 = vrot.slane %v2523, 7
        %v2526 = vor.u32 %v2522, %v2525
        %v2527 = vsel %vm643, %v2518, %v2526
        %2529 = vst [vmem:[#allocation4 + $0x20] sm:$0xf] %v2527
        %v2530 = vld [vmem:[#allocation4] sm:$0xff]
        %v2531 = vld [vmem:[#allocation4 + $0x8] sm:$0xff]
        %v2532 = vld [vmem:[#allocation4 + $0x10] sm:$0xff]
        %v2533 = vld [vmem:[#allocation4 + $0x18] sm:$0xff]
        %v2534 = vld [vmem:[#allocation4 + $0x20] sm:$0xf]
        %v2535 = vld [vmem:[%s7] sm:$0xf]
        %v2536 = vld [vmem:[%s7 + $0x4] sm:$0xf]
        %v2537 = vld [vmem:[%s7 + $0x8] sm:$0xf]
        %v2538 = vld [vmem:[%s7 + $0xc] sm:$0xf]
        %v2539 = vld [vmem:[%s7 + $0x10] sm:$0xf]
        %v2540 = vld [vmem:[%s7 + $0x14] sm:$0xf]
        %v2541 = vld [vmem:[%s7 + $0x18] sm:$0xf]
        %v2542 = vld [vmem:[%s7 + $0x1c] sm:$0xf]
        %v2543 = vld [vmem:[%s7 + $0x20] sm:$0xf]
        %v2544 = vld [vmem:[%s7 + $0x24] sm:$0xf]
        %v2545 = vld [vmem:[%s7 + $0x28] sm:$0xf]
        %v2546 = vld [vmem:[%s7 + $0x2c] sm:$0xf]
        %v2547 = vld [vmem:[%s7 + $0x30] sm:$0xf]
        %v2548 = vld [vmem:[%s7 + $0x34] sm:$0xf]
        %v2549 = vld [vmem:[%s7 + $0x38] sm:$0xf]
        %v2550 = vld [vmem:[%s7 + $0x3c] sm:$0xf]
        %v2551 = vld [vmem:[%s7 + $0x40] sm:$0xf]
        %v2552 = vld [vmem:[%s7 + $0x44] sm:$0xf]
        %v2553 = vld [vmem:[%s7 + $0x48] sm:$0xf]
        %v2554 = vld [vmem:[%s7 + $0x4c] sm:$0xf]
        %v2555 = vld [vmem:[%s7 + $0x50] sm:$0xf]
        %v2556 = vld [vmem:[%s7 + $0x54] sm:$0xf]
        %v2557 = vld [vmem:[%s7 + $0x58] sm:$0xf]
        %v2558 = vld [vmem:[%s7 + $0x5c] sm:$0xf]
        %v2559 = vld [vmem:[%s7 + $0x60] sm:$0xf]
        %v2560 = vld [vmem:[%s7 + $0x64] sm:$0xf]
        %v2561 = vld [vmem:[%s7 + $0x68] sm:$0xf]
        %v2562 = vld [vmem:[%s7 + $0x6c] sm:$0xf]
        %v2563 = vld [vmem:[%s7 + $0x70] sm:$0xf]
        %v2564 = vld [vmem:[%s7 + $0x74] sm:$0xf]
        %v2565 = vld [vmem:[%s7 + $0x78] sm:$0xf]
        %v2566 = vld [vmem:[%s7 + $0x7c] sm:$0xf]
        %v2567 = vld [vmem:[%s7 + $0x80] sm:$0xf]
        %v2568 = vld [vmem:[%s7 + $0x84] sm:$0xf]
        %v2569 = vld [vmem:[%s7 + $0x88] sm:$0xf]
        %v2570 = vld [vmem:[%s7 + $0x8c] sm:$0xf]
        %v2571 = vld [vmem:[%s7 + $0x90] sm:$0xf]
        %v2572 = vld [vmem:[%s7 + $0x94] sm:$0xf]
        %v2573 = vld [vmem:[%s7 + $0x98] sm:$0xf]
        %v2574 = vld [vmem:[%s7 + $0x9c] sm:$0xf]
        %v2575 = vld [vmem:[%s7 + $0xa0] sm:$0xf]
        %v2576 = vld [vmem:[%s7 + $0xa4] sm:$0xf]
        %v2577 = vld [vmem:[%s7 + $0xa8] sm:$0xf]
        %v2578 = vld [vmem:[%s7 + $0xac] sm:$0xf]
        %v2579 = vld [vmem:[%s7 + $0xb0] sm:$0xf]
        %v2580 = vld [vmem:[%s7 + $0xb4] sm:$0xf]
        %v2581 = vld [vmem:[%s7 + $0xb8] sm:$0xf]
        %v2582 = vld [vmem:[%s7 + $0xbc] sm:$0xf]
        %v2583 = vld [vmem:[%s7 + $0xc0] sm:$0xf]
        %v2584 = vld [vmem:[%s7 + $0xc4] sm:$0xf]
        %v2585 = vld [vmem:[%s7 + $0xc8] sm:$0xf]
        %v2586 = vld [vmem:[%s7 + $0xcc] sm:$0xf]
        %v2587 = vld [vmem:[%s7 + $0xd0] sm:$0xf]
        %v2588 = vld [vmem:[%s7 + $0xd4] sm:$0xf]
        %v2589 = vld [vmem:[%s7 + $0xd8] sm:$0xf]
        %v2590 = vld [vmem:[%s7 + $0xdc] sm:$0xf]
        %v2591 = vld [vmem:[%s7 + $0xe0] sm:$0xf]
        %v2592 = vld [vmem:[%s7 + $0xe4] sm:$0xf]
        %v2593 = vld [vmem:[%s7 + $0xe8] sm:$0xf]
        %v2594 = vld [vmem:[%s7 + $0xec] sm:$0xf]
        %v2595 = vld [vmem:[%s7 + $0xf0] sm:$0xf]
        %v2596 = vld [vmem:[%s7 + $0xf4] sm:$0xf]
        %v2597 = vld [vmem:[%s7 + $0xf8] sm:$0xf]
        %v2598 = vld [vmem:[%s7 + $0xfc] sm:$0xf]
        %v2599 = vld [vmem:[%s7 + $0x100] sm:$0xf]
        %v2600 = vld [vmem:[%s7 + $0x104] sm:$0xf]
        %v2601 = vld [vmem:[%s7 + $0x108] sm:$0xf]
        %v2602 = vld [vmem:[%s7 + $0x10c] sm:$0xf]
        %v2603 = vld [vmem:[%s7 + $0x110] sm:$0xf]
        %v2604 = vld [vmem:[%s7 + $0x114] sm:$0xf]
        %v2605 = vld [vmem:[%s7 + $0x118] sm:$0xf]
        %v2606 = vld [vmem:[%s7 + $0x11c] sm:$0xf]
        %v2607 = vld [vmem:[%s7 + $0x120] sm:$0xf]
        %v2608 = vld [vmem:[%s7 + $0x124] sm:$0xf]
        %v2609 = vld [vmem:[%s7 + $0x128] sm:$0xf]
        %v2610 = vld [vmem:[%s7 + $0x12c] sm:$0xf]
        %v2611 = vld [vmem:[%s7 + $0x130] sm:$0xf]
        %v2612 = vld [vmem:[%s7 + $0x134] sm:$0xf]
        %v2613 = vld [vmem:[%s7 + $0x138] sm:$0xf]
        %v2614 = vld [vmem:[%s7 + $0x13c] sm:$0xf]
        %v2615 = vld [vmem:[%s7 + $0x140] sm:$0xf]
        %v2616 = vld [vmem:[%s7 + $0x144] sm:$0xf]
        %v2617 = vld [vmem:[%s7 + $0x148] sm:$0xf]
        %v2618 = vld [vmem:[%s7 + $0x14c] sm:$0xf]
        %v2619 = vld [vmem:[%s7 + $0x150] sm:$0xf]
        %v2620 = vld [vmem:[%s7 + $0x154] sm:$0xf]
        %v2621 = vld [vmem:[%s7 + $0x158] sm:$0xf]
        %v2622 = vld [vmem:[%s7 + $0x15c] sm:$0xf]
        %v2623 = vld [vmem:[%s7 + $0x160] sm:$0xf]
        %v2624 = vld [vmem:[%s7 + $0x164] sm:$0xf]
        %v2625 = vld [vmem:[%s7 + $0x168] sm:$0xf]
        %v2626 = vld [vmem:[%s7 + $0x16c] sm:$0xf]
        %v2627 = vld [vmem:[%s7 + $0x170] sm:$0xf]
        %v2628 = vld [vmem:[%s7 + $0x174] sm:$0xf]
        %v2629 = vld [vmem:[%s7 + $0x178] sm:$0xf]
        %v2630 = vld [vmem:[%s7 + $0x17c] sm:$0xf]
        %v2631 = vld [vmem:[%s7 + $0x180] sm:$0xf]
        %v2632 = vld [vmem:[%s7 + $0x184] sm:$0xf]
        %v2633 = vld [vmem:[%s7 + $0x188] sm:$0xf]
        %v2634 = vld [vmem:[%s7 + $0x18c] sm:$0xf]
        %v2635 = vld [vmem:[%s7 + $0x190] sm:$0xf]
        %v2636 = vld [vmem:[%s7 + $0x194] sm:$0xf]
        %v2637 = vld [vmem:[%s7 + $0x198] sm:$0xf]
        %v2638 = vld [vmem:[%s7 + $0x19c] sm:$0xf]
        %v2639 = vld [vmem:[%s7 + $0x1a0] sm:$0xf]
        %v2640 = vld [vmem:[%s7 + $0x1a4] sm:$0xf]
        %v2641 = vld [vmem:[%s7 + $0x1a8] sm:$0xf]
        %v2642 = vld [vmem:[%s7 + $0x1ac] sm:$0xf]
        %v2643 = vld [vmem:[%s7 + $0x1b0] sm:$0xf]
        %v2644 = vld [vmem:[%s7 + $0x1b4] sm:$0xf]
        %v2645 = vld [vmem:[%s7 + $0x1b8] sm:$0xf]
        %v2646 = vld [vmem:[%s7 + $0x1bc] sm:$0xf]
        %v2647 = vld [vmem:[%s7 + $0x1c0] sm:$0xf]
        %v2648 = vld [vmem:[%s7 + $0x1c4] sm:$0xf]
        %v2649 = vld [vmem:[%s7 + $0x1c8] sm:$0xf]
        %v2650 = vld [vmem:[%s7 + $0x1cc] sm:$0xf]
        %v2651 = vld [vmem:[%s7 + $0x1d0] sm:$0xf]
        %v2652 = vld [vmem:[%s7 + $0x1d4] sm:$0xf]
        %v2653 = vld [vmem:[%s7 + $0x1d8] sm:$0xf]
        %v2654 = vld [vmem:[%s7 + $0x1dc] sm:$0xf]
        %v2655 = vld [vmem:[%s7 + $0x1e0] sm:$0xf]
        %v2656 = vld [vmem:[%s7 + $0x1e4] sm:$0xf]
        %v2657 = vld [vmem:[%s7 + $0x1e8] sm:$0xf]
        %v2658 = vld [vmem:[%s7 + $0x1ec] sm:$0xf]
        %v2659 = vld [vmem:[%s7 + $0x1f0] sm:$0xf]
        %v2660 = vld [vmem:[%s7 + $0x1f4] sm:$0xf]
        %v2661 = vld [vmem:[%s7 + $0x1f8] sm:$0xf]
        %v2662 = vld [vmem:[%s7 + $0x1fc] sm:$0xf]
        %v2663 = vld [vmem:[%s7 + $0x200] sm:$0xf]
        %v2664 = vld [vmem:[%s7 + $0x204] sm:$0xf]
        %v2665 = vld [vmem:[%s7 + $0x208] sm:$0xf]
        %v2666 = vld [vmem:[%s7 + $0x20c] sm:$0xf]
        %v2667 = vld [vmem:[%s7 + $0x210] sm:$0xf]
        %v2668 = vld [vmem:[%s7 + $0x214] sm:$0xf]
        %v2669 = vld [vmem:[%s7 + $0x218] sm:$0xf]
        %v2670 = vld [vmem:[%s7 + $0x21c] sm:$0xf]
        %v2671 = vld [vmem:[%s7 + $0x220] sm:$0xf]
        %v2672 = vld [vmem:[%s7 + $0x224] sm:$0xf]
        %v2673 = vld [vmem:[%s7 + $0x228] sm:$0xf]
        %v2674 = vld [vmem:[%s7 + $0x22c] sm:$0xf]
        %v2675 = vld [vmem:[%s7 + $0x230] sm:$0xf]
        %v2676 = vld [vmem:[%s7 + $0x234] sm:$0xf]
        %v2677 = vld [vmem:[%s7 + $0x238] sm:$0xf]
        %v2678 = vld [vmem:[%s7 + $0x23c] sm:$0xf]
        %v2684 = vunpack.c.l.b16 %v2530
        %v2685 = vunpack.c.h.b16 %v2530
        %v2686 = vunpack.c.l.b16 %v2531
        %v2687 = vunpack.c.h.b16 %v2531
        %v2688 = vunpack.c.l.b16 %v2532
        %v2689 = vunpack.c.h.b16 %v2532
        %v2690 = vunpack.c.l.b16 %v2533
        %v2691 = vunpack.c.h.b16 %v2533
        %v2692 = vunpack.c.l.b16 %v2534
        %v2693 = vpack.c.b16 %v2684, %v2684
        %v2694 = vpack.c.b16 %v2685, %v2685
        %v2695 = vpack.c.b16 %v2686, %v2686
        %v2696 = vpack.c.b16 %v2687, %v2687
        %v2697 = vpack.c.b16 %v2688, %v2688
        %v2698 = vpack.c.b16 %v2689, %v2689
        %v2699 = vpack.c.b16 %v2690, %v2690
        %v2700 = vpack.c.b16 %v2691, %v2691
        %v2701 = vpack.c.b16 %v2692, %v2692
        %v2855 = vunpack.c.l.b16 %v2535
        %v2856 = vunpack.c.l.b16 %v2536
        %v2857 = vunpack.c.l.b16 %v2537
        %v2858 = vunpack.c.l.b16 %v2538
        %v2859 = vunpack.c.l.b16 %v2539
        %v2860 = vunpack.c.l.b16 %v2540
        %v2861 = vunpack.c.l.b16 %v2541
        %v2862 = vunpack.c.l.b16 %v2542
        %v2863 = vunpack.c.l.b16 %v2543
        %v2864 = vunpack.c.l.b16 %v2544
        %v2865 = vunpack.c.l.b16 %v2545
        %v2866 = vunpack.c.l.b16 %v2546
        %v2867 = vunpack.c.l.b16 %v2547
        %v2868 = vunpack.c.l.b16 %v2548
        %v2869 = vunpack.c.l.b16 %v2549
        %v2870 = vunpack.c.l.b16 %v2550
        %v2871 = vunpack.c.l.b16 %v2551
        %v2872 = vunpack.c.l.b16 %v2552
        %v2873 = vunpack.c.l.b16 %v2553
        %v2874 = vunpack.c.l.b16 %v2554
        %v2875 = vunpack.c.l.b16 %v2555
        %v2876 = vunpack.c.l.b16 %v2556
        %v2877 = vunpack.c.l.b16 %v2557
        %v2878 = vunpack.c.l.b16 %v2558
        %v2879 = vunpack.c.l.b16 %v2559
        %v2880 = vunpack.c.l.b16 %v2560
        %v2881 = vunpack.c.l.b16 %v2561
        %v2882 = vunpack.c.l.b16 %v2562
        %v2883 = vunpack.c.l.b16 %v2563
        %v2884 = vunpack.c.l.b16 %v2564
        %v2885 = vunpack.c.l.b16 %v2565
        %v2886 = vunpack.c.l.b16 %v2566
        %v2887 = vunpack.c.l.b16 %v2567
        %v2888 = vunpack.c.l.b16 %v2568
        %v2889 = vunpack.c.l.b16 %v2569
        %v2890 = vunpack.c.l.b16 %v2570
        %v2891 = vunpack.c.l.b16 %v2571
        %v2892 = vunpack.c.l.b16 %v2572
        %v2893 = vunpack.c.l.b16 %v2573
        %v2894 = vunpack.c.l.b16 %v2574
        %v2895 = vunpack.c.l.b16 %v2575
        %v2896 = vunpack.c.l.b16 %v2576
        %v2897 = vunpack.c.l.b16 %v2577
        %v2898 = vunpack.c.l.b16 %v2578
        %v2899 = vunpack.c.l.b16 %v2579
        %v2900 = vunpack.c.l.b16 %v2580
        %v2901 = vunpack.c.l.b16 %v2581
        %v2902 = vunpack.c.l.b16 %v2582
        %v2903 = vunpack.c.l.b16 %v2583
        %v2904 = vunpack.c.l.b16 %v2584
        %v2905 = vunpack.c.l.b16 %v2585
        %v2906 = vunpack.c.l.b16 %v2586
        %v2907 = vunpack.c.l.b16 %v2587
        %v2908 = vunpack.c.l.b16 %v2588
        %v2909 = vunpack.c.l.b16 %v2589
        %v2910 = vunpack.c.l.b16 %v2590
        %v2911 = vunpack.c.l.b16 %v2591
        %v2912 = vunpack.c.l.b16 %v2592
        %v2913 = vunpack.c.l.b16 %v2593
        %v2914 = vunpack.c.l.b16 %v2594
        %v2915 = vunpack.c.l.b16 %v2595
        %v2916 = vunpack.c.l.b16 %v2596
        %v2917 = vunpack.c.l.b16 %v2597
        %v2918 = vunpack.c.l.b16 %v2598
        %v2919 = vunpack.c.l.b16 %v2599
        %v2920 = vunpack.c.l.b16 %v2600
        %v2921 = vunpack.c.l.b16 %v2601
        %v2922 = vunpack.c.l.b16 %v2602
        %v2923 = vunpack.c.l.b16 %v2603
        %v2924 = vunpack.c.l.b16 %v2604
        %v2925 = vunpack.c.l.b16 %v2605
        %v2926 = vunpack.c.l.b16 %v2606
        %v2927 = vunpack.c.l.b16 %v2607
        %v2928 = vunpack.c.l.b16 %v2608
        %v2929 = vunpack.c.l.b16 %v2609
        %v2930 = vunpack.c.l.b16 %v2610
        %v2931 = vunpack.c.l.b16 %v2611
        %v2932 = vunpack.c.l.b16 %v2612
        %v2933 = vunpack.c.l.b16 %v2613
        %v2934 = vunpack.c.l.b16 %v2614
        %v2935 = vunpack.c.l.b16 %v2615
        %v2936 = vunpack.c.l.b16 %v2616
        %v2937 = vunpack.c.l.b16 %v2617
        %v2938 = vunpack.c.l.b16 %v2618
        %v2939 = vunpack.c.l.b16 %v2619
        %v2940 = vunpack.c.l.b16 %v2620
        %v2941 = vunpack.c.l.b16 %v2621
        %v2942 = vunpack.c.l.b16 %v2622
        %v2943 = vunpack.c.l.b16 %v2623
        %v2944 = vunpack.c.l.b16 %v2624
        %v2945 = vunpack.c.l.b16 %v2625
        %v2946 = vunpack.c.l.b16 %v2626
        %v2947 = vunpack.c.l.b16 %v2627
        %v2948 = vunpack.c.l.b16 %v2628
        %v2949 = vunpack.c.l.b16 %v2629
        %v2950 = vunpack.c.l.b16 %v2630
        %v2951 = vunpack.c.l.b16 %v2631
        %v2952 = vunpack.c.l.b16 %v2632
        %v2953 = vunpack.c.l.b16 %v2633
        %v2954 = vunpack.c.l.b16 %v2634
        %v2955 = vunpack.c.l.b16 %v2635
        %v2956 = vunpack.c.l.b16 %v2636
        %v2957 = vunpack.c.l.b16 %v2637
        %v2958 = vunpack.c.l.b16 %v2638
        %v2959 = vunpack.c.l.b16 %v2639
        %v2960 = vunpack.c.l.b16 %v2640
        %v2961 = vunpack.c.l.b16 %v2641
        %v2962 = vunpack.c.l.b16 %v2642
        %v2963 = vunpack.c.l.b16 %v2643
        %v2964 = vunpack.c.l.b16 %v2644
        %v2965 = vunpack.c.l.b16 %v2645
        %v2966 = vunpack.c.l.b16 %v2646
        %v2967 = vunpack.c.l.b16 %v2647
        %v2968 = vunpack.c.l.b16 %v2648
        %v2969 = vunpack.c.l.b16 %v2649
        %v2970 = vunpack.c.l.b16 %v2650
        %v2971 = vunpack.c.l.b16 %v2651
        %v2972 = vunpack.c.l.b16 %v2652
        %v2973 = vunpack.c.l.b16 %v2653
        %v2974 = vunpack.c.l.b16 %v2654
        %v2975 = vunpack.c.l.b16 %v2655
        %v2976 = vunpack.c.l.b16 %v2656
        %v2977 = vunpack.c.l.b16 %v2657
        %v2978 = vunpack.c.l.b16 %v2658
        %v2979 = vunpack.c.l.b16 %v2659
        %v2980 = vunpack.c.l.b16 %v2660
        %v2981 = vunpack.c.l.b16 %v2661
        %v2982 = vunpack.c.l.b16 %v2662
        %v2983 = vunpack.c.l.b16 %v2663
        %v2984 = vunpack.c.l.b16 %v2664
        %v2985 = vunpack.c.l.b16 %v2665
        %v2986 = vunpack.c.l.b16 %v2666
        %v2987 = vunpack.c.l.b16 %v2667
        %v2988 = vunpack.c.l.b16 %v2668
        %v2989 = vunpack.c.l.b16 %v2669
        %v2990 = vunpack.c.l.b16 %v2670
        %v2991 = vunpack.c.l.b16 %v2671
        %v2992 = vunpack.c.l.b16 %v2672
        %v2993 = vunpack.c.l.b16 %v2673
        %v2994 = vunpack.c.l.b16 %v2674
        %v2995 = vunpack.c.l.b16 %v2675
        %v2996 = vunpack.c.l.b16 %v2676
        %v2997 = vunpack.c.l.b16 %v2677
        %v2998 = vunpack.c.l.b16 %v2678
        %v2999 = vpack.c.b16 %v2856, %v2855
        %v3000 = vpack.c.b16 %v2858, %v2857
        %v3001 = vpack.c.b16 %v2860, %v2859
        %v3002 = vpack.c.b16 %v2862, %v2861
        %v3003 = vpack.c.b16 %v2864, %v2863
        %v3004 = vpack.c.b16 %v2866, %v2865
        %v3005 = vpack.c.b16 %v2868, %v2867
        %v3006 = vpack.c.b16 %v2870, %v2869
        %v3007 = vpack.c.b16 %v2872, %v2871
        %v3008 = vpack.c.b16 %v2874, %v2873
        %v3009 = vpack.c.b16 %v2876, %v2875
        %v3010 = vpack.c.b16 %v2878, %v2877
        %v3011 = vpack.c.b16 %v2880, %v2879
        %v3012 = vpack.c.b16 %v2882, %v2881
        %v3013 = vpack.c.b16 %v2884, %v2883
        %v3014 = vpack.c.b16 %v2886, %v2885
        %v3015 = vpack.c.b16 %v2888, %v2887
        %v3016 = vpack.c.b16 %v2890, %v2889
        %v3017 = vpack.c.b16 %v2892, %v2891
        %v3018 = vpack.c.b16 %v2894, %v2893
        %v3019 = vpack.c.b16 %v2896, %v2895
        %v3020 = vpack.c.b16 %v2898, %v2897
        %v3021 = vpack.c.b16 %v2900, %v2899
        %v3022 = vpack.c.b16 %v2902, %v2901
        %v3023 = vpack.c.b16 %v2904, %v2903
        %v3024 = vpack.c.b16 %v2906, %v2905
        %v3025 = vpack.c.b16 %v2908, %v2907
        %v3026 = vpack.c.b16 %v2910, %v2909
        %v3027 = vpack.c.b16 %v2912, %v2911
        %v3028 = vpack.c.b16 %v2914, %v2913
        %v3029 = vpack.c.b16 %v2916, %v2915
        %v3030 = vpack.c.b16 %v2918, %v2917
        %v3031 = vpack.c.b16 %v2920, %v2919
        %v3032 = vpack.c.b16 %v2922, %v2921
        %v3033 = vpack.c.b16 %v2924, %v2923
        %v3034 = vpack.c.b16 %v2926, %v2925
        %v3035 = vpack.c.b16 %v2928, %v2927
        %v3036 = vpack.c.b16 %v2930, %v2929
        %v3037 = vpack.c.b16 %v2932, %v2931
        %v3038 = vpack.c.b16 %v2934, %v2933
        %v3039 = vpack.c.b16 %v2936, %v2935
        %v3040 = vpack.c.b16 %v2938, %v2937
        %v3041 = vpack.c.b16 %v2940, %v2939
        %v3042 = vpack.c.b16 %v2942, %v2941
        %v3043 = vpack.c.b16 %v2944, %v2943
        %v3044 = vpack.c.b16 %v2946, %v2945
        %v3045 = vpack.c.b16 %v2948, %v2947
        %v3046 = vpack.c.b16 %v2950, %v2949
        %v3047 = vpack.c.b16 %v2952, %v2951
        %v3048 = vpack.c.b16 %v2954, %v2953
        %v3049 = vpack.c.b16 %v2956, %v2955
        %v3050 = vpack.c.b16 %v2958, %v2957
        %v3051 = vpack.c.b16 %v2960, %v2959
        %v3052 = vpack.c.b16 %v2962, %v2961
        %v3053 = vpack.c.b16 %v2964, %v2963
        %v3054 = vpack.c.b16 %v2966, %v2965
        %v3055 = vpack.c.b16 %v2968, %v2967
        %v3056 = vpack.c.b16 %v2970, %v2969
        %v3057 = vpack.c.b16 %v2972, %v2971
        %v3058 = vpack.c.b16 %v2974, %v2973
        %v3059 = vpack.c.b16 %v2976, %v2975
        %v3060 = vpack.c.b16 %v2978, %v2977
        %v3061 = vpack.c.b16 %v2980, %v2979
        %v3062 = vpack.c.b16 %v2982, %v2981
        %v3063 = vpack.c.b16 %v2984, %v2983
        %v3064 = vpack.c.b16 %v2986, %v2985
        %v3065 = vpack.c.b16 %v2988, %v2987
        %v3066 = vpack.c.b16 %v2990, %v2989
        %v3067 = vpack.c.b16 %v2992, %v2991
        %v3068 = vpack.c.b16 %v2994, %v2993
        %v3069 = vpack.c.b16 %v2996, %v2995
        %v3070 = vpack.c.b16 %v2998, %v2997
        %3143 = vmatpush.bf16.msra.mxu0 %v3006
        %3144 = vmatpush.bf16.msra.mxu0 %v3005
        %3145 = vmatpush.bf16.msra.mxu0 %v3004
        %3146 = vmatpush.bf16.msra.mxu0 %v3003
        %3147 = vmatpush.bf16.msra.mxu0 %v3002
        %3148 = vmatpush.bf16.msra.mxu0 %v3001
        %3149 = vmatpush.bf16.msra.mxu0 %v3000
        %3150 = vmatpush.bf16.msra.mxu0 %v2999
        %3151 = vmatmul.bf16.gmra.mxu0 %v2693
        %v3152 = vpop.f32.mrf.mxu0
        %v3153 = vadd.f32 0.0, %v3152
        %v3154 = vpop.f32.mrf.mxu0
        %3155 = vdwg.mxu0
        %3156 = vmatpush.bf16.msra.mxu0 %v3014
        %3157 = vmatpush.bf16.msra.mxu0 %v3013
        %3158 = vmatpush.bf16.msra.mxu0 %v3012
        %3159 = vmatpush.bf16.msra.mxu0 %v3011
        %3160 = vmatpush.bf16.msra.mxu0 %v3010
        %3161 = vmatpush.bf16.msra.mxu0 %v3009
        %3162 = vmatpush.bf16.msra.mxu0 %v3008
        %3163 = vmatpush.bf16.msra.mxu0 %v3007
        %3164 = vmatmul.bf16.gmra.mxu0 %v2694
        %v3165 = vpop.f32.mrf.mxu0
        %v3166 = vadd.f32 %v3153, %v3165
        %v3167 = vpop.f32.mrf.mxu0
        %3168 = vdwg.mxu0
        %3169 = vmatpush.bf16.msra.mxu0 %v3022
        %3170 = vmatpush.bf16.msra.mxu0 %v3021
        %3171 = vmatpush.bf16.msra.mxu0 %v3020
        %3172 = vmatpush.bf16.msra.mxu0 %v3019
        %3173 = vmatpush.bf16.msra.mxu0 %v3018
        %3174 = vmatpush.bf16.msra.mxu0 %v3017
        %3175 = vmatpush.bf16.msra.mxu0 %v3016
        %3176 = vmatpush.bf16.msra.mxu0 %v3015
        %3177 = vmatmul.bf16.gmra.mxu0 %v2695
        %v3178 = vpop.f32.mrf.mxu0
        %v3179 = vadd.f32 %v3166, %v3178
        %v3180 = vpop.f32.mrf.mxu0
        %3181 = vdwg.mxu0
        %3182 = vmatpush.bf16.msra.mxu0 %v3030
        %3183 = vmatpush.bf16.msra.mxu0 %v3029
        %3184 = vmatpush.bf16.msra.mxu0 %v3028
        %3185 = vmatpush.bf16.msra.mxu0 %v3027
        %3186 = vmatpush.bf16.msra.mxu0 %v3026
        %3187 = vmatpush.bf16.msra.mxu0 %v3025
        %3188 = vmatpush.bf16.msra.mxu0 %v3024
        %3189 = vmatpush.bf16.msra.mxu0 %v3023
        %3190 = vmatmul.bf16.gmra.mxu0 %v2696
        %v3191 = vpop.f32.mrf.mxu0
        %v3192 = vadd.f32 %v3179, %v3191
        %v3193 = vpop.f32.mrf.mxu0
        %3194 = vdwg.mxu0
        %3195 = vmatpush.bf16.msra.mxu0 %v3038
        %3196 = vmatpush.bf16.msra.mxu0 %v3037
        %3197 = vmatpush.bf16.msra.mxu0 %v3036
        %3198 = vmatpush.bf16.msra.mxu0 %v3035
        %3199 = vmatpush.bf16.msra.mxu0 %v3034
        %3200 = vmatpush.bf16.msra.mxu0 %v3033
        %3201 = vmatpush.bf16.msra.mxu0 %v3032
        %3202 = vmatpush.bf16.msra.mxu0 %v3031
        %3203 = vmatmul.bf16.gmra.mxu0 %v2697
        %v3204 = vpop.f32.mrf.mxu0
        %v3205 = vadd.f32 %v3192, %v3204
        %v3206 = vpop.f32.mrf.mxu0
        %3207 = vdwg.mxu0
        %3208 = vmatpush.bf16.msra.mxu0 %v3046
        %3209 = vmatpush.bf16.msra.mxu0 %v3045
        %3210 = vmatpush.bf16.msra.mxu0 %v3044
        %3211 = vmatpush.bf16.msra.mxu0 %v3043
        %3212 = vmatpush.bf16.msra.mxu0 %v3042
        %3213 = vmatpush.bf16.msra.mxu0 %v3041
        %3214 = vmatpush.bf16.msra.mxu0 %v3040
        %3215 = vmatpush.bf16.msra.mxu0 %v3039
        %3216 = vmatmul.bf16.gmra.mxu0 %v2698
        %v3217 = vpop.f32.mrf.mxu0
        %v3218 = vadd.f32 %v3205, %v3217
        %v3219 = vpop.f32.mrf.mxu0
        %3220 = vdwg.mxu0
        %3221 = vmatpush.bf16.msra.mxu0 %v3054
        %3222 = vmatpush.bf16.msra.mxu0 %v3053
        %3223 = vmatpush.bf16.msra.mxu0 %v3052
        %3224 = vmatpush.bf16.msra.mxu0 %v3051
        %3225 = vmatpush.bf16.msra.mxu0 %v3050
        %3226 = vmatpush.bf16.msra.mxu0 %v3049
        %3227 = vmatpush.bf16.msra.mxu0 %v3048
        %3228 = vmatpush.bf16.msra.mxu0 %v3047
        %3229 = vmatmul.bf16.gmra.mxu0 %v2699
        %v3230 = vpop.f32.mrf.mxu0
        %v3231 = vadd.f32 %v3218, %v3230
        %v3232 = vpop.f32.mrf.mxu0
        %3233 = vdwg.mxu0
        %3234 = vmatpush.bf16.msra.mxu0 %v3062
        %3235 = vmatpush.bf16.msra.mxu0 %v3061
        %3236 = vmatpush.bf16.msra.mxu0 %v3060
        %3237 = vmatpush.bf16.msra.mxu0 %v3059
        %3238 = vmatpush.bf16.msra.mxu0 %v3058
        %3239 = vmatpush.bf16.msra.mxu0 %v3057
        %3240 = vmatpush.bf16.msra.mxu0 %v3056
        %3241 = vmatpush.bf16.msra.mxu0 %v3055
        %3242 = vmatmul.bf16.gmra.mxu0 %v2700
        %v3243 = vpop.f32.mrf.mxu0
        %v3244 = vadd.f32 %v3231, %v3243
        %v3245 = vpop.f32.mrf.mxu0
        %3246 = vdwg.mxu0
        %3247 = vmatpush.bf16.msra.mxu0 %v3070
        %3248 = vmatpush.bf16.msra.mxu0 %v3069
        %3249 = vmatpush.bf16.msra.mxu0 %v3068
        %3250 = vmatpush.bf16.msra.mxu0 %v3067
        %3251 = vmatpush.bf16.msra.mxu0 %v3066
        %3252 = vmatpush.bf16.msra.mxu0 %v3065
        %3253 = vmatpush.bf16.msra.mxu0 %v3064
        %3254 = vmatpush.bf16.msra.mxu0 %v3063
        %3255 = vmatmul.bf16.gmra.mxu0 %v2701
        %v3256 = vpop.f32.mrf.mxu0
        %v3257 = vadd.f32 %v3244, %v3256
        %v3258 = vpop.f32.mrf.mxu0
        %3259 = vdwg.mxu0
        %vm3260 = vcmp.gt.f32.partialorder %v3257, 0.0
        %v3261 = vmul.f32 %v3257, 0.2
        %v3262 = vsel %vm3260, %v3257, %v3261
        %v3264 = vrot.slane %v3262, 1
        %v3266 = vadd.f32 %v3262, %v3264
        %v3267 = vrot.slane %v3262, 6
        %v3269 = vadd.f32 %v3266, %v3267
        %v3270 = vrot.slane %v3262, 7
        %v3272 = vadd.f32 %v3269, %v3270
        %v3273 = vmul.f32 %v3272, 0.25
        %s3274 = scalar_lea.vmem [#allocation5], %s27
        %3275 = vst [vmem:[%s3274] sm:$0x1] %v3273
        %v3276 = vld [vmem:[%s8] sm:$0xff]
        %v3277 = vld [vmem:[%s8 + $0x8] sm:$0xff]
        %v3278 = vld [vmem:[%s8 + $0x10] sm:$0xff]
        %v3279 = vld [vmem:[%s8 + $0x18] sm:$0xff]
        %v3280 = vld [vmem:[%s8 + $0x20] sm:$0xff]
        %v3281 = vld [vmem:[%s8 + $0x28] sm:$0xff]
        %v3282 = vld [vmem:[%s8 + $0x30] sm:$0xff]
        %v3283 = vld [vmem:[%s8 + $0x38] sm:$0xff]
        %v3284 = vld [vmem:[%s8 + $0x40] sm:$0xff]
        %v3285 = vld [vmem:[%s8 + $0x48] sm:$0xff]
        %v3286 = vld [vmem:[%s8 + $0x50] sm:$0xff]
        %v3287 = vld [vmem:[%s8 + $0x58] sm:$0xff]
        %v3288 = vld [vmem:[%s8 + $0x60] sm:$0xff]
        %v3289 = vld [vmem:[%s8 + $0x68] sm:$0xff]
        %v3290 = vld [vmem:[%s8 + $0x70] sm:$0xff]
        %v3291 = vld [vmem:[%s8 + $0x78] sm:$0xff]
        %v3292 = vld [vmem:[%s9] sm:$0x1]
        %3293 = vmatpush.msra.mxu0 %v3291
        %3294 = vmatpush.msra.mxu0 %v3290
        %3295 = vmatpush.msra.mxu0 %v3289
        %3296 = vmatpush.msra.mxu0 %v3288
        %3297 = vmatpush.msra.mxu0 %v3287
        %3298 = vmatpush.msra.mxu0 %v3286
        %3299 = vmatpush.msra.mxu0 %v3285
        %3300 = vmatpush.msra.mxu0 %v3284
        %3301 = vmatpush.msra.mxu0 %v3283
        %3302 = vmatpush.msra.mxu0 %v3282
        %3303 = vmatpush.msra.mxu0 %v3281
        %3304 = vmatpush.msra.mxu0 %v3280
        %3305 = vmatpush.msra.mxu0 %v3279
        %3306 = vmatpush.msra.mxu0 %v3278
        %3307 = vmatpush.msra.mxu0 %v3277
        %3308 = vmatpush.msra.mxu0 %v3276
        %3309 = vmatmul.f32.gmra.mxu0 %v3273
        %v3310 = vpop.f32.mrf.mxu0
        %v3311 = vadd.f32 %v3292, %v3310
        %3312 = vdwg.mxu0
        %s3313 = scalar_lea.vmem [#allocation6], %s27
        %vm3314 = vcmask 81920
        %3315 = vst.msk [vmem:[%s3313] sm:$0x1] %vm3314, %v3311
        %p3316 = scmp.eq.s32.totalorder %s27, 1
        // Predicated region
        $region65: #{discriminator_forward.7} parent=59 // pred_check
          %p3317 = pneg %p3316
        $region66: #{discriminator_forward.7} parent=59 // pred_check_branch
          %3319 = sbr.rel (%p3317) target = $region68
        $region67: #{discriminator_forward.7} parent=59 // pred_region
          %v3320 = vld [vmem:[#allocation5] sm:$0x1]
          %v3321 = vld [vmem:[#allocation5 + $0x1] sm:$0x1]
          %3324 = vst [vmem:[#allocation1] ss:$9 sm:$0xff] %v3320
          %s3325 = scalar_lea.vmem [#allocation1], 1
          %3326 = vst [vmem:[%s3325] ss:$9 sm:$0xff] %v3321
          %v3327 = vld [vmem:[#allocation1] sm:$0xff]
          %3329 = vst [vmem:[#allocation7] sm:$0x3] %v3327
          %v3330 = vld [vmem:[#allocation6] sm:$0x1]
          %v3331 = vld [vmem:[#allocation6 + $0x1] sm:$0x1]
          %3334 = vst [vmem:[#allocation1] ss:$9 sm:$0xff] %v3330
          %s3335 = scalar_lea.vmem [#allocation1], 1
          %3336 = vst [vmem:[%s3335] ss:$9 sm:$0xff] %v3331
          %v3337 = vld [vmem:[#allocation1] sm:$0xff]
          %vm3339 = vcmask 82944
          %3340 = vst.msk [vmem:[#allocation9] sm:$0x3] %vm3339, %v3337
          %v3341 = vlaneseq
          %vm3342 = vcmp.ge.s32.totalorder %v3341, 0
          %vm3343 = vcmp.lt.s32.totalorder %v3341, 11
          %vm3344 = vmand %vm3342, %vm3343
          %v3345 = vsel %vm3344, %v3330, -inf
          %v3346 = vsel %vm3344, %v3331, -inf
          %v3347 = vmax.f32 %v3345, %v3346
          %v3349 = vperm.slane %v3347, 0
          %v3351 = vrot.slane %v3349, 1
          %v3353 = vsub.f32 %v3330, %v3349
          %v3354 = vsub.f32 %v3331, %v3351
          %v3355 = vmul.f32 %v3353, 1.442695
          %v3356 = vpow.pop %v3355
          %v3357 = vmul.f32 %v3354, 1.442695
          %v3358 = vpow.pop %v3357
          %3361 = vst [vmem:[#allocation1] ss:$9 sm:$0xff] %v3356
          %s3362 = scalar_lea.vmem [#allocation1], 1
          %3363 = vst [vmem:[%s3362] ss:$9 sm:$0xff] %v3358
          %v3364 = vld [vmem:[#allocation1] sm:$0xff]
          %v3366 = vsel %vm3339, %v3364, 0.0
          %v3367 = vrot.slane %v3366, 4
          %v3368 = vadd.f32 %v3366, %v3367
          %v3369 = vrot.slane %v3368, 2
          %v3370 = vadd.f32 %v3368, %v3369
          %v3371 = vrot.slane %v3370, 1
          %v3372 = vadd.f32 %v3370, %v3371
          %v3373 = vlog2.pop %v3372
          %v3374 = vmul.f32 %v3373, 0.6931472
          %v3375 = vadd.f32 %v3374, %v3347
          %v3376 = vperm.slane %v3375, 0
          %v3378 = vrot.slane %v3376, 1
          %v3380 = vsub.f32 %v3330, %v3376
          %v3381 = vsub.f32 %v3331, %v3378
          %3384 = vst [vmem:[#allocation1] ss:$9 sm:$0xff] %v3380
          %s3385 = scalar_lea.vmem [#allocation1], 1
          %3386 = vst [vmem:[%s3385] ss:$9 sm:$0xff] %v3381
          %v3387 = vld [vmem:[#allocation1] sm:$0xff]
          %3389 = vst.msk [vmem:[#allocation11] sm:$0x3] %vm3339, %v3387
          %v3390 = vlaneseq
          %v3391 = vand.u32 %v3390, 127
          %vm3392 = vcmp.lt.s32.totalorder %v3391, 10
          %3393 = vst [vmem:[#allocation1] ss:$9 sm:$0xff] %v3330
          %s3394 = scalar_lea.vmem [#allocation1], 1
          %3395 = vst [vmem:[%s3394] ss:$9 sm:$0xff] %v3331
          %v3396 = vld [vmem:[#allocation1] sm:$0xff]
          %v3398 = vsel %vm3392, %v3396, -inf
          %v3399 = vsel %vm3339, %v3398, -inf
          %3400 = vmax.xlane.f32.xlu0 %v3399
          %v3401 = vpop.xlane.xlu0 %3400
          %v3403 = vperm.slane %v3401, 0
          %v3404 = vperm.slane %v3401, 1
          %v3407 = vsub.f32 %v3330, %v3403
          %v3408 = vsub.f32 %v3331, %v3404
          %v3409 = vmul.f32 %v3407, 1.442695
          %v3410 = vpow.pop %v3409
          %v3411 = vmul.f32 %v3408, 1.442695
          %v3412 = vpow.pop %v3411
          %3415 = vst [vmem:[#allocation1] ss:$9 sm:$0xff] %v3410
          %s3416 = scalar_lea.vmem [#allocation1], 1
          %3417 = vst [vmem:[%s3416] ss:$9 sm:$0xff] %v3412
          %v3418 = vld [vmem:[#allocation1] sm:$0xff]
          %v3420 = vsel %vm3392, %v3418, 0.0
          %v3421 = vsel %vm3339, %v3420, 0.0
          %3422 = vadd.xlane.f32.xlu0 %v3421
          %v3423 = vpop.xlane.xlu0 %3422
          %vm3424 = vcmp.eq.s32.totalorder %v3391, 10
          %3425 = vst [vmem:[#allocation1] ss:$9 sm:$0xff] %v3330
          %s3426 = scalar_lea.vmem [#allocation1], 1
          %3427 = vst [vmem:[%s3426] ss:$9 sm:$0xff] %v3331
          %v3428 = vld [vmem:[#allocation1] sm:$0xff]
          %v3430 = vsel %vm3424, %v3428, 0.0
          %v3431 = vsel %vm3339, %v3430, 0.0
          %3432 = vadd.xlane.f32.xlu0 %v3431
          %v3433 = vpop.xlane.xlu0 %3432
          %v3434 = vlog2.pop %v3423
          %v3435 = vmul.f32 %v3434, 0.6931472
          %v3436 = vadd.f32 %v3435, %v3401
          %v3437 = vsub.f32 %v3436, %v3433
          %vm3438 = vcmask 1024
          %3439 = vst.msk [vmem:[%s13] sm:$0x3] %vm3438, %v3437
        $region68: #{discriminator_forward.7} parent=59 // pred_fallthru
          _
        // Predicated region
        $region69: #{discriminator_forward.7} parent=59 // pred_check
          %p3440 = pneg %p255
        $region70: #{discriminator_forward.7} parent=59 // pred_check_branch
          %3442 = sbr.rel (%p3440) target = $region72
        $region71: #{discriminator_forward.7} parent=59 // pred_region
          %3444 = vsyncadd [#allocation8], 0
          %s3446 = sshll.u32 [#allocation7], 4
          %s3447 = int_to_ptr.vmem [resolvable:$true] %s3446
          %s3448 = sshll.u32 %s10, 4
          %s3449 = int_to_ptr.hbm [resolvable:$true] %s3448
          %3451 = dma.vmem_to_hbm [thread:$0]  %s3447, 32, %s3449, [#allocation8]
        $region72: #{discriminator_forward.7} parent=59 // pred_fallthru
          _
        // Predicated region
        $region73: #{discriminator_forward.7} parent=59 // pred_check
          %p3452 = pneg %p276
        $region74: #{discriminator_forward.7} parent=59 // pred_check_branch
          %3454 = sbr.rel (%p3452) target = $region76
        $region75: #{discriminator_forward.7} parent=59 // pred_region
          %3456 = vsyncadd [#allocation10], 0
          %s3458 = sshll.u32 [#allocation9], 4
          %s3459 = int_to_ptr.vmem [resolvable:$true] %s3458
          %s3460 = sshll.u32 %s11, 4
          %s3461 = int_to_ptr.hbm [resolvable:$true] %s3460
          %3463 = dma.vmem_to_hbm [thread:$0]  %s3459, 32, %s3461, [#allocation10]
        $region76: #{discriminator_forward.7} parent=59 // pred_fallthru
          _
        // Predicated region
        $region77: #{discriminator_forward.7} parent=59 // pred_check
          %p3464 = pneg %p297
        $region78: #{discriminator_forward.7} parent=59 // pred_check_branch
          %3466 = sbr.rel (%p3464) target = $region80
        $region79: #{discriminator_forward.7} parent=59 // pred_region
          %3468 = vsyncadd [#allocation10], 0
          %s3470 = sshll.u32 [#allocation11], 4
          %s3471 = int_to_ptr.vmem [resolvable:$true] %s3470
          %s3472 = sshll.u32 %s12, 4
          %s3473 = int_to_ptr.hbm [resolvable:$true] %s3472
          %3475 = dma.vmem_to_hbm [thread:$0]  %s3471, 32, %s3473, [#allocation10]
        $region80: #{discriminator_forward.7} parent=59 // pred_fallthru
          _
        // Predicated region
        $region81: #{discriminator_forward.7} parent=59 // pred_check
          %p3476 = pneg %p318
        $region82: #{discriminator_forward.7} parent=59 // pred_check_branch
          %3478 = sbr.rel (%p3476) target = $region84
        $region83: #{discriminator_forward.7} parent=59 // pred_region
          _
        $region84: #{discriminator_forward.7} parent=59 // pred_fallthru
          _
        // Predicated region
        $region85: #{discriminator_forward.7} parent=59 // pred_check
          %p3479 = pneg %p255
        $region86: #{discriminator_forward.7} parent=59 // pred_check_branch
          %3481 = sbr.rel (%p3479) target = $region88
        $region87: #{discriminator_forward.7} parent=59 // pred_region
          %3483 = dma.done [#allocation8], 32
        $region88: #{discriminator_forward.7} parent=59 // pred_fallthru
          _
        // Predicated region
        $region89: #{discriminator_forward.7} parent=59 // pred_check
          %p3484 = pneg %p276
        $region90: #{discriminator_forward.7} parent=59 // pred_check_branch
          %3486 = sbr.rel (%p3484) target = $region92
        $region91: #{discriminator_forward.7} parent=59 // pred_region
          %3488 = dma.done [#allocation10], 32
        $region92: #{discriminator_forward.7} parent=59 // pred_fallthru
          _
        // Predicated region
        $region93: #{discriminator_forward.7} parent=59 // pred_check
          %p3489 = pneg %p297
        $region94: #{discriminator_forward.7} parent=59 // pred_check_branch
          %3491 = sbr.rel (%p3489) target = $region96
        $region95: #{discriminator_forward.7} parent=59 // pred_region
          %3493 = dma.done [#allocation10], 32
        $region96: #{discriminator_forward.7} parent=59 // pred_fallthru
          _
        // Predicated region
        $region97: #{discriminator_forward.7} parent=59 // pred_check
          %p3494 = pneg %p318
        $region98: #{discriminator_forward.7} parent=59 // pred_check_branch
          %3496 = sbr.rel (%p3494) target = $region100
        $region99: #{discriminator_forward.7} parent=59 // pred_region
          _
        $region100: #{discriminator_forward.7} parent=59 // pred_fallthru
          _
      $region60: #{discriminator_forward.7} parent=5 // pred_fallthru
        _
      %p3497 = scmp.le.s32.totalorder 2, %s22
      // Predicated region
      $region101: #{discriminator_forward.7} parent=5 // pred_check
        %p3498 = pneg %p3497
      $region102: #{discriminator_forward.7} parent=5 // pred_check_branch
        %3500 = sbr.rel (%p3498) target = $region104
      $region103: #{discriminator_forward.7} parent=5 // pred_region
        %s3501 = ssub.s32 %s22, 2
      $region104: #{discriminator_forward.7} parent=5 // pred_fallthru
        _
    $region6: #{discriminator_forward.7} parent=1 // loop_footer
      %s26 = sadd.s32 1, %s22
    $region7: #{discriminator_forward.7} parent=1 // loop_footer_branch
      %21 = sbr.rel target = $region3
    $region8: #{discriminator_forward.7} parent=1 // loop_exit
      _
    %3502 = vsyncpa [#allocation8], 1
    %s3503 = scalar_lea.sflag [#allocation8], 1
    %3504 = vsyncpa %s3503, 1
    %3505 = vsyncpa [#allocation10], 1

</llo_original>
